<compile_context>
chip_gen: v7x
topology: tpu7x:2x2x1
jax: 0.10.0
libtpu: 0.0.40
codegen_flags: <defaults>
</compile_context>

<pallas_src>
import functools
import math

import jax
import jax.numpy as jnp
from jax.experimental import pallas as pl
from jax.experimental.pallas import tpu as pltpu


# ------------------------------------------------------------------ kernel

def _decoder_layer_kernel(
        x_ref, enc_ref, tbias_ref, sbias_ref,
        wqkv1_ref, bqkv1_ref, wo1_ref, bo1_ref, g1_ref, be1_ref,
        wq2_ref, bq2_ref, wkv2_ref, bkv2_ref, wo2_ref, bo2_ref, g2_ref, be2_ref,
        w1_ref, b1_ref, w2_ref, b2_ref, g3_ref, be3_ref,
        o_ref, *, num_heads, eps):
    """One full decoder layer for a block of Bb batch elements."""
    bb, sq, d = x_ref.shape
    skv = enc_ref.shape[1]
    dh = d // num_heads

    def layer_norm(y, g_ref_, b_ref_):
        mu = jnp.mean(y, axis=-1, keepdims=True)
        var = jnp.mean((y - mu) * (y - mu), axis=-1, keepdims=True)
        return (y - mu) * jax.lax.rsqrt(var + eps) * g_ref_[...] + b_ref_[...]

    def mha(q_full, k_full, v_full, bias):
        # q_full: (sq, d) f32 (1/sqrt(dh) already folded into Wq/bq),
        # k_full/v_full: (skv, d) f32, bias: (sq, skv) f32 additive (0 / -1e9).
        head_outs = []
        for h in range(num_heads):                       # static unroll, H small
            q = q_full[:, h * dh:(h + 1) * dh].astype(jnp.bfloat16)
            k = k_full[:, h * dh:(h + 1) * dh].astype(jnp.bfloat16)
            v = v_full[:, h * dh:(h + 1) * dh].astype(jnp.bfloat16)
            s = jax.lax.dot_general(q, k, (((1,), (1,)), ((), ())),
                                    preferred_element_type=jnp.float32)
            s = s + bias
            s = s - jnp.max(s, axis=-1, keepdims=True)
            p = jnp.exp(s)
            p = p / jnp.sum(p, axis=-1, keepdims=True)   # exact divide (parity)
            head_outs.append(jnp.dot(p.astype(jnp.bfloat16), v,
                                     preferred_element_type=jnp.float32))
        return jnp.concatenate(head_outs, axis=-1)       # (sq, d)

    # residual / query input, flattened to lane-dense (bb*sq, d) rows
    x = x_ref[...].reshape(bb * sq, d).astype(jnp.float32)

    # -------- masked self-attention + add & norm --------
    qkv = jnp.dot(x.astype(jnp.bfloat16), wqkv1_ref[...],
                  preferred_element_type=jnp.float32) + bqkv1_ref[...]   # (bb*sq, 3d)
    attn = jnp.concatenate(
        [mha(qkv[b * sq:(b + 1) * sq, 0:d],
             qkv[b * sq:(b + 1) * sq, d:2 * d],
             qkv[b * sq:(b + 1) * sq, 2 * d:3 * d],
             tbias_ref[b].astype(jnp.float32)) for b in range(bb)], axis=0)
    attn = jnp.dot(attn.astype(jnp.bfloat16), wo1_ref[...],
                   preferred_element_type=jnp.float32) + bo1_ref[...]
    x = layer_norm(x + attn, g1_ref, be1_ref)

    # -------- cross-attention over encoder output + add & norm --------
    enc = enc_ref[...].reshape(bb * skv, d).astype(jnp.bfloat16)
    kv = jnp.dot(enc, wkv2_ref[...],
                 preferred_element_type=jnp.float32) + bkv2_ref[...]     # (bb*skv, 2d)
    q_all = jnp.dot(x.astype(jnp.bfloat16), wq2_ref[...],
                    preferred_element_type=jnp.float32) + bq2_ref[...]   # (bb*sq, d)
    attn = jnp.concatenate(
        [mha(q_all[b * sq:(b + 1) * sq, :],
             kv[b * skv:(b + 1) * skv, 0:d],
             kv[b * skv:(b + 1) * skv, d:2 * d],
             sbias_ref[b].astype(jnp.float32)) for b in range(bb)], axis=0)
    attn = jnp.dot(attn.astype(jnp.bfloat16), wo2_ref[...],
                   preferred_element_type=jnp.float32) + bo2_ref[...]
    x = layer_norm(x + attn, g2_ref, be2_ref)

    # -------- position-wise FFN + add & norm --------
    # (For very large d_ff one would tile this matmul over dff; at demo shapes
    #  the bf16 weights + single full-width matmul easily fit VMEM.)
    h = jnp.dot(x.astype(jnp.bfloat16), w1_ref[...],
                preferred_element_type=jnp.float32) + b1_ref[...]
    h = jnp.maximum(h, 0.0)
    y = jnp.dot(h.astype(jnp.bfloat16), w2_ref[...],
                preferred_element_type=jnp.float32) + b2_ref[...]
    x = layer_norm(x + y, g3_ref, be3_ref)

    o_ref[...] = x.reshape(bb, sq, d).astype(o_ref.dtype)


# ------------------------------------------------------------------ wrapper

def _pick_batch_block(batch, rows_per_batch, row_cap=512):
    """Batch elements per grid step: keep >= 2 grid steps (v7x megacore) and
    at most ~row_cap projection rows per step."""
    best = 1
    for bb in range(1, batch + 1):
        if batch % bb:
            continue
        if bb * rows_per_batch > row_cap:
            break
        if batch // bb >= 2 or batch == 1:
            best = bb
    return best


def decoder_layer(x, enc, tgt_bias, src_bias, p, num_heads, eps=1e-5):
    """One fused pallas_call for a full decoder layer."""
    B, Sq, D = x.shape
    Skv = enc.shape[1]
    dff = p["w1"].shape[1]
    Bb = _pick_batch_block(B, Sq)
    grid = (B // Bb,)

    def wspec(shape):
        # grid-invariant weight / bias / LN-param block (constant index map)
        return pl.BlockSpec(shape, lambda i, _s=shape: (0,) * len(_s))

    in_specs = [
        pl.BlockSpec((Bb, Sq, D), lambda i: (i, 0, 0)),     # x
        pl.BlockSpec((Bb, Skv, D), lambda i: (i, 0, 0)),    # encoder output
        pl.BlockSpec((Bb, Sq, Sq), lambda i: (i, 0, 0)),    # target additive bias
        pl.BlockSpec((Bb, Sq, Skv), lambda i: (i, 0, 0)),   # source additive bias
        wspec((D, 3 * D)), wspec((1, 3 * D)),               # wqkv1, bqkv1
        wspec((D, D)), wspec((1, D)),                       # wo1, bo1
        wspec((1, D)), wspec((1, D)),                       # g1, be1
        wspec((D, D)), wspec((1, D)),                       # wq2, bq2
        wspec((D, 2 * D)), wspec((1, 2 * D)),               # wkv2, bkv2
        wspec((D, D)), wspec((1, D)),                       # wo2, bo2
        wspec((1, D)), wspec((1, D)),                       # g2, be2
        wspec((D, dff)), wspec((1, dff)),                   # w1, b1
        wspec((dff, D)), wspec((1, D)),                     # w2, b2
        wspec((1, D)), wspec((1, D)),                       # g3, be3
    ]
    ops = [x, enc, tgt_bias, src_bias,
           p["wqkv1"], p["bqkv1"], p["wo1"], p["bo1"], p["g1"], p["be1"],
           p["wq2"], p["bq2"], p["wkv2"], p["bkv2"], p["wo2"], p["bo2"],
           p["g2"], p["be2"],
           p["w1"], p["b1"], p["w2"], p["b2"], p["g3"], p["be3"]]

    return pl.pallas_call(
        functools.partial(_decoder_layer_kernel, num_heads=num_heads, eps=eps),
        out_shape=jax.ShapeDtypeStruct((B, Sq, D), x.dtype),
        grid=grid,
        in_specs=in_specs,
        out_specs=pl.BlockSpec((Bb, Sq, D), lambda i: (i, 0, 0)),
        compiler_params=pltpu.CompilerParams(
            dimension_semantics=("parallel",),
            vmem_limit_bytes=48 * 1024 * 1024),
    )(*ops)


def decoders_forward(x, encoder_output, source_mask, target_mask, layer_params,
                     num_heads):
    # masks -> additive bias (0 = attend, -1e9 = masked), computed ONCE in bf16
    # and reused by every layer (same post-softmax result as masked_fill(-1e9)).
    src_bias = ((source_mask.astype(jnp.float32)[:, 0] - 1.0)
                * 1e9).astype(jnp.bfloat16)                 # (B, Sq, Ssrc)
    tgt_bias = ((target_mask.astype(jnp.float32)[:, 0] - 1.0)
                * 1e9).astype(jnp.bfloat16)                 # (B, Sq, Sq)
    # mirrors Decoders.forward: sequentially apply each decoder layer
    for p in layer_params:
        x = decoder_layer(x, encoder_output, tgt_bias, src_bias, p, num_heads)
    return x


# ------------------------------------------------------------------- params

def init_layer_params(key, d_model, d_ff, num_heads):
    """Random per-layer params in a plain (in, out) layout with 1-D biases."""
    del num_heads
    ks = jax.random.split(key, 10)
    s_d = 1.0 / math.sqrt(d_model)
    s_f = 1.0 / math.sqrt(d_ff)

    def w(k, din, dout, s):
        return jax.random.normal(k, (din, dout), jnp.float32) * s

    p = {
        "wq1": w(ks[0], d_model, d_model, s_d), "wk1": w(ks[1], d_model, d_model, s_d),
        "wv1": w(ks[2], d_model, d_model, s_d), "wo1": w(ks[3], d_model, d_model, s_d),
        "wq2": w(ks[4], d_model, d_model, s_d), "wk2": w(ks[5], d_model, d_model, s_d),
        "wv2": w(ks[6], d_model, d_model, s_d), "wo2": w(ks[7], d_model, d_model, s_d),
        "w1": w(ks[8], d_model, d_ff, s_d), "w2": w(ks[9], d_ff, d_model, s_f),
        "b1": jnp.zeros((d_ff,), jnp.float32),
    }
    for n in ("bq1", "bk1", "bv1", "bo1", "bq2", "bk2", "bv2", "bo2", "b2"):
        p[n] = jnp.zeros((d_model,), jnp.float32)
    for i in (1, 2, 3):
        p[f"g{i}"] = jnp.ones((d_model,), jnp.float32)
        p[f"be{i}"] = jnp.zeros((d_model,), jnp.float32)
    return p


def pack_layer_params(p, d_model, num_heads):
    """One-time packing: fuse QKV / KV matrices, fold 1/sqrt(Dh) into the Q
    projection, pre-cast weight matrices to bf16 (f32 biases / LN params)."""
    scale = 1.0 / math.sqrt(d_model // num_heads)
    row = lambda v: v.reshape(1, -1).astype(jnp.float32)
    q = {}
    q["wqkv1"] = jnp.concatenate(
        [p["wq1"] * scale, p["wk1"], p["wv1"]], axis=1).astype(jnp.bfloat16)
    q["bqkv1"] = jnp.concatenate(
        [row(p["bq1"]) * scale, row(p["bk1"]), row(p["bv1"])], axis=1)
    q["wo1"], q["bo1"] = p["wo1"].astype(jnp.bfloat16), row(p["bo1"])
    q["wq2"], q["bq2"] = (p["wq2"] * scale).astype(jnp.bfloat16), row(p["bq2"]) * scale
    q["wkv2"] = jnp.concatenate([p["wk2"], p["wv2"]], axis=1).astype(jnp.bfloat16)
    q["bkv2"] = jnp.concatenate([row(p["bk2"]), row(p["bv2"])], axis=1)
    q["wo2"], q["bo2"] = p["wo2"].astype(jnp.bfloat16), row(p["bo2"])
    q["w1"], q["b1"] = p["w1"].astype(jnp.bfloat16), row(p["b1"])
    q["w2"], q["b2"] = p["w2"].astype(jnp.bfloat16), row(p["b2"])
    for i in (1, 2, 3):
        q[f"g{i}"], q[f"be{i}"] = row(p[f"g{i}"]), row(p[f"be{i}"])
    return q


# --------------------------------------------------------------------- main

if __name__ == "__main__":
    B, S_tgt, S_src = 2, 8, 16
    D, H, D_FF, N_LAYERS = 128, 4, 256, 2

    key = jax.random.PRNGKey(0)
    k_x, k_enc, *k_layers = jax.random.split(key, 2 + N_LAYERS)

    x = jax.random.normal(k_x, (B, S_tgt, D), jnp.float32)
    encoder_output = jax.random.normal(k_enc, (B, S_src, D), jnp.float32)

    # target_mask: causal (B, 1, S_tgt, S_tgt); source_mask: padding mask
    # (B, 1, S_tgt, S_src), last 2 source positions of batch 1 masked out.
    target_mask = jnp.tril(jnp.ones((S_tgt, S_tgt), jnp.float32))
    target_mask = jnp.broadcast_to(target_mask, (B, 1, S_tgt, S_tgt))
    src_valid = jnp.stack([jnp.ones((S_src,), jnp.float32),
                           jnp.concatenate([jnp.ones((S_src - 2,), jnp.float32),
                                            jnp.zeros((2,), jnp.float32)])])
    source_mask = jnp.broadcast_to(src_valid[:, None, None, :],
                                   (B, 1, S_tgt, S_src))

    layer_params = [pack_layer_params(init_layer_params(k, D, D_FF, H), D, H)
                    for k in k_layers]

    fwd = jax.jit(functools.partial(decoders_forward, num_heads=H))
    out = fwd(x, encoder_output, source_mask, target_mask, layer_params)
    out = jax.block_until_ready(out)

    assert out.shape == (B, S_tgt, D) and out.dtype == jnp.float32
    assert bool(jnp.all(jnp.isfinite(out)))
    print("KERNEL_OK")
</pallas_src>

<mosaic_0001>
module attributes {stable_mosaic.version = 11 : i64} {
  func.func @_decoder_layer_kernel(%arg0: i32, %arg1: memref<1x8x128xf32, #tpu.memory_space<vmem>>, %arg2: memref<1x16x128xf32, #tpu.memory_space<vmem>>, %arg3: memref<1x8x8xbf16, #tpu.memory_space<vmem>>, %arg4: memref<1x8x16xbf16, #tpu.memory_space<vmem>>, %arg5: memref<128x384xbf16, #tpu.memory_space<vmem>>, %arg6: memref<1x384xf32, #tpu.memory_space<vmem>>, %arg7: memref<128x128xbf16, #tpu.memory_space<vmem>>, %arg8: memref<1x128xf32, #tpu.memory_space<vmem>>, %arg9: memref<1x128xf32, #tpu.memory_space<vmem>>, %arg10: memref<1x128xf32, #tpu.memory_space<vmem>>, %arg11: memref<128x128xbf16, #tpu.memory_space<vmem>>, %arg12: memref<1x128xf32, #tpu.memory_space<vmem>>, %arg13: memref<128x256xbf16, #tpu.memory_space<vmem>>, %arg14: memref<1x256xf32, #tpu.memory_space<vmem>>, %arg15: memref<128x128xbf16, #tpu.memory_space<vmem>>, %arg16: memref<1x128xf32, #tpu.memory_space<vmem>>, %arg17: memref<1x128xf32, #tpu.memory_space<vmem>>, %arg18: memref<1x128xf32, #tpu.memory_space<vmem>>, %arg19: memref<128x256xbf16, #tpu.memory_space<vmem>>, %arg20: memref<1x256xf32, #tpu.memory_space<vmem>>, %arg21: memref<256x128xbf16, #tpu.memory_space<vmem>>, %arg22: memref<1x128xf32, #tpu.memory_space<vmem>>, %arg23: memref<1x128xf32, #tpu.memory_space<vmem>>, %arg24: memref<1x128xf32, #tpu.memory_space<vmem>>, %arg25: memref<1x8x128xf32, #tpu.memory_space<vmem>>) attributes {dimension_semantics = [#tpu.dimension_semantics<parallel>], iteration_bounds = array<i64: 2>, scalar_prefetch = 0 : i64, scratch_operands = 0 : i64, tpu.core_type = #tpu.core_type<tc>, window_params = [{transform_indices = @transform_0, window_bounds = array<i64: 1, 8, 128>}, {transform_indices = @transform_1, window_bounds = array<i64: 1, 16, 128>}, {transform_indices = @transform_2, window_bounds = array<i64: 1, 8, 8>}, {transform_indices = @transform_3, window_bounds = array<i64: 1, 8, 16>}, {pipeline_mode = #tpu.pipeline_mode<synchronous>, transform_indices = @transform_4, window_bounds = array<i64: 128, 384>}, {pipeline_mode = #tpu.pipeline_mode<synchronous>, transform_indices = @transform_5, window_bounds = array<i64: 1, 384>}, {pipeline_mode = #tpu.pipeline_mode<synchronous>, transform_indices = @transform_6, window_bounds = array<i64: 128, 128>}, {pipeline_mode = #tpu.pipeline_mode<synchronous>, transform_indices = @transform_7, window_bounds = array<i64: 1, 128>}, {pipeline_mode = #tpu.pipeline_mode<synchronous>, transform_indices = @transform_8, window_bounds = array<i64: 1, 128>}, {pipeline_mode = #tpu.pipeline_mode<synchronous>, transform_indices = @transform_9, window_bounds = array<i64: 1, 128>}, {pipeline_mode = #tpu.pipeline_mode<synchronous>, transform_indices = @transform_10, window_bounds = array<i64: 128, 128>}, {pipeline_mode = #tpu.pipeline_mode<synchronous>, transform_indices = @transform_11, window_bounds = array<i64: 1, 128>}, {pipeline_mode = #tpu.pipeline_mode<synchronous>, transform_indices = @transform_12, window_bounds = array<i64: 128, 256>}, {pipeline_mode = #tpu.pipeline_mode<synchronous>, transform_indices = @transform_13, window_bounds = array<i64: 1, 256>}, {pipeline_mode = #tpu.pipeline_mode<synchronous>, transform_indices = @transform_14, window_bounds = array<i64: 128, 128>}, {pipeline_mode = #tpu.pipeline_mode<synchronous>, transform_indices = @transform_15, window_bounds = array<i64: 1, 128>}, {pipeline_mode = #tpu.pipeline_mode<synchronous>, transform_indices = @transform_16, window_bounds = array<i64: 1, 128>}, {pipeline_mode = #tpu.pipeline_mode<synchronous>, transform_indices = @transform_17, window_bounds = array<i64: 1, 128>}, {pipeline_mode = #tpu.pipeline_mode<synchronous>, transform_indices = @transform_18, window_bounds = array<i64: 128, 256>}, {pipeline_mode = #tpu.pipeline_mode<synchronous>, transform_indices = @transform_19, window_bounds = array<i64: 1, 256>}, {pipeline_mode = #tpu.pipeline_mode<synchronous>, transform_indices = @transform_20, window_bounds = array<i64: 256, 128>}, {pipeline_mode = #tpu.pipeline_mode<synchronous>, transform_indices = @transform_21, window_bounds = array<i64: 1, 128>}, {pipeline_mode = #tpu.pipeline_mode<synchronous>, transform_indices = @transform_22, window_bounds = array<i64: 1, 128>}, {pipeline_mode = #tpu.pipeline_mode<synchronous>, transform_indices = @transform_23, window_bounds = array<i64: 1, 128>}, {transform_indices = @transform_24, window_bounds = array<i64: 1, 8, 128>}]} {
    %c0 = arith.constant 0 : index
    %c0_0 = arith.constant 0 : index
    %c0_1 = arith.constant 0 : index
    %0 = vector.load %arg1[%c0, %c0_0, %c0_1] : memref<1x8x128xf32, #tpu.memory_space<vmem>>, vector<1x8x128xf32>
    %1 = vector.shape_cast %0 : vector<1x8x128xf32> to vector<8x128xf32>
    %2 = arith.truncf %1 : vector<8x128xf32> to vector<8x128xbf16>
    %c0_2 = arith.constant 0 : index
    %c0_3 = arith.constant 0 : index
    %3 = vector.load %arg5[%c0_2, %c0_3] : memref<128x384xbf16, #tpu.memory_space<vmem>>, vector<128x384xbf16>
    %cst = arith.constant dense<0.000000e+00> : vector<8x384xf32>
    %4 = tpu.matmul %2, %3, %cst {dimension_numbers = #tpu.dot_dimension_numbers<[1], [0], [0], [1], [0, 0, 1, 1], [], []>} : vector<8x128xbf16>, vector<128x384xbf16>, vector<8x384xf32> -> vector<8x384xf32>
    %c0_4 = arith.constant 0 : index
    %c0_5 = arith.constant 0 : index
    %5 = vector.load %arg6[%c0_4, %c0_5] : memref<1x384xf32, #tpu.memory_space<vmem>>, vector<1x384xf32>
    %6 = vector.broadcast %5 : vector<1x384xf32> to vector<8x384xf32>
    %7 = arith.addf %4, %6 : vector<8x384xf32>
    %8 = vector.extract_strided_slice %7 {offsets = [0, 0], sizes = [8, 128], strides = [1, 1]} : vector<8x384xf32> to vector<8x128xf32>
    %9 = vector.extract_strided_slice %7 {offsets = [0, 128], sizes = [8, 128], strides = [1, 1]} : vector<8x384xf32> to vector<8x128xf32>
    %10 = vector.extract_strided_slice %7 {offsets = [0, 256], sizes = [8, 128], strides = [1, 1]} : vector<8x384xf32> to vector<8x128xf32>
    %c0_6 = arith.constant 0 : index
    %c0_7 = arith.constant 0 : index
    %c0_8 = arith.constant 0 : index
    %11 = vector.load %arg3[%c0_6, %c0_7, %c0_8] : memref<1x8x8xbf16, #tpu.memory_space<vmem>>, vector<1x8x8xbf16>
    %12 = vector.shape_cast %11 : vector<1x8x8xbf16> to vector<8x8xbf16>
    %13 = arith.extf %12 : vector<8x8xbf16> to vector<8x8xf32>
    %14 = vector.extract_strided_slice %8 {offsets = [0, 0], sizes = [8, 32], strides = [1, 1]} : vector<8x128xf32> to vector<8x32xf32>
    %15 = arith.truncf %14 : vector<8x32xf32> to vector<8x32xbf16>
    %16 = vector.extract_strided_slice %9 {offsets = [0, 0], sizes = [8, 32], strides = [1, 1]} : vector<8x128xf32> to vector<8x32xf32>
    %17 = arith.truncf %16 : vector<8x32xf32> to vector<8x32xbf16>
    %18 = vector.extract_strided_slice %10 {offsets = [0, 0], sizes = [8, 32], strides = [1, 1]} : vector<8x128xf32> to vector<8x32xf32>
    %19 = arith.truncf %18 : vector<8x32xf32> to vector<8x32xbf16>
    %cst_9 = arith.constant dense<0.000000e+00> : vector<8x8xf32>
    %20 = tpu.matmul %15, %17, %cst_9 {dimension_numbers = #tpu.dot_dimension_numbers<[1], [1], [0], [0], [0, 0, 1, 0], [], []>} : vector<8x32xbf16>, vector<8x32xbf16>, vector<8x8xf32> -> vector<8x8xf32>
    %21 = arith.addf %20, %13 : vector<8x8xf32>
    %cst_10 = arith.constant dense<0xFF800000> : vector<8xf32>
    %22 = vector.multi_reduction <maximumf>, %21, %cst_10 [1] : vector<8x8xf32> to vector<8xf32>
    %23 = vector.shape_cast %22 : vector<8xf32> to vector<8x1xf32>
    %24 = vector.broadcast %23 : vector<8x1xf32> to vector<8x8xf32>
    %25 = arith.subf %21, %24 : vector<8x8xf32>
    %26 = math.exp %25 : vector<8x8xf32>
    %cst_11 = arith.constant dense<0.000000e+00> : vector<8xf32>
    %27 = vector.multi_reduction <add>, %26, %cst_11 [1] : vector<8x8xf32> to vector<8xf32>
    %28 = vector.shape_cast %27 : vector<8xf32> to vector<8x1xf32>
    %29 = vector.broadcast %28 : vector<8x1xf32> to vector<8x8xf32>
    %30 = arith.divf %26, %29 : vector<8x8xf32>
    %31 = arith.truncf %30 : vector<8x8xf32> to vector<8x8xbf16>
    %cst_12 = arith.constant dense<0.000000e+00> : vector<8x32xf32>
    %32 = tpu.matmul %31, %19, %cst_12 {dimension_numbers = #tpu.dot_dimension_numbers<[1], [0], [0], [1], [0, 0, 1, 1], [], []>} : vector<8x8xbf16>, vector<8x32xbf16>, vector<8x32xf32> -> vector<8x32xf32>
    %33 = vector.extract_strided_slice %8 {offsets = [0, 32], sizes = [8, 32], strides = [1, 1]} : vector<8x128xf32> to vector<8x32xf32>
    %34 = arith.truncf %33 : vector<8x32xf32> to vector<8x32xbf16>
    %35 = vector.extract_strided_slice %9 {offsets = [0, 32], sizes = [8, 32], strides = [1, 1]} : vector<8x128xf32> to vector<8x32xf32>
    %36 = arith.truncf %35 : vector<8x32xf32> to vector<8x32xbf16>
    %37 = vector.extract_strided_slice %10 {offsets = [0, 32], sizes = [8, 32], strides = [1, 1]} : vector<8x128xf32> to vector<8x32xf32>
    %38 = arith.truncf %37 : vector<8x32xf32> to vector<8x32xbf16>
    %cst_13 = arith.constant dense<0.000000e+00> : vector<8x8xf32>
    %39 = tpu.matmul %34, %36, %cst_13 {dimension_numbers = #tpu.dot_dimension_numbers<[1], [1], [0], [0], [0, 0, 1, 0], [], []>} : vector<8x32xbf16>, vector<8x32xbf16>, vector<8x8xf32> -> vector<8x8xf32>
    %40 = arith.addf %39, %13 : vector<8x8xf32>
    %cst_14 = arith.constant dense<0xFF800000> : vector<8xf32>
    %41 = vector.multi_reduction <maximumf>, %40, %cst_14 [1] : vector<8x8xf32> to vector<8xf32>
    %42 = vector.shape_cast %41 : vector<8xf32> to vector<8x1xf32>
    %43 = vector.broadcast %42 : vector<8x1xf32> to vector<8x8xf32>
    %44 = arith.subf %40, %43 : vector<8x8xf32>
    %45 = math.exp %44 : vector<8x8xf32>
    %cst_15 = arith.constant dense<0.000000e+00> : vector<8xf32>
    %46 = vector.multi_reduction <add>, %45, %cst_15 [1] : vector<8x8xf32> to vector<8xf32>
    %47 = vector.shape_cast %46 : vector<8xf32> to vector<8x1xf32>
    %48 = vector.broadcast %47 : vector<8x1xf32> to vector<8x8xf32>
    %49 = arith.divf %45, %48 : vector<8x8xf32>
    %50 = arith.truncf %49 : vector<8x8xf32> to vector<8x8xbf16>
    %cst_16 = arith.constant dense<0.000000e+00> : vector<8x32xf32>
    %51 = tpu.matmul %50, %38, %cst_16 {dimension_numbers = #tpu.dot_dimension_numbers<[1], [0], [0], [1], [0, 0, 1, 1], [], []>} : vector<8x8xbf16>, vector<8x32xbf16>, vector<8x32xf32> -> vector<8x32xf32>
    %52 = vector.extract_strided_slice %8 {offsets = [0, 64], sizes = [8, 32], strides = [1, 1]} : vector<8x128xf32> to vector<8x32xf32>
    %53 = arith.truncf %52 : vector<8x32xf32> to vector<8x32xbf16>
    %54 = vector.extract_strided_slice %9 {offsets = [0, 64], sizes = [8, 32], strides = [1, 1]} : vector<8x128xf32> to vector<8x32xf32>
    %55 = arith.truncf %54 : vector<8x32xf32> to vector<8x32xbf16>
    %56 = vector.extract_strided_slice %10 {offsets = [0, 64], sizes = [8, 32], strides = [1, 1]} : vector<8x128xf32> to vector<8x32xf32>
    %57 = arith.truncf %56 : vector<8x32xf32> to vector<8x32xbf16>
    %cst_17 = arith.constant dense<0.000000e+00> : vector<8x8xf32>
    %58 = tpu.matmul %53, %55, %cst_17 {dimension_numbers = #tpu.dot_dimension_numbers<[1], [1], [0], [0], [0, 0, 1, 0], [], []>} : vector<8x32xbf16>, vector<8x32xbf16>, vector<8x8xf32> -> vector<8x8xf32>
    %59 = arith.addf %58, %13 : vector<8x8xf32>
    %cst_18 = arith.constant dense<0xFF800000> : vector<8xf32>
    %60 = vector.multi_reduction <maximumf>, %59, %cst_18 [1] : vector<8x8xf32> to vector<8xf32>
    %61 = vector.shape_cast %60 : vector<8xf32> to vector<8x1xf32>
    %62 = vector.broadcast %61 : vector<8x1xf32> to vector<8x8xf32>
    %63 = arith.subf %59, %62 : vector<8x8xf32>
    %64 = math.exp %63 : vector<8x8xf32>
    %cst_19 = arith.constant dense<0.000000e+00> : vector<8xf32>
    %65 = vector.multi_reduction <add>, %64, %cst_19 [1] : vector<8x8xf32> to vector<8xf32>
    %66 = vector.shape_cast %65 : vector<8xf32> to vector<8x1xf32>
    %67 = vector.broadcast %66 : vector<8x1xf32> to vector<8x8xf32>
    %68 = arith.divf %64, %67 : vector<8x8xf32>
    %69 = arith.truncf %68 : vector<8x8xf32> to vector<8x8xbf16>
    %cst_20 = arith.constant dense<0.000000e+00> : vector<8x32xf32>
    %70 = tpu.matmul %69, %57, %cst_20 {dimension_numbers = #tpu.dot_dimension_numbers<[1], [0], [0], [1], [0, 0, 1, 1], [], []>} : vector<8x8xbf16>, vector<8x32xbf16>, vector<8x32xf32> -> vector<8x32xf32>
    %71 = vector.extract_strided_slice %8 {offsets = [0, 96], sizes = [8, 32], strides = [1, 1]} : vector<8x128xf32> to vector<8x32xf32>
    %72 = arith.truncf %71 : vector<8x32xf32> to vector<8x32xbf16>
    %73 = vector.extract_strided_slice %9 {offsets = [0, 96], sizes = [8, 32], strides = [1, 1]} : vector<8x128xf32> to vector<8x32xf32>
    %74 = arith.truncf %73 : vector<8x32xf32> to vector<8x32xbf16>
    %75 = vector.extract_strided_slice %10 {offsets = [0, 96], sizes = [8, 32], strides = [1, 1]} : vector<8x128xf32> to vector<8x32xf32>
    %76 = arith.truncf %75 : vector<8x32xf32> to vector<8x32xbf16>
    %cst_21 = arith.constant dense<0.000000e+00> : vector<8x8xf32>
    %77 = tpu.matmul %72, %74, %cst_21 {dimension_numbers = #tpu.dot_dimension_numbers<[1], [1], [0], [0], [0, 0, 1, 0], [], []>} : vector<8x32xbf16>, vector<8x32xbf16>, vector<8x8xf32> -> vector<8x8xf32>
    %78 = arith.addf %77, %13 : vector<8x8xf32>
    %cst_22 = arith.constant dense<0xFF800000> : vector<8xf32>
    %79 = vector.multi_reduction <maximumf>, %78, %cst_22 [1] : vector<8x8xf32> to vector<8xf32>
    %80 = vector.shape_cast %79 : vector<8xf32> to vector<8x1xf32>
    %81 = vector.broadcast %80 : vector<8x1xf32> to vector<8x8xf32>
    %82 = arith.subf %78, %81 : vector<8x8xf32>
    %83 = math.exp %82 : vector<8x8xf32>
    %cst_23 = arith.constant dense<0.000000e+00> : vector<8xf32>
    %84 = vector.multi_reduction <add>, %83, %cst_23 [1] : vector<8x8xf32> to vector<8xf32>
    %85 = vector.shape_cast %84 : vector<8xf32> to vector<8x1xf32>
    %86 = vector.broadcast %85 : vector<8x1xf32> to vector<8x8xf32>
    %87 = arith.divf %83, %86 : vector<8x8xf32>
    %88 = arith.truncf %87 : vector<8x8xf32> to vector<8x8xbf16>
    %cst_24 = arith.constant dense<0.000000e+00> : vector<8x32xf32>
    %89 = tpu.matmul %88, %76, %cst_24 {dimension_numbers = #tpu.dot_dimension_numbers<[1], [0], [0], [1], [0, 0, 1, 1], [], []>} : vector<8x8xbf16>, vector<8x32xbf16>, vector<8x32xf32> -> vector<8x32xf32>
    %90 = tpu.concatenate %32, %51, %70, %89 in 1 : vector<8x32xf32>, vector<8x32xf32>, vector<8x32xf32>, vector<8x32xf32> -> vector<8x128xf32>
    %91 = arith.truncf %90 : vector<8x128xf32> to vector<8x128xbf16>
    %c0_25 = arith.constant 0 : index
    %c0_26 = arith.constant 0 : index
    %92 = vector.load %arg7[%c0_25, %c0_26] : memref<128x128xbf16, #tpu.memory_space<vmem>>, vector<128x128xbf16>
    %cst_27 = arith.constant dense<0.000000e+00> : vector<8x128xf32>
    %93 = tpu.matmul %91, %92, %cst_27 {dimension_numbers = #tpu.dot_dimension_numbers<[1], [0], [0], [1], [0, 0, 1, 1], [], []>} : vector<8x128xbf16>, vector<128x128xbf16>, vector<8x128xf32> -> vector<8x128xf32>
    %c0_28 = arith.constant 0 : index
    %c0_29 = arith.constant 0 : index
    %94 = vector.load %arg8[%c0_28, %c0_29] : memref<1x128xf32, #tpu.memory_space<vmem>>, vector<1x128xf32>
    %95 = vector.broadcast %94 : vector<1x128xf32> to vector<8x128xf32>
    %96 = arith.addf %93, %95 : vector<8x128xf32>
    %97 = arith.addf %1, %96 : vector<8x128xf32>
    %cst_30 = arith.constant dense<0.000000e+00> : vector<8xf32>
    %98 = vector.multi_reduction <add>, %97, %cst_30 [1] : vector<8x128xf32> to vector<8xf32>
    %99 = vector.shape_cast %98 : vector<8xf32> to vector<8x1xf32>
    %cst_31 = arith.constant 1.280000e+02 : f32
    %100 = vector.broadcast %cst_31 : f32 to vector<8x1xf32>
    %101 = arith.divf %99, %100 : vector<8x1xf32>
    %102 = vector.broadcast %101 : vector<8x1xf32> to vector<8x128xf32>
    %103 = arith.subf %97, %102 : vector<8x128xf32>
    %104 = vector.broadcast %101 : vector<8x1xf32> to vector<8x128xf32>
    %105 = arith.subf %97, %104 : vector<8x128xf32>
    %106 = arith.mulf %103, %105 : vector<8x128xf32>
    %cst_32 = arith.constant dense<0.000000e+00> : vector<8xf32>
    %107 = vector.multi_reduction <add>, %106, %cst_32 [1] : vector<8x128xf32> to vector<8xf32>
    %108 = vector.shape_cast %107 : vector<8xf32> to vector<8x1xf32>
    %cst_33 = arith.constant 1.280000e+02 : f32
    %109 = vector.broadcast %cst_33 : f32 to vector<8x1xf32>
    %110 = arith.divf %108, %109 : vector<8x1xf32>
    %111 = vector.broadcast %101 : vector<8x1xf32> to vector<8x128xf32>
    %112 = arith.subf %97, %111 : vector<8x128xf32>
    %cst_34 = arith.constant 9.99999974E-6 : f32
    %113 = vector.broadcast %cst_34 : f32 to vector<8x1xf32>
    %114 = arith.addf %110, %113 : vector<8x1xf32>
    %115 = math.rsqrt %114 : vector<8x1xf32>
    %116 = vector.broadcast %115 : vector<8x1xf32> to vector<8x128xf32>
    %117 = arith.mulf %112, %116 : vector<8x128xf32>
    %c0_35 = arith.constant 0 : index
    %c0_36 = arith.constant 0 : index
    %118 = vector.load %arg9[%c0_35, %c0_36] : memref<1x128xf32, #tpu.memory_space<vmem>>, vector<1x128xf32>
    %119 = vector.broadcast %118 : vector<1x128xf32> to vector<8x128xf32>
    %120 = arith.mulf %117, %119 : vector<8x128xf32>
    %c0_37 = arith.constant 0 : index
    %c0_38 = arith.constant 0 : index
    %121 = vector.load %arg10[%c0_37, %c0_38] : memref<1x128xf32, #tpu.memory_space<vmem>>, vector<1x128xf32>
    %122 = vector.broadcast %121 : vector<1x128xf32> to vector<8x128xf32>
    %123 = arith.addf %120, %122 : vector<8x128xf32>
    %c0_39 = arith.constant 0 : index
    %c0_40 = arith.constant 0 : index
    %c0_41 = arith.constant 0 : index
    %124 = vector.load %arg2[%c0_39, %c0_40, %c0_41] : memref<1x16x128xf32, #tpu.memory_space<vmem>>, vector<1x16x128xf32>
    %125 = vector.shape_cast %124 : vector<1x16x128xf32> to vector<16x128xf32>
    %126 = arith.truncf %125 : vector<16x128xf32> to vector<16x128xbf16>
    %c0_42 = arith.constant 0 : index
    %c0_43 = arith.constant 0 : index
    %127 = vector.load %arg13[%c0_42, %c0_43] : memref<128x256xbf16, #tpu.memory_space<vmem>>, vector<128x256xbf16>
    %cst_44 = arith.constant dense<0.000000e+00> : vector<16x256xf32>
    %128 = tpu.matmul %126, %127, %cst_44 {dimension_numbers = #tpu.dot_dimension_numbers<[1], [0], [0], [1], [0, 0, 1, 1], [], []>} : vector<16x128xbf16>, vector<128x256xbf16>, vector<16x256xf32> -> vector<16x256xf32>
    %c0_45 = arith.constant 0 : index
    %c0_46 = arith.constant 0 : index
    %129 = vector.load %arg14[%c0_45, %c0_46] : memref<1x256xf32, #tpu.memory_space<vmem>>, vector<1x256xf32>
    %130 = vector.broadcast %129 : vector<1x256xf32> to vector<16x256xf32>
    %131 = arith.addf %128, %130 : vector<16x256xf32>
    %132 = arith.truncf %123 : vector<8x128xf32> to vector<8x128xbf16>
    %c0_47 = arith.constant 0 : index
    %c0_48 = arith.constant 0 : index
    %133 = vector.load %arg11[%c0_47, %c0_48] : memref<128x128xbf16, #tpu.memory_space<vmem>>, vector<128x128xbf16>
    %cst_49 = arith.constant dense<0.000000e+00> : vector<8x128xf32>
    %134 = tpu.matmul %132, %133, %cst_49 {dimension_numbers = #tpu.dot_dimension_numbers<[1], [0], [0], [1], [0, 0, 1, 1], [], []>} : vector<8x128xbf16>, vector<128x128xbf16>, vector<8x128xf32> -> vector<8x128xf32>
    %c0_50 = arith.constant 0 : index
    %c0_51 = arith.constant 0 : index
    %135 = vector.load %arg12[%c0_50, %c0_51] : memref<1x128xf32, #tpu.memory_space<vmem>>, vector<1x128xf32>
    %136 = vector.broadcast %135 : vector<1x128xf32> to vector<8x128xf32>
    %137 = arith.addf %134, %136 : vector<8x128xf32>
    %138 = vector.extract_strided_slice %131 {offsets = [0, 0], sizes = [16, 128], strides = [1, 1]} : vector<16x256xf32> to vector<16x128xf32>
    %139 = vector.extract_strided_slice %131 {offsets = [0, 128], sizes = [16, 128], strides = [1, 1]} : vector<16x256xf32> to vector<16x128xf32>
    %c0_52 = arith.constant 0 : index
    %c0_53 = arith.constant 0 : index
    %c0_54 = arith.constant 0 : index
    %140 = vector.load %arg4[%c0_52, %c0_53, %c0_54] : memref<1x8x16xbf16, #tpu.memory_space<vmem>>, vector<1x8x16xbf16>
    %141 = vector.shape_cast %140 : vector<1x8x16xbf16> to vector<8x16xbf16>
    %142 = arith.extf %141 : vector<8x16xbf16> to vector<8x16xf32>
    %143 = vector.extract_strided_slice %137 {offsets = [0, 0], sizes = [8, 32], strides = [1, 1]} : vector<8x128xf32> to vector<8x32xf32>
    %144 = arith.truncf %143 : vector<8x32xf32> to vector<8x32xbf16>
    %145 = vector.extract_strided_slice %138 {offsets = [0, 0], sizes = [16, 32], strides = [1, 1]} : vector<16x128xf32> to vector<16x32xf32>
    %146 = arith.truncf %145 : vector<16x32xf32> to vector<16x32xbf16>
    %147 = vector.extract_strided_slice %139 {offsets = [0, 0], sizes = [16, 32], strides = [1, 1]} : vector<16x128xf32> to vector<16x32xf32>
    %148 = arith.truncf %147 : vector<16x32xf32> to vector<16x32xbf16>
    %cst_55 = arith.constant dense<0.000000e+00> : vector<8x16xf32>
    %149 = tpu.matmul %144, %146, %cst_55 {dimension_numbers = #tpu.dot_dimension_numbers<[1], [1], [0], [0], [0, 0, 1, 0], [], []>} : vector<8x32xbf16>, vector<16x32xbf16>, vector<8x16xf32> -> vector<8x16xf32>
    %150 = arith.addf %149, %142 : vector<8x16xf32>
    %cst_56 = arith.constant dense<0xFF800000> : vector<8xf32>
    %151 = vector.multi_reduction <maximumf>, %150, %cst_56 [1] : vector<8x16xf32> to vector<8xf32>
    %152 = vector.shape_cast %151 : vector<8xf32> to vector<8x1xf32>
    %153 = vector.broadcast %152 : vector<8x1xf32> to vector<8x16xf32>
    %154 = arith.subf %150, %153 : vector<8x16xf32>
    %155 = math.exp %154 : vector<8x16xf32>
    %cst_57 = arith.constant dense<0.000000e+00> : vector<8xf32>
    %156 = vector.multi_reduction <add>, %155, %cst_57 [1] : vector<8x16xf32> to vector<8xf32>
    %157 = vector.shape_cast %156 : vector<8xf32> to vector<8x1xf32>
    %158 = vector.broadcast %157 : vector<8x1xf32> to vector<8x16xf32>
    %159 = arith.divf %155, %158 : vector<8x16xf32>
    %160 = arith.truncf %159 : vector<8x16xf32> to vector<8x16xbf16>
    %cst_58 = arith.constant dense<0.000000e+00> : vector<8x32xf32>
    %161 = tpu.matmul %160, %148, %cst_58 {dimension_numbers = #tpu.dot_dimension_numbers<[1], [0], [0], [1], [0, 0, 1, 1], [], []>} : vector<8x16xbf16>, vector<16x32xbf16>, vector<8x32xf32> -> vector<8x32xf32>
    %162 = vector.extract_strided_slice %137 {offsets = [0, 32], sizes = [8, 32], strides = [1, 1]} : vector<8x128xf32> to vector<8x32xf32>
    %163 = arith.truncf %162 : vector<8x32xf32> to vector<8x32xbf16>
    %164 = vector.extract_strided_slice %138 {offsets = [0, 32], sizes = [16, 32], strides = [1, 1]} : vector<16x128xf32> to vector<16x32xf32>
    %165 = arith.truncf %164 : vector<16x32xf32> to vector<16x32xbf16>
    %166 = vector.extract_strided_slice %139 {offsets = [0, 32], sizes = [16, 32], strides = [1, 1]} : vector<16x128xf32> to vector<16x32xf32>
    %167 = arith.truncf %166 : vector<16x32xf32> to vector<16x32xbf16>
    %cst_59 = arith.constant dense<0.000000e+00> : vector<8x16xf32>
    %168 = tpu.matmul %163, %165, %cst_59 {dimension_numbers = #tpu.dot_dimension_numbers<[1], [1], [0], [0], [0, 0, 1, 0], [], []>} : vector<8x32xbf16>, vector<16x32xbf16>, vector<8x16xf32> -> vector<8x16xf32>
    %169 = arith.addf %168, %142 : vector<8x16xf32>
    %cst_60 = arith.constant dense<0xFF800000> : vector<8xf32>
    %170 = vector.multi_reduction <maximumf>, %169, %cst_60 [1] : vector<8x16xf32> to vector<8xf32>
    %171 = vector.shape_cast %170 : vector<8xf32> to vector<8x1xf32>
    %172 = vector.broadcast %171 : vector<8x1xf32> to vector<8x16xf32>
    %173 = arith.subf %169, %172 : vector<8x16xf32>
    %174 = math.exp %173 : vector<8x16xf32>
    %cst_61 = arith.constant dense<0.000000e+00> : vector<8xf32>
    %175 = vector.multi_reduction <add>, %174, %cst_61 [1] : vector<8x16xf32> to vector<8xf32>
    %176 = vector.shape_cast %175 : vector<8xf32> to vector<8x1xf32>
    %177 = vector.broadcast %176 : vector<8x1xf32> to vector<8x16xf32>
    %178 = arith.divf %174, %177 : vector<8x16xf32>
    %179 = arith.truncf %178 : vector<8x16xf32> to vector<8x16xbf16>
    %cst_62 = arith.constant dense<0.000000e+00> : vector<8x32xf32>
    %180 = tpu.matmul %179, %167, %cst_62 {dimension_numbers = #tpu.dot_dimension_numbers<[1], [0], [0], [1], [0, 0, 1, 1], [], []>} : vector<8x16xbf16>, vector<16x32xbf16>, vector<8x32xf32> -> vector<8x32xf32>
    %181 = vector.extract_strided_slice %137 {offsets = [0, 64], sizes = [8, 32], strides = [1, 1]} : vector<8x128xf32> to vector<8x32xf32>
    %182 = arith.truncf %181 : vector<8x32xf32> to vector<8x32xbf16>
    %183 = vector.extract_strided_slice %138 {offsets = [0, 64], sizes = [16, 32], strides = [1, 1]} : vector<16x128xf32> to vector<16x32xf32>
    %184 = arith.truncf %183 : vector<16x32xf32> to vector<16x32xbf16>
    %185 = vector.extract_strided_slice %139 {offsets = [0, 64], sizes = [16, 32], strides = [1, 1]} : vector<16x128xf32> to vector<16x32xf32>
    %186 = arith.truncf %185 : vector<16x32xf32> to vector<16x32xbf16>
    %cst_63 = arith.constant dense<0.000000e+00> : vector<8x16xf32>
    %187 = tpu.matmul %182, %184, %cst_63 {dimension_numbers = #tpu.dot_dimension_numbers<[1], [1], [0], [0], [0, 0, 1, 0], [], []>} : vector<8x32xbf16>, vector<16x32xbf16>, vector<8x16xf32> -> vector<8x16xf32>
    %188 = arith.addf %187, %142 : vector<8x16xf32>
    %cst_64 = arith.constant dense<0xFF800000> : vector<8xf32>
    %189 = vector.multi_reduction <maximumf>, %188, %cst_64 [1] : vector<8x16xf32> to vector<8xf32>
    %190 = vector.shape_cast %189 : vector<8xf32> to vector<8x1xf32>
    %191 = vector.broadcast %190 : vector<8x1xf32> to vector<8x16xf32>
    %192 = arith.subf %188, %191 : vector<8x16xf32>
    %193 = math.exp %192 : vector<8x16xf32>
    %cst_65 = arith.constant dense<0.000000e+00> : vector<8xf32>
    %194 = vector.multi_reduction <add>, %193, %cst_65 [1] : vector<8x16xf32> to vector<8xf32>
    %195 = vector.shape_cast %194 : vector<8xf32> to vector<8x1xf32>
    %196 = vector.broadcast %195 : vector<8x1xf32> to vector<8x16xf32>
    %197 = arith.divf %193, %196 : vector<8x16xf32>
    %198 = arith.truncf %197 : vector<8x16xf32> to vector<8x16xbf16>
    %cst_66 = arith.constant dense<0.000000e+00> : vector<8x32xf32>
    %199 = tpu.matmul %198, %186, %cst_66 {dimension_numbers = #tpu.dot_dimension_numbers<[1], [0], [0], [1], [0, 0, 1, 1], [], []>} : vector<8x16xbf16>, vector<16x32xbf16>, vector<8x32xf32> -> vector<8x32xf32>
    %200 = vector.extract_strided_slice %137 {offsets = [0, 96], sizes = [8, 32], strides = [1, 1]} : vector<8x128xf32> to vector<8x32xf32>
    %201 = arith.truncf %200 : vector<8x32xf32> to vector<8x32xbf16>
    %202 = vector.extract_strided_slice %138 {offsets = [0, 96], sizes = [16, 32], strides = [1, 1]} : vector<16x128xf32> to vector<16x32xf32>
    %203 = arith.truncf %202 : vector<16x32xf32> to vector<16x32xbf16>
    %204 = vector.extract_strided_slice %139 {offsets = [0, 96], sizes = [16, 32], strides = [1, 1]} : vector<16x128xf32> to vector<16x32xf32>
    %205 = arith.truncf %204 : vector<16x32xf32> to vector<16x32xbf16>
    %cst_67 = arith.constant dense<0.000000e+00> : vector<8x16xf32>
    %206 = tpu.matmul %201, %203, %cst_67 {dimension_numbers = #tpu.dot_dimension_numbers<[1], [1], [0], [0], [0, 0, 1, 0], [], []>} : vector<8x32xbf16>, vector<16x32xbf16>, vector<8x16xf32> -> vector<8x16xf32>
    %207 = arith.addf %206, %142 : vector<8x16xf32>
    %cst_68 = arith.constant dense<0xFF800000> : vector<8xf32>
    %208 = vector.multi_reduction <maximumf>, %207, %cst_68 [1] : vector<8x16xf32> to vector<8xf32>
    %209 = vector.shape_cast %208 : vector<8xf32> to vector<8x1xf32>
    %210 = vector.broadcast %209 : vector<8x1xf32> to vector<8x16xf32>
    %211 = arith.subf %207, %210 : vector<8x16xf32>
    %212 = math.exp %211 : vector<8x16xf32>
    %cst_69 = arith.constant dense<0.000000e+00> : vector<8xf32>
    %213 = vector.multi_reduction <add>, %212, %cst_69 [1] : vector<8x16xf32> to vector<8xf32>
    %214 = vector.shape_cast %213 : vector<8xf32> to vector<8x1xf32>
    %215 = vector.broadcast %214 : vector<8x1xf32> to vector<8x16xf32>
    %216 = arith.divf %212, %215 : vector<8x16xf32>
    %217 = arith.truncf %216 : vector<8x16xf32> to vector<8x16xbf16>
    %cst_70 = arith.constant dense<0.000000e+00> : vector<8x32xf32>
    %218 = tpu.matmul %217, %205, %cst_70 {dimension_numbers = #tpu.dot_dimension_numbers<[1], [0], [0], [1], [0, 0, 1, 1], [], []>} : vector<8x16xbf16>, vector<16x32xbf16>, vector<8x32xf32> -> vector<8x32xf32>
    %219 = tpu.concatenate %161, %180, %199, %218 in 1 : vector<8x32xf32>, vector<8x32xf32>, vector<8x32xf32>, vector<8x32xf32> -> vector<8x128xf32>
    %220 = arith.truncf %219 : vector<8x128xf32> to vector<8x128xbf16>
    %c0_71 = arith.constant 0 : index
    %c0_72 = arith.constant 0 : index
    %221 = vector.load %arg15[%c0_71, %c0_72] : memref<128x128xbf16, #tpu.memory_space<vmem>>, vector<128x128xbf16>
    %cst_73 = arith.constant dense<0.000000e+00> : vector<8x128xf32>
    %222 = tpu.matmul %220, %221, %cst_73 {dimension_numbers = #tpu.dot_dimension_numbers<[1], [0], [0], [1], [0, 0, 1, 1], [], []>} : vector<8x128xbf16>, vector<128x128xbf16>, vector<8x128xf32> -> vector<8x128xf32>
    %c0_74 = arith.constant 0 : index
    %c0_75 = arith.constant 0 : index
    %223 = vector.load %arg16[%c0_74, %c0_75] : memref<1x128xf32, #tpu.memory_space<vmem>>, vector<1x128xf32>
    %224 = vector.broadcast %223 : vector<1x128xf32> to vector<8x128xf32>
    %225 = arith.addf %222, %224 : vector<8x128xf32>
    %226 = arith.addf %123, %225 : vector<8x128xf32>
    %cst_76 = arith.constant dense<0.000000e+00> : vector<8xf32>
    %227 = vector.multi_reduction <add>, %226, %cst_76 [1] : vector<8x128xf32> to vector<8xf32>
    %228 = vector.shape_cast %227 : vector<8xf32> to vector<8x1xf32>
    %cst_77 = arith.constant 1.280000e+02 : f32
    %229 = vector.broadcast %cst_77 : f32 to vector<8x1xf32>
    %230 = arith.divf %228, %229 : vector<8x1xf32>
    %231 = vector.broadcast %230 : vector<8x1xf32> to vector<8x128xf32>
    %232 = arith.subf %226, %231 : vector<8x128xf32>
    %233 = vector.broadcast %230 : vector<8x1xf32> to vector<8x128xf32>
    %234 = arith.subf %226, %233 : vector<8x128xf32>
    %235 = arith.mulf %232, %234 : vector<8x128xf32>
    %cst_78 = arith.constant dense<0.000000e+00> : vector<8xf32>
    %236 = vector.multi_reduction <add>, %235, %cst_78 [1] : vector<8x128xf32> to vector<8xf32>
    %237 = vector.shape_cast %236 : vector<8xf32> to vector<8x1xf32>
    %cst_79 = arith.constant 1.280000e+02 : f32
    %238 = vector.broadcast %cst_79 : f32 to vector<8x1xf32>
    %239 = arith.divf %237, %238 : vector<8x1xf32>
    %240 = vector.broadcast %230 : vector<8x1xf32> to vector<8x128xf32>
    %241 = arith.subf %226, %240 : vector<8x128xf32>
    %cst_80 = arith.constant 9.99999974E-6 : f32
    %242 = vector.broadcast %cst_80 : f32 to vector<8x1xf32>
    %243 = arith.addf %239, %242 : vector<8x1xf32>
    %244 = math.rsqrt %243 : vector<8x1xf32>
    %245 = vector.broadcast %244 : vector<8x1xf32> to vector<8x128xf32>
    %246 = arith.mulf %241, %245 : vector<8x128xf32>
    %c0_81 = arith.constant 0 : index
    %c0_82 = arith.constant 0 : index
    %247 = vector.load %arg17[%c0_81, %c0_82] : memref<1x128xf32, #tpu.memory_space<vmem>>, vector<1x128xf32>
    %248 = vector.broadcast %247 : vector<1x128xf32> to vector<8x128xf32>
    %249 = arith.mulf %246, %248 : vector<8x128xf32>
    %c0_83 = arith.constant 0 : index
    %c0_84 = arith.constant 0 : index
    %250 = vector.load %arg18[%c0_83, %c0_84] : memref<1x128xf32, #tpu.memory_space<vmem>>, vector<1x128xf32>
    %251 = vector.broadcast %250 : vector<1x128xf32> to vector<8x128xf32>
    %252 = arith.addf %249, %251 : vector<8x128xf32>
    %253 = arith.truncf %252 : vector<8x128xf32> to vector<8x128xbf16>
    %c0_85 = arith.constant 0 : index
    %c0_86 = arith.constant 0 : index
    %254 = vector.load %arg19[%c0_85, %c0_86] : memref<128x256xbf16, #tpu.memory_space<vmem>>, vector<128x256xbf16>
    %cst_87 = arith.constant dense<0.000000e+00> : vector<8x256xf32>
    %255 = tpu.matmul %253, %254, %cst_87 {dimension_numbers = #tpu.dot_dimension_numbers<[1], [0], [0], [1], [0, 0, 1, 1], [], []>} : vector<8x128xbf16>, vector<128x256xbf16>, vector<8x256xf32> -> vector<8x256xf32>
    %c0_88 = arith.constant 0 : index
    %c0_89 = arith.constant 0 : index
    %256 = vector.load %arg20[%c0_88, %c0_89] : memref<1x256xf32, #tpu.memory_space<vmem>>, vector<1x256xf32>
    %257 = vector.broadcast %256 : vector<1x256xf32> to vector<8x256xf32>
    %258 = arith.addf %255, %257 : vector<8x256xf32>
    %cst_90 = arith.constant 0.000000e+00 : f32
    %259 = vector.broadcast %cst_90 : f32 to vector<8x256xf32>
    %260 = arith.maximumf %258, %259 : vector<8x256xf32>
    %261 = arith.truncf %260 : vector<8x256xf32> to vector<8x256xbf16>
    %c0_91 = arith.constant 0 : index
    %c0_92 = arith.constant 0 : index
    %262 = vector.load %arg21[%c0_91, %c0_92] : memref<256x128xbf16, #tpu.memory_space<vmem>>, vector<256x128xbf16>
    %cst_93 = arith.constant dense<0.000000e+00> : vector<8x128xf32>
    %263 = tpu.matmul %261, %262, %cst_93 {dimension_numbers = #tpu.dot_dimension_numbers<[1], [0], [0], [1], [0, 0, 1, 1], [], []>} : vector<8x256xbf16>, vector<256x128xbf16>, vector<8x128xf32> -> vector<8x128xf32>
    %c0_94 = arith.constant 0 : index
    %c0_95 = arith.constant 0 : index
    %264 = vector.load %arg22[%c0_94, %c0_95] : memref<1x128xf32, #tpu.memory_space<vmem>>, vector<1x128xf32>
    %265 = vector.broadcast %264 : vector<1x128xf32> to vector<8x128xf32>
    %266 = arith.addf %263, %265 : vector<8x128xf32>
    %267 = arith.addf %252, %266 : vector<8x128xf32>
    %cst_96 = arith.constant dense<0.000000e+00> : vector<8xf32>
    %268 = vector.multi_reduction <add>, %267, %cst_96 [1] : vector<8x128xf32> to vector<8xf32>
    %269 = vector.shape_cast %268 : vector<8xf32> to vector<8x1xf32>
    %cst_97 = arith.constant 1.280000e+02 : f32
    %270 = vector.broadcast %cst_97 : f32 to vector<8x1xf32>
    %271 = arith.divf %269, %270 : vector<8x1xf32>
    %272 = vector.broadcast %271 : vector<8x1xf32> to vector<8x128xf32>
    %273 = arith.subf %267, %272 : vector<8x128xf32>
    %274 = vector.broadcast %271 : vector<8x1xf32> to vector<8x128xf32>
    %275 = arith.subf %267, %274 : vector<8x128xf32>
    %276 = arith.mulf %273, %275 : vector<8x128xf32>
    %cst_98 = arith.constant dense<0.000000e+00> : vector<8xf32>
    %277 = vector.multi_reduction <add>, %276, %cst_98 [1] : vector<8x128xf32> to vector<8xf32>
    %278 = vector.shape_cast %277 : vector<8xf32> to vector<8x1xf32>
    %cst_99 = arith.constant 1.280000e+02 : f32
    %279 = vector.broadcast %cst_99 : f32 to vector<8x1xf32>
    %280 = arith.divf %278, %279 : vector<8x1xf32>
    %281 = vector.broadcast %271 : vector<8x1xf32> to vector<8x128xf32>
    %282 = arith.subf %267, %281 : vector<8x128xf32>
    %cst_100 = arith.constant 9.99999974E-6 : f32
    %283 = vector.broadcast %cst_100 : f32 to vector<8x1xf32>
    %284 = arith.addf %280, %283 : vector<8x1xf32>
    %285 = math.rsqrt %284 : vector<8x1xf32>
    %286 = vector.broadcast %285 : vector<8x1xf32> to vector<8x128xf32>
    %287 = arith.mulf %282, %286 : vector<8x128xf32>
    %c0_101 = arith.constant 0 : index
    %c0_102 = arith.constant 0 : index
    %288 = vector.load %arg23[%c0_101, %c0_102] : memref<1x128xf32, #tpu.memory_space<vmem>>, vector<1x128xf32>
    %289 = vector.broadcast %288 : vector<1x128xf32> to vector<8x128xf32>
    %290 = arith.mulf %287, %289 : vector<8x128xf32>
    %c0_103 = arith.constant 0 : index
    %c0_104 = arith.constant 0 : index
    %291 = vector.load %arg24[%c0_103, %c0_104] : memref<1x128xf32, #tpu.memory_space<vmem>>, vector<1x128xf32>
    %292 = vector.broadcast %291 : vector<1x128xf32> to vector<8x128xf32>
    %293 = arith.addf %290, %292 : vector<8x128xf32>
    %294 = vector.shape_cast %293 : vector<8x128xf32> to vector<1x8x128xf32>
    %c0_105 = arith.constant 0 : index
    %c0_106 = arith.constant 0 : index
    %c0_107 = arith.constant 0 : index
    %295 = vector.load %arg25[%c0_105, %c0_106, %c0_107] : memref<1x8x128xf32, #tpu.memory_space<vmem>>, vector<1x8x128xf32>
    tpu.vector_store %arg25[%c0_105, %c0_106, %c0_107], %294 {strides = array<i32>} : memref<1x8x128xf32, #tpu.memory_space<vmem>>, vector<1x8x128xf32>,
    return
  }
  func.func @transform_0(%arg0: i32) -> (i32, i32, i32) {
    %c0_i32 = arith.constant 0 : i32
    %c0_i32_0 = arith.constant 0 : i32
    %c0_i32_1 = arith.constant 0 : i32
    return %arg0, %c0_i32, %c0_i32_0 : i32, i32, i32
  }
  func.func @transform_1(%arg0: i32) -> (i32, i32, i32) {
    %c0_i32 = arith.constant 0 : i32
    %c0_i32_0 = arith.constant 0 : i32
    %c0_i32_1 = arith.constant 0 : i32
    return %arg0, %c0_i32, %c0_i32_0 : i32, i32, i32
  }
  func.func @transform_2(%arg0: i32) -> (i32, i32, i32) {
    %c0_i32 = arith.constant 0 : i32
    %c0_i32_0 = arith.constant 0 : i32
    %c0_i32_1 = arith.constant 0 : i32
    return %arg0, %c0_i32, %c0_i32_0 : i32, i32, i32
  }
  func.func @transform_3(%arg0: i32) -> (i32, i32, i32) {
    %c0_i32 = arith.constant 0 : i32
    %c0_i32_0 = arith.constant 0 : i32
    %c0_i32_1 = arith.constant 0 : i32
    return %arg0, %c0_i32, %c0_i32_0 : i32, i32, i32
  }
  func.func @transform_4(%arg0: i32) -> (i32, i32) {
    %c0_i32 = arith.constant 0 : i32
    %c0_i32_0 = arith.constant 0 : i32
    %c0_i32_1 = arith.constant 0 : i32
    return %c0_i32, %c0_i32_0 : i32, i32
  }
  func.func @transform_5(%arg0: i32) -> (i32, i32) {
    %c0_i32 = arith.constant 0 : i32
    %c0_i32_0 = arith.constant 0 : i32
    %c0_i32_1 = arith.constant 0 : i32
    return %c0_i32, %c0_i32_0 : i32, i32
  }
  func.func @transform_6(%arg0: i32) -> (i32, i32) {
    %c0_i32 = arith.constant 0 : i32
    %c0_i32_0 = arith.constant 0 : i32
    %c0_i32_1 = arith.constant 0 : i32
    return %c0_i32, %c0_i32_0 : i32, i32
  }
  func.func @transform_7(%arg0: i32) -> (i32, i32) {
    %c0_i32 = arith.constant 0 : i32
    %c0_i32_0 = arith.constant 0 : i32
    %c0_i32_1 = arith.constant 0 : i32
    return %c0_i32, %c0_i32_0 : i32, i32
  }
  func.func @transform_8(%arg0: i32) -> (i32, i32) {
    %c0_i32 = arith.constant 0 : i32
    %c0_i32_0 = arith.constant 0 : i32
    %c0_i32_1 = arith.constant 0 : i32
    return %c0_i32, %c0_i32_0 : i32, i32
  }
  func.func @transform_9(%arg0: i32) -> (i32, i32) {
    %c0_i32 = arith.constant 0 : i32
    %c0_i32_0 = arith.constant 0 : i32
    %c0_i32_1 = arith.constant 0 : i32
    return %c0_i32, %c0_i32_0 : i32, i32
  }
  func.func @transform_10(%arg0: i32) -> (i32, i32) {
    %c0_i32 = arith.constant 0 : i32
    %c0_i32_0 = arith.constant 0 : i32
    %c0_i32_1 = arith.constant 0 : i32
    return %c0_i32, %c0_i32_0 : i32, i32
  }
  func.func @transform_11(%arg0: i32) -> (i32, i32) {
    %c0_i32 = arith.constant 0 : i32
    %c0_i32_0 = arith.constant 0 : i32
    %c0_i32_1 = arith.constant 0 : i32
    return %c0_i32, %c0_i32_0 : i32, i32
  }
  func.func @transform_12(%arg0: i32) -> (i32, i32) {
    %c0_i32 = arith.constant 0 : i32
    %c0_i32_0 = arith.constant 0 : i32
    %c0_i32_1 = arith.constant 0 : i32
    return %c0_i32, %c0_i32_0 : i32, i32
  }
  func.func @transform_13(%arg0: i32) -> (i32, i32) {
    %c0_i32 = arith.constant 0 : i32
    %c0_i32_0 = arith.constant 0 : i32
    %c0_i32_1 = arith.constant 0 : i32
    return %c0_i32, %c0_i32_0 : i32, i32
  }
  func.func @transform_14(%arg0: i32) -> (i32, i32) {
    %c0_i32 = arith.constant 0 : i32
    %c0_i32_0 = arith.constant 0 : i32
    %c0_i32_1 = arith.constant 0 : i32
    return %c0_i32, %c0_i32_0 : i32, i32
  }
  func.func @transform_15(%arg0: i32) -> (i32, i32) {
    %c0_i32 = arith.constant 0 : i32
    %c0_i32_0 = arith.constant 0 : i32
    %c0_i32_1 = arith.constant 0 : i32
    return %c0_i32, %c0_i32_0 : i32, i32
  }
  func.func @transform_16(%arg0: i32) -> (i32, i32) {
    %c0_i32 = arith.constant 0 : i32
    %c0_i32_0 = arith.constant 0 : i32
    %c0_i32_1 = arith.constant 0 : i32
    return %c0_i32, %c0_i32_0 : i32, i32
  }
  func.func @transform_17(%arg0: i32) -> (i32, i32) {
    %c0_i32 = arith.constant 0 : i32
    %c0_i32_0 = arith.constant 0 : i32
    %c0_i32_1 = arith.constant 0 : i32
    return %c0_i32, %c0_i32_0 : i32, i32
  }
  func.func @transform_18(%arg0: i32) -> (i32, i32) {
    %c0_i32 = arith.constant 0 : i32
    %c0_i32_0 = arith.constant 0 : i32
    %c0_i32_1 = arith.constant 0 : i32
    return %c0_i32, %c0_i32_0 : i32, i32
  }
  func.func @transform_19(%arg0: i32) -> (i32, i32) {
    %c0_i32 = arith.constant 0 : i32
    %c0_i32_0 = arith.constant 0 : i32
    %c0_i32_1 = arith.constant 0 : i32
    return %c0_i32, %c0_i32_0 : i32, i32
  }
  func.func @transform_20(%arg0: i32) -> (i32, i32) {
    %c0_i32 = arith.constant 0 : i32
    %c0_i32_0 = arith.constant 0 : i32
    %c0_i32_1 = arith.constant 0 : i32
    return %c0_i32, %c0_i32_0 : i32, i32
  }
  func.func @transform_21(%arg0: i32) -> (i32, i32) {
    %c0_i32 = arith.constant 0 : i32
    %c0_i32_0 = arith.constant 0 : i32
    %c0_i32_1 = arith.constant 0 : i32
    return %c0_i32, %c0_i32_0 : i32, i32
  }
  func.func @transform_22(%arg0: i32) -> (i32, i32) {
    %c0_i32 = arith.constant 0 : i32
    %c0_i32_0 = arith.constant 0 : i32
    %c0_i32_1 = arith.constant 0 : i32
    return %c0_i32, %c0_i32_0 : i32, i32
  }
  func.func @transform_23(%arg0: i32) -> (i32, i32) {
    %c0_i32 = arith.constant 0 : i32
    %c0_i32_0 = arith.constant 0 : i32
    %c0_i32_1 = arith.constant 0 : i32
    return %c0_i32, %c0_i32_0 : i32, i32
  }
  func.func @transform_24(%arg0: i32) -> (i32, i32, i32) {
    %c0_i32 = arith.constant 0 : i32
    %c0_i32_0 = arith.constant 0 : i32
    %c0_i32_1 = arith.constant 0 : i32
    return %arg0, %c0_i32, %c0_i32_0 : i32, i32, i32
  }
}

module attributes {stable_mosaic.version = 11 : i64} {
  func.func @_decoder_layer_kernel(%arg0: i32, %arg1: memref<1x8x128xf32, #tpu.memory_space<vmem>>, %arg2: memref<1x16x128xf32, #tpu.memory_space<vmem>>, %arg3: memref<1x8x8xbf16, #tpu.memory_space<vmem>>, %arg4: memref<1x8x16xbf16, #tpu.memory_space<vmem>>, %arg5: memref<128x384xbf16, #tpu.memory_space<vmem>>, %arg6: memref<1x384xf32, #tpu.memory_space<vmem>>, %arg7: memref<128x128xbf16, #tpu.memory_space<vmem>>, %arg8: memref<1x128xf32, #tpu.memory_space<vmem>>, %arg9: memref<1x128xf32, #tpu.memory_space<vmem>>, %arg10: memref<1x128xf32, #tpu.memory_space<vmem>>, %arg11: memref<128x128xbf16, #tpu.memory_space<vmem>>, %arg12: memref<1x128xf32, #tpu.memory_space<vmem>>, %arg13: memref<128x256xbf16, #tpu.memory_space<vmem>>, %arg14: memref<1x256xf32, #tpu.memory_space<vmem>>, %arg15: memref<128x128xbf16, #tpu.memory_space<vmem>>, %arg16: memref<1x128xf32, #tpu.memory_space<vmem>>, %arg17: memref<1x128xf32, #tpu.memory_space<vmem>>, %arg18: memref<1x128xf32, #tpu.memory_space<vmem>>, %arg19: memref<128x256xbf16, #tpu.memory_space<vmem>>, %arg20: memref<1x256xf32, #tpu.memory_space<vmem>>, %arg21: memref<256x128xbf16, #tpu.memory_space<vmem>>, %arg22: memref<1x128xf32, #tpu.memory_space<vmem>>, %arg23: memref<1x128xf32, #tpu.memory_space<vmem>>, %arg24: memref<1x128xf32, #tpu.memory_space<vmem>>, %arg25: memref<1x8x128xf32, #tpu.memory_space<vmem>>) attributes {dimension_semantics = [#tpu.dimension_semantics<parallel>], iteration_bounds = array<i64: 2>, scalar_prefetch = 0 : i64, scratch_operands = 0 : i64, tpu.core_type = #tpu.core_type<tc>, window_params = [{transform_indices = @transform_0, window_bounds = array<i64: 1, 8, 128>}, {transform_indices = @transform_1, window_bounds = array<i64: 1, 16, 128>}, {transform_indices = @transform_2, window_bounds = array<i64: 1, 8, 8>}, {transform_indices = @transform_3, window_bounds = array<i64: 1, 8, 16>}, {pipeline_mode = #tpu.pipeline_mode<synchronous>, transform_indices = @transform_4, window_bounds = array<i64: 128, 384>}, {pipeline_mode = #tpu.pipeline_mode<synchronous>, transform_indices = @transform_5, window_bounds = array<i64: 1, 384>}, {pipeline_mode = #tpu.pipeline_mode<synchronous>, transform_indices = @transform_6, window_bounds = array<i64: 128, 128>}, {pipeline_mode = #tpu.pipeline_mode<synchronous>, transform_indices = @transform_7, window_bounds = array<i64: 1, 128>}, {pipeline_mode = #tpu.pipeline_mode<synchronous>, transform_indices = @transform_8, window_bounds = array<i64: 1, 128>}, {pipeline_mode = #tpu.pipeline_mode<synchronous>, transform_indices = @transform_9, window_bounds = array<i64: 1, 128>}, {pipeline_mode = #tpu.pipeline_mode<synchronous>, transform_indices = @transform_10, window_bounds = array<i64: 128, 128>}, {pipeline_mode = #tpu.pipeline_mode<synchronous>, transform_indices = @transform_11, window_bounds = array<i64: 1, 128>}, {pipeline_mode = #tpu.pipeline_mode<synchronous>, transform_indices = @transform_12, window_bounds = array<i64: 128, 256>}, {pipeline_mode = #tpu.pipeline_mode<synchronous>, transform_indices = @transform_13, window_bounds = array<i64: 1, 256>}, {pipeline_mode = #tpu.pipeline_mode<synchronous>, transform_indices = @transform_14, window_bounds = array<i64: 128, 128>}, {pipeline_mode = #tpu.pipeline_mode<synchronous>, transform_indices = @transform_15, window_bounds = array<i64: 1, 128>}, {pipeline_mode = #tpu.pipeline_mode<synchronous>, transform_indices = @transform_16, window_bounds = array<i64: 1, 128>}, {pipeline_mode = #tpu.pipeline_mode<synchronous>, transform_indices = @transform_17, window_bounds = array<i64: 1, 128>}, {pipeline_mode = #tpu.pipeline_mode<synchronous>, transform_indices = @transform_18, window_bounds = array<i64: 128, 256>}, {pipeline_mode = #tpu.pipeline_mode<synchronous>, transform_indices = @transform_19, window_bounds = array<i64: 1, 256>}, {pipeline_mode = #tpu.pipeline_mode<synchronous>, transform_indices = @transform_20, window_bounds = array<i64: 256, 128>}, {pipeline_mode = #tpu.pipeline_mode<synchronous>, transform_indices = @transform_21, window_bounds = array<i64: 1, 128>}, {pipeline_mode = #tpu.pipeline_mode<synchronous>, transform_indices = @transform_22, window_bounds = array<i64: 1, 128>}, {pipeline_mode = #tpu.pipeline_mode<synchronous>, transform_indices = @transform_23, window_bounds = array<i64: 1, 128>}, {transform_indices = @transform_24, window_bounds = array<i64: 1, 8, 128>}]} {
    %c0 = arith.constant 0 : index
    %c0_0 = arith.constant 0 : index
    %c0_1 = arith.constant 0 : index
    %0 = vector.load %arg1[%c0, %c0_0, %c0_1] : memref<1x8x128xf32, #tpu.memory_space<vmem>>, vector<1x8x128xf32>
    %1 = vector.shape_cast %0 : vector<1x8x128xf32> to vector<8x128xf32>
    %2 = arith.truncf %1 : vector<8x128xf32> to vector<8x128xbf16>
    %c0_2 = arith.constant 0 : index
    %c0_3 = arith.constant 0 : index
    %3 = vector.load %arg5[%c0_2, %c0_3] : memref<128x384xbf16, #tpu.memory_space<vmem>>, vector<128x384xbf16>
    %cst = arith.constant dense<0.000000e+00> : vector<8x384xf32>
    %4 = tpu.matmul %2, %3, %cst {dimension_numbers = #tpu.dot_dimension_numbers<[1], [0], [0], [1], [0, 0, 1, 1], [], []>} : vector<8x128xbf16>, vector<128x384xbf16>, vector<8x384xf32> -> vector<8x384xf32>
    %c0_4 = arith.constant 0 : index
    %c0_5 = arith.constant 0 : index
    %5 = vector.load %arg6[%c0_4, %c0_5] : memref<1x384xf32, #tpu.memory_space<vmem>>, vector<1x384xf32>
    %6 = vector.broadcast %5 : vector<1x384xf32> to vector<8x384xf32>
    %7 = arith.addf %4, %6 : vector<8x384xf32>
    %8 = vector.extract_strided_slice %7 {offsets = [0, 0], sizes = [8, 128], strides = [1, 1]} : vector<8x384xf32> to vector<8x128xf32>
    %9 = vector.extract_strided_slice %7 {offsets = [0, 128], sizes = [8, 128], strides = [1, 1]} : vector<8x384xf32> to vector<8x128xf32>
    %10 = vector.extract_strided_slice %7 {offsets = [0, 256], sizes = [8, 128], strides = [1, 1]} : vector<8x384xf32> to vector<8x128xf32>
    %c0_6 = arith.constant 0 : index
    %c0_7 = arith.constant 0 : index
    %c0_8 = arith.constant 0 : index
    %11 = vector.load %arg3[%c0_6, %c0_7, %c0_8] : memref<1x8x8xbf16, #tpu.memory_space<vmem>>, vector<1x8x8xbf16>
    %12 = vector.shape_cast %11 : vector<1x8x8xbf16> to vector<8x8xbf16>
    %13 = arith.extf %12 : vector<8x8xbf16> to vector<8x8xf32>
    %14 = vector.extract_strided_slice %8 {offsets = [0, 0], sizes = [8, 32], strides = [1, 1]} : vector<8x128xf32> to vector<8x32xf32>
    %15 = arith.truncf %14 : vector<8x32xf32> to vector<8x32xbf16>
    %16 = vector.extract_strided_slice %9 {offsets = [0, 0], sizes = [8, 32], strides = [1, 1]} : vector<8x128xf32> to vector<8x32xf32>
    %17 = arith.truncf %16 : vector<8x32xf32> to vector<8x32xbf16>
    %18 = vector.extract_strided_slice %10 {offsets = [0, 0], sizes = [8, 32], strides = [1, 1]} : vector<8x128xf32> to vector<8x32xf32>
    %19 = arith.truncf %18 : vector<8x32xf32> to vector<8x32xbf16>
    %cst_9 = arith.constant dense<0.000000e+00> : vector<8x8xf32>
    %20 = tpu.matmul %15, %17, %cst_9 {dimension_numbers = #tpu.dot_dimension_numbers<[1], [1], [0], [0], [0, 0, 1, 0], [], []>} : vector<8x32xbf16>, vector<8x32xbf16>, vector<8x8xf32> -> vector<8x8xf32>
    %21 = arith.addf %20, %13 : vector<8x8xf32>
    %cst_10 = arith.constant dense<0xFF800000> : vector<8xf32>
    %22 = vector.multi_reduction <maximumf>, %21, %cst_10 [1] : vector<8x8xf32> to vector<8xf32>
    %23 = vector.shape_cast %22 : vector<8xf32> to vector<8x1xf32>
    %24 = vector.broadcast %23 : vector<8x1xf32> to vector<8x8xf32>
    %25 = arith.subf %21, %24 : vector<8x8xf32>
    %26 = math.exp %25 : vector<8x8xf32>
    %cst_11 = arith.constant dense<0.000000e+00> : vector<8xf32>
    %27 = vector.multi_reduction <add>, %26, %cst_11 [1] : vector<8x8xf32> to vector<8xf32>
    %28 = vector.shape_cast %27 : vector<8xf32> to vector<8x1xf32>
    %29 = vector.broadcast %28 : vector<8x1xf32> to vector<8x8xf32>
    %30 = arith.divf %26, %29 : vector<8x8xf32>
    %31 = arith.truncf %30 : vector<8x8xf32> to vector<8x8xbf16>
    %cst_12 = arith.constant dense<0.000000e+00> : vector<8x32xf32>
    %32 = tpu.matmul %31, %19, %cst_12 {dimension_numbers = #tpu.dot_dimension_numbers<[1], [0], [0], [1], [0, 0, 1, 1], [], []>} : vector<8x8xbf16>, vector<8x32xbf16>, vector<8x32xf32> -> vector<8x32xf32>
    %33 = vector.extract_strided_slice %8 {offsets = [0, 32], sizes = [8, 32], strides = [1, 1]} : vector<8x128xf32> to vector<8x32xf32>
    %34 = arith.truncf %33 : vector<8x32xf32> to vector<8x32xbf16>
    %35 = vector.extract_strided_slice %9 {offsets = [0, 32], sizes = [8, 32], strides = [1, 1]} : vector<8x128xf32> to vector<8x32xf32>
    %36 = arith.truncf %35 : vector<8x32xf32> to vector<8x32xbf16>
    %37 = vector.extract_strided_slice %10 {offsets = [0, 32], sizes = [8, 32], strides = [1, 1]} : vector<8x128xf32> to vector<8x32xf32>
    %38 = arith.truncf %37 : vector<8x32xf32> to vector<8x32xbf16>
    %cst_13 = arith.constant dense<0.000000e+00> : vector<8x8xf32>
    %39 = tpu.matmul %34, %36, %cst_13 {dimension_numbers = #tpu.dot_dimension_numbers<[1], [1], [0], [0], [0, 0, 1, 0], [], []>} : vector<8x32xbf16>, vector<8x32xbf16>, vector<8x8xf32> -> vector<8x8xf32>
    %40 = arith.addf %39, %13 : vector<8x8xf32>
    %cst_14 = arith.constant dense<0xFF800000> : vector<8xf32>
    %41 = vector.multi_reduction <maximumf>, %40, %cst_14 [1] : vector<8x8xf32> to vector<8xf32>
    %42 = vector.shape_cast %41 : vector<8xf32> to vector<8x1xf32>
    %43 = vector.broadcast %42 : vector<8x1xf32> to vector<8x8xf32>
    %44 = arith.subf %40, %43 : vector<8x8xf32>
    %45 = math.exp %44 : vector<8x8xf32>
    %cst_15 = arith.constant dense<0.000000e+00> : vector<8xf32>
    %46 = vector.multi_reduction <add>, %45, %cst_15 [1] : vector<8x8xf32> to vector<8xf32>
    %47 = vector.shape_cast %46 : vector<8xf32> to vector<8x1xf32>
    %48 = vector.broadcast %47 : vector<8x1xf32> to vector<8x8xf32>
    %49 = arith.divf %45, %48 : vector<8x8xf32>
    %50 = arith.truncf %49 : vector<8x8xf32> to vector<8x8xbf16>
    %cst_16 = arith.constant dense<0.000000e+00> : vector<8x32xf32>
    %51 = tpu.matmul %50, %38, %cst_16 {dimension_numbers = #tpu.dot_dimension_numbers<[1], [0], [0], [1], [0, 0, 1, 1], [], []>} : vector<8x8xbf16>, vector<8x32xbf16>, vector<8x32xf32> -> vector<8x32xf32>
    %52 = vector.extract_strided_slice %8 {offsets = [0, 64], sizes = [8, 32], strides = [1, 1]} : vector<8x128xf32> to vector<8x32xf32>
    %53 = arith.truncf %52 : vector<8x32xf32> to vector<8x32xbf16>
    %54 = vector.extract_strided_slice %9 {offsets = [0, 64], sizes = [8, 32], strides = [1, 1]} : vector<8x128xf32> to vector<8x32xf32>
    %55 = arith.truncf %54 : vector<8x32xf32> to vector<8x32xbf16>
    %56 = vector.extract_strided_slice %10 {offsets = [0, 64], sizes = [8, 32], strides = [1, 1]} : vector<8x128xf32> to vector<8x32xf32>
    %57 = arith.truncf %56 : vector<8x32xf32> to vector<8x32xbf16>
    %cst_17 = arith.constant dense<0.000000e+00> : vector<8x8xf32>
    %58 = tpu.matmul %53, %55, %cst_17 {dimension_numbers = #tpu.dot_dimension_numbers<[1], [1], [0], [0], [0, 0, 1, 0], [], []>} : vector<8x32xbf16>, vector<8x32xbf16>, vector<8x8xf32> -> vector<8x8xf32>
    %59 = arith.addf %58, %13 : vector<8x8xf32>
    %cst_18 = arith.constant dense<0xFF800000> : vector<8xf32>
    %60 = vector.multi_reduction <maximumf>, %59, %cst_18 [1] : vector<8x8xf32> to vector<8xf32>
    %61 = vector.shape_cast %60 : vector<8xf32> to vector<8x1xf32>
    %62 = vector.broadcast %61 : vector<8x1xf32> to vector<8x8xf32>
    %63 = arith.subf %59, %62 : vector<8x8xf32>
    %64 = math.exp %63 : vector<8x8xf32>
    %cst_19 = arith.constant dense<0.000000e+00> : vector<8xf32>
    %65 = vector.multi_reduction <add>, %64, %cst_19 [1] : vector<8x8xf32> to vector<8xf32>
    %66 = vector.shape_cast %65 : vector<8xf32> to vector<8x1xf32>
    %67 = vector.broadcast %66 : vector<8x1xf32> to vector<8x8xf32>
    %68 = arith.divf %64, %67 : vector<8x8xf32>
    %69 = arith.truncf %68 : vector<8x8xf32> to vector<8x8xbf16>
    %cst_20 = arith.constant dense<0.000000e+00> : vector<8x32xf32>
    %70 = tpu.matmul %69, %57, %cst_20 {dimension_numbers = #tpu.dot_dimension_numbers<[1], [0], [0], [1], [0, 0, 1, 1], [], []>} : vector<8x8xbf16>, vector<8x32xbf16>, vector<8x32xf32> -> vector<8x32xf32>
    %71 = vector.extract_strided_slice %8 {offsets = [0, 96], sizes = [8, 32], strides = [1, 1]} : vector<8x128xf32> to vector<8x32xf32>
    %72 = arith.truncf %71 : vector<8x32xf32> to vector<8x32xbf16>
    %73 = vector.extract_strided_slice %9 {offsets = [0, 96], sizes = [8, 32], strides = [1, 1]} : vector<8x128xf32> to vector<8x32xf32>
    %74 = arith.truncf %73 : vector<8x32xf32> to vector<8x32xbf16>
    %75 = vector.extract_strided_slice %10 {offsets = [0, 96], sizes = [8, 32], strides = [1, 1]} : vector<8x128xf32> to vector<8x32xf32>
    %76 = arith.truncf %75 : vector<8x32xf32> to vector<8x32xbf16>
    %cst_21 = arith.constant dense<0.000000e+00> : vector<8x8xf32>
    %77 = tpu.matmul %72, %74, %cst_21 {dimension_numbers = #tpu.dot_dimension_numbers<[1], [1], [0], [0], [0, 0, 1, 0], [], []>} : vector<8x32xbf16>, vector<8x32xbf16>, vector<8x8xf32> -> vector<8x8xf32>
    %78 = arith.addf %77, %13 : vector<8x8xf32>
    %cst_22 = arith.constant dense<0xFF800000> : vector<8xf32>
    %79 = vector.multi_reduction <maximumf>, %78, %cst_22 [1] : vector<8x8xf32> to vector<8xf32>
    %80 = vector.shape_cast %79 : vector<8xf32> to vector<8x1xf32>
    %81 = vector.broadcast %80 : vector<8x1xf32> to vector<8x8xf32>
    %82 = arith.subf %78, %81 : vector<8x8xf32>
    %83 = math.exp %82 : vector<8x8xf32>
    %cst_23 = arith.constant dense<0.000000e+00> : vector<8xf32>
    %84 = vector.multi_reduction <add>, %83, %cst_23 [1] : vector<8x8xf32> to vector<8xf32>
    %85 = vector.shape_cast %84 : vector<8xf32> to vector<8x1xf32>
    %86 = vector.broadcast %85 : vector<8x1xf32> to vector<8x8xf32>
    %87 = arith.divf %83, %86 : vector<8x8xf32>
    %88 = arith.truncf %87 : vector<8x8xf32> to vector<8x8xbf16>
    %cst_24 = arith.constant dense<0.000000e+00> : vector<8x32xf32>
    %89 = tpu.matmul %88, %76, %cst_24 {dimension_numbers = #tpu.dot_dimension_numbers<[1], [0], [0], [1], [0, 0, 1, 1], [], []>} : vector<8x8xbf16>, vector<8x32xbf16>, vector<8x32xf32> -> vector<8x32xf32>
    %90 = tpu.concatenate %32, %51, %70, %89 in 1 : vector<8x32xf32>, vector<8x32xf32>, vector<8x32xf32>, vector<8x32xf32> -> vector<8x128xf32>
    %91 = arith.truncf %90 : vector<8x128xf32> to vector<8x128xbf16>
    %c0_25 = arith.constant 0 : index
    %c0_26 = arith.constant 0 : index
    %92 = vector.load %arg7[%c0_25, %c0_26] : memref<128x128xbf16, #tpu.memory_space<vmem>>, vector<128x128xbf16>
    %cst_27 = arith.constant dense<0.000000e+00> : vector<8x128xf32>
    %93 = tpu.matmul %91, %92, %cst_27 {dimension_numbers = #tpu.dot_dimension_numbers<[1], [0], [0], [1], [0, 0, 1, 1], [], []>} : vector<8x128xbf16>, vector<128x128xbf16>, vector<8x128xf32> -> vector<8x128xf32>
    %c0_28 = arith.constant 0 : index
    %c0_29 = arith.constant 0 : index
    %94 = vector.load %arg8[%c0_28, %c0_29] : memref<1x128xf32, #tpu.memory_space<vmem>>, vector<1x128xf32>
    %95 = vector.broadcast %94 : vector<1x128xf32> to vector<8x128xf32>
    %96 = arith.addf %93, %95 : vector<8x128xf32>
    %97 = arith.addf %1, %96 : vector<8x128xf32>
    %cst_30 = arith.constant dense<0.000000e+00> : vector<8xf32>
    %98 = vector.multi_reduction <add>, %97, %cst_30 [1] : vector<8x128xf32> to vector<8xf32>
    %99 = vector.shape_cast %98 : vector<8xf32> to vector<8x1xf32>
    %cst_31 = arith.constant 1.280000e+02 : f32
    %100 = vector.broadcast %cst_31 : f32 to vector<8x1xf32>
    %101 = arith.divf %99, %100 : vector<8x1xf32>
    %102 = vector.broadcast %101 : vector<8x1xf32> to vector<8x128xf32>
    %103 = arith.subf %97, %102 : vector<8x128xf32>
    %104 = vector.broadcast %101 : vector<8x1xf32> to vector<8x128xf32>
    %105 = arith.subf %97, %104 : vector<8x128xf32>
    %106 = arith.mulf %103, %105 : vector<8x128xf32>
    %cst_32 = arith.constant dense<0.000000e+00> : vector<8xf32>
    %107 = vector.multi_reduction <add>, %106, %cst_32 [1] : vector<8x128xf32> to vector<8xf32>
    %108 = vector.shape_cast %107 : vector<8xf32> to vector<8x1xf32>
    %cst_33 = arith.constant 1.280000e+02 : f32
    %109 = vector.broadcast %cst_33 : f32 to vector<8x1xf32>
    %110 = arith.divf %108, %109 : vector<8x1xf32>
    %111 = vector.broadcast %101 : vector<8x1xf32> to vector<8x128xf32>
    %112 = arith.subf %97, %111 : vector<8x128xf32>
    %cst_34 = arith.constant 9.99999974E-6 : f32
    %113 = vector.broadcast %cst_34 : f32 to vector<8x1xf32>
    %114 = arith.addf %110, %113 : vector<8x1xf32>
    %115 = math.rsqrt %114 : vector<8x1xf32>
    %116 = vector.broadcast %115 : vector<8x1xf32> to vector<8x128xf32>
    %117 = arith.mulf %112, %116 : vector<8x128xf32>
    %c0_35 = arith.constant 0 : index
    %c0_36 = arith.constant 0 : index
    %118 = vector.load %arg9[%c0_35, %c0_36] : memref<1x128xf32, #tpu.memory_space<vmem>>, vector<1x128xf32>
    %119 = vector.broadcast %118 : vector<1x128xf32> to vector<8x128xf32>
    %120 = arith.mulf %117, %119 : vector<8x128xf32>
    %c0_37 = arith.constant 0 : index
    %c0_38 = arith.constant 0 : index
    %121 = vector.load %arg10[%c0_37, %c0_38] : memref<1x128xf32, #tpu.memory_space<vmem>>, vector<1x128xf32>
    %122 = vector.broadcast %121 : vector<1x128xf32> to vector<8x128xf32>
    %123 = arith.addf %120, %122 : vector<8x128xf32>
    %c0_39 = arith.constant 0 : index
    %c0_40 = arith.constant 0 : index
    %c0_41 = arith.constant 0 : index
    %124 = vector.load %arg2[%c0_39, %c0_40, %c0_41] : memref<1x16x128xf32, #tpu.memory_space<vmem>>, vector<1x16x128xf32>
    %125 = vector.shape_cast %124 : vector<1x16x128xf32> to vector<16x128xf32>
    %126 = arith.truncf %125 : vector<16x128xf32> to vector<16x128xbf16>
    %c0_42 = arith.constant 0 : index
    %c0_43 = arith.constant 0 : index
    %127 = vector.load %arg13[%c0_42, %c0_43] : memref<128x256xbf16, #tpu.memory_space<vmem>>, vector<128x256xbf16>
    %cst_44 = arith.constant dense<0.000000e+00> : vector<16x256xf32>
    %128 = tpu.matmul %126, %127, %cst_44 {dimension_numbers = #tpu.dot_dimension_numbers<[1], [0], [0], [1], [0, 0, 1, 1], [], []>} : vector<16x128xbf16>, vector<128x256xbf16>, vector<16x256xf32> -> vector<16x256xf32>
    %c0_45 = arith.constant 0 : index
    %c0_46 = arith.constant 0 : index
    %129 = vector.load %arg14[%c0_45, %c0_46] : memref<1x256xf32, #tpu.memory_space<vmem>>, vector<1x256xf32>
    %130 = vector.broadcast %129 : vector<1x256xf32> to vector<16x256xf32>
    %131 = arith.addf %128, %130 : vector<16x256xf32>
    %132 = arith.truncf %123 : vector<8x128xf32> to vector<8x128xbf16>
    %c0_47 = arith.constant 0 : index
    %c0_48 = arith.constant 0 : index
    %133 = vector.load %arg11[%c0_47, %c0_48] : memref<128x128xbf16, #tpu.memory_space<vmem>>, vector<128x128xbf16>
    %cst_49 = arith.constant dense<0.000000e+00> : vector<8x128xf32>
    %134 = tpu.matmul %132, %133, %cst_49 {dimension_numbers = #tpu.dot_dimension_numbers<[1], [0], [0], [1], [0, 0, 1, 1], [], []>} : vector<8x128xbf16>, vector<128x128xbf16>, vector<8x128xf32> -> vector<8x128xf32>
    %c0_50 = arith.constant 0 : index
    %c0_51 = arith.constant 0 : index
    %135 = vector.load %arg12[%c0_50, %c0_51] : memref<1x128xf32, #tpu.memory_space<vmem>>, vector<1x128xf32>
    %136 = vector.broadcast %135 : vector<1x128xf32> to vector<8x128xf32>
    %137 = arith.addf %134, %136 : vector<8x128xf32>
    %138 = vector.extract_strided_slice %131 {offsets = [0, 0], sizes = [16, 128], strides = [1, 1]} : vector<16x256xf32> to vector<16x128xf32>
    %139 = vector.extract_strided_slice %131 {offsets = [0, 128], sizes = [16, 128], strides = [1, 1]} : vector<16x256xf32> to vector<16x128xf32>
    %c0_52 = arith.constant 0 : index
    %c0_53 = arith.constant 0 : index
    %c0_54 = arith.constant 0 : index
    %140 = vector.load %arg4[%c0_52, %c0_53, %c0_54] : memref<1x8x16xbf16, #tpu.memory_space<vmem>>, vector<1x8x16xbf16>
    %141 = vector.shape_cast %140 : vector<1x8x16xbf16> to vector<8x16xbf16>
    %142 = arith.extf %141 : vector<8x16xbf16> to vector<8x16xf32>
    %143 = vector.extract_strided_slice %137 {offsets = [0, 0], sizes = [8, 32], strides = [1, 1]} : vector<8x128xf32> to vector<8x32xf32>
    %144 = arith.truncf %143 : vector<8x32xf32> to vector<8x32xbf16>
    %145 = vector.extract_strided_slice %138 {offsets = [0, 0], sizes = [16, 32], strides = [1, 1]} : vector<16x128xf32> to vector<16x32xf32>
    %146 = arith.truncf %145 : vector<16x32xf32> to vector<16x32xbf16>
    %147 = vector.extract_strided_slice %139 {offsets = [0, 0], sizes = [16, 32], strides = [1, 1]} : vector<16x128xf32> to vector<16x32xf32>
    %148 = arith.truncf %147 : vector<16x32xf32> to vector<16x32xbf16>
    %cst_55 = arith.constant dense<0.000000e+00> : vector<8x16xf32>
    %149 = tpu.matmul %144, %146, %cst_55 {dimension_numbers = #tpu.dot_dimension_numbers<[1], [1], [0], [0], [0, 0, 1, 0], [], []>} : vector<8x32xbf16>, vector<16x32xbf16>, vector<8x16xf32> -> vector<8x16xf32>
    %150 = arith.addf %149, %142 : vector<8x16xf32>
    %cst_56 = arith.constant dense<0xFF800000> : vector<8xf32>
    %151 = vector.multi_reduction <maximumf>, %150, %cst_56 [1] : vector<8x16xf32> to vector<8xf32>
    %152 = vector.shape_cast %151 : vector<8xf32> to vector<8x1xf32>
    %153 = vector.broadcast %152 : vector<8x1xf32> to vector<8x16xf32>
    %154 = arith.subf %150, %153 : vector<8x16xf32>
    %155 = math.exp %154 : vector<8x16xf32>
    %cst_57 = arith.constant dense<0.000000e+00> : vector<8xf32>
    %156 = vector.multi_reduction <add>, %155, %cst_57 [1] : vector<8x16xf32> to vector<8xf32>
    %157 = vector.shape_cast %156 : vector<8xf32> to vector<8x1xf32>
    %158 = vector.broadcast %157 : vector<8x1xf32> to vector<8x16xf32>
    %159 = arith.divf %155, %158 : vector<8x16xf32>
    %160 = arith.truncf %159 : vector<8x16xf32> to vector<8x16xbf16>
    %cst_58 = arith.constant dense<0.000000e+00> : vector<8x32xf32>
    %161 = tpu.matmul %160, %148, %cst_58 {dimension_numbers = #tpu.dot_dimension_numbers<[1], [0], [0], [1], [0, 0, 1, 1], [], []>} : vector<8x16xbf16>, vector<16x32xbf16>, vector<8x32xf32> -> vector<8x32xf32>
    %162 = vector.extract_strided_slice %137 {offsets = [0, 32], sizes = [8, 32], strides = [1, 1]} : vector<8x128xf32> to vector<8x32xf32>
    %163 = arith.truncf %162 : vector<8x32xf32> to vector<8x32xbf16>
    %164 = vector.extract_strided_slice %138 {offsets = [0, 32], sizes = [16, 32], strides = [1, 1]} : vector<16x128xf32> to vector<16x32xf32>
    %165 = arith.truncf %164 : vector<16x32xf32> to vector<16x32xbf16>
    %166 = vector.extract_strided_slice %139 {offsets = [0, 32], sizes = [16, 32], strides = [1, 1]} : vector<16x128xf32> to vector<16x32xf32>
    %167 = arith.truncf %166 : vector<16x32xf32> to vector<16x32xbf16>
    %cst_59 = arith.constant dense<0.000000e+00> : vector<8x16xf32>
    %168 = tpu.matmul %163, %165, %cst_59 {dimension_numbers = #tpu.dot_dimension_numbers<[1], [1], [0], [0], [0, 0, 1, 0], [], []>} : vector<8x32xbf16>, vector<16x32xbf16>, vector<8x16xf32> -> vector<8x16xf32>
    %169 = arith.addf %168, %142 : vector<8x16xf32>
    %cst_60 = arith.constant dense<0xFF800000> : vector<8xf32>
    %170 = vector.multi_reduction <maximumf>, %169, %cst_60 [1] : vector<8x16xf32> to vector<8xf32>
    %171 = vector.shape_cast %170 : vector<8xf32> to vector<8x1xf32>
    %172 = vector.broadcast %171 : vector<8x1xf32> to vector<8x16xf32>
    %173 = arith.subf %169, %172 : vector<8x16xf32>
    %174 = math.exp %173 : vector<8x16xf32>
    %cst_61 = arith.constant dense<0.000000e+00> : vector<8xf32>
    %175 = vector.multi_reduction <add>, %174, %cst_61 [1] : vector<8x16xf32> to vector<8xf32>
    %176 = vector.shape_cast %175 : vector<8xf32> to vector<8x1xf32>
    %177 = vector.broadcast %176 : vector<8x1xf32> to vector<8x16xf32>
    %178 = arith.divf %174, %177 : vector<8x16xf32>
    %179 = arith.truncf %178 : vector<8x16xf32> to vector<8x16xbf16>
    %cst_62 = arith.constant dense<0.000000e+00> : vector<8x32xf32>
    %180 = tpu.matmul %179, %167, %cst_62 {dimension_numbers = #tpu.dot_dimension_numbers<[1], [0], [0], [1], [0, 0, 1, 1], [], []>} : vector<8x16xbf16>, vector<16x32xbf16>, vector<8x32xf32> -> vector<8x32xf32>
    %181 = vector.extract_strided_slice %137 {offsets = [0, 64], sizes = [8, 32], strides = [1, 1]} : vector<8x128xf32> to vector<8x32xf32>
    %182 = arith.truncf %181 : vector<8x32xf32> to vector<8x32xbf16>
    %183 = vector.extract_strided_slice %138 {offsets = [0, 64], sizes = [16, 32], strides = [1, 1]} : vector<16x128xf32> to vector<16x32xf32>
    %184 = arith.truncf %183 : vector<16x32xf32> to vector<16x32xbf16>
    %185 = vector.extract_strided_slice %139 {offsets = [0, 64], sizes = [16, 32], strides = [1, 1]} : vector<16x128xf32> to vector<16x32xf32>
    %186 = arith.truncf %185 : vector<16x32xf32> to vector<16x32xbf16>
    %cst_63 = arith.constant dense<0.000000e+00> : vector<8x16xf32>
    %187 = tpu.matmul %182, %184, %cst_63 {dimension_numbers = #tpu.dot_dimension_numbers<[1], [1], [0], [0], [0, 0, 1, 0], [], []>} : vector<8x32xbf16>, vector<16x32xbf16>, vector<8x16xf32> -> vector<8x16xf32>
    %188 = arith.addf %187, %142 : vector<8x16xf32>
    %cst_64 = arith.constant dense<0xFF800000> : vector<8xf32>
    %189 = vector.multi_reduction <maximumf>, %188, %cst_64 [1] : vector<8x16xf32> to vector<8xf32>
    %190 = vector.shape_cast %189 : vector<8xf32> to vector<8x1xf32>
    %191 = vector.broadcast %190 : vector<8x1xf32> to vector<8x16xf32>
    %192 = arith.subf %188, %191 : vector<8x16xf32>
    %193 = math.exp %192 : vector<8x16xf32>
    %cst_65 = arith.constant dense<0.000000e+00> : vector<8xf32>
    %194 = vector.multi_reduction <add>, %193, %cst_65 [1] : vector<8x16xf32> to vector<8xf32>
    %195 = vector.shape_cast %194 : vector<8xf32> to vector<8x1xf32>
    %196 = vector.broadcast %195 : vector<8x1xf32> to vector<8x16xf32>
    %197 = arith.divf %193, %196 : vector<8x16xf32>
    %198 = arith.truncf %197 : vector<8x16xf32> to vector<8x16xbf16>
    %cst_66 = arith.constant dense<0.000000e+00> : vector<8x32xf32>
    %199 = tpu.matmul %198, %186, %cst_66 {dimension_numbers = #tpu.dot_dimension_numbers<[1], [0], [0], [1], [0, 0, 1, 1], [], []>} : vector<8x16xbf16>, vector<16x32xbf16>, vector<8x32xf32> -> vector<8x32xf32>
    %200 = vector.extract_strided_slice %137 {offsets = [0, 96], sizes = [8, 32], strides = [1, 1]} : vector<8x128xf32> to vector<8x32xf32>
    %201 = arith.truncf %200 : vector<8x32xf32> to vector<8x32xbf16>
    %202 = vector.extract_strided_slice %138 {offsets = [0, 96], sizes = [16, 32], strides = [1, 1]} : vector<16x128xf32> to vector<16x32xf32>
    %203 = arith.truncf %202 : vector<16x32xf32> to vector<16x32xbf16>
    %204 = vector.extract_strided_slice %139 {offsets = [0, 96], sizes = [16, 32], strides = [1, 1]} : vector<16x128xf32> to vector<16x32xf32>
    %205 = arith.truncf %204 : vector<16x32xf32> to vector<16x32xbf16>
    %cst_67 = arith.constant dense<0.000000e+00> : vector<8x16xf32>
    %206 = tpu.matmul %201, %203, %cst_67 {dimension_numbers = #tpu.dot_dimension_numbers<[1], [1], [0], [0], [0, 0, 1, 0], [], []>} : vector<8x32xbf16>, vector<16x32xbf16>, vector<8x16xf32> -> vector<8x16xf32>
    %207 = arith.addf %206, %142 : vector<8x16xf32>
    %cst_68 = arith.constant dense<0xFF800000> : vector<8xf32>
    %208 = vector.multi_reduction <maximumf>, %207, %cst_68 [1] : vector<8x16xf32> to vector<8xf32>
    %209 = vector.shape_cast %208 : vector<8xf32> to vector<8x1xf32>
    %210 = vector.broadcast %209 : vector<8x1xf32> to vector<8x16xf32>
    %211 = arith.subf %207, %210 : vector<8x16xf32>
    %212 = math.exp %211 : vector<8x16xf32>
    %cst_69 = arith.constant dense<0.000000e+00> : vector<8xf32>
    %213 = vector.multi_reduction <add>, %212, %cst_69 [1] : vector<8x16xf32> to vector<8xf32>
    %214 = vector.shape_cast %213 : vector<8xf32> to vector<8x1xf32>
    %215 = vector.broadcast %214 : vector<8x1xf32> to vector<8x16xf32>
    %216 = arith.divf %212, %215 : vector<8x16xf32>
    %217 = arith.truncf %216 : vector<8x16xf32> to vector<8x16xbf16>
    %cst_70 = arith.constant dense<0.000000e+00> : vector<8x32xf32>
    %218 = tpu.matmul %217, %205, %cst_70 {dimension_numbers = #tpu.dot_dimension_numbers<[1], [0], [0], [1], [0, 0, 1, 1], [], []>} : vector<8x16xbf16>, vector<16x32xbf16>, vector<8x32xf32> -> vector<8x32xf32>
    %219 = tpu.concatenate %161, %180, %199, %218 in 1 : vector<8x32xf32>, vector<8x32xf32>, vector<8x32xf32>, vector<8x32xf32> -> vector<8x128xf32>
    %220 = arith.truncf %219 : vector<8x128xf32> to vector<8x128xbf16>
    %c0_71 = arith.constant 0 : index
    %c0_72 = arith.constant 0 : index
    %221 = vector.load %arg15[%c0_71, %c0_72] : memref<128x128xbf16, #tpu.memory_space<vmem>>, vector<128x128xbf16>
    %cst_73 = arith.constant dense<0.000000e+00> : vector<8x128xf32>
    %222 = tpu.matmul %220, %221, %cst_73 {dimension_numbers = #tpu.dot_dimension_numbers<[1], [0], [0], [1], [0, 0, 1, 1], [], []>} : vector<8x128xbf16>, vector<128x128xbf16>, vector<8x128xf32> -> vector<8x128xf32>
    %c0_74 = arith.constant 0 : index
    %c0_75 = arith.constant 0 : index
    %223 = vector.load %arg16[%c0_74, %c0_75] : memref<1x128xf32, #tpu.memory_space<vmem>>, vector<1x128xf32>
    %224 = vector.broadcast %223 : vector<1x128xf32> to vector<8x128xf32>
    %225 = arith.addf %222, %224 : vector<8x128xf32>
    %226 = arith.addf %123, %225 : vector<8x128xf32>
    %cst_76 = arith.constant dense<0.000000e+00> : vector<8xf32>
    %227 = vector.multi_reduction <add>, %226, %cst_76 [1] : vector<8x128xf32> to vector<8xf32>
    %228 = vector.shape_cast %227 : vector<8xf32> to vector<8x1xf32>
    %cst_77 = arith.constant 1.280000e+02 : f32
    %229 = vector.broadcast %cst_77 : f32 to vector<8x1xf32>
    %230 = arith.divf %228, %229 : vector<8x1xf32>
    %231 = vector.broadcast %230 : vector<8x1xf32> to vector<8x128xf32>
    %232 = arith.subf %226, %231 : vector<8x128xf32>
    %233 = vector.broadcast %230 : vector<8x1xf32> to vector<8x128xf32>
    %234 = arith.subf %226, %233 : vector<8x128xf32>
    %235 = arith.mulf %232, %234 : vector<8x128xf32>
    %cst_78 = arith.constant dense<0.000000e+00> : vector<8xf32>
    %236 = vector.multi_reduction <add>, %235, %cst_78 [1] : vector<8x128xf32> to vector<8xf32>
    %237 = vector.shape_cast %236 : vector<8xf32> to vector<8x1xf32>
    %cst_79 = arith.constant 1.280000e+02 : f32
    %238 = vector.broadcast %cst_79 : f32 to vector<8x1xf32>
    %239 = arith.divf %237, %238 : vector<8x1xf32>
    %240 = vector.broadcast %230 : vector<8x1xf32> to vector<8x128xf32>
    %241 = arith.subf %226, %240 : vector<8x128xf32>
    %cst_80 = arith.constant 9.99999974E-6 : f32
    %242 = vector.broadcast %cst_80 : f32 to vector<8x1xf32>
    %243 = arith.addf %239, %242 : vector<8x1xf32>
    %244 = math.rsqrt %243 : vector<8x1xf32>
    %245 = vector.broadcast %244 : vector<8x1xf32> to vector<8x128xf32>
    %246 = arith.mulf %241, %245 : vector<8x128xf32>
    %c0_81 = arith.constant 0 : index
    %c0_82 = arith.constant 0 : index
    %247 = vector.load %arg17[%c0_81, %c0_82] : memref<1x128xf32, #tpu.memory_space<vmem>>, vector<1x128xf32>
    %248 = vector.broadcast %247 : vector<1x128xf32> to vector<8x128xf32>
    %249 = arith.mulf %246, %248 : vector<8x128xf32>
    %c0_83 = arith.constant 0 : index
    %c0_84 = arith.constant 0 : index
    %250 = vector.load %arg18[%c0_83, %c0_84] : memref<1x128xf32, #tpu.memory_space<vmem>>, vector<1x128xf32>
    %251 = vector.broadcast %250 : vector<1x128xf32> to vector<8x128xf32>
    %252 = arith.addf %249, %251 : vector<8x128xf32>
    %253 = arith.truncf %252 : vector<8x128xf32> to vector<8x128xbf16>
    %c0_85 = arith.constant 0 : index
    %c0_86 = arith.constant 0 : index
    %254 = vector.load %arg19[%c0_85, %c0_86] : memref<128x256xbf16, #tpu.memory_space<vmem>>, vector<128x256xbf16>
    %cst_87 = arith.constant dense<0.000000e+00> : vector<8x256xf32>
    %255 = tpu.matmul %253, %254, %cst_87 {dimension_numbers = #tpu.dot_dimension_numbers<[1], [0], [0], [1], [0, 0, 1, 1], [], []>} : vector<8x128xbf16>, vector<128x256xbf16>, vector<8x256xf32> -> vector<8x256xf32>
    %c0_88 = arith.constant 0 : index
    %c0_89 = arith.constant 0 : index
    %256 = vector.load %arg20[%c0_88, %c0_89] : memref<1x256xf32, #tpu.memory_space<vmem>>, vector<1x256xf32>
    %257 = vector.broadcast %256 : vector<1x256xf32> to vector<8x256xf32>
    %258 = arith.addf %255, %257 : vector<8x256xf32>
    %cst_90 = arith.constant 0.000000e+00 : f32
    %259 = vector.broadcast %cst_90 : f32 to vector<8x256xf32>
    %260 = arith.maximumf %258, %259 : vector<8x256xf32>
    %261 = arith.truncf %260 : vector<8x256xf32> to vector<8x256xbf16>
    %c0_91 = arith.constant 0 : index
    %c0_92 = arith.constant 0 : index
    %262 = vector.load %arg21[%c0_91, %c0_92] : memref<256x128xbf16, #tpu.memory_space<vmem>>, vector<256x128xbf16>
    %cst_93 = arith.constant dense<0.000000e+00> : vector<8x128xf32>
    %263 = tpu.matmul %261, %262, %cst_93 {dimension_numbers = #tpu.dot_dimension_numbers<[1], [0], [0], [1], [0, 0, 1, 1], [], []>} : vector<8x256xbf16>, vector<256x128xbf16>, vector<8x128xf32> -> vector<8x128xf32>
    %c0_94 = arith.constant 0 : index
    %c0_95 = arith.constant 0 : index
    %264 = vector.load %arg22[%c0_94, %c0_95] : memref<1x128xf32, #tpu.memory_space<vmem>>, vector<1x128xf32>
    %265 = vector.broadcast %264 : vector<1x128xf32> to vector<8x128xf32>
    %266 = arith.addf %263, %265 : vector<8x128xf32>
    %267 = arith.addf %252, %266 : vector<8x128xf32>
    %cst_96 = arith.constant dense<0.000000e+00> : vector<8xf32>
    %268 = vector.multi_reduction <add>, %267, %cst_96 [1] : vector<8x128xf32> to vector<8xf32>
    %269 = vector.shape_cast %268 : vector<8xf32> to vector<8x1xf32>
    %cst_97 = arith.constant 1.280000e+02 : f32
    %270 = vector.broadcast %cst_97 : f32 to vector<8x1xf32>
    %271 = arith.divf %269, %270 : vector<8x1xf32>
    %272 = vector.broadcast %271 : vector<8x1xf32> to vector<8x128xf32>
    %273 = arith.subf %267, %272 : vector<8x128xf32>
    %274 = vector.broadcast %271 : vector<8x1xf32> to vector<8x128xf32>
    %275 = arith.subf %267, %274 : vector<8x128xf32>
    %276 = arith.mulf %273, %275 : vector<8x128xf32>
    %cst_98 = arith.constant dense<0.000000e+00> : vector<8xf32>
    %277 = vector.multi_reduction <add>, %276, %cst_98 [1] : vector<8x128xf32> to vector<8xf32>
    %278 = vector.shape_cast %277 : vector<8xf32> to vector<8x1xf32>
    %cst_99 = arith.constant 1.280000e+02 : f32
    %279 = vector.broadcast %cst_99 : f32 to vector<8x1xf32>
    %280 = arith.divf %278, %279 : vector<8x1xf32>
    %281 = vector.broadcast %271 : vector<8x1xf32> to vector<8x128xf32>
    %282 = arith.subf %267, %281 : vector<8x128xf32>
    %cst_100 = arith.constant 9.99999974E-6 : f32
    %283 = vector.broadcast %cst_100 : f32 to vector<8x1xf32>
    %284 = arith.addf %280, %283 : vector<8x1xf32>
    %285 = math.rsqrt %284 : vector<8x1xf32>
    %286 = vector.broadcast %285 : vector<8x1xf32> to vector<8x128xf32>
    %287 = arith.mulf %282, %286 : vector<8x128xf32>
    %c0_101 = arith.constant 0 : index
    %c0_102 = arith.constant 0 : index
    %288 = vector.load %arg23[%c0_101, %c0_102] : memref<1x128xf32, #tpu.memory_space<vmem>>, vector<1x128xf32>
    %289 = vector.broadcast %288 : vector<1x128xf32> to vector<8x128xf32>
    %290 = arith.mulf %287, %289 : vector<8x128xf32>
    %c0_103 = arith.constant 0 : index
    %c0_104 = arith.constant 0 : index
    %291 = vector.load %arg24[%c0_103, %c0_104] : memref<1x128xf32, #tpu.memory_space<vmem>>, vector<1x128xf32>
    %292 = vector.broadcast %291 : vector<1x128xf32> to vector<8x128xf32>
    %293 = arith.addf %290, %292 : vector<8x128xf32>
    %294 = vector.shape_cast %293 : vector<8x128xf32> to vector<1x8x128xf32>
    %c0_105 = arith.constant 0 : index
    %c0_106 = arith.constant 0 : index
    %c0_107 = arith.constant 0 : index
    %295 = vector.load %arg25[%c0_105, %c0_106, %c0_107] : memref<1x8x128xf32, #tpu.memory_space<vmem>>, vector<1x8x128xf32>
    tpu.vector_store %arg25[%c0_105, %c0_106, %c0_107], %294 {strides = array<i32>} : memref<1x8x128xf32, #tpu.memory_space<vmem>>, vector<1x8x128xf32>,
    return
  }
  func.func @transform_0(%arg0: i32) -> (i32, i32, i32) {
    %c0_i32 = arith.constant 0 : i32
    %c0_i32_0 = arith.constant 0 : i32
    %c0_i32_1 = arith.constant 0 : i32
    return %arg0, %c0_i32, %c0_i32_0 : i32, i32, i32
  }
  func.func @transform_1(%arg0: i32) -> (i32, i32, i32) {
    %c0_i32 = arith.constant 0 : i32
    %c0_i32_0 = arith.constant 0 : i32
    %c0_i32_1 = arith.constant 0 : i32
    return %arg0, %c0_i32, %c0_i32_0 : i32, i32, i32
  }
  func.func @transform_2(%arg0: i32) -> (i32, i32, i32) {
    %c0_i32 = arith.constant 0 : i32
    %c0_i32_0 = arith.constant 0 : i32
    %c0_i32_1 = arith.constant 0 : i32
    return %arg0, %c0_i32, %c0_i32_0 : i32, i32, i32
  }
  func.func @transform_3(%arg0: i32) -> (i32, i32, i32) {
    %c0_i32 = arith.constant 0 : i32
    %c0_i32_0 = arith.constant 0 : i32
    %c0_i32_1 = arith.constant 0 : i32
    return %arg0, %c0_i32, %c0_i32_0 : i32, i32, i32
  }
  func.func @transform_4(%arg0: i32) -> (i32, i32) {
    %c0_i32 = arith.constant 0 : i32
    %c0_i32_0 = arith.constant 0 : i32
    %c0_i32_1 = arith.constant 0 : i32
    return %c0_i32, %c0_i32_0 : i32, i32
  }
  func.func @transform_5(%arg0: i32) -> (i32, i32) {
    %c0_i32 = arith.constant 0 : i32
    %c0_i32_0 = arith.constant 0 : i32
    %c0_i32_1 = arith.constant 0 : i32
    return %c0_i32, %c0_i32_0 : i32, i32
  }
  func.func @transform_6(%arg0: i32) -> (i32, i32) {
    %c0_i32 = arith.constant 0 : i32
    %c0_i32_0 = arith.constant 0 : i32
    %c0_i32_1 = arith.constant 0 : i32
    return %c0_i32, %c0_i32_0 : i32, i32
  }
  func.func @transform_7(%arg0: i32) -> (i32, i32) {
    %c0_i32 = arith.constant 0 : i32
    %c0_i32_0 = arith.constant 0 : i32
    %c0_i32_1 = arith.constant 0 : i32
    return %c0_i32, %c0_i32_0 : i32, i32
  }
  func.func @transform_8(%arg0: i32) -> (i32, i32) {
    %c0_i32 = arith.constant 0 : i32
    %c0_i32_0 = arith.constant 0 : i32
    %c0_i32_1 = arith.constant 0 : i32
    return %c0_i32, %c0_i32_0 : i32, i32
  }
  func.func @transform_9(%arg0: i32) -> (i32, i32) {
    %c0_i32 = arith.constant 0 : i32
    %c0_i32_0 = arith.constant 0 : i32
    %c0_i32_1 = arith.constant 0 : i32
    return %c0_i32, %c0_i32_0 : i32, i32
  }
  func.func @transform_10(%arg0: i32) -> (i32, i32) {
    %c0_i32 = arith.constant 0 : i32
    %c0_i32_0 = arith.constant 0 : i32
    %c0_i32_1 = arith.constant 0 : i32
    return %c0_i32, %c0_i32_0 : i32, i32
  }
  func.func @transform_11(%arg0: i32) -> (i32, i32) {
    %c0_i32 = arith.constant 0 : i32
    %c0_i32_0 = arith.constant 0 : i32
    %c0_i32_1 = arith.constant 0 : i32
    return %c0_i32, %c0_i32_0 : i32, i32
  }
  func.func @transform_12(%arg0: i32) -> (i32, i32) {
    %c0_i32 = arith.constant 0 : i32
    %c0_i32_0 = arith.constant 0 : i32
    %c0_i32_1 = arith.constant 0 : i32
    return %c0_i32, %c0_i32_0 : i32, i32
  }
  func.func @transform_13(%arg0: i32) -> (i32, i32) {
    %c0_i32 = arith.constant 0 : i32
    %c0_i32_0 = arith.constant 0 : i32
    %c0_i32_1 = arith.constant 0 : i32
    return %c0_i32, %c0_i32_0 : i32, i32
  }
  func.func @transform_14(%arg0: i32) -> (i32, i32) {
    %c0_i32 = arith.constant 0 : i32
    %c0_i32_0 = arith.constant 0 : i32
    %c0_i32_1 = arith.constant 0 : i32
    return %c0_i32, %c0_i32_0 : i32, i32
  }
  func.func @transform_15(%arg0: i32) -> (i32, i32) {
    %c0_i32 = arith.constant 0 : i32
    %c0_i32_0 = arith.constant 0 : i32
    %c0_i32_1 = arith.constant 0 : i32
    return %c0_i32, %c0_i32_0 : i32, i32
  }
  func.func @transform_16(%arg0: i32) -> (i32, i32) {
    %c0_i32 = arith.constant 0 : i32
    %c0_i32_0 = arith.constant 0 : i32
    %c0_i32_1 = arith.constant 0 : i32
    return %c0_i32, %c0_i32_0 : i32, i32
  }
  func.func @transform_17(%arg0: i32) -> (i32, i32) {
    %c0_i32 = arith.constant 0 : i32
    %c0_i32_0 = arith.constant 0 : i32
    %c0_i32_1 = arith.constant 0 : i32
    return %c0_i32, %c0_i32_0 : i32, i32
  }
  func.func @transform_18(%arg0: i32) -> (i32, i32) {
    %c0_i32 = arith.constant 0 : i32
    %c0_i32_0 = arith.constant 0 : i32
    %c0_i32_1 = arith.constant 0 : i32
    return %c0_i32, %c0_i32_0 : i32, i32
  }
  func.func @transform_19(%arg0: i32) -> (i32, i32) {
    %c0_i32 = arith.constant 0 : i32
    %c0_i32_0 = arith.constant 0 : i32
    %c0_i32_1 = arith.constant 0 : i32
    return %c0_i32, %c0_i32_0 : i32, i32
  }
  func.func @transform_20(%arg0: i32) -> (i32, i32) {
    %c0_i32 = arith.constant 0 : i32
    %c0_i32_0 = arith.constant 0 : i32
    %c0_i32_1 = arith.constant 0 : i32
    return %c0_i32, %c0_i32_0 : i32, i32
  }
  func.func @transform_21(%arg0: i32) -> (i32, i32) {
    %c0_i32 = arith.constant 0 : i32
    %c0_i32_0 = arith.constant 0 : i32
    %c0_i32_1 = arith.constant 0 : i32
    return %c0_i32, %c0_i32_0 : i32, i32
  }
  func.func @transform_22(%arg0: i32) -> (i32, i32) {
    %c0_i32 = arith.constant 0 : i32
    %c0_i32_0 = arith.constant 0 : i32
    %c0_i32_1 = arith.constant 0 : i32
    return %c0_i32, %c0_i32_0 : i32, i32
  }
  func.func @transform_23(%arg0: i32) -> (i32, i32) {
    %c0_i32 = arith.constant 0 : i32
    %c0_i32_0 = arith.constant 0 : i32
    %c0_i32_1 = arith.constant 0 : i32
    return %c0_i32, %c0_i32_0 : i32, i32
  }
  func.func @transform_24(%arg0: i32) -> (i32, i32, i32) {
    %c0_i32 = arith.constant 0 : i32
    %c0_i32_0 = arith.constant 0 : i32
    %c0_i32_1 = arith.constant 0 : i32
    return %arg0, %c0_i32, %c0_i32_0 : i32, i32, i32
  }
}

</mosaic_0001>

<llo_original>
// kernel: decoders_forward.2
$region0: #{decoders_forward.2}
  #allocation0 [shape = 'u32[]', space=smem, size = 0x4, offset = 0x4, fixed_abs, tag = 'smem constant byte address 0x4 - core index']
  #allocation1 [shape = 'u32[144,128]{1,0:T(1,128)}', space=vmem, size = 0x12000, scoped, tag = 'internal scratch']
  %s0 = inlined_call_operand.vmem [shape: f32[2,8,128], index: 0, kind: input, shape index: {}]
  %s1 = inlined_call_operand.vmem [shape: f32[2,16,128], index: 1, kind: input, shape index: {}]
  %s2 = inlined_call_operand.vmem [shape: bf16[2,8,8], index: 2, kind: input, shape index: {}]
  %s3 = inlined_call_operand.vmem [shape: bf16[2,8,16], index: 3, kind: input, shape index: {}]
  %s4 = inlined_call_operand.hbm [shape: bf16[128,384], index: 4, kind: input, shape index: {}]
  %s5 = inlined_call_operand.vmem [shape: f32[1,384], index: 5, kind: input, shape index: {}]
  %s6 = inlined_call_operand.vmem [shape: bf16[128,128], index: 6, kind: input, shape index: {}]
  %s7 = inlined_call_operand.hbm [shape: f32[1,128], index: 7, kind: input, shape index: {}]
  %s8 = inlined_call_operand.hbm [shape: f32[1,128], index: 8, kind: input, shape index: {}]
  %s9 = inlined_call_operand.hbm [shape: f32[1,128], index: 9, kind: input, shape index: {}]
  %s10 = inlined_call_operand.hbm [shape: bf16[128,128], index: 10, kind: input, shape index: {}]
  %s11 = inlined_call_operand.hbm [shape: f32[1,128], index: 11, kind: input, shape index: {}]
  %s12 = inlined_call_operand.hbm [shape: bf16[128,256], index: 12, kind: input, shape index: {}]
  %s13 = inlined_call_operand.vmem [shape: f32[1,256], index: 13, kind: input, shape index: {}]
  %s14 = inlined_call_operand.hbm [shape: bf16[128,128], index: 14, kind: input, shape index: {}]
  %s15 = inlined_call_operand.hbm [shape: f32[1,128], index: 15, kind: input, shape index: {}]
  %s16 = inlined_call_operand.hbm [shape: f32[1,128], index: 16, kind: input, shape index: {}]
  %s17 = inlined_call_operand.hbm [shape: f32[1,128], index: 17, kind: input, shape index: {}]
  %s18 = inlined_call_operand.hbm [shape: bf16[128,256], index: 18, kind: input, shape index: {}]
  %s19 = inlined_call_operand.vmem [shape: f32[1,256], index: 19, kind: input, shape index: {}]
  %s20 = inlined_call_operand.hbm [shape: bf16[256,128], index: 20, kind: input, shape index: {}]
  %s21 = inlined_call_operand.hbm [shape: f32[1,128], index: 21, kind: input, shape index: {}]
  %s22 = inlined_call_operand.hbm [shape: f32[1,128], index: 22, kind: input, shape index: {}]
  %s23 = inlined_call_operand.hbm [shape: f32[1,128], index: 23, kind: input, shape index: {}]
  %s24 = inlined_call_operand.vmem [shape: f32[2,8,128], index: 24, kind: output, shape index: {}]
  %s25 = sld [smem:[#allocation0]]
  $region193: #{decoders_forward.2} parent=0
    _
  %s27 = ssub.s32 1, %s25
  %s28 = scalar_select 0, %s27, %s25
  $region1: #{decoders_forward.2} parent=0
    #allocation2 [shape = 'u8[98304]{0}', space=vmem, size = 0x18000, scoped, tag = 'input window, operand 4, single buffered']
    #allocation3 [shape = 's32[2]{0}', space=sflag, size = 0x8, scoped, tag = 'scoped memory for decoders_forward.2']
    #allocation4 [shape = 'u8[512]{0}', space=vmem, size = 0x400, scoped, tag = 'input window, operand 7, single buffered']
    #allocation5 [shape = 's32[1]{0}', space=sflag, size = 0x4, scoped, tag = 'scoped memory for decoders_forward.2']
    #allocation6 [shape = 'u8[512]{0}', space=vmem, size = 0x400, scoped, tag = 'input window, operand 8, single buffered']
    #allocation7 [shape = 'u8[512]{0}', space=vmem, size = 0x400, scoped, tag = 'input window, operand 9, single buffered']
    #allocation8 [shape = 's32[1]{0}', space=sflag, size = 0x4, scoped, tag = 'scoped memory for decoders_forward.2']
    #allocation9 [shape = 'u8[32768]{0}', space=vmem, size = 0x8000, scoped, tag = 'input window, operand 10, single buffered']
    #allocation10 [shape = 'u8[512]{0}', space=vmem, size = 0x400, scoped, tag = 'input window, operand 11, single buffered']
    #allocation11 [shape = 's32[1]{0}', space=sflag, size = 0x4, scoped, tag = 'scoped memory for decoders_forward.2']
    #allocation12 [shape = 'u8[65536]{0}', space=vmem, size = 0x10000, scoped, tag = 'input window, operand 12, single buffered']
    #allocation13 [shape = 'u8[32768]{0}', space=vmem, size = 0x8000, scoped, tag = 'input window, operand 14, single buffered']
    #allocation14 [shape = 's32[1]{0}', space=sflag, size = 0x4, scoped, tag = 'scoped memory for decoders_forward.2']
    #allocation15 [shape = 'u8[512]{0}', space=vmem, size = 0x400, scoped, tag = 'input window, operand 15, single buffered']
    #allocation16 [shape = 'u8[512]{0}', space=vmem, size = 0x400, scoped, tag = 'input window, operand 16, single buffered']
    #allocation17 [shape = 's32[1]{0}', space=sflag, size = 0x4, scoped, tag = 'scoped memory for decoders_forward.2']
    #allocation18 [shape = 'u8[512]{0}', space=vmem, size = 0x400, scoped, tag = 'input window, operand 17, single buffered']
    #allocation19 [shape = 'u8[65536]{0}', space=vmem, size = 0x10000, scoped, tag = 'input window, operand 18, single buffered']
    #allocation20 [shape = 's32[1]{0}', space=sflag, size = 0x4, scoped, tag = 'scoped memory for decoders_forward.2']
    #allocation21 [shape = 'u8[65536]{0}', space=vmem, size = 0x10000, scoped, tag = 'input window, operand 20, single buffered']
    #allocation22 [shape = 'u8[512]{0}', space=vmem, size = 0x400, scoped, tag = 'input window, operand 21, single buffered']
    #allocation23 [shape = 's32[1]{0}', space=sflag, size = 0x4, scoped, tag = 'scoped memory for decoders_forward.2']
    #allocation24 [shape = 'u8[512]{0}', space=vmem, size = 0x400, scoped, tag = 'input window, operand 22, single buffered']
    #allocation25 [shape = 'u8[512]{0}', space=vmem, size = 0x400, scoped, tag = 'input window, operand 23, single buffered']
    #allocation26 [shape = 's32[1]{0}', space=sflag, size = 0x4, scoped, tag = 'scoped memory for decoders_forward.2']
    %29 = vsyncpa [#allocation3], 0
    %30 = vsyncpa [#allocation5], 0
    %31 = vsyncpa [#allocation8], 0
    %32 = vsyncpa [#allocation11], 0
    %33 = vsyncpa [#allocation14], 0
    %34 = vsyncpa [#allocation17], 0
    %35 = vsyncpa [#allocation20], 0
    %36 = vsyncpa [#allocation23], 0
    %37 = vsyncpa [#allocation26], 0
    loop: start=0, step=1, limit=4
    $region2: #{decoders_forward.2} parent=1 // loop_pre_header
      _
    $region3: #{decoders_forward.2} parent=1 // loop_header
      %s39 = sphi 0, %s43
      %p40 = scmp.ge.s32.totalorder %s39, 4
      %s49 = sphi 0, %s51
      %s52 = sphi 0, %s49
      %s53 = sphi 0, %s52
      %s69 = sphi 0, %s53
      %s75 = sphi 0, %s77
      %s78 = sphi 0, %s75
      %s79 = sphi 0, %s78
      %s95 = sphi 0, %s79
      %s101 = sphi 0, %s103
      %s104 = sphi 0, %s101
      %s105 = sphi 0, %s104
      %s121 = sphi 0, %s105
      %s127 = sphi 0, %s129
      %s130 = sphi 0, %s127
      %s131 = sphi 0, %s130
      %s147 = sphi 0, %s131
      %s151 = sphi 0, %s151
      %s153 = sphi 0, %s151
      %s154 = sphi 0, %s153
      %s168 = sphi 0, %s154
      %s172 = sphi 0, %s172
      %s174 = sphi 0, %s172
      %s175 = sphi 0, %s174
      %s189 = sphi 0, %s175
      %s193 = sphi 0, %s193
      %s195 = sphi 0, %s193
      %s196 = sphi 0, %s195
      %s210 = sphi 0, %s196
      %s214 = sphi 0, %s214
      %s216 = sphi 0, %s214
      %s217 = sphi 0, %s216
      %s231 = sphi 0, %s217
      %s235 = sphi 0, %s235
      %s237 = sphi 0, %s235
      %s238 = sphi 0, %s237
      %s252 = sphi 0, %s238
      %s256 = sphi 0, %s256
      %s258 = sphi 0, %s256
      %s259 = sphi 0, %s258
      %s273 = sphi 0, %s259
      %s277 = sphi 0, %s277
      %s279 = sphi 0, %s277
      %s280 = sphi 0, %s279
      %s294 = sphi 0, %s280
      %s298 = sphi 0, %s298
      %s300 = sphi 0, %s298
      %s301 = sphi 0, %s300
      %s315 = sphi 0, %s301
      %s319 = sphi 0, %s319
      %s321 = sphi 0, %s319
      %s322 = sphi 0, %s321
      %s336 = sphi 0, %s322
      %s340 = sphi 0, %s340
      %s342 = sphi 0, %s340
      %s343 = sphi 0, %s342
      %s357 = sphi 0, %s343
      %s361 = sphi 0, %s361
      %s363 = sphi 0, %s361
      %s364 = sphi 0, %s363
      %s378 = sphi 0, %s364
      %s382 = sphi 0, %s382
      %s384 = sphi 0, %s382
      %s385 = sphi 0, %s384
      %s399 = sphi 0, %s385
      %s403 = sphi 0, %s403
      %s405 = sphi 0, %s403
      %s406 = sphi 0, %s405
      %s420 = sphi 0, %s406
      %s424 = sphi 0, %s424
      %s426 = sphi 0, %s424
      %s427 = sphi 0, %s426
      %s441 = sphi 0, %s427
      %s445 = sphi 0, %s445
      %s447 = sphi 0, %s445
      %s448 = sphi 0, %s447
      %s462 = sphi 0, %s448
      %s466 = sphi 0, %s466
      %s468 = sphi 0, %s466
      %s469 = sphi 0, %s468
      %s483 = sphi 0, %s469
      %s487 = sphi 0, %s487
      %s489 = sphi 0, %s487
      %s490 = sphi 0, %s489
      %s504 = sphi 0, %s490
      %s508 = sphi 0, %s508
      %s510 = sphi 0, %s508
      %s511 = sphi 0, %s510
      %s525 = sphi 0, %s511
      %s529 = sphi 0, %s529
      %s531 = sphi 0, %s529
      %s532 = sphi 0, %s531
      %s546 = sphi 0, %s532
      %s550 = sphi 0, %s550
      %s552 = sphi 0, %s550
      %s553 = sphi 0, %s552
      %s567 = sphi 0, %s553
      %s573 = sphi 0, %s575
      %s576 = sphi 0, %s573
      %s577 = sphi 0, %s576
      %s593 = sphi 0, %s577
    $region4: #{decoders_forward.2} parent=1 // loop_header_branch
      %42 = sbr.rel (%p40) target = $region8
    $region5: #{decoders_forward.2} parent=1 // loop_body
      %s44 = ssub.s32 %s39, 1
      %s45 = ssub.s32 %s39, 2
      %s46 = sadd.s32 %s39, 1
      %s47 = ssub.s32 %s39, %s46
      %p48 = scmp.eq.s32.totalorder %s47, 0
      %s50 = sadd.s32 %s49, 1
      %s51 = scalar_select %p48, %s49, %s50
      %p54 = pneg %p48
      %p55 = scmp.eq.s32.totalorder %s39, 1
      %p56 = por %p54, %p55
      %p57 = scmp.ne.s32.totalorder %s49, %s52
      %p58 = scmp.eq.s32.totalorder %s39, 0
      %p59 = por %p57, %p58
      %p60 = scmp.ne.s32.totalorder %s49, %s52
      %p61 = scmp.eq.s32.totalorder %s44, 1
      %p62 = por %p60, %p61
      %p63 = scmp.ne.s32.totalorder %s52, %s53
      %p64 = scmp.eq.s32.totalorder %s44, 0
      %p65 = por %p63, %p64
      %p66 = scmp.ne.s32.totalorder %s52, %s53
      %p67 = scmp.eq.s32.totalorder %s45, 1
      %p68 = por %p66, %p67
      %p70 = scmp.ne.s32.totalorder %s53, %s69
      %p71 = scmp.eq.s32.totalorder %s45, 0
      %p72 = por %p70, %p71
      %s73 = ssub.s32 %s39, %s46
      %p74 = scmp.eq.s32.totalorder %s73, 0
      %s76 = sadd.s32 %s75, 1
      %s77 = scalar_select %p74, %s75, %s76
      %p80 = pneg %p74
      %p81 = scmp.eq.s32.totalorder %s39, 1
      %p82 = por %p80, %p81
      %p83 = scmp.ne.s32.totalorder %s75, %s78
      %p84 = scmp.eq.s32.totalorder %s39, 0
      %p85 = por %p83, %p84
      %p86 = scmp.ne.s32.totalorder %s75, %s78
      %p87 = scmp.eq.s32.totalorder %s44, 1
      %p88 = por %p86, %p87
      %p89 = scmp.ne.s32.totalorder %s78, %s79
      %p90 = scmp.eq.s32.totalorder %s44, 0
      %p91 = por %p89, %p90
      %p92 = scmp.ne.s32.totalorder %s78, %s79
      %p93 = scmp.eq.s32.totalorder %s45, 1
      %p94 = por %p92, %p93
      %p96 = scmp.ne.s32.totalorder %s79, %s95
      %p97 = scmp.eq.s32.totalorder %s45, 0
      %p98 = por %p96, %p97
      %s99 = ssub.s32 %s39, %s46
      %p100 = scmp.eq.s32.totalorder %s99, 0
      %s102 = sadd.s32 %s101, 1
      %s103 = scalar_select %p100, %s101, %s102
      %p106 = pneg %p100
      %p107 = scmp.eq.s32.totalorder %s39, 1
      %p108 = por %p106, %p107
      %p109 = scmp.ne.s32.totalorder %s101, %s104
      %p110 = scmp.eq.s32.totalorder %s39, 0
      %p111 = por %p109, %p110
      %p112 = scmp.ne.s32.totalorder %s101, %s104
      %p113 = scmp.eq.s32.totalorder %s44, 1
      %p114 = por %p112, %p113
      %p115 = scmp.ne.s32.totalorder %s104, %s105
      %p116 = scmp.eq.s32.totalorder %s44, 0
      %p117 = por %p115, %p116
      %p118 = scmp.ne.s32.totalorder %s104, %s105
      %p119 = scmp.eq.s32.totalorder %s45, 1
      %p120 = por %p118, %p119
      %p122 = scmp.ne.s32.totalorder %s105, %s121
      %p123 = scmp.eq.s32.totalorder %s45, 0
      %p124 = por %p122, %p123
      %s125 = ssub.s32 %s39, %s46
      %p126 = scmp.eq.s32.totalorder %s125, 0
      %s128 = sadd.s32 %s127, 1
      %s129 = scalar_select %p126, %s127, %s128
      %p132 = pneg %p126
      %p133 = scmp.eq.s32.totalorder %s39, 1
      %p134 = por %p132, %p133
      %p135 = scmp.ne.s32.totalorder %s127, %s130
      %p136 = scmp.eq.s32.totalorder %s39, 0
      %p137 = por %p135, %p136
      %p138 = scmp.ne.s32.totalorder %s127, %s130
      %p139 = scmp.eq.s32.totalorder %s44, 1
      %p140 = por %p138, %p139
      %p141 = scmp.ne.s32.totalorder %s130, %s131
      %p142 = scmp.eq.s32.totalorder %s44, 0
      %p143 = por %p141, %p142
      %p144 = scmp.ne.s32.totalorder %s130, %s131
      %p145 = scmp.eq.s32.totalorder %s45, 1
      %p146 = por %p144, %p145
      %p148 = scmp.ne.s32.totalorder %s131, %s147
      %p149 = scmp.eq.s32.totalorder %s45, 0
      %p150 = por %p148, %p149
      %s152 = sadd.s32 %s151, 1
      %p155 = scmp.eq.s32.totalorder %s39, 1
      %p156 = scmp.ne.s32.totalorder %s151, %s153
      %p157 = scmp.eq.s32.totalorder %s39, 0
      %p158 = por %p156, %p157
      %p159 = scmp.ne.s32.totalorder %s151, %s153
      %p160 = scmp.eq.s32.totalorder %s44, 1
      %p161 = por %p159, %p160
      %p162 = scmp.ne.s32.totalorder %s153, %s154
      %p163 = scmp.eq.s32.totalorder %s44, 0
      %p164 = por %p162, %p163
      %p165 = scmp.ne.s32.totalorder %s153, %s154
      %p166 = scmp.eq.s32.totalorder %s45, 1
      %p167 = por %p165, %p166
      %p169 = scmp.ne.s32.totalorder %s154, %s168
      %p170 = scmp.eq.s32.totalorder %s45, 0
      %p171 = por %p169, %p170
      %s173 = sadd.s32 %s172, 1
      %p176 = scmp.eq.s32.totalorder %s39, 1
      %p177 = scmp.ne.s32.totalorder %s172, %s174
      %p178 = scmp.eq.s32.totalorder %s39, 0
      %p179 = por %p177, %p178
      %p180 = scmp.ne.s32.totalorder %s172, %s174
      %p181 = scmp.eq.s32.totalorder %s44, 1
      %p182 = por %p180, %p181
      %p183 = scmp.ne.s32.totalorder %s174, %s175
      %p184 = scmp.eq.s32.totalorder %s44, 0
      %p185 = por %p183, %p184
      %p186 = scmp.ne.s32.totalorder %s174, %s175
      %p187 = scmp.eq.s32.totalorder %s45, 1
      %p188 = por %p186, %p187
      %p190 = scmp.ne.s32.totalorder %s175, %s189
      %p191 = scmp.eq.s32.totalorder %s45, 0
      %p192 = por %p190, %p191
      %s194 = sadd.s32 %s193, 1
      %p197 = scmp.eq.s32.totalorder %s39, 1
      %p198 = scmp.ne.s32.totalorder %s193, %s195
      %p199 = scmp.eq.s32.totalorder %s39, 0
      %p200 = por %p198, %p199
      %p201 = scmp.ne.s32.totalorder %s193, %s195
      %p202 = scmp.eq.s32.totalorder %s44, 1
      %p203 = por %p201, %p202
      %p204 = scmp.ne.s32.totalorder %s195, %s196
      %p205 = scmp.eq.s32.totalorder %s44, 0
      %p206 = por %p204, %p205
      %p207 = scmp.ne.s32.totalorder %s195, %s196
      %p208 = scmp.eq.s32.totalorder %s45, 1
      %p209 = por %p207, %p208
      %p211 = scmp.ne.s32.totalorder %s196, %s210
      %p212 = scmp.eq.s32.totalorder %s45, 0
      %p213 = por %p211, %p212
      %s215 = sadd.s32 %s214, 1
      %p218 = scmp.eq.s32.totalorder %s39, 1
      %p219 = scmp.ne.s32.totalorder %s214, %s216
      %p220 = scmp.eq.s32.totalorder %s39, 0
      %p221 = por %p219, %p220
      %p222 = scmp.ne.s32.totalorder %s214, %s216
      %p223 = scmp.eq.s32.totalorder %s44, 1
      %p224 = por %p222, %p223
      %p225 = scmp.ne.s32.totalorder %s216, %s217
      %p226 = scmp.eq.s32.totalorder %s44, 0
      %p227 = por %p225, %p226
      %p228 = scmp.ne.s32.totalorder %s216, %s217
      %p229 = scmp.eq.s32.totalorder %s45, 1
      %p230 = por %p228, %p229
      %p232 = scmp.ne.s32.totalorder %s217, %s231
      %p233 = scmp.eq.s32.totalorder %s45, 0
      %p234 = por %p232, %p233
      %s236 = sadd.s32 %s235, 1
      %p239 = scmp.eq.s32.totalorder %s39, 1
      %p240 = scmp.ne.s32.totalorder %s235, %s237
      %p241 = scmp.eq.s32.totalorder %s39, 0
      %p242 = por %p240, %p241
      %p243 = scmp.ne.s32.totalorder %s235, %s237
      %p244 = scmp.eq.s32.totalorder %s44, 1
      %p245 = por %p243, %p244
      %p246 = scmp.ne.s32.totalorder %s237, %s238
      %p247 = scmp.eq.s32.totalorder %s44, 0
      %p248 = por %p246, %p247
      %p249 = scmp.ne.s32.totalorder %s237, %s238
      %p250 = scmp.eq.s32.totalorder %s45, 1
      %p251 = por %p249, %p250
      %p253 = scmp.ne.s32.totalorder %s238, %s252
      %p254 = scmp.eq.s32.totalorder %s45, 0
      %p255 = por %p253, %p254
      %s257 = sadd.s32 %s256, 1
      %p260 = scmp.eq.s32.totalorder %s39, 1
      %p261 = scmp.ne.s32.totalorder %s256, %s258
      %p262 = scmp.eq.s32.totalorder %s39, 0
      %p263 = por %p261, %p262
      %p264 = scmp.ne.s32.totalorder %s256, %s258
      %p265 = scmp.eq.s32.totalorder %s44, 1
      %p266 = por %p264, %p265
      %p267 = scmp.ne.s32.totalorder %s258, %s259
      %p268 = scmp.eq.s32.totalorder %s44, 0
      %p269 = por %p267, %p268
      %p270 = scmp.ne.s32.totalorder %s258, %s259
      %p271 = scmp.eq.s32.totalorder %s45, 1
      %p272 = por %p270, %p271
      %p274 = scmp.ne.s32.totalorder %s259, %s273
      %p275 = scmp.eq.s32.totalorder %s45, 0
      %p276 = por %p274, %p275
      %s278 = sadd.s32 %s277, 1
      %p281 = scmp.eq.s32.totalorder %s39, 1
      %p282 = scmp.ne.s32.totalorder %s277, %s279
      %p283 = scmp.eq.s32.totalorder %s39, 0
      %p284 = por %p282, %p283
      %p285 = scmp.ne.s32.totalorder %s277, %s279
      %p286 = scmp.eq.s32.totalorder %s44, 1
      %p287 = por %p285, %p286
      %p288 = scmp.ne.s32.totalorder %s279, %s280
      %p289 = scmp.eq.s32.totalorder %s44, 0
      %p290 = por %p288, %p289
      %p291 = scmp.ne.s32.totalorder %s279, %s280
      %p292 = scmp.eq.s32.totalorder %s45, 1
      %p293 = por %p291, %p292
      %p295 = scmp.ne.s32.totalorder %s280, %s294
      %p296 = scmp.eq.s32.totalorder %s45, 0
      %p297 = por %p295, %p296
      %s299 = sadd.s32 %s298, 1
      %p302 = scmp.eq.s32.totalorder %s39, 1
      %p303 = scmp.ne.s32.totalorder %s298, %s300
      %p304 = scmp.eq.s32.totalorder %s39, 0
      %p305 = por %p303, %p304
      %p306 = scmp.ne.s32.totalorder %s298, %s300
      %p307 = scmp.eq.s32.totalorder %s44, 1
      %p308 = por %p306, %p307
      %p309 = scmp.ne.s32.totalorder %s300, %s301
      %p310 = scmp.eq.s32.totalorder %s44, 0
      %p311 = por %p309, %p310
      %p312 = scmp.ne.s32.totalorder %s300, %s301
      %p313 = scmp.eq.s32.totalorder %s45, 1
      %p314 = por %p312, %p313
      %p316 = scmp.ne.s32.totalorder %s301, %s315
      %p317 = scmp.eq.s32.totalorder %s45, 0
      %p318 = por %p316, %p317
      %s320 = sadd.s32 %s319, 1
      %p323 = scmp.eq.s32.totalorder %s39, 1
      %p324 = scmp.ne.s32.totalorder %s319, %s321
      %p325 = scmp.eq.s32.totalorder %s39, 0
      %p326 = por %p324, %p325
      %p327 = scmp.ne.s32.totalorder %s319, %s321
      %p328 = scmp.eq.s32.totalorder %s44, 1
      %p329 = por %p327, %p328
      %p330 = scmp.ne.s32.totalorder %s321, %s322
      %p331 = scmp.eq.s32.totalorder %s44, 0
      %p332 = por %p330, %p331
      %p333 = scmp.ne.s32.totalorder %s321, %s322
      %p334 = scmp.eq.s32.totalorder %s45, 1
      %p335 = por %p333, %p334
      %p337 = scmp.ne.s32.totalorder %s322, %s336
      %p338 = scmp.eq.s32.totalorder %s45, 0
      %p339 = por %p337, %p338
      %s341 = sadd.s32 %s340, 1
      %p344 = scmp.eq.s32.totalorder %s39, 1
      %p345 = scmp.ne.s32.totalorder %s340, %s342
      %p346 = scmp.eq.s32.totalorder %s39, 0
      %p347 = por %p345, %p346
      %p348 = scmp.ne.s32.totalorder %s340, %s342
      %p349 = scmp.eq.s32.totalorder %s44, 1
      %p350 = por %p348, %p349
      %p351 = scmp.ne.s32.totalorder %s342, %s343
      %p352 = scmp.eq.s32.totalorder %s44, 0
      %p353 = por %p351, %p352
      %p354 = scmp.ne.s32.totalorder %s342, %s343
      %p355 = scmp.eq.s32.totalorder %s45, 1
      %p356 = por %p354, %p355
      %p358 = scmp.ne.s32.totalorder %s343, %s357
      %p359 = scmp.eq.s32.totalorder %s45, 0
      %p360 = por %p358, %p359
      %s362 = sadd.s32 %s361, 1
      %p365 = scmp.eq.s32.totalorder %s39, 1
      %p366 = scmp.ne.s32.totalorder %s361, %s363
      %p367 = scmp.eq.s32.totalorder %s39, 0
      %p368 = por %p366, %p367
      %p369 = scmp.ne.s32.totalorder %s361, %s363
      %p370 = scmp.eq.s32.totalorder %s44, 1
      %p371 = por %p369, %p370
      %p372 = scmp.ne.s32.totalorder %s363, %s364
      %p373 = scmp.eq.s32.totalorder %s44, 0
      %p374 = por %p372, %p373
      %p375 = scmp.ne.s32.totalorder %s363, %s364
      %p376 = scmp.eq.s32.totalorder %s45, 1
      %p377 = por %p375, %p376
      %p379 = scmp.ne.s32.totalorder %s364, %s378
      %p380 = scmp.eq.s32.totalorder %s45, 0
      %p381 = por %p379, %p380
      %s383 = sadd.s32 %s382, 1
      %p386 = scmp.eq.s32.totalorder %s39, 1
      %p387 = scmp.ne.s32.totalorder %s382, %s384
      %p388 = scmp.eq.s32.totalorder %s39, 0
      %p389 = por %p387, %p388
      %p390 = scmp.ne.s32.totalorder %s382, %s384
      %p391 = scmp.eq.s32.totalorder %s44, 1
      %p392 = por %p390, %p391
      %p393 = scmp.ne.s32.totalorder %s384, %s385
      %p394 = scmp.eq.s32.totalorder %s44, 0
      %p395 = por %p393, %p394
      %p396 = scmp.ne.s32.totalorder %s384, %s385
      %p397 = scmp.eq.s32.totalorder %s45, 1
      %p398 = por %p396, %p397
      %p400 = scmp.ne.s32.totalorder %s385, %s399
      %p401 = scmp.eq.s32.totalorder %s45, 0
      %p402 = por %p400, %p401
      %s404 = sadd.s32 %s403, 1
      %p407 = scmp.eq.s32.totalorder %s39, 1
      %p408 = scmp.ne.s32.totalorder %s403, %s405
      %p409 = scmp.eq.s32.totalorder %s39, 0
      %p410 = por %p408, %p409
      %p411 = scmp.ne.s32.totalorder %s403, %s405
      %p412 = scmp.eq.s32.totalorder %s44, 1
      %p413 = por %p411, %p412
      %p414 = scmp.ne.s32.totalorder %s405, %s406
      %p415 = scmp.eq.s32.totalorder %s44, 0
      %p416 = por %p414, %p415
      %p417 = scmp.ne.s32.totalorder %s405, %s406
      %p418 = scmp.eq.s32.totalorder %s45, 1
      %p419 = por %p417, %p418
      %p421 = scmp.ne.s32.totalorder %s406, %s420
      %p422 = scmp.eq.s32.totalorder %s45, 0
      %p423 = por %p421, %p422
      %s425 = sadd.s32 %s424, 1
      %p428 = scmp.eq.s32.totalorder %s39, 1
      %p429 = scmp.ne.s32.totalorder %s424, %s426
      %p430 = scmp.eq.s32.totalorder %s39, 0
      %p431 = por %p429, %p430
      %p432 = scmp.ne.s32.totalorder %s424, %s426
      %p433 = scmp.eq.s32.totalorder %s44, 1
      %p434 = por %p432, %p433
      %p435 = scmp.ne.s32.totalorder %s426, %s427
      %p436 = scmp.eq.s32.totalorder %s44, 0
      %p437 = por %p435, %p436
      %p438 = scmp.ne.s32.totalorder %s426, %s427
      %p439 = scmp.eq.s32.totalorder %s45, 1
      %p440 = por %p438, %p439
      %p442 = scmp.ne.s32.totalorder %s427, %s441
      %p443 = scmp.eq.s32.totalorder %s45, 0
      %p444 = por %p442, %p443
      %s446 = sadd.s32 %s445, 1
      %p449 = scmp.eq.s32.totalorder %s39, 1
      %p450 = scmp.ne.s32.totalorder %s445, %s447
      %p451 = scmp.eq.s32.totalorder %s39, 0
      %p452 = por %p450, %p451
      %p453 = scmp.ne.s32.totalorder %s445, %s447
      %p454 = scmp.eq.s32.totalorder %s44, 1
      %p455 = por %p453, %p454
      %p456 = scmp.ne.s32.totalorder %s447, %s448
      %p457 = scmp.eq.s32.totalorder %s44, 0
      %p458 = por %p456, %p457
      %p459 = scmp.ne.s32.totalorder %s447, %s448
      %p460 = scmp.eq.s32.totalorder %s45, 1
      %p461 = por %p459, %p460
      %p463 = scmp.ne.s32.totalorder %s448, %s462
      %p464 = scmp.eq.s32.totalorder %s45, 0
      %p465 = por %p463, %p464
      %s467 = sadd.s32 %s466, 1
      %p470 = scmp.eq.s32.totalorder %s39, 1
      %p471 = scmp.ne.s32.totalorder %s466, %s468
      %p472 = scmp.eq.s32.totalorder %s39, 0
      %p473 = por %p471, %p472
      %p474 = scmp.ne.s32.totalorder %s466, %s468
      %p475 = scmp.eq.s32.totalorder %s44, 1
      %p476 = por %p474, %p475
      %p477 = scmp.ne.s32.totalorder %s468, %s469
      %p478 = scmp.eq.s32.totalorder %s44, 0
      %p479 = por %p477, %p478
      %p480 = scmp.ne.s32.totalorder %s468, %s469
      %p481 = scmp.eq.s32.totalorder %s45, 1
      %p482 = por %p480, %p481
      %p484 = scmp.ne.s32.totalorder %s469, %s483
      %p485 = scmp.eq.s32.totalorder %s45, 0
      %p486 = por %p484, %p485
      %s488 = sadd.s32 %s487, 1
      %p491 = scmp.eq.s32.totalorder %s39, 1
      %p492 = scmp.ne.s32.totalorder %s487, %s489
      %p493 = scmp.eq.s32.totalorder %s39, 0
      %p494 = por %p492, %p493
      %p495 = scmp.ne.s32.totalorder %s487, %s489
      %p496 = scmp.eq.s32.totalorder %s44, 1
      %p497 = por %p495, %p496
      %p498 = scmp.ne.s32.totalorder %s489, %s490
      %p499 = scmp.eq.s32.totalorder %s44, 0
      %p500 = por %p498, %p499
      %p501 = scmp.ne.s32.totalorder %s489, %s490
      %p502 = scmp.eq.s32.totalorder %s45, 1
      %p503 = por %p501, %p502
      %p505 = scmp.ne.s32.totalorder %s490, %s504
      %p506 = scmp.eq.s32.totalorder %s45, 0
      %p507 = por %p505, %p506
      %s509 = sadd.s32 %s508, 1
      %p512 = scmp.eq.s32.totalorder %s39, 1
      %p513 = scmp.ne.s32.totalorder %s508, %s510
      %p514 = scmp.eq.s32.totalorder %s39, 0
      %p515 = por %p513, %p514
      %p516 = scmp.ne.s32.totalorder %s508, %s510
      %p517 = scmp.eq.s32.totalorder %s44, 1
      %p518 = por %p516, %p517
      %p519 = scmp.ne.s32.totalorder %s510, %s511
      %p520 = scmp.eq.s32.totalorder %s44, 0
      %p521 = por %p519, %p520
      %p522 = scmp.ne.s32.totalorder %s510, %s511
      %p523 = scmp.eq.s32.totalorder %s45, 1
      %p524 = por %p522, %p523
      %p526 = scmp.ne.s32.totalorder %s511, %s525
      %p527 = scmp.eq.s32.totalorder %s45, 0
      %p528 = por %p526, %p527
      %s530 = sadd.s32 %s529, 1
      %p533 = scmp.eq.s32.totalorder %s39, 1
      %p534 = scmp.ne.s32.totalorder %s529, %s531
      %p535 = scmp.eq.s32.totalorder %s39, 0
      %p536 = por %p534, %p535
      %p537 = scmp.ne.s32.totalorder %s529, %s531
      %p538 = scmp.eq.s32.totalorder %s44, 1
      %p539 = por %p537, %p538
      %p540 = scmp.ne.s32.totalorder %s531, %s532
      %p541 = scmp.eq.s32.totalorder %s44, 0
      %p542 = por %p540, %p541
      %p543 = scmp.ne.s32.totalorder %s531, %s532
      %p544 = scmp.eq.s32.totalorder %s45, 1
      %p545 = por %p543, %p544
      %p547 = scmp.ne.s32.totalorder %s532, %s546
      %p548 = scmp.eq.s32.totalorder %s45, 0
      %p549 = por %p547, %p548
      %s551 = sadd.s32 %s550, 1
      %p554 = scmp.eq.s32.totalorder %s39, 1
      %p555 = scmp.ne.s32.totalorder %s550, %s552
      %p556 = scmp.eq.s32.totalorder %s39, 0
      %p557 = por %p555, %p556
      %p558 = scmp.ne.s32.totalorder %s550, %s552
      %p559 = scmp.eq.s32.totalorder %s44, 1
      %p560 = por %p558, %p559
      %p561 = scmp.ne.s32.totalorder %s552, %s553
      %p562 = scmp.eq.s32.totalorder %s44, 0
      %p563 = por %p561, %p562
      %p564 = scmp.ne.s32.totalorder %s552, %s553
      %p565 = scmp.eq.s32.totalorder %s45, 1
      %p566 = por %p564, %p565
      %p568 = scmp.ne.s32.totalorder %s553, %s567
      %p569 = scmp.eq.s32.totalorder %s45, 0
      %p570 = por %p568, %p569
      %s571 = ssub.s32 %s39, %s46
      %p572 = scmp.eq.s32.totalorder %s571, 0
      %s574 = sadd.s32 %s573, 1
      %s575 = scalar_select %p572, %s573, %s574
      %p578 = pneg %p572
      %p579 = scmp.eq.s32.totalorder %s39, 1
      %p580 = por %p578, %p579
      %p581 = scmp.ne.s32.totalorder %s573, %s576
      %p582 = scmp.eq.s32.totalorder %s39, 0
      %p583 = por %p581, %p582
      %p584 = scmp.ne.s32.totalorder %s573, %s576
      %p585 = scmp.eq.s32.totalorder %s44, 1
      %p586 = por %p584, %p585
      %p587 = scmp.ne.s32.totalorder %s576, %s577
      %p588 = scmp.eq.s32.totalorder %s44, 0
      %p589 = por %p587, %p588
      %p590 = scmp.ne.s32.totalorder %s576, %s577
      %p591 = scmp.eq.s32.totalorder %s45, 1
      %p592 = por %p590, %p591
      %p594 = scmp.ne.s32.totalorder %s577, %s593
      %p595 = scmp.eq.s32.totalorder %s45, 0
      %p596 = por %p594, %p595
      %p597 = scmp.le.s32.totalorder 1, %s39
      %p598 = scmp.lt.s32.totalorder %s39, 3
      %p599 = pnand %p597, %p598
      %p600 = pneg %p599
      // Predicated region
      $region9: #{decoders_forward.2} parent=5 // pred_check
        _
      $region10: #{decoders_forward.2} parent=5 // pred_check_branch
        %602 = sbr.rel (%p599) target = $region12
      $region11: #{decoders_forward.2} parent=5 // pred_region
        %s603 = ssub.s32 %s39, 1
        // Predicated region
        $region13: #{decoders_forward.2} parent=11 // pred_check
          %p604 = pneg %p164
        $region14: #{decoders_forward.2} parent=11 // pred_check_branch
          %606 = sbr.rel (%p604) target = $region16
        $region15: #{decoders_forward.2} parent=11 // pred_region
          %s608 = ssub.s32 3072, 3072
          %609 = vsyncadd [#allocation3], %s608
          %s610 = sshll.u32 [#allocation2], 4
          %s611 = int_to_ptr.vmem [resolvable:$true] %s610
          %616 = dma.hbm_to_vmem [thread:$0]  %s4, 3072, %s611, [#allocation3], 192, 192, 12
        $region16: #{decoders_forward.2} parent=11 // pred_fallthru
          _
        // Predicated region
        $region17: #{decoders_forward.2} parent=11 // pred_check
          %p617 = pneg %p185
        $region18: #{decoders_forward.2} parent=11 // pred_check_branch
          %619 = sbr.rel (%p617) target = $region20
        $region19: #{decoders_forward.2} parent=11 // pred_region
          _
        $region20: #{decoders_forward.2} parent=11 // pred_fallthru
          _
        // Predicated region
        $region21: #{decoders_forward.2} parent=11 // pred_check
          %p620 = pneg %p206
        $region22: #{decoders_forward.2} parent=11 // pred_check_branch
          %622 = sbr.rel (%p620) target = $region24
        $region23: #{decoders_forward.2} parent=11 // pred_region
          _
        $region24: #{decoders_forward.2} parent=11 // pred_fallthru
          _
        // Predicated region
        $region25: #{decoders_forward.2} parent=11 // pred_check
          %p623 = pneg %p227
        $region26: #{decoders_forward.2} parent=11 // pred_check_branch
          %625 = sbr.rel (%p623) target = $region28
        $region27: #{decoders_forward.2} parent=11 // pred_region
          %s627 = ssub.s32 16, 16
          %628 = vsyncadd [#allocation5], %s627
          %s630 = sshll.u32 [#allocation4], 4
          %s631 = int_to_ptr.vmem [resolvable:$true] %s630
          %633 = dma.hbm_to_vmem [thread:$0]  %s7, 16, %s631, [#allocation5]
        $region28: #{decoders_forward.2} parent=11 // pred_fallthru
          _
        // Predicated region
        $region29: #{decoders_forward.2} parent=11 // pred_check
          %p634 = pneg %p248
        $region30: #{decoders_forward.2} parent=11 // pred_check_branch
          %636 = sbr.rel (%p634) target = $region32
        $region31: #{decoders_forward.2} parent=11 // pred_region
          %s638 = ssub.s32 16, 16
          %639 = vsyncadd [#allocation5], %s638
          %s641 = sshll.u32 [#allocation6], 4
          %s642 = int_to_ptr.vmem [resolvable:$true] %s641
          %644 = dma.hbm_to_vmem [thread:$0]  %s8, 16, %s642, [#allocation5]
        $region32: #{decoders_forward.2} parent=11 // pred_fallthru
          _
        // Predicated region
        $region33: #{decoders_forward.2} parent=11 // pred_check
          %p645 = pneg %p269
        $region34: #{decoders_forward.2} parent=11 // pred_check_branch
          %647 = sbr.rel (%p645) target = $region36
        $region35: #{decoders_forward.2} parent=11 // pred_region
          %s649 = ssub.s32 16, 16
          %650 = vsyncadd [#allocation8], %s649
          %s652 = sshll.u32 [#allocation7], 4
          %s653 = int_to_ptr.vmem [resolvable:$true] %s652
          %655 = dma.hbm_to_vmem [thread:$0]  %s9, 16, %s653, [#allocation8]
        $region36: #{decoders_forward.2} parent=11 // pred_fallthru
          _
        // Predicated region
        $region37: #{decoders_forward.2} parent=11 // pred_check
          %p656 = pneg %p290
        $region38: #{decoders_forward.2} parent=11 // pred_check_branch
          %658 = sbr.rel (%p656) target = $region40
        $region39: #{decoders_forward.2} parent=11 // pred_region
          %s660 = ssub.s32 1024, 1024
          %661 = vsyncadd [#allocation8], %s660
          %s662 = sshll.u32 [#allocation9], 4
          %s663 = int_to_ptr.vmem [resolvable:$true] %s662
          %668 = dma.hbm_to_vmem [thread:$0]  %s10, 1024, %s663, [#allocation8], 64, 64, 4
        $region40: #{decoders_forward.2} parent=11 // pred_fallthru
          _
        // Predicated region
        $region41: #{decoders_forward.2} parent=11 // pred_check
          %p669 = pneg %p311
        $region42: #{decoders_forward.2} parent=11 // pred_check_branch
          %671 = sbr.rel (%p669) target = $region44
        $region43: #{decoders_forward.2} parent=11 // pred_region
          %s673 = ssub.s32 16, 16
          %674 = vsyncadd [#allocation11], %s673
          %s676 = sshll.u32 [#allocation10], 4
          %s677 = int_to_ptr.vmem [resolvable:$true] %s676
          %679 = dma.hbm_to_vmem [thread:$0]  %s11, 16, %s677, [#allocation11]
        $region44: #{decoders_forward.2} parent=11 // pred_fallthru
          _
        // Predicated region
        $region45: #{decoders_forward.2} parent=11 // pred_check
          %p680 = pneg %p332
        $region46: #{decoders_forward.2} parent=11 // pred_check_branch
          %682 = sbr.rel (%p680) target = $region48
        $region47: #{decoders_forward.2} parent=11 // pred_region
          %s684 = ssub.s32 2048, 2048
          %685 = vsyncadd [#allocation11], %s684
          %s686 = sshll.u32 [#allocation12], 4
          %s687 = int_to_ptr.vmem [resolvable:$true] %s686
          %692 = dma.hbm_to_vmem [thread:$0]  %s12, 2048, %s687, [#allocation11], 128, 128, 8
        $region48: #{decoders_forward.2} parent=11 // pred_fallthru
          _
        // Predicated region
        $region49: #{decoders_forward.2} parent=11 // pred_check
          %p693 = pneg %p353
        $region50: #{decoders_forward.2} parent=11 // pred_check_branch
          %695 = sbr.rel (%p693) target = $region52
        $region51: #{decoders_forward.2} parent=11 // pred_region
          _
        $region52: #{decoders_forward.2} parent=11 // pred_fallthru
          _
        // Predicated region
        $region53: #{decoders_forward.2} parent=11 // pred_check
          %p696 = pneg %p374
        $region54: #{decoders_forward.2} parent=11 // pred_check_branch
          %698 = sbr.rel (%p696) target = $region56
        $region55: #{decoders_forward.2} parent=11 // pred_region
          %s700 = ssub.s32 1024, 1024
          %701 = vsyncadd [#allocation14], %s700
          %s702 = sshll.u32 [#allocation13], 4
          %s703 = int_to_ptr.vmem [resolvable:$true] %s702
          %708 = dma.hbm_to_vmem [thread:$0]  %s14, 1024, %s703, [#allocation14], 64, 64, 4
        $region56: #{decoders_forward.2} parent=11 // pred_fallthru
          _
        // Predicated region
        $region57: #{decoders_forward.2} parent=11 // pred_check
          %p709 = pneg %p395
        $region58: #{decoders_forward.2} parent=11 // pred_check_branch
          %711 = sbr.rel (%p709) target = $region60
        $region59: #{decoders_forward.2} parent=11 // pred_region
          %s713 = ssub.s32 16, 16
          %714 = vsyncadd [#allocation14], %s713
          %s716 = sshll.u32 [#allocation15], 4
          %s717 = int_to_ptr.vmem [resolvable:$true] %s716
          %719 = dma.hbm_to_vmem [thread:$0]  %s15, 16, %s717, [#allocation14]
        $region60: #{decoders_forward.2} parent=11 // pred_fallthru
          _
        // Predicated region
        $region61: #{decoders_forward.2} parent=11 // pred_check
          %p720 = pneg %p416
        $region62: #{decoders_forward.2} parent=11 // pred_check_branch
          %722 = sbr.rel (%p720) target = $region64
        $region63: #{decoders_forward.2} parent=11 // pred_region
          %s724 = ssub.s32 16, 16
          %725 = vsyncadd [#allocation17], %s724
          %s727 = sshll.u32 [#allocation16], 4
          %s728 = int_to_ptr.vmem [resolvable:$true] %s727
          %730 = dma.hbm_to_vmem [thread:$0]  %s16, 16, %s728, [#allocation17]
        $region64: #{decoders_forward.2} parent=11 // pred_fallthru
          _
        // Predicated region
        $region65: #{decoders_forward.2} parent=11 // pred_check
          %p731 = pneg %p437
        $region66: #{decoders_forward.2} parent=11 // pred_check_branch
          %733 = sbr.rel (%p731) target = $region68
        $region67: #{decoders_forward.2} parent=11 // pred_region
          %s735 = ssub.s32 16, 16
          %736 = vsyncadd [#allocation17], %s735
          %s738 = sshll.u32 [#allocation18], 4
          %s739 = int_to_ptr.vmem [resolvable:$true] %s738
          %741 = dma.hbm_to_vmem [thread:$0]  %s17, 16, %s739, [#allocation17]
        $region68: #{decoders_forward.2} parent=11 // pred_fallthru
          _
        // Predicated region
        $region69: #{decoders_forward.2} parent=11 // pred_check
          %p742 = pneg %p458
        $region70: #{decoders_forward.2} parent=11 // pred_check_branch
          %744 = sbr.rel (%p742) target = $region72
        $region71: #{decoders_forward.2} parent=11 // pred_region
          %s746 = ssub.s32 2048, 2048
          %747 = vsyncadd [#allocation20], %s746
          %s748 = sshll.u32 [#allocation19], 4
          %s749 = int_to_ptr.vmem [resolvable:$true] %s748
          %754 = dma.hbm_to_vmem [thread:$0]  %s18, 2048, %s749, [#allocation20], 128, 128, 8
        $region72: #{decoders_forward.2} parent=11 // pred_fallthru
          _
        // Predicated region
        $region73: #{decoders_forward.2} parent=11 // pred_check
          %p755 = pneg %p479
        $region74: #{decoders_forward.2} parent=11 // pred_check_branch
          %757 = sbr.rel (%p755) target = $region76
        $region75: #{decoders_forward.2} parent=11 // pred_region
          _
        $region76: #{decoders_forward.2} parent=11 // pred_fallthru
          _
        // Predicated region
        $region77: #{decoders_forward.2} parent=11 // pred_check
          %p758 = pneg %p500
        $region78: #{decoders_forward.2} parent=11 // pred_check_branch
          %760 = sbr.rel (%p758) target = $region80
        $region79: #{decoders_forward.2} parent=11 // pred_region
          %s762 = ssub.s32 2048, 2048
          %763 = vsyncadd [#allocation20], %s762
          %s764 = sshll.u32 [#allocation21], 4
          %s765 = int_to_ptr.vmem [resolvable:$true] %s764
          %770 = dma.hbm_to_vmem [thread:$0]  %s20, 2048, %s765, [#allocation20], 64, 64, 4
        $region80: #{decoders_forward.2} parent=11 // pred_fallthru
          _
        // Predicated region
        $region81: #{decoders_forward.2} parent=11 // pred_check
          %p771 = pneg %p521
        $region82: #{decoders_forward.2} parent=11 // pred_check_branch
          %773 = sbr.rel (%p771) target = $region84
        $region83: #{decoders_forward.2} parent=11 // pred_region
          %s775 = ssub.s32 16, 16
          %776 = vsyncadd [#allocation23], %s775
          %s778 = sshll.u32 [#allocation22], 4
          %s779 = int_to_ptr.vmem [resolvable:$true] %s778
          %781 = dma.hbm_to_vmem [thread:$0]  %s21, 16, %s779, [#allocation23]
        $region84: #{decoders_forward.2} parent=11 // pred_fallthru
          _
        // Predicated region
        $region85: #{decoders_forward.2} parent=11 // pred_check
          %p782 = pneg %p542
        $region86: #{decoders_forward.2} parent=11 // pred_check_branch
          %784 = sbr.rel (%p782) target = $region88
        $region87: #{decoders_forward.2} parent=11 // pred_region
          %s786 = ssub.s32 16, 16
          %787 = vsyncadd [#allocation23], %s786
          %s789 = sshll.u32 [#allocation24], 4
          %s790 = int_to_ptr.vmem [resolvable:$true] %s789
          %792 = dma.hbm_to_vmem [thread:$0]  %s22, 16, %s790, [#allocation23]
        $region88: #{decoders_forward.2} parent=11 // pred_fallthru
          _
        // Predicated region
        $region89: #{decoders_forward.2} parent=11 // pred_check
          %p793 = pneg %p563
        $region90: #{decoders_forward.2} parent=11 // pred_check_branch
          %795 = sbr.rel (%p793) target = $region92
        $region91: #{decoders_forward.2} parent=11 // pred_region
          %s797 = ssub.s32 16, 16
          %798 = vsyncadd [#allocation26], %s797
          %s800 = sshll.u32 [#allocation25], 4
          %s801 = int_to_ptr.vmem [resolvable:$true] %s800
          %803 = dma.hbm_to_vmem [thread:$0]  %s23, 16, %s801, [#allocation26]
        $region92: #{decoders_forward.2} parent=11 // pred_fallthru
          _
      $region12: #{decoders_forward.2} parent=5 // pred_fallthru
        _
      %p804 = scmp.lt.s32.totalorder %s39, 2
      // Predicated region
      $region93: #{decoders_forward.2} parent=5 // pred_check
        %p805 = pneg %p804
      $region94: #{decoders_forward.2} parent=5 // pred_check_branch
        %807 = sbr.rel (%p805) target = $region96
      $region95: #{decoders_forward.2} parent=5 // pred_region
        // Predicated region
        $region97: #{decoders_forward.2} parent=95 // pred_check
          %p808 = pneg %p59
        $region98: #{decoders_forward.2} parent=95 // pred_check_branch
          %810 = sbr.rel (%p808) target = $region100
        $region99: #{decoders_forward.2} parent=95 // pred_region
          %p811 = scmp.lt.s32.totalorder %s39, 1
          %s812 = scalar_select %p811, %s39, 1
          %s813 = smul.addr %s812, 8
          %s814 = scalar_lea.vmem %s0, %s813
        $region100: #{decoders_forward.2} parent=95 // pred_fallthru
          _
        // Predicated region
        $region101: #{decoders_forward.2} parent=95 // pred_check
          %p815 = pneg %p85
        $region102: #{decoders_forward.2} parent=95 // pred_check_branch
          %817 = sbr.rel (%p815) target = $region104
        $region103: #{decoders_forward.2} parent=95 // pred_region
          %p818 = scmp.lt.s32.totalorder %s39, 1
          %s819 = scalar_select %p818, %s39, 1
          %s820 = smul.addr %s819, 2
          %s821 = smul.addr %s820, 8
          %s822 = scalar_lea.vmem %s1, %s821
        $region104: #{decoders_forward.2} parent=95 // pred_fallthru
          _
        // Predicated region
        $region105: #{decoders_forward.2} parent=95 // pred_check
          %p823 = pneg %p111
        $region106: #{decoders_forward.2} parent=95 // pred_check_branch
          %825 = sbr.rel (%p823) target = $region108
        $region107: #{decoders_forward.2} parent=95 // pred_region
          %p826 = scmp.lt.s32.totalorder %s39, 1
          %s827 = scalar_select %p826, %s39, 1
          %s828 = smul.addr %s827, 4
          %s829 = scalar_lea.vmem %s2, %s828
        $region108: #{decoders_forward.2} parent=95 // pred_fallthru
          _
        // Predicated region
        $region109: #{decoders_forward.2} parent=95 // pred_check
          %p830 = pneg %p137
        $region110: #{decoders_forward.2} parent=95 // pred_check_branch
          %832 = sbr.rel (%p830) target = $region112
        $region111: #{decoders_forward.2} parent=95 // pred_region
          %p833 = scmp.lt.s32.totalorder %s39, 1
          %s834 = scalar_select %p833, %s39, 1
          %s835 = smul.addr %s834, 4
          %s836 = scalar_lea.vmem %s3, %s835
        $region112: #{decoders_forward.2} parent=95 // pred_fallthru
          _
      $region96: #{decoders_forward.2} parent=5 // pred_fallthru
        _
      %p837 = scmp.le.s32.totalorder 1, %s39
      %p838 = scmp.lt.s32.totalorder %s39, 3
      %p839 = pnand %p837, %p838
      %p840 = pneg %p839
      // Predicated region
      $region113: #{decoders_forward.2} parent=5 // pred_check
        _
      $region114: #{decoders_forward.2} parent=5 // pred_check_branch
        %842 = sbr.rel (%p839) target = $region116
      $region115: #{decoders_forward.2} parent=5 // pred_region
        %s843 = ssub.s32 %s39, 1
        // Predicated region
        $region117: #{decoders_forward.2} parent=115 // pred_check
          %p844 = pneg %p164
        $region118: #{decoders_forward.2} parent=115 // pred_check_branch
          %846 = sbr.rel (%p844) target = $region120
        $region119: #{decoders_forward.2} parent=115 // pred_region
          %847 = dma.done [#allocation3], 3072
        $region120: #{decoders_forward.2} parent=115 // pred_fallthru
          _
        // Predicated region
        $region121: #{decoders_forward.2} parent=115 // pred_check
          %p848 = pneg %p227
        $region122: #{decoders_forward.2} parent=115 // pred_check_branch
          %850 = sbr.rel (%p848) target = $region124
        $region123: #{decoders_forward.2} parent=115 // pred_region
          %851 = dma.done [#allocation5], 16
        $region124: #{decoders_forward.2} parent=115 // pred_fallthru
          _
        // Predicated region
        $region125: #{decoders_forward.2} parent=115 // pred_check
          %p852 = pneg %p248
        $region126: #{decoders_forward.2} parent=115 // pred_check_branch
          %854 = sbr.rel (%p852) target = $region128
        $region127: #{decoders_forward.2} parent=115 // pred_region
          %855 = dma.done [#allocation5], 16
        $region128: #{decoders_forward.2} parent=115 // pred_fallthru
          _
        // Predicated region
        $region129: #{decoders_forward.2} parent=115 // pred_check
          %p856 = pneg %p269
        $region130: #{decoders_forward.2} parent=115 // pred_check_branch
          %858 = sbr.rel (%p856) target = $region132
        $region131: #{decoders_forward.2} parent=115 // pred_region
          %859 = dma.done [#allocation8], 16
        $region132: #{decoders_forward.2} parent=115 // pred_fallthru
          _
        // Predicated region
        $region133: #{decoders_forward.2} parent=115 // pred_check
          %p860 = pneg %p290
        $region134: #{decoders_forward.2} parent=115 // pred_check_branch
          %862 = sbr.rel (%p860) target = $region136
        $region135: #{decoders_forward.2} parent=115 // pred_region
          %863 = dma.done [#allocation8], 1024
        $region136: #{decoders_forward.2} parent=115 // pred_fallthru
          _
        // Predicated region
        $region137: #{decoders_forward.2} parent=115 // pred_check
          %p864 = pneg %p311
        $region138: #{decoders_forward.2} parent=115 // pred_check_branch
          %866 = sbr.rel (%p864) target = $region140
        $region139: #{decoders_forward.2} parent=115 // pred_region
          %867 = dma.done [#allocation11], 16
        $region140: #{decoders_forward.2} parent=115 // pred_fallthru
          _
        // Predicated region
        $region141: #{decoders_forward.2} parent=115 // pred_check
          %p868 = pneg %p332
        $region142: #{decoders_forward.2} parent=115 // pred_check_branch
          %870 = sbr.rel (%p868) target = $region144
        $region143: #{decoders_forward.2} parent=115 // pred_region
          %871 = dma.done [#allocation11], 2048
        $region144: #{decoders_forward.2} parent=115 // pred_fallthru
          _
        // Predicated region
        $region145: #{decoders_forward.2} parent=115 // pred_check
          %p872 = pneg %p374
        $region146: #{decoders_forward.2} parent=115 // pred_check_branch
          %874 = sbr.rel (%p872) target = $region148
        $region147: #{decoders_forward.2} parent=115 // pred_region
          %875 = dma.done [#allocation14], 1024
        $region148: #{decoders_forward.2} parent=115 // pred_fallthru
          _
        // Predicated region
        $region149: #{decoders_forward.2} parent=115 // pred_check
          %p876 = pneg %p395
        $region150: #{decoders_forward.2} parent=115 // pred_check_branch
          %878 = sbr.rel (%p876) target = $region152
        $region151: #{decoders_forward.2} parent=115 // pred_region
          %879 = dma.done [#allocation14], 16
        $region152: #{decoders_forward.2} parent=115 // pred_fallthru
          _
        // Predicated region
        $region153: #{decoders_forward.2} parent=115 // pred_check
          %p880 = pneg %p416
        $region154: #{decoders_forward.2} parent=115 // pred_check_branch
          %882 = sbr.rel (%p880) target = $region156
        $region155: #{decoders_forward.2} parent=115 // pred_region
          %883 = dma.done [#allocation17], 16
        $region156: #{decoders_forward.2} parent=115 // pred_fallthru
          _
        // Predicated region
        $region157: #{decoders_forward.2} parent=115 // pred_check
          %p884 = pneg %p437
        $region158: #{decoders_forward.2} parent=115 // pred_check_branch
          %886 = sbr.rel (%p884) target = $region160
        $region159: #{decoders_forward.2} parent=115 // pred_region
          %887 = dma.done [#allocation17], 16
        $region160: #{decoders_forward.2} parent=115 // pred_fallthru
          _
        // Predicated region
        $region161: #{decoders_forward.2} parent=115 // pred_check
          %p888 = pneg %p458
        $region162: #{decoders_forward.2} parent=115 // pred_check_branch
          %890 = sbr.rel (%p888) target = $region164
        $region163: #{decoders_forward.2} parent=115 // pred_region
          %891 = dma.done [#allocation20], 2048
        $region164: #{decoders_forward.2} parent=115 // pred_fallthru
          _
        // Predicated region
        $region165: #{decoders_forward.2} parent=115 // pred_check
          %p892 = pneg %p500
        $region166: #{decoders_forward.2} parent=115 // pred_check_branch
          %894 = sbr.rel (%p892) target = $region168
        $region167: #{decoders_forward.2} parent=115 // pred_region
          %895 = dma.done [#allocation20], 2048
        $region168: #{decoders_forward.2} parent=115 // pred_fallthru
          _
        // Predicated region
        $region169: #{decoders_forward.2} parent=115 // pred_check
          %p896 = pneg %p521
        $region170: #{decoders_forward.2} parent=115 // pred_check_branch
          %898 = sbr.rel (%p896) target = $region172
        $region171: #{decoders_forward.2} parent=115 // pred_region
          %899 = dma.done [#allocation23], 16
        $region172: #{decoders_forward.2} parent=115 // pred_fallthru
          _
        // Predicated region
        $region173: #{decoders_forward.2} parent=115 // pred_check
          %p900 = pneg %p542
        $region174: #{decoders_forward.2} parent=115 // pred_check_branch
          %902 = sbr.rel (%p900) target = $region176
        $region175: #{decoders_forward.2} parent=115 // pred_region
          %903 = dma.done [#allocation23], 16
        $region176: #{decoders_forward.2} parent=115 // pred_fallthru
          _
        // Predicated region
        $region177: #{decoders_forward.2} parent=115 // pred_check
          %p904 = pneg %p563
        $region178: #{decoders_forward.2} parent=115 // pred_check_branch
          %906 = sbr.rel (%p904) target = $region180
        $region179: #{decoders_forward.2} parent=115 // pred_region
          %907 = dma.done [#allocation26], 16
        $region180: #{decoders_forward.2} parent=115 // pred_fallthru
          _
        %p908 = scmp.lt.s32.totalorder %s44, 1
        %s909 = scalar_select %p908, %s44, 1
        %s910 = smul.addr %s909, 8
        %s911 = scalar_lea.vmem %s0, %s910
        %p912 = pneg %p65
        %p913 = pneg %p62
        %p914 = scmp.lt.s32.totalorder %s44, 1
        %s915 = scalar_select %p914, %s44, 1
        %s916 = smul.addr %s915, 2
        %s917 = smul.addr %s916, 8
        %s918 = scalar_lea.vmem %s1, %s917
        %p919 = pneg %p91
        %p920 = pneg %p88
        %p921 = scmp.lt.s32.totalorder %s44, 1
        %s922 = scalar_select %p921, %s44, 1
        %s923 = smul.addr %s922, 4
        %s924 = scalar_lea.vmem %s2, %s923
        %p925 = pneg %p117
        %p926 = pneg %p114
        %p927 = scmp.lt.s32.totalorder %s44, 1
        %s928 = scalar_select %p927, %s44, 1
        %s929 = smul.addr %s928, 4
        %s930 = scalar_lea.vmem %s3, %s929
        %p931 = pneg %p143
        %p932 = pneg %p140
        %p933 = pneg %p164
        %p934 = pneg %p161
        %p935 = pneg %p185
        %p936 = pneg %p182
        %p937 = pneg %p206
        %p938 = pneg %p203
        %p939 = pneg %p227
        %p940 = pneg %p224
        %p941 = pneg %p248
        %p942 = pneg %p245
        %p943 = pneg %p269
        %p944 = pneg %p266
        %p945 = pneg %p290
        %p946 = pneg %p287
        %p947 = pneg %p311
        %p948 = pneg %p308
        %p949 = pneg %p332
        %p950 = pneg %p329
        %p951 = pneg %p353
        %p952 = pneg %p350
        %p953 = pneg %p374
        %p954 = pneg %p371
        %p955 = pneg %p395
        %p956 = pneg %p392
        %p957 = pneg %p416
        %p958 = pneg %p413
        %p959 = pneg %p437
        %p960 = pneg %p434
        %p961 = pneg %p458
        %p962 = pneg %p455
        %p963 = pneg %p479
        %p964 = pneg %p476
        %p965 = pneg %p500
        %p966 = pneg %p497
        %p967 = pneg %p521
        %p968 = pneg %p518
        %p969 = pneg %p542
        %p970 = pneg %p539
        %p971 = pneg %p563
        %p972 = pneg %p560
        %p973 = pneg %p589
        %p974 = pneg %p586
        %p975 = scmp.lt.s32.totalorder %s44, 1
        %s976 = scalar_select %p975, %s44, 1
        %s977 = smul.addr %s976, 8
        %s978 = scalar_lea.vmem %s24, %s977
        %p979 = scmp.lt.s32.totalorder %s44, 1
        %s980 = scalar_select %p979, %s44, 1
        %s981 = smul.addr %s980, 8
        %s982 = scalar_lea.vmem %s0, %s981
        %p983 = scmp.lt.s32.totalorder %s44, 1
        %s984 = scalar_select %p983, %s44, 1
        %s985 = smul.addr %s984, 2
        %s986 = smul.addr %s985, 8
        %s987 = scalar_lea.vmem %s1, %s986
        %p988 = scmp.lt.s32.totalorder %s44, 1
        %s989 = scalar_select %p988, %s44, 1
        %s990 = smul.addr %s989, 4
        %s991 = scalar_lea.vmem %s2, %s990
        %p992 = scmp.lt.s32.totalorder %s44, 1
        %s993 = scalar_select %p992, %s44, 1
        %s994 = smul.addr %s993, 4
        %s995 = scalar_lea.vmem %s3, %s994
        %p996 = scmp.lt.s32.totalorder %s44, 1
        %s997 = scalar_select %p996, %s44, 1
        %s998 = smul.addr %s997, 8
        %s999 = scalar_lea.vmem %s24, %s998
        %v1001 = vld [vmem:[%s982] sm:$0xff]
        %v1002 = vpack.c.bf16 %v1001, %v1001
        %v1003 = vld [vmem:[#allocation2] sm:$0xff]
        %v1004 = vld [vmem:[#allocation2 + $0x8] sm:$0xf]
        %v1005 = vld [vmem:[#allocation2 + $0xc] sm:$0xff]
        %v1006 = vld [vmem:[#allocation2 + $0x14] sm:$0xf]
        %v1007 = vld [vmem:[#allocation2 + $0x18] sm:$0xff]
        %v1008 = vld [vmem:[#allocation2 + $0x20] sm:$0xf]
        %v1009 = vld [vmem:[#allocation2 + $0x24] sm:$0xff]
        %v1010 = vld [vmem:[#allocation2 + $0x2c] sm:$0xf]
        %v1011 = vld [vmem:[#allocation2 + $0x30] sm:$0xff]
        %v1012 = vld [vmem:[#allocation2 + $0x38] sm:$0xf]
        %v1013 = vld [vmem:[#allocation2 + $0x3c] sm:$0xff]
        %v1014 = vld [vmem:[#allocation2 + $0x44] sm:$0xf]
        %v1015 = vld [vmem:[#allocation2 + $0x48] sm:$0xff]
        %v1016 = vld [vmem:[#allocation2 + $0x50] sm:$0xf]
        %v1017 = vld [vmem:[#allocation2 + $0x54] sm:$0xff]
        %v1018 = vld [vmem:[#allocation2 + $0x5c] sm:$0xf]
        %v1019 = vld [vmem:[#allocation2 + $0x60] sm:$0xff]
        %v1020 = vld [vmem:[#allocation2 + $0x68] sm:$0xf]
        %v1021 = vld [vmem:[#allocation2 + $0x6c] sm:$0xff]
        %v1022 = vld [vmem:[#allocation2 + $0x74] sm:$0xf]
        %v1023 = vld [vmem:[#allocation2 + $0x78] sm:$0xff]
        %v1024 = vld [vmem:[#allocation2 + $0x80] sm:$0xf]
        %v1025 = vld [vmem:[#allocation2 + $0x84] sm:$0xff]
        %v1026 = vld [vmem:[#allocation2 + $0x8c] sm:$0xf]
        %v1027 = vld [vmem:[#allocation2 + $0x90] sm:$0xff]
        %v1028 = vld [vmem:[#allocation2 + $0x98] sm:$0xf]
        %v1029 = vld [vmem:[#allocation2 + $0x9c] sm:$0xff]
        %v1030 = vld [vmem:[#allocation2 + $0xa4] sm:$0xf]
        %v1031 = vld [vmem:[#allocation2 + $0xa8] sm:$0xff]
        %v1032 = vld [vmem:[#allocation2 + $0xb0] sm:$0xf]
        %v1033 = vld [vmem:[#allocation2 + $0xb4] sm:$0xff]
        %v1034 = vld [vmem:[#allocation2 + $0xbc] sm:$0xf]
        %v1035 = vld [vmem:[%s5] sm:$0x7]
        %v1037 = vlaneseq
        %v1038 = vshrl.u32 %v1037, 7
        %v1039 = vsub.s32 0, %v1038
        %v1040 = vrot.slane %v1035, %v1039
        %v1041 = vlaneseq
        %v1042 = vshrl.u32 %v1041, 7
        %v1043 = vsub.s32 1, %v1042
        %v1044 = vrot.slane %v1035, %v1043
        %v1045 = vlaneseq
        %v1046 = vshrl.u32 %v1045, 7
        %v1047 = vsub.s32 2, %v1046
        %v1048 = vrot.slane %v1035, %v1047
        %v1084 = vunpack.c.l.b16 %v1003
        %v1085 = vunpack.c.h.b16 %v1003
        %v1086 = vunpack.c.l.b16 %v1004
        %v1087 = vunpack.c.l.b16 %v1005
        %v1088 = vunpack.c.h.b16 %v1005
        %v1089 = vunpack.c.l.b16 %v1006
        %v1090 = vunpack.c.l.b16 %v1007
        %v1091 = vunpack.c.h.b16 %v1007
        %v1092 = vunpack.c.l.b16 %v1008
        %v1093 = vunpack.c.l.b16 %v1009
        %v1094 = vunpack.c.h.b16 %v1009
        %v1095 = vunpack.c.l.b16 %v1010
        %v1096 = vunpack.c.l.b16 %v1011
        %v1097 = vunpack.c.h.b16 %v1011
        %v1098 = vunpack.c.l.b16 %v1012
        %v1099 = vunpack.c.l.b16 %v1013
        %v1100 = vunpack.c.h.b16 %v1013
        %v1101 = vunpack.c.l.b16 %v1014
        %v1102 = vunpack.c.l.b16 %v1015
        %v1103 = vunpack.c.h.b16 %v1015
        %v1104 = vunpack.c.l.b16 %v1016
        %v1105 = vunpack.c.l.b16 %v1017
        %v1106 = vunpack.c.h.b16 %v1017
        %v1107 = vunpack.c.l.b16 %v1018
        %v1108 = vunpack.c.l.b16 %v1019
        %v1109 = vunpack.c.h.b16 %v1019
        %v1110 = vunpack.c.l.b16 %v1020
        %v1111 = vunpack.c.l.b16 %v1021
        %v1112 = vunpack.c.h.b16 %v1021
        %v1113 = vunpack.c.l.b16 %v1022
        %v1114 = vunpack.c.l.b16 %v1023
        %v1115 = vunpack.c.h.b16 %v1023
        %v1116 = vunpack.c.l.b16 %v1024
        %v1117 = vunpack.c.l.b16 %v1025
        %v1118 = vunpack.c.h.b16 %v1025
        %v1119 = vunpack.c.l.b16 %v1026
        %v1120 = vunpack.c.l.b16 %v1027
        %v1121 = vunpack.c.h.b16 %v1027
        %v1122 = vunpack.c.l.b16 %v1028
        %v1123 = vunpack.c.l.b16 %v1029
        %v1124 = vunpack.c.h.b16 %v1029
        %v1125 = vunpack.c.l.b16 %v1030
        %v1126 = vunpack.c.l.b16 %v1031
        %v1127 = vunpack.c.h.b16 %v1031
        %v1128 = vunpack.c.l.b16 %v1032
        %v1129 = vunpack.c.l.b16 %v1033
        %v1130 = vunpack.c.h.b16 %v1033
        %v1131 = vunpack.c.l.b16 %v1034
        %v1132 = vpack.c.b16 %v1087, %v1084
        %v1133 = vpack.c.b16 %v1088, %v1085
        %v1134 = vpack.c.b16 %v1089, %v1086
        %v1135 = vpack.c.b16 %v1093, %v1090
        %v1136 = vpack.c.b16 %v1094, %v1091
        %v1137 = vpack.c.b16 %v1095, %v1092
        %v1138 = vpack.c.b16 %v1099, %v1096
        %v1139 = vpack.c.b16 %v1100, %v1097
        %v1140 = vpack.c.b16 %v1101, %v1098
        %v1141 = vpack.c.b16 %v1105, %v1102
        %v1142 = vpack.c.b16 %v1106, %v1103
        %v1143 = vpack.c.b16 %v1107, %v1104
        %v1144 = vpack.c.b16 %v1111, %v1108
        %v1145 = vpack.c.b16 %v1112, %v1109
        %v1146 = vpack.c.b16 %v1113, %v1110
        %v1147 = vpack.c.b16 %v1117, %v1114
        %v1148 = vpack.c.b16 %v1118, %v1115
        %v1149 = vpack.c.b16 %v1119, %v1116
        %v1150 = vpack.c.b16 %v1123, %v1120
        %v1151 = vpack.c.b16 %v1124, %v1121
        %v1152 = vpack.c.b16 %v1125, %v1122
        %v1153 = vpack.c.b16 %v1129, %v1126
        %v1154 = vpack.c.b16 %v1130, %v1127
        %v1155 = vpack.c.b16 %v1131, %v1128
        %1180 = vmatprep.subr.bf16.mxu0 %v1133
        %1181 = vmatpush1.bf16.msra.mxu0 %v1132
        %1182 = vmatprep.subr.bf16.mxu0 %v1136
        %1183 = vmatpush1.bf16.msra.mxu0 %v1135
        %1184 = vmatprep.subr.bf16.mxu0 %v1139
        %1185 = vmatpush1.bf16.msra.mxu0 %v1138
        %1186 = vmatprep.subr.bf16.mxu0 %v1142
        %1187 = vmatpush1.bf16.msra.mxu0 %v1141
        %1188 = vmatprep.subr.bf16.mxu0 %v1145
        %1189 = vmatpush1.bf16.msra.mxu0 %v1144
        %1190 = vmatprep.subr.bf16.mxu0 %v1148
        %1191 = vmatpush1.bf16.msra.mxu0 %v1147
        %1192 = vmatprep.subr.bf16.mxu0 %v1151
        %1193 = vmatpush1.bf16.msra.mxu0 %v1150
        %1194 = vmatprep.subr.bf16.mxu0 %v1154
        %1195 = vmatpush1.bf16.msra.mxu0 %v1153
        %1196 = vmatprep.subr.bf16.mxu0 0
        %1197 = vmatpush1.bf16.msra.mxu0 0
        %1198 = vmatprep.subr.bf16.mxu0 0
        %1199 = vmatpush1.bf16.msra.mxu0 0
        %1200 = vmatprep.subr.bf16.mxu0 0
        %1201 = vmatpush1.bf16.msra.mxu0 0
        %1202 = vmatprep.subr.bf16.mxu0 0
        %1203 = vmatpush1.bf16.msra.mxu0 0
        %1204 = vmatprep.subr.bf16.mxu0 0
        %1205 = vmatpush1.bf16.msra.mxu0 0
        %1206 = vmatprep.subr.bf16.mxu0 0
        %1207 = vmatpush1.bf16.msra.mxu0 0
        %1208 = vmatprep.subr.bf16.mxu0 0
        %1209 = vmatpush1.bf16.msra.mxu0 0
        %1210 = vmatprep.subr.bf16.mxu0 0
        %1211 = vmatpush1.bf16.msra.mxu0 0
        %1212 = vmatprep.mubr.bf16.mxu0 0
        %1213 = vmatmul.mubr.bf16.gmra.mrb[0].mxu0 %v1002
        %v1214 = vpop.f32.mrb[0].mxu0
        %v1215 = vadd.f32 %v1040, %v1214
        %v1216 = vpop.f32.mrb[0].mxu0
        %v1217 = vadd.f32 %v1044, %v1216
        %v1218 = vpop.f32.mrb[0].mxu0
        %v1219 = vpop.f32.mrb[0].mxu0
        %1220 = vdwg.mxu0
        %1221 = vmatprep.subr.bf16.mxu0 0
        %1222 = vmatpush1.bf16.msra.mxu0 %v1134
        %1223 = vmatprep.subr.bf16.mxu0 0
        %1224 = vmatpush1.bf16.msra.mxu0 %v1137
        %1225 = vmatprep.subr.bf16.mxu0 0
        %1226 = vmatpush1.bf16.msra.mxu0 %v1140
        %1227 = vmatprep.subr.bf16.mxu0 0
        %1228 = vmatpush1.bf16.msra.mxu0 %v1143
        %1229 = vmatprep.subr.bf16.mxu0 0
        %1230 = vmatpush1.bf16.msra.mxu0 %v1146
        %1231 = vmatprep.subr.bf16.mxu0 0
        %1232 = vmatpush1.bf16.msra.mxu0 %v1149
        %1233 = vmatprep.subr.bf16.mxu0 0
        %1234 = vmatpush1.bf16.msra.mxu0 %v1152
        %1235 = vmatprep.subr.bf16.mxu0 0
        %1236 = vmatpush1.bf16.msra.mxu0 %v1155
        %1237 = vmatprep.subr.bf16.mxu0 0
        %1238 = vmatpush1.bf16.msra.mxu0 0
        %1239 = vmatprep.subr.bf16.mxu0 0
        %1240 = vmatpush1.bf16.msra.mxu0 0
        %1241 = vmatprep.subr.bf16.mxu0 0
        %1242 = vmatpush1.bf16.msra.mxu0 0
        %1243 = vmatprep.subr.bf16.mxu0 0
        %1244 = vmatpush1.bf16.msra.mxu0 0
        %1245 = vmatprep.subr.bf16.mxu0 0
        %1246 = vmatpush1.bf16.msra.mxu0 0
        %1247 = vmatprep.subr.bf16.mxu0 0
        %1248 = vmatpush1.bf16.msra.mxu0 0
        %1249 = vmatprep.subr.bf16.mxu0 0
        %1250 = vmatpush1.bf16.msra.mxu0 0
        %1251 = vmatprep.subr.bf16.mxu0 0
        %1252 = vmatpush1.bf16.msra.mxu0 0
        %1253 = vmatprep.mubr.bf16.mxu0 0
        %1254 = vmatmul.mubr.bf16.gmra.mrb[0].mxu0 %v1002
        %v1255 = vpop.f32.mrb[0].mxu0
        %v1256 = vadd.f32 %v1048, %v1255
        %v1257 = vpop.f32.mrb[0].mxu0
        %v1258 = vpop.f32.mrb[0].mxu0
        %v1259 = vpop.f32.mrb[0].mxu0
        %1260 = vdwg.mxu0
        %v1261 = vld [vmem:[%s991] sm:$0xf]
        %v1262 = vunpack.c.l.bf16 %v1261
        %v1263 = vpack.c.bf16 %v1215, %v1215
        %v1264 = vpack.c.bf16 %v1217, %v1217
        %v1265 = vpack.c.bf16 %v1256, %v1256
        %vm1266 = vcmask 261120
        %v1268 = vsel %vm1266, %v1263, 0
        %v1271 = vsel %vm1266, %v1264, 0
        %1273 = vmatprep.subr.bf16.mxu0 0
        %1274 = vmatpush1.bf16.xpose.msra.mxu0 %v1271
        %1275 = vmatprep.subr.bf16.mxu0 0
        %1276 = vmatpush1.bf16.xpose.msra.mxu0 0
        %1277 = vmatprep.subr.bf16.mxu0 0
        %1278 = vmatpush1.bf16.xpose.msra.mxu0 0
        %1279 = vmatprep.subr.bf16.mxu0 0
        %1280 = vmatpush1.bf16.xpose.msra.mxu0 0
        %1281 = vmatprep.subr.bf16.mxu0 0
        %1282 = vmatpush1.bf16.xpose.msra.mxu0 0
        %1283 = vmatprep.subr.bf16.mxu0 0
        %1284 = vmatpush1.bf16.xpose.msra.mxu0 0
        %1285 = vmatprep.subr.bf16.mxu0 0
        %1286 = vmatpush1.bf16.xpose.msra.mxu0 0
        %1287 = vmatprep.subr.bf16.mxu0 0
        %1288 = vmatpush1.bf16.xpose.msra.mxu0 0
        %1289 = vmatprep.subr.bf16.mxu0 0
        %1290 = vmatpush1.bf16.xpose.msra.mxu0 0
        %1291 = vmatprep.subr.bf16.mxu0 0
        %1292 = vmatpush1.bf16.xpose.msra.mxu0 0
        %1293 = vmatprep.subr.bf16.mxu0 0
        %1294 = vmatpush1.bf16.xpose.msra.mxu0 0
        %1295 = vmatprep.subr.bf16.mxu0 0
        %1296 = vmatpush1.bf16.xpose.msra.mxu0 0
        %1297 = vmatprep.subr.bf16.mxu0 0
        %1298 = vmatpush1.bf16.xpose.msra.mxu0 0
        %1299 = vmatprep.subr.bf16.mxu0 0
        %1300 = vmatpush1.bf16.xpose.msra.mxu0 0
        %1301 = vmatprep.subr.bf16.mxu0 0
        %1302 = vmatpush1.bf16.xpose.msra.mxu0 0
        %1303 = vmatprep.subr.bf16.mxu0 0
        %1304 = vmatpush1.bf16.xpose.msra.mxu0 0
        %1305 = vmatprep.mubr.bf16.mxu0 0
        %1306 = vmatmul.mubr.bf16.gmra.mrb[0].mxu0 %v1268
        %v1307 = vpop.f32.mrb[0].mxu0
        %v1308 = vadd.f32 %v1262, %v1307
        %v1309 = vpop.f32.mrb[0].mxu0
        %v1310 = vpop.f32.mrb[0].mxu0
        %v1311 = vpop.f32.mrb[0].mxu0
        %1312 = vdwg.mxu0
        %vm1313 = vcmask 64512
        %v1314 = vsel %vm1313, %v1308, -inf
        %1315 = vmax.xlane.f32.xlu0 %v1314
        %v1316 = vpop.xlane.xlu0 %1315
        %v1317 = vsub.f32 %v1308, %v1316
        %v1318 = vmul.f32 %v1317, 1.442695
        %v1319 = vpow.pop %v1318
        %v1320 = vsel %vm1313, %v1319, 0.0
        %1321 = vadd.xlane.f32.xlu0 %v1320
        %v1322 = vpop.xlane.xlu0 %1321
        %v1323 = vrcp.pop %v1322
        %v1324 = vmul.f32 %v1319, %v1323
        %v1325 = vpack.c.bf16 %v1324, %v1324
        %v1327 = vsel %vm1313, %v1325, 0
        %vm1329 = vcmask 1043456
        %v1331 = vsel %vm1329, %v1265, 0
        %1333 = vmatprep.subr.bf16.mxu0 0
        %1334 = vmatpush1.bf16.msra.mxu0 %v1331
        %1335 = vmatprep.subr.bf16.mxu0 0
        %1336 = vmatpush1.bf16.msra.mxu0 0
        %1337 = vmatprep.subr.bf16.mxu0 0
        %1338 = vmatpush1.bf16.msra.mxu0 0
        %1339 = vmatprep.subr.bf16.mxu0 0
        %1340 = vmatpush1.bf16.msra.mxu0 0
        %1341 = vmatprep.subr.bf16.mxu0 0
        %1342 = vmatpush1.bf16.msra.mxu0 0
        %1343 = vmatprep.subr.bf16.mxu0 0
        %1344 = vmatpush1.bf16.msra.mxu0 0
        %1345 = vmatprep.subr.bf16.mxu0 0
        %1346 = vmatpush1.bf16.msra.mxu0 0
        %1347 = vmatprep.subr.bf16.mxu0 0
        %1348 = vmatpush1.bf16.msra.mxu0 0
        %1349 = vmatprep.subr.bf16.mxu0 0
        %1350 = vmatpush1.bf16.msra.mxu0 0
        %1351 = vmatprep.subr.bf16.mxu0 0
        %1352 = vmatpush1.bf16.msra.mxu0 0
        %1353 = vmatprep.subr.bf16.mxu0 0
        %1354 = vmatpush1.bf16.msra.mxu0 0
        %1355 = vmatprep.subr.bf16.mxu0 0
        %1356 = vmatpush1.bf16.msra.mxu0 0
        %1357 = vmatprep.subr.bf16.mxu0 0
        %1358 = vmatpush1.bf16.msra.mxu0 0
        %1359 = vmatprep.subr.bf16.mxu0 0
        %1360 = vmatpush1.bf16.msra.mxu0 0
        %1361 = vmatprep.subr.bf16.mxu0 0
        %1362 = vmatpush1.bf16.msra.mxu0 0
        %1363 = vmatprep.subr.bf16.mxu0 0
        %1364 = vmatpush1.bf16.msra.mxu0 0
        %1365 = vmatprep.mubr.bf16.mxu0 0
        %1366 = vmatmul.mubr.bf16.gmra.mrb[0].mxu0 %v1327
        %v1367 = vpop.f32.mrb[0].mxu0
        %v1368 = vadd.f32 0.0, %v1367
        %v1369 = vpop.f32.mrb[0].mxu0
        %v1370 = vpop.f32.mrb[0].mxu0
        %v1371 = vpop.f32.mrb[0].mxu0
        %1372 = vdwg.mxu0
        %1374 = vrot.lane.b32.xlu0 %v1263, 96
        %v1375 = vpop.permute.xlu0 %1374
        %1377 = vrot.lane.b32.xlu0 %v1264, 96
        %v1378 = vpop.permute.xlu0 %1377
        %v1380 = vsel %vm1266, %v1375, 0
        %v1383 = vsel %vm1266, %v1378, 0
        %1385 = vmatprep.subr.bf16.mxu0 0
        %1386 = vmatpush1.bf16.xpose.msra.mxu0 %v1383
        %1387 = vmatprep.subr.bf16.mxu0 0
        %1388 = vmatpush1.bf16.xpose.msra.mxu0 0
        %1389 = vmatprep.subr.bf16.mxu0 0
        %1390 = vmatpush1.bf16.xpose.msra.mxu0 0
        %1391 = vmatprep.subr.bf16.mxu0 0
        %1392 = vmatpush1.bf16.xpose.msra.mxu0 0
        %1393 = vmatprep.subr.bf16.mxu0 0
        %1394 = vmatpush1.bf16.xpose.msra.mxu0 0
        %1395 = vmatprep.subr.bf16.mxu0 0
        %1396 = vmatpush1.bf16.xpose.msra.mxu0 0
        %1397 = vmatprep.subr.bf16.mxu0 0
        %1398 = vmatpush1.bf16.xpose.msra.mxu0 0
        %1399 = vmatprep.subr.bf16.mxu0 0
        %1400 = vmatpush1.bf16.xpose.msra.mxu0 0
        %1401 = vmatprep.subr.bf16.mxu0 0
        %1402 = vmatpush1.bf16.xpose.msra.mxu0 0
        %1403 = vmatprep.subr.bf16.mxu0 0
        %1404 = vmatpush1.bf16.xpose.msra.mxu0 0
        %1405 = vmatprep.subr.bf16.mxu0 0
        %1406 = vmatpush1.bf16.xpose.msra.mxu0 0
        %1407 = vmatprep.subr.bf16.mxu0 0
        %1408 = vmatpush1.bf16.xpose.msra.mxu0 0
        %1409 = vmatprep.subr.bf16.mxu0 0
        %1410 = vmatpush1.bf16.xpose.msra.mxu0 0
        %1411 = vmatprep.subr.bf16.mxu0 0
        %1412 = vmatpush1.bf16.xpose.msra.mxu0 0
        %1413 = vmatprep.subr.bf16.mxu0 0
        %1414 = vmatpush1.bf16.xpose.msra.mxu0 0
        %1415 = vmatprep.subr.bf16.mxu0 0
        %1416 = vmatpush1.bf16.xpose.msra.mxu0 0
        %1417 = vmatprep.mubr.bf16.mxu0 0
        %1418 = vmatmul.mubr.bf16.gmra.mrb[0].mxu0 %v1380
        %v1419 = vpop.f32.mrb[0].mxu0
        %v1420 = vadd.f32 %v1262, %v1419
        %v1421 = vpop.f32.mrb[0].mxu0
        %v1422 = vpop.f32.mrb[0].mxu0
        %v1423 = vpop.f32.mrb[0].mxu0
        %1424 = vdwg.mxu0
        %v1425 = vsel %vm1313, %v1420, -inf
        %1426 = vmax.xlane.f32.xlu0 %v1425
        %v1427 = vpop.xlane.xlu0 %1426
        %v1428 = vsub.f32 %v1420, %v1427
        %v1429 = vmul.f32 %v1428, 1.442695
        %v1430 = vpow.pop %v1429
        %v1431 = vsel %vm1313, %v1430, 0.0
        %1432 = vadd.xlane.f32.xlu0 %v1431
        %v1433 = vpop.xlane.xlu0 %1432
        %v1434 = vrcp.pop %v1433
        %v1435 = vmul.f32 %v1430, %v1434
        %v1436 = vpack.c.bf16 %v1435, %v1435
        %1438 = vrot.lane.b32.xlu0 %v1265, 96
        %v1439 = vpop.permute.xlu0 %1438
        %v1441 = vsel %vm1313, %v1436, 0
        %v1444 = vsel %vm1329, %v1439, 0
        %1446 = vmatprep.subr.bf16.mxu0 0
        %1447 = vmatpush1.bf16.msra.mxu0 %v1444
        %1448 = vmatprep.subr.bf16.mxu0 0
        %1449 = vmatpush1.bf16.msra.mxu0 0
        %1450 = vmatprep.subr.bf16.mxu0 0
        %1451 = vmatpush1.bf16.msra.mxu0 0
        %1452 = vmatprep.subr.bf16.mxu0 0
        %1453 = vmatpush1.bf16.msra.mxu0 0
        %1454 = vmatprep.subr.bf16.mxu0 0
        %1455 = vmatpush1.bf16.msra.mxu0 0
        %1456 = vmatprep.subr.bf16.mxu0 0
        %1457 = vmatpush1.bf16.msra.mxu0 0
        %1458 = vmatprep.subr.bf16.mxu0 0
        %1459 = vmatpush1.bf16.msra.mxu0 0
        %1460 = vmatprep.subr.bf16.mxu0 0
        %1461 = vmatpush1.bf16.msra.mxu0 0
        %1462 = vmatprep.subr.bf16.mxu0 0
        %1463 = vmatpush1.bf16.msra.mxu0 0
        %1464 = vmatprep.subr.bf16.mxu0 0
        %1465 = vmatpush1.bf16.msra.mxu0 0
        %1466 = vmatprep.subr.bf16.mxu0 0
        %1467 = vmatpush1.bf16.msra.mxu0 0
        %1468 = vmatprep.subr.bf16.mxu0 0
        %1469 = vmatpush1.bf16.msra.mxu0 0
        %1470 = vmatprep.subr.bf16.mxu0 0
        %1471 = vmatpush1.bf16.msra.mxu0 0
        %1472 = vmatprep.subr.bf16.mxu0 0
        %1473 = vmatpush1.bf16.msra.mxu0 0
        %1474 = vmatprep.subr.bf16.mxu0 0
        %1475 = vmatpush1.bf16.msra.mxu0 0
        %1476 = vmatprep.subr.bf16.mxu0 0
        %1477 = vmatpush1.bf16.msra.mxu0 0
        %1478 = vmatprep.mubr.bf16.mxu0 0
        %1479 = vmatmul.mubr.bf16.gmra.mrb[0].mxu0 %v1441
        %v1480 = vpop.f32.mrb[0].mxu0
        %v1481 = vadd.f32 0.0, %v1480
        %v1482 = vpop.f32.mrb[0].mxu0
        %v1483 = vpop.f32.mrb[0].mxu0
        %v1484 = vpop.f32.mrb[0].mxu0
        %1485 = vdwg.mxu0
        %1486 = vrot.lane.b32.xlu0 %v1263, 64
        %v1487 = vpop.permute.xlu0 %1486
        %1488 = vrot.lane.b32.xlu0 %v1264, 64
        %v1489 = vpop.permute.xlu0 %1488
        %v1491 = vsel %vm1266, %v1487, 0
        %v1494 = vsel %vm1266, %v1489, 0
        %1496 = vmatprep.subr.bf16.mxu0 0
        %1497 = vmatpush1.bf16.xpose.msra.mxu0 %v1494
        %1498 = vmatprep.subr.bf16.mxu0 0
        %1499 = vmatpush1.bf16.xpose.msra.mxu0 0
        %1500 = vmatprep.subr.bf16.mxu0 0
        %1501 = vmatpush1.bf16.xpose.msra.mxu0 0
        %1502 = vmatprep.subr.bf16.mxu0 0
        %1503 = vmatpush1.bf16.xpose.msra.mxu0 0
        %1504 = vmatprep.subr.bf16.mxu0 0
        %1505 = vmatpush1.bf16.xpose.msra.mxu0 0
        %1506 = vmatprep.subr.bf16.mxu0 0
        %1507 = vmatpush1.bf16.xpose.msra.mxu0 0
        %1508 = vmatprep.subr.bf16.mxu0 0
        %1509 = vmatpush1.bf16.xpose.msra.mxu0 0
        %1510 = vmatprep.subr.bf16.mxu0 0
        %1511 = vmatpush1.bf16.xpose.msra.mxu0 0
        %1512 = vmatprep.subr.bf16.mxu0 0
        %1513 = vmatpush1.bf16.xpose.msra.mxu0 0
        %1514 = vmatprep.subr.bf16.mxu0 0
        %1515 = vmatpush1.bf16.xpose.msra.mxu0 0
        %1516 = vmatprep.subr.bf16.mxu0 0
        %1517 = vmatpush1.bf16.xpose.msra.mxu0 0
        %1518 = vmatprep.subr.bf16.mxu0 0
        %1519 = vmatpush1.bf16.xpose.msra.mxu0 0
        %1520 = vmatprep.subr.bf16.mxu0 0
        %1521 = vmatpush1.bf16.xpose.msra.mxu0 0
        %1522 = vmatprep.subr.bf16.mxu0 0
        %1523 = vmatpush1.bf16.xpose.msra.mxu0 0
        %1524 = vmatprep.subr.bf16.mxu0 0
        %1525 = vmatpush1.bf16.xpose.msra.mxu0 0
        %1526 = vmatprep.subr.bf16.mxu0 0
        %1527 = vmatpush1.bf16.xpose.msra.mxu0 0
        %1528 = vmatprep.mubr.bf16.mxu0 0
        %1529 = vmatmul.mubr.bf16.gmra.mrb[0].mxu0 %v1491
        %v1530 = vpop.f32.mrb[0].mxu0
        %v1531 = vadd.f32 %v1262, %v1530
        %v1532 = vpop.f32.mrb[0].mxu0
        %v1533 = vpop.f32.mrb[0].mxu0
        %v1534 = vpop.f32.mrb[0].mxu0
        %1535 = vdwg.mxu0
        %v1536 = vsel %vm1313, %v1531, -inf
        %1537 = vmax.xlane.f32.xlu0 %v1536
        %v1538 = vpop.xlane.xlu0 %1537
        %v1539 = vsub.f32 %v1531, %v1538
        %v1540 = vmul.f32 %v1539, 1.442695
        %v1541 = vpow.pop %v1540
        %v1542 = vsel %vm1313, %v1541, 0.0
        %1543 = vadd.xlane.f32.xlu0 %v1542
        %v1544 = vpop.xlane.xlu0 %1543
        %v1545 = vrcp.pop %v1544
        %v1546 = vmul.f32 %v1541, %v1545
        %v1547 = vpack.c.bf16 %v1546, %v1546
        %1548 = vrot.lane.b32.xlu0 %v1265, 64
        %v1549 = vpop.permute.xlu0 %1548
        %v1551 = vsel %vm1313, %v1547, 0
        %v1554 = vsel %vm1329, %v1549, 0
        %1556 = vmatprep.subr.bf16.mxu0 0
        %1557 = vmatpush1.bf16.msra.mxu0 %v1554
        %1558 = vmatprep.subr.bf16.mxu0 0
        %1559 = vmatpush1.bf16.msra.mxu0 0
        %1560 = vmatprep.subr.bf16.mxu0 0
        %1561 = vmatpush1.bf16.msra.mxu0 0
        %1562 = vmatprep.subr.bf16.mxu0 0
        %1563 = vmatpush1.bf16.msra.mxu0 0
        %1564 = vmatprep.subr.bf16.mxu0 0
        %1565 = vmatpush1.bf16.msra.mxu0 0
        %1566 = vmatprep.subr.bf16.mxu0 0
        %1567 = vmatpush1.bf16.msra.mxu0 0
        %1568 = vmatprep.subr.bf16.mxu0 0
        %1569 = vmatpush1.bf16.msra.mxu0 0
        %1570 = vmatprep.subr.bf16.mxu0 0
        %1571 = vmatpush1.bf16.msra.mxu0 0
        %1572 = vmatprep.subr.bf16.mxu0 0
        %1573 = vmatpush1.bf16.msra.mxu0 0
        %1574 = vmatprep.subr.bf16.mxu0 0
        %1575 = vmatpush1.bf16.msra.mxu0 0
        %1576 = vmatprep.subr.bf16.mxu0 0
        %1577 = vmatpush1.bf16.msra.mxu0 0
        %1578 = vmatprep.subr.bf16.mxu0 0
        %1579 = vmatpush1.bf16.msra.mxu0 0
        %1580 = vmatprep.subr.bf16.mxu0 0
        %1581 = vmatpush1.bf16.msra.mxu0 0
        %1582 = vmatprep.subr.bf16.mxu0 0
        %1583 = vmatpush1.bf16.msra.mxu0 0
        %1584 = vmatprep.subr.bf16.mxu0 0
        %1585 = vmatpush1.bf16.msra.mxu0 0
        %1586 = vmatprep.subr.bf16.mxu0 0
        %1587 = vmatpush1.bf16.msra.mxu0 0
        %1588 = vmatprep.mubr.bf16.mxu0 0
        %1589 = vmatmul.mubr.bf16.gmra.mrb[0].mxu0 %v1551
        %v1590 = vpop.f32.mrb[0].mxu0
        %v1591 = vadd.f32 0.0, %v1590
        %v1592 = vpop.f32.mrb[0].mxu0
        %v1593 = vpop.f32.mrb[0].mxu0
        %v1594 = vpop.f32.mrb[0].mxu0
        %1595 = vdwg.mxu0
        %1596 = vrot.lane.b32.xlu0 %v1263, 32
        %v1597 = vpop.permute.xlu0 %1596
        %1598 = vrot.lane.b32.xlu0 %v1264, 32
        %v1599 = vpop.permute.xlu0 %1598
        %v1601 = vsel %vm1266, %v1597, 0
        %v1604 = vsel %vm1266, %v1599, 0
        %1606 = vmatprep.subr.bf16.mxu0 0
        %1607 = vmatpush1.bf16.xpose.msra.mxu0 %v1604
        %1608 = vmatprep.subr.bf16.mxu0 0
        %1609 = vmatpush1.bf16.xpose.msra.mxu0 0
        %1610 = vmatprep.subr.bf16.mxu0 0
        %1611 = vmatpush1.bf16.xpose.msra.mxu0 0
        %1612 = vmatprep.subr.bf16.mxu0 0
        %1613 = vmatpush1.bf16.xpose.msra.mxu0 0
        %1614 = vmatprep.subr.bf16.mxu0 0
        %1615 = vmatpush1.bf16.xpose.msra.mxu0 0
        %1616 = vmatprep.subr.bf16.mxu0 0
        %1617 = vmatpush1.bf16.xpose.msra.mxu0 0
        %1618 = vmatprep.subr.bf16.mxu0 0
        %1619 = vmatpush1.bf16.xpose.msra.mxu0 0
        %1620 = vmatprep.subr.bf16.mxu0 0
        %1621 = vmatpush1.bf16.xpose.msra.mxu0 0
        %1622 = vmatprep.subr.bf16.mxu0 0
        %1623 = vmatpush1.bf16.xpose.msra.mxu0 0
        %1624 = vmatprep.subr.bf16.mxu0 0
        %1625 = vmatpush1.bf16.xpose.msra.mxu0 0
        %1626 = vmatprep.subr.bf16.mxu0 0
        %1627 = vmatpush1.bf16.xpose.msra.mxu0 0
        %1628 = vmatprep.subr.bf16.mxu0 0
        %1629 = vmatpush1.bf16.xpose.msra.mxu0 0
        %1630 = vmatprep.subr.bf16.mxu0 0
        %1631 = vmatpush1.bf16.xpose.msra.mxu0 0
        %1632 = vmatprep.subr.bf16.mxu0 0
        %1633 = vmatpush1.bf16.xpose.msra.mxu0 0
        %1634 = vmatprep.subr.bf16.mxu0 0
        %1635 = vmatpush1.bf16.xpose.msra.mxu0 0
        %1636 = vmatprep.subr.bf16.mxu0 0
        %1637 = vmatpush1.bf16.xpose.msra.mxu0 0
        %1638 = vmatprep.mubr.bf16.mxu0 0
        %1639 = vmatmul.mubr.bf16.gmra.mrb[0].mxu0 %v1601
        %v1640 = vpop.f32.mrb[0].mxu0
        %v1641 = vadd.f32 %v1262, %v1640
        %v1642 = vpop.f32.mrb[0].mxu0
        %v1643 = vpop.f32.mrb[0].mxu0
        %v1644 = vpop.f32.mrb[0].mxu0
        %1645 = vdwg.mxu0
        %v1646 = vsel %vm1313, %v1641, -inf
        %1647 = vmax.xlane.f32.xlu0 %v1646
        %v1648 = vpop.xlane.xlu0 %1647
        %v1649 = vsub.f32 %v1641, %v1648
        %v1650 = vmul.f32 %v1649, 1.442695
        %v1651 = vpow.pop %v1650
        %v1652 = vsel %vm1313, %v1651, 0.0
        %1653 = vadd.xlane.f32.xlu0 %v1652
        %v1654 = vpop.xlane.xlu0 %1653
        %v1655 = vrcp.pop %v1654
        %v1656 = vmul.f32 %v1651, %v1655
        %v1657 = vpack.c.bf16 %v1656, %v1656
        %1658 = vrot.lane.b32.xlu0 %v1265, 32
        %v1659 = vpop.permute.xlu0 %1658
        %v1661 = vsel %vm1313, %v1657, 0
        %v1664 = vsel %vm1329, %v1659, 0
        %1666 = vmatprep.subr.bf16.mxu0 0
        %1667 = vmatpush1.bf16.msra.mxu0 %v1664
        %1668 = vmatprep.subr.bf16.mxu0 0
        %1669 = vmatpush1.bf16.msra.mxu0 0
        %1670 = vmatprep.subr.bf16.mxu0 0
        %1671 = vmatpush1.bf16.msra.mxu0 0
        %1672 = vmatprep.subr.bf16.mxu0 0
        %1673 = vmatpush1.bf16.msra.mxu0 0
        %1674 = vmatprep.subr.bf16.mxu0 0
        %1675 = vmatpush1.bf16.msra.mxu0 0
        %1676 = vmatprep.subr.bf16.mxu0 0
        %1677 = vmatpush1.bf16.msra.mxu0 0
        %1678 = vmatprep.subr.bf16.mxu0 0
        %1679 = vmatpush1.bf16.msra.mxu0 0
        %1680 = vmatprep.subr.bf16.mxu0 0
        %1681 = vmatpush1.bf16.msra.mxu0 0
        %1682 = vmatprep.subr.bf16.mxu0 0
        %1683 = vmatpush1.bf16.msra.mxu0 0
        %1684 = vmatprep.subr.bf16.mxu0 0
        %1685 = vmatpush1.bf16.msra.mxu0 0
        %1686 = vmatprep.subr.bf16.mxu0 0
        %1687 = vmatpush1.bf16.msra.mxu0 0
        %1688 = vmatprep.subr.bf16.mxu0 0
        %1689 = vmatpush1.bf16.msra.mxu0 0
        %1690 = vmatprep.subr.bf16.mxu0 0
        %1691 = vmatpush1.bf16.msra.mxu0 0
        %1692 = vmatprep.subr.bf16.mxu0 0
        %1693 = vmatpush1.bf16.msra.mxu0 0
        %1694 = vmatprep.subr.bf16.mxu0 0
        %1695 = vmatpush1.bf16.msra.mxu0 0
        %1696 = vmatprep.subr.bf16.mxu0 0
        %1697 = vmatpush1.bf16.msra.mxu0 0
        %1698 = vmatprep.mubr.bf16.mxu0 0
        %1699 = vmatmul.mubr.bf16.gmra.mrb[0].mxu0 %v1661
        %v1700 = vpop.f32.mrb[0].mxu0
        %v1701 = vadd.f32 0.0, %v1700
        %v1702 = vpop.f32.mrb[0].mxu0
        %v1703 = vpop.f32.mrb[0].mxu0
        %v1704 = vpop.f32.mrb[0].mxu0
        %1705 = vdwg.mxu0
        %1707 = vrot.lane.b32.xlu0 %v1481, 32
        %v1708 = vpop.permute.xlu0 %1707
        %1711 = vrot.lane.b32.xlu0 %v1591, 64
        %v1712 = vpop.permute.xlu0 %1711
        %1715 = vrot.lane.b32.xlu0 %v1701, 96
        %v1716 = vpop.permute.xlu0 %1715
        %v1718 = vsel %vm1266, %v1368, %v1708
        %vm1719 = vcmask 523264
        %v1720 = vsel %vm1719, %v1718, %v1712
        %vm1721 = vcmask 785408
        %v1722 = vsel %vm1721, %v1720, %v1716
        %v1723 = vpack.c.bf16 %v1722, %v1722
        %v1724 = vld [vmem:[%s6] sm:$0xf]
        %v1725 = vld [vmem:[%s6 + $0x4] sm:$0xf]
        %v1726 = vld [vmem:[%s6 + $0x8] sm:$0xf]
        %v1727 = vld [vmem:[%s6 + $0xc] sm:$0xf]
        %v1728 = vld [vmem:[%s6 + $0x10] sm:$0xf]
        %v1729 = vld [vmem:[%s6 + $0x14] sm:$0xf]
        %v1730 = vld [vmem:[%s6 + $0x18] sm:$0xf]
        %v1731 = vld [vmem:[%s6 + $0x1c] sm:$0xf]
        %v1732 = vld [vmem:[%s6 + $0x20] sm:$0xf]
        %v1733 = vld [vmem:[%s6 + $0x24] sm:$0xf]
        %v1734 = vld [vmem:[%s6 + $0x28] sm:$0xf]
        %v1735 = vld [vmem:[%s6 + $0x2c] sm:$0xf]
        %v1736 = vld [vmem:[%s6 + $0x30] sm:$0xf]
        %v1737 = vld [vmem:[%s6 + $0x34] sm:$0xf]
        %v1738 = vld [vmem:[%s6 + $0x38] sm:$0xf]
        %v1739 = vld [vmem:[%s6 + $0x3c] sm:$0xf]
        %v1740 = vld [vmem:[#allocation4] sm:$0x1]
        %v1742 = vlaneseq
        %v1743 = vshrl.u32 %v1742, 7
        %v1744 = vsub.s32 0, %v1743
        %v1745 = vrot.slane %v1740, %v1744
        %v1763 = vunpack.c.l.b16 %v1724
        %v1764 = vunpack.c.l.b16 %v1725
        %v1765 = vunpack.c.l.b16 %v1726
        %v1766 = vunpack.c.l.b16 %v1727
        %v1767 = vunpack.c.l.b16 %v1728
        %v1768 = vunpack.c.l.b16 %v1729
        %v1769 = vunpack.c.l.b16 %v1730
        %v1770 = vunpack.c.l.b16 %v1731
        %v1771 = vunpack.c.l.b16 %v1732
        %v1772 = vunpack.c.l.b16 %v1733
        %v1773 = vunpack.c.l.b16 %v1734
        %v1774 = vunpack.c.l.b16 %v1735
        %v1775 = vunpack.c.l.b16 %v1736
        %v1776 = vunpack.c.l.b16 %v1737
        %v1777 = vunpack.c.l.b16 %v1738
        %v1778 = vunpack.c.l.b16 %v1739
        %v1779 = vpack.c.b16 %v1764, %v1763
        %v1780 = vpack.c.b16 %v1766, %v1765
        %v1781 = vpack.c.b16 %v1768, %v1767
        %v1782 = vpack.c.b16 %v1770, %v1769
        %v1783 = vpack.c.b16 %v1772, %v1771
        %v1784 = vpack.c.b16 %v1774, %v1773
        %v1785 = vpack.c.b16 %v1776, %v1775
        %v1786 = vpack.c.b16 %v1778, %v1777
        %1795 = vmatprep.subr.bf16.mxu0 0
        %1796 = vmatpush1.bf16.msra.mxu0 %v1779
        %1797 = vmatprep.subr.bf16.mxu0 0
        %1798 = vmatpush1.bf16.msra.mxu0 %v1780
        %1799 = vmatprep.subr.bf16.mxu0 0
        %1800 = vmatpush1.bf16.msra.mxu0 %v1781
        %1801 = vmatprep.subr.bf16.mxu0 0
        %1802 = vmatpush1.bf16.msra.mxu0 %v1782
        %1803 = vmatprep.subr.bf16.mxu0 0
        %1804 = vmatpush1.bf16.msra.mxu0 %v1783
        %1805 = vmatprep.subr.bf16.mxu0 0
        %1806 = vmatpush1.bf16.msra.mxu0 %v1784
        %1807 = vmatprep.subr.bf16.mxu0 0
        %1808 = vmatpush1.bf16.msra.mxu0 %v1785
        %1809 = vmatprep.subr.bf16.mxu0 0
        %1810 = vmatpush1.bf16.msra.mxu0 %v1786
        %1811 = vmatprep.subr.bf16.mxu0 0
        %1812 = vmatpush1.bf16.msra.mxu0 0
        %1813 = vmatprep.subr.bf16.mxu0 0
        %1814 = vmatpush1.bf16.msra.mxu0 0
        %1815 = vmatprep.subr.bf16.mxu0 0
        %1816 = vmatpush1.bf16.msra.mxu0 0
        %1817 = vmatprep.subr.bf16.mxu0 0
        %1818 = vmatpush1.bf16.msra.mxu0 0
        %1819 = vmatprep.subr.bf16.mxu0 0
        %1820 = vmatpush1.bf16.msra.mxu0 0
        %1821 = vmatprep.subr.bf16.mxu0 0
        %1822 = vmatpush1.bf16.msra.mxu0 0
        %1823 = vmatprep.subr.bf16.mxu0 0
        %1824 = vmatpush1.bf16.msra.mxu0 0
        %1825 = vmatprep.subr.bf16.mxu0 0
        %1826 = vmatpush1.bf16.msra.mxu0 0
        %1827 = vmatprep.mubr.bf16.mxu0 0
        %1828 = vmatmul.mubr.bf16.gmra.mrb[0].mxu0 %v1723
        %v1829 = vpop.f32.mrb[0].mxu0
        %v1830 = vadd.f32 %v1745, %v1829
        %v1831 = vpop.f32.mrb[0].mxu0
        %v1832 = vpop.f32.mrb[0].mxu0
        %v1833 = vpop.f32.mrb[0].mxu0
        %1834 = vdwg.mxu0
        %v1835 = vadd.f32 %v1001, %v1830
        %1836 = vadd.xlane.f32.xlu0 %v1835
        %v1837 = vpop.xlane.xlu0 %1836
        %v1838 = vrcp.pop 128.0
        %v1839 = vmul.f32 %v1837, %v1838
        %v1840 = vsub.f32 %v1835, %v1839
        %v1841 = vmul.f32 %v1840, %v1840
        %1842 = vadd.xlane.f32.xlu0 %v1841
        %v1843 = vpop.xlane.xlu0 %1842
        %v1844 = vmul.f32 %v1843, %v1838
        %v1845 = vadd.f32 %v1844, 1e-05
        %v1846 = vrsqrt.pop %v1845
        %v1847 = vmul.f32 %v1840, %v1846
        %v1848 = vld [vmem:[#allocation6] sm:$0x1]
        %v1850 = vlaneseq
        %v1851 = vshrl.u32 %v1850, 7
        %v1852 = vsub.s32 0, %v1851
        %v1853 = vrot.slane %v1848, %v1852
        %v1855 = vmul.f32 %v1847, %v1853
        %v1856 = vld [vmem:[#allocation7] sm:$0x1]
        %v1858 = vlaneseq
        %v1859 = vshrl.u32 %v1858, 7
        %v1860 = vsub.s32 0, %v1859
        %v1861 = vrot.slane %v1856, %v1860
        %v1863 = vadd.f32 %v1855, %v1861
        %v1864 = vld [vmem:[%s987] sm:$0xff]
        %v1865 = vld [vmem:[%s987 + $0x8] sm:$0xff]
        %v1866 = vpack.c.bf16 %v1865, %v1864
        %v1867 = vld [vmem:[#allocation12] sm:$0xff]
        %v1868 = vld [vmem:[#allocation12 + $0x8] sm:$0xff]
        %v1869 = vld [vmem:[#allocation12 + $0x10] sm:$0xff]
        %v1870 = vld [vmem:[#allocation12 + $0x18] sm:$0xff]
        %v1871 = vld [vmem:[#allocation12 + $0x20] sm:$0xff]
        %v1872 = vld [vmem:[#allocation12 + $0x28] sm:$0xff]
        %v1873 = vld [vmem:[#allocation12 + $0x30] sm:$0xff]
        %v1874 = vld [vmem:[#allocation12 + $0x38] sm:$0xff]
        %v1875 = vld [vmem:[#allocation12 + $0x40] sm:$0xff]
        %v1876 = vld [vmem:[#allocation12 + $0x48] sm:$0xff]
        %v1877 = vld [vmem:[#allocation12 + $0x50] sm:$0xff]
        %v1878 = vld [vmem:[#allocation12 + $0x58] sm:$0xff]
        %v1879 = vld [vmem:[#allocation12 + $0x60] sm:$0xff]
        %v1880 = vld [vmem:[#allocation12 + $0x68] sm:$0xff]
        %v1881 = vld [vmem:[#allocation12 + $0x70] sm:$0xff]
        %v1882 = vld [vmem:[#allocation12 + $0x78] sm:$0xff]
        %v1883 = vld [vmem:[%s13] sm:$0x3]
        %v1885 = vlaneseq
        %v1886 = vshrl.u32 %v1885, 7
        %v1887 = vsub.s32 0, %v1886
        %v1888 = vrot.slane %v1883, %v1887
        %v1889 = vlaneseq
        %v1890 = vshrl.u32 %v1889, 7
        %v1891 = vsub.s32 1, %v1890
        %v1892 = vrot.slane %v1883, %v1891
        %v1911 = vunpack.c.l.b16 %v1867
        %v1912 = vunpack.c.h.b16 %v1867
        %v1913 = vunpack.c.l.b16 %v1868
        %v1914 = vunpack.c.h.b16 %v1868
        %v1915 = vunpack.c.l.b16 %v1869
        %v1916 = vunpack.c.h.b16 %v1869
        %v1917 = vunpack.c.l.b16 %v1870
        %v1918 = vunpack.c.h.b16 %v1870
        %v1919 = vunpack.c.l.b16 %v1871
        %v1920 = vunpack.c.h.b16 %v1871
        %v1921 = vunpack.c.l.b16 %v1872
        %v1922 = vunpack.c.h.b16 %v1872
        %v1923 = vunpack.c.l.b16 %v1873
        %v1924 = vunpack.c.h.b16 %v1873
        %v1925 = vunpack.c.l.b16 %v1874
        %v1926 = vunpack.c.h.b16 %v1874
        %v1927 = vunpack.c.l.b16 %v1875
        %v1928 = vunpack.c.h.b16 %v1875
        %v1929 = vunpack.c.l.b16 %v1876
        %v1930 = vunpack.c.h.b16 %v1876
        %v1931 = vunpack.c.l.b16 %v1877
        %v1932 = vunpack.c.h.b16 %v1877
        %v1933 = vunpack.c.l.b16 %v1878
        %v1934 = vunpack.c.h.b16 %v1878
        %v1935 = vunpack.c.l.b16 %v1879
        %v1936 = vunpack.c.h.b16 %v1879
        %v1937 = vunpack.c.l.b16 %v1880
        %v1938 = vunpack.c.h.b16 %v1880
        %v1939 = vunpack.c.l.b16 %v1881
        %v1940 = vunpack.c.h.b16 %v1881
        %v1941 = vunpack.c.l.b16 %v1882
        %v1942 = vunpack.c.h.b16 %v1882
        %v1943 = vpack.c.b16 %v1913, %v1911
        %v1944 = vpack.c.b16 %v1914, %v1912
        %v1945 = vpack.c.b16 %v1917, %v1915
        %v1946 = vpack.c.b16 %v1918, %v1916
        %v1947 = vpack.c.b16 %v1921, %v1919
        %v1948 = vpack.c.b16 %v1922, %v1920
        %v1949 = vpack.c.b16 %v1925, %v1923
        %v1950 = vpack.c.b16 %v1926, %v1924
        %v1951 = vpack.c.b16 %v1929, %v1927
        %v1952 = vpack.c.b16 %v1930, %v1928
        %v1953 = vpack.c.b16 %v1933, %v1931
        %v1954 = vpack.c.b16 %v1934, %v1932
        %v1955 = vpack.c.b16 %v1937, %v1935
        %v1956 = vpack.c.b16 %v1938, %v1936
        %v1957 = vpack.c.b16 %v1941, %v1939
        %v1958 = vpack.c.b16 %v1942, %v1940
        %1975 = vmatprep.subr.bf16.mxu0 %v1944
        %1976 = vmatpush1.bf16.msra.mxu0 %v1943
        %1977 = vmatprep.subr.bf16.mxu0 %v1946
        %1978 = vmatpush1.bf16.msra.mxu0 %v1945
        %1979 = vmatprep.subr.bf16.mxu0 %v1948
        %1980 = vmatpush1.bf16.msra.mxu0 %v1947
        %1981 = vmatprep.subr.bf16.mxu0 %v1950
        %1982 = vmatpush1.bf16.msra.mxu0 %v1949
        %1983 = vmatprep.subr.bf16.mxu0 %v1952
        %1984 = vmatpush1.bf16.msra.mxu0 %v1951
        %1985 = vmatprep.subr.bf16.mxu0 %v1954
        %1986 = vmatpush1.bf16.msra.mxu0 %v1953
        %1987 = vmatprep.subr.bf16.mxu0 %v1956
        %1988 = vmatpush1.bf16.msra.mxu0 %v1955
        %1989 = vmatprep.subr.bf16.mxu0 %v1958
        %1990 = vmatpush1.bf16.msra.mxu0 %v1957
        %1991 = vmatprep.subr.bf16.mxu0 0
        %1992 = vmatpush1.bf16.msra.mxu0 0
        %1993 = vmatprep.subr.bf16.mxu0 0
        %1994 = vmatpush1.bf16.msra.mxu0 0
        %1995 = vmatprep.subr.bf16.mxu0 0
        %1996 = vmatpush1.bf16.msra.mxu0 0
        %1997 = vmatprep.subr.bf16.mxu0 0
        %1998 = vmatpush1.bf16.msra.mxu0 0
        %1999 = vmatprep.subr.bf16.mxu0 0
        %2000 = vmatpush1.bf16.msra.mxu0 0
        %2001 = vmatprep.subr.bf16.mxu0 0
        %2002 = vmatpush1.bf16.msra.mxu0 0
        %2003 = vmatprep.subr.bf16.mxu0 0
        %2004 = vmatpush1.bf16.msra.mxu0 0
        %2005 = vmatprep.subr.bf16.mxu0 0
        %2006 = vmatpush1.bf16.msra.mxu0 0
        %2007 = vmatprep.mubr.bf16.mxu0 0
        %2008 = vmatmul.mubr.bf16.gmra.mrb[0].mxu0 %v1866
        %v2009 = vpop.f32.mrb[0].mxu0
        %v2010 = vadd.f32 %v1888, %v2009
        %v2011 = vpop.f32.mrb[0].mxu0
        %v2012 = vadd.f32 %v1892, %v2011
        %v2013 = vpop.f32.mrb[0].mxu0
        %v2014 = vadd.f32 %v1888, %v2013
        %v2015 = vpop.f32.mrb[0].mxu0
        %v2016 = vadd.f32 %v1892, %v2015
        %2017 = vdwg.mxu0
        %v2018 = vpack.c.bf16 %v1863, %v1863
        %v2019 = vld [vmem:[#allocation9] sm:$0xf]
        %v2020 = vld [vmem:[#allocation9 + $0x4] sm:$0xf]
        %v2021 = vld [vmem:[#allocation9 + $0x8] sm:$0xf]
        %v2022 = vld [vmem:[#allocation9 + $0xc] sm:$0xf]
        %v2023 = vld [vmem:[#allocation9 + $0x10] sm:$0xf]
        %v2024 = vld [vmem:[#allocation9 + $0x14] sm:$0xf]
        %v2025 = vld [vmem:[#allocation9 + $0x18] sm:$0xf]
        %v2026 = vld [vmem:[#allocation9 + $0x1c] sm:$0xf]
        %v2027 = vld [vmem:[#allocation9 + $0x20] sm:$0xf]
        %v2028 = vld [vmem:[#allocation9 + $0x24] sm:$0xf]
        %v2029 = vld [vmem:[#allocation9 + $0x28] sm:$0xf]
        %v2030 = vld [vmem:[#allocation9 + $0x2c] sm:$0xf]
        %v2031 = vld [vmem:[#allocation9 + $0x30] sm:$0xf]
        %v2032 = vld [vmem:[#allocation9 + $0x34] sm:$0xf]
        %v2033 = vld [vmem:[#allocation9 + $0x38] sm:$0xf]
        %v2034 = vld [vmem:[#allocation9 + $0x3c] sm:$0xf]
        %v2035 = vld [vmem:[#allocation10] sm:$0x1]
        %v2037 = vlaneseq
        %v2038 = vshrl.u32 %v2037, 7
        %v2039 = vsub.s32 0, %v2038
        %v2040 = vrot.slane %v2035, %v2039
        %v2058 = vunpack.c.l.b16 %v2019
        %v2059 = vunpack.c.l.b16 %v2020
        %v2060 = vunpack.c.l.b16 %v2021
        %v2061 = vunpack.c.l.b16 %v2022
        %v2062 = vunpack.c.l.b16 %v2023
        %v2063 = vunpack.c.l.b16 %v2024
        %v2064 = vunpack.c.l.b16 %v2025
        %v2065 = vunpack.c.l.b16 %v2026
        %v2066 = vunpack.c.l.b16 %v2027
        %v2067 = vunpack.c.l.b16 %v2028
        %v2068 = vunpack.c.l.b16 %v2029
        %v2069 = vunpack.c.l.b16 %v2030
        %v2070 = vunpack.c.l.b16 %v2031
        %v2071 = vunpack.c.l.b16 %v2032
        %v2072 = vunpack.c.l.b16 %v2033
        %v2073 = vunpack.c.l.b16 %v2034
        %v2074 = vpack.c.b16 %v2059, %v2058
        %v2075 = vpack.c.b16 %v2061, %v2060
        %v2076 = vpack.c.b16 %v2063, %v2062
        %v2077 = vpack.c.b16 %v2065, %v2064
        %v2078 = vpack.c.b16 %v2067, %v2066
        %v2079 = vpack.c.b16 %v2069, %v2068
        %v2080 = vpack.c.b16 %v2071, %v2070
        %v2081 = vpack.c.b16 %v2073, %v2072
        %2090 = vmatprep.subr.bf16.mxu0 0
        %2091 = vmatpush1.bf16.msra.mxu0 %v2074
        %2092 = vmatprep.subr.bf16.mxu0 0
        %2093 = vmatpush1.bf16.msra.mxu0 %v2075
        %2094 = vmatprep.subr.bf16.mxu0 0
        %2095 = vmatpush1.bf16.msra.mxu0 %v2076
        %2096 = vmatprep.subr.bf16.mxu0 0
        %2097 = vmatpush1.bf16.msra.mxu0 %v2077
        %2098 = vmatprep.subr.bf16.mxu0 0
        %2099 = vmatpush1.bf16.msra.mxu0 %v2078
        %2100 = vmatprep.subr.bf16.mxu0 0
        %2101 = vmatpush1.bf16.msra.mxu0 %v2079
        %2102 = vmatprep.subr.bf16.mxu0 0
        %2103 = vmatpush1.bf16.msra.mxu0 %v2080
        %2104 = vmatprep.subr.bf16.mxu0 0
        %2105 = vmatpush1.bf16.msra.mxu0 %v2081
        %2106 = vmatprep.subr.bf16.mxu0 0
        %2107 = vmatpush1.bf16.msra.mxu0 0
        %2108 = vmatprep.subr.bf16.mxu0 0
        %2109 = vmatpush1.bf16.msra.mxu0 0
        %2110 = vmatprep.subr.bf16.mxu0 0
        %2111 = vmatpush1.bf16.msra.mxu0 0
        %2112 = vmatprep.subr.bf16.mxu0 0
        %2113 = vmatpush1.bf16.msra.mxu0 0
        %2114 = vmatprep.subr.bf16.mxu0 0
        %2115 = vmatpush1.bf16.msra.mxu0 0
        %2116 = vmatprep.subr.bf16.mxu0 0
        %2117 = vmatpush1.bf16.msra.mxu0 0
        %2118 = vmatprep.subr.bf16.mxu0 0
        %2119 = vmatpush1.bf16.msra.mxu0 0
        %2120 = vmatprep.subr.bf16.mxu0 0
        %2121 = vmatpush1.bf16.msra.mxu0 0
        %2122 = vmatprep.mubr.bf16.mxu0 0
        %2123 = vmatmul.mubr.bf16.gmra.mrb[0].mxu0 %v2018
        %v2124 = vpop.f32.mrb[0].mxu0
        %v2125 = vadd.f32 %v2040, %v2124
        %v2126 = vpop.f32.mrb[0].mxu0
        %v2127 = vpop.f32.mrb[0].mxu0
        %v2128 = vpop.f32.mrb[0].mxu0
        %2129 = vdwg.mxu0
        %v2130 = vld [vmem:[%s995] sm:$0xf]
        %v2131 = vunpack.c.l.bf16 %v2130
        %v2132 = vpack.c.bf16 %v2125, %v2125
        %v2133 = vpack.c.bf16 %v2014, %v2010
        %v2134 = vpack.c.bf16 %v2016, %v2012
        %v2136 = vsel %vm1266, %v2132, 0
        %v2139 = vsel %vm1266, %v2133, 0
        %2141 = vmatprep.subr.bf16.mxu0 0
        %2142 = vmatpush1.bf16.xpose.msra.mxu0 %v2139
        %2143 = vmatprep.subr.bf16.mxu0 0
        %2144 = vmatpush1.bf16.xpose.msra.mxu0 0
        %2145 = vmatprep.subr.bf16.mxu0 0
        %2146 = vmatpush1.bf16.xpose.msra.mxu0 0
        %2147 = vmatprep.subr.bf16.mxu0 0
        %2148 = vmatpush1.bf16.xpose.msra.mxu0 0
        %2149 = vmatprep.subr.bf16.mxu0 0
        %2150 = vmatpush1.bf16.xpose.msra.mxu0 0
        %2151 = vmatprep.subr.bf16.mxu0 0
        %2152 = vmatpush1.bf16.xpose.msra.mxu0 0
        %2153 = vmatprep.subr.bf16.mxu0 0
        %2154 = vmatpush1.bf16.xpose.msra.mxu0 0
        %2155 = vmatprep.subr.bf16.mxu0 0
        %2156 = vmatpush1.bf16.xpose.msra.mxu0 0
        %2157 = vmatprep.subr.bf16.mxu0 0
        %2158 = vmatpush1.bf16.xpose.msra.mxu0 0
        %2159 = vmatprep.subr.bf16.mxu0 0
        %2160 = vmatpush1.bf16.xpose.msra.mxu0 0
        %2161 = vmatprep.subr.bf16.mxu0 0
        %2162 = vmatpush1.bf16.xpose.msra.mxu0 0
        %2163 = vmatprep.subr.bf16.mxu0 0
        %2164 = vmatpush1.bf16.xpose.msra.mxu0 0
        %2165 = vmatprep.subr.bf16.mxu0 0
        %2166 = vmatpush1.bf16.xpose.msra.mxu0 0
        %2167 = vmatprep.subr.bf16.mxu0 0
        %2168 = vmatpush1.bf16.xpose.msra.mxu0 0
        %2169 = vmatprep.subr.bf16.mxu0 0
        %2170 = vmatpush1.bf16.xpose.msra.mxu0 0
        %2171 = vmatprep.subr.bf16.mxu0 0
        %2172 = vmatpush1.bf16.xpose.msra.mxu0 0
        %2173 = vmatprep.mubr.bf16.mxu0 0
        %2174 = vmatmul.mubr.bf16.gmra.mrb[0].mxu0 %v2136
        %v2175 = vpop.f32.mrb[0].mxu0
        %v2176 = vadd.f32 %v2131, %v2175
        %v2177 = vpop.f32.mrb[0].mxu0
        %v2178 = vpop.f32.mrb[0].mxu0
        %v2179 = vpop.f32.mrb[0].mxu0
        %2180 = vdwg.mxu0
        %vm2181 = vcmask 130048
        %v2182 = vsel %vm2181, %v2176, -inf
        %2183 = vmax.xlane.f32.xlu0 %v2182
        %v2184 = vpop.xlane.xlu0 %2183
        %v2185 = vsub.f32 %v2176, %v2184
        %v2186 = vmul.f32 %v2185, 1.442695
        %v2187 = vpow.pop %v2186
        %v2188 = vsel %vm2181, %v2187, 0.0
        %2189 = vadd.xlane.f32.xlu0 %v2188
        %v2190 = vpop.xlane.xlu0 %2189
        %v2191 = vrcp.pop %v2190
        %v2192 = vmul.f32 %v2187, %v2191
        %v2193 = vpack.c.bf16 %v2192, %v2192
        %v2195 = vsel %vm2181, %v2193, 0
        %2197 = vmatprep.subr.bf16.mxu0 0
        %2198 = vmatpush1.bf16.msra.mxu0 %v2134
        %2199 = vmatprep.subr.bf16.mxu0 0
        %2200 = vmatpush1.bf16.msra.mxu0 0
        %2201 = vmatprep.subr.bf16.mxu0 0
        %2202 = vmatpush1.bf16.msra.mxu0 0
        %2203 = vmatprep.subr.bf16.mxu0 0
        %2204 = vmatpush1.bf16.msra.mxu0 0
        %2205 = vmatprep.subr.bf16.mxu0 0
        %2206 = vmatpush1.bf16.msra.mxu0 0
        %2207 = vmatprep.subr.bf16.mxu0 0
        %2208 = vmatpush1.bf16.msra.mxu0 0
        %2209 = vmatprep.subr.bf16.mxu0 0
        %2210 = vmatpush1.bf16.msra.mxu0 0
        %2211 = vmatprep.subr.bf16.mxu0 0
        %2212 = vmatpush1.bf16.msra.mxu0 0
        %2213 = vmatprep.subr.bf16.mxu0 0
        %2214 = vmatpush1.bf16.msra.mxu0 0
        %2215 = vmatprep.subr.bf16.mxu0 0
        %2216 = vmatpush1.bf16.msra.mxu0 0
        %2217 = vmatprep.subr.bf16.mxu0 0
        %2218 = vmatpush1.bf16.msra.mxu0 0
        %2219 = vmatprep.subr.bf16.mxu0 0
        %2220 = vmatpush1.bf16.msra.mxu0 0
        %2221 = vmatprep.subr.bf16.mxu0 0
        %2222 = vmatpush1.bf16.msra.mxu0 0
        %2223 = vmatprep.subr.bf16.mxu0 0
        %2224 = vmatpush1.bf16.msra.mxu0 0
        %2225 = vmatprep.subr.bf16.mxu0 0
        %2226 = vmatpush1.bf16.msra.mxu0 0
        %2227 = vmatprep.subr.bf16.mxu0 0
        %2228 = vmatpush1.bf16.msra.mxu0 0
        %2229 = vmatprep.mubr.bf16.mxu0 0
        %2230 = vmatmul.mubr.bf16.gmra.mrb[0].mxu0 %v2195
        %v2231 = vpop.f32.mrb[0].mxu0
        %v2232 = vadd.f32 0.0, %v2231
        %v2233 = vpop.f32.mrb[0].mxu0
        %v2234 = vpop.f32.mrb[0].mxu0
        %v2235 = vpop.f32.mrb[0].mxu0
        %2236 = vdwg.mxu0
        %2238 = vrot.lane.b32.xlu0 %v2132, 96
        %v2239 = vpop.permute.xlu0 %2238
        %2241 = vrot.lane.b32.xlu0 %v2133, 96
        %v2242 = vpop.permute.xlu0 %2241
        %v2244 = vsel %vm1266, %v2239, 0
        %v2247 = vsel %vm1266, %v2242, 0
        %2249 = vmatprep.subr.bf16.mxu0 0
        %2250 = vmatpush1.bf16.xpose.msra.mxu0 %v2247
        %2251 = vmatprep.subr.bf16.mxu0 0
        %2252 = vmatpush1.bf16.xpose.msra.mxu0 0
        %2253 = vmatprep.subr.bf16.mxu0 0
        %2254 = vmatpush1.bf16.xpose.msra.mxu0 0
        %2255 = vmatprep.subr.bf16.mxu0 0
        %2256 = vmatpush1.bf16.xpose.msra.mxu0 0
        %2257 = vmatprep.subr.bf16.mxu0 0
        %2258 = vmatpush1.bf16.xpose.msra.mxu0 0
        %2259 = vmatprep.subr.bf16.mxu0 0
        %2260 = vmatpush1.bf16.xpose.msra.mxu0 0
        %2261 = vmatprep.subr.bf16.mxu0 0
        %2262 = vmatpush1.bf16.xpose.msra.mxu0 0
        %2263 = vmatprep.subr.bf16.mxu0 0
        %2264 = vmatpush1.bf16.xpose.msra.mxu0 0
        %2265 = vmatprep.subr.bf16.mxu0 0
        %2266 = vmatpush1.bf16.xpose.msra.mxu0 0
        %2267 = vmatprep.subr.bf16.mxu0 0
        %2268 = vmatpush1.bf16.xpose.msra.mxu0 0
        %2269 = vmatprep.subr.bf16.mxu0 0
        %2270 = vmatpush1.bf16.xpose.msra.mxu0 0
        %2271 = vmatprep.subr.bf16.mxu0 0
        %2272 = vmatpush1.bf16.xpose.msra.mxu0 0
        %2273 = vmatprep.subr.bf16.mxu0 0
        %2274 = vmatpush1.bf16.xpose.msra.mxu0 0
        %2275 = vmatprep.subr.bf16.mxu0 0
        %2276 = vmatpush1.bf16.xpose.msra.mxu0 0
        %2277 = vmatprep.subr.bf16.mxu0 0
        %2278 = vmatpush1.bf16.xpose.msra.mxu0 0
        %2279 = vmatprep.subr.bf16.mxu0 0
        %2280 = vmatpush1.bf16.xpose.msra.mxu0 0
        %2281 = vmatprep.mubr.bf16.mxu0 0
        %2282 = vmatmul.mubr.bf16.gmra.mrb[0].mxu0 %v2244
        %v2283 = vpop.f32.mrb[0].mxu0
        %v2284 = vadd.f32 %v2131, %v2283
        %v2285 = vpop.f32.mrb[0].mxu0
        %v2286 = vpop.f32.mrb[0].mxu0
        %v2287 = vpop.f32.mrb[0].mxu0
        %2288 = vdwg.mxu0
        %v2289 = vsel %vm2181, %v2284, -inf
        %2290 = vmax.xlane.f32.xlu0 %v2289
        %v2291 = vpop.xlane.xlu0 %2290
        %v2292 = vsub.f32 %v2284, %v2291
        %v2293 = vmul.f32 %v2292, 1.442695
        %v2294 = vpow.pop %v2293
        %v2295 = vsel %vm2181, %v2294, 0.0
        %2296 = vadd.xlane.f32.xlu0 %v2295
        %v2297 = vpop.xlane.xlu0 %2296
        %v2298 = vrcp.pop %v2297
        %v2299 = vmul.f32 %v2294, %v2298
        %v2300 = vpack.c.bf16 %v2299, %v2299
        %2302 = vrot.lane.b32.xlu0 %v2134, 96
        %v2303 = vpop.permute.xlu0 %2302
        %v2306 = vsel %vm2181, %v2300, 0
        %2308 = vmatprep.subr.bf16.mxu0 0
        %2309 = vmatpush1.bf16.msra.mxu0 %v2303
        %2310 = vmatprep.subr.bf16.mxu0 0
        %2311 = vmatpush1.bf16.msra.mxu0 0
        %2312 = vmatprep.subr.bf16.mxu0 0
        %2313 = vmatpush1.bf16.msra.mxu0 0
        %2314 = vmatprep.subr.bf16.mxu0 0
        %2315 = vmatpush1.bf16.msra.mxu0 0
        %2316 = vmatprep.subr.bf16.mxu0 0
        %2317 = vmatpush1.bf16.msra.mxu0 0
        %2318 = vmatprep.subr.bf16.mxu0 0
        %2319 = vmatpush1.bf16.msra.mxu0 0
        %2320 = vmatprep.subr.bf16.mxu0 0
        %2321 = vmatpush1.bf16.msra.mxu0 0
        %2322 = vmatprep.subr.bf16.mxu0 0
        %2323 = vmatpush1.bf16.msra.mxu0 0
        %2324 = vmatprep.subr.bf16.mxu0 0
        %2325 = vmatpush1.bf16.msra.mxu0 0
        %2326 = vmatprep.subr.bf16.mxu0 0
        %2327 = vmatpush1.bf16.msra.mxu0 0
        %2328 = vmatprep.subr.bf16.mxu0 0
        %2329 = vmatpush1.bf16.msra.mxu0 0
        %2330 = vmatprep.subr.bf16.mxu0 0
        %2331 = vmatpush1.bf16.msra.mxu0 0
        %2332 = vmatprep.subr.bf16.mxu0 0
        %2333 = vmatpush1.bf16.msra.mxu0 0
        %2334 = vmatprep.subr.bf16.mxu0 0
        %2335 = vmatpush1.bf16.msra.mxu0 0
        %2336 = vmatprep.subr.bf16.mxu0 0
        %2337 = vmatpush1.bf16.msra.mxu0 0
        %2338 = vmatprep.subr.bf16.mxu0 0
        %2339 = vmatpush1.bf16.msra.mxu0 0
        %2340 = vmatprep.mubr.bf16.mxu0 0
        %2341 = vmatmul.mubr.bf16.gmra.mrb[0].mxu0 %v2306
        %v2342 = vpop.f32.mrb[0].mxu0
        %v2343 = vadd.f32 0.0, %v2342
        %v2344 = vpop.f32.mrb[0].mxu0
        %v2345 = vpop.f32.mrb[0].mxu0
        %v2346 = vpop.f32.mrb[0].mxu0
        %2347 = vdwg.mxu0
        %2348 = vrot.lane.b32.xlu0 %v2132, 64
        %v2349 = vpop.permute.xlu0 %2348
        %2350 = vrot.lane.b32.xlu0 %v2133, 64
        %v2351 = vpop.permute.xlu0 %2350
        %v2353 = vsel %vm1266, %v2349, 0
        %v2356 = vsel %vm1266, %v2351, 0
        %2358 = vmatprep.subr.bf16.mxu0 0
        %2359 = vmatpush1.bf16.xpose.msra.mxu0 %v2356
        %2360 = vmatprep.subr.bf16.mxu0 0
        %2361 = vmatpush1.bf16.xpose.msra.mxu0 0
        %2362 = vmatprep.subr.bf16.mxu0 0
        %2363 = vmatpush1.bf16.xpose.msra.mxu0 0
        %2364 = vmatprep.subr.bf16.mxu0 0
        %2365 = vmatpush1.bf16.xpose.msra.mxu0 0
        %2366 = vmatprep.subr.bf16.mxu0 0
        %2367 = vmatpush1.bf16.xpose.msra.mxu0 0
        %2368 = vmatprep.subr.bf16.mxu0 0
        %2369 = vmatpush1.bf16.xpose.msra.mxu0 0
        %2370 = vmatprep.subr.bf16.mxu0 0
        %2371 = vmatpush1.bf16.xpose.msra.mxu0 0
        %2372 = vmatprep.subr.bf16.mxu0 0
        %2373 = vmatpush1.bf16.xpose.msra.mxu0 0
        %2374 = vmatprep.subr.bf16.mxu0 0
        %2375 = vmatpush1.bf16.xpose.msra.mxu0 0
        %2376 = vmatprep.subr.bf16.mxu0 0
        %2377 = vmatpush1.bf16.xpose.msra.mxu0 0
        %2378 = vmatprep.subr.bf16.mxu0 0
        %2379 = vmatpush1.bf16.xpose.msra.mxu0 0
        %2380 = vmatprep.subr.bf16.mxu0 0
        %2381 = vmatpush1.bf16.xpose.msra.mxu0 0
        %2382 = vmatprep.subr.bf16.mxu0 0
        %2383 = vmatpush1.bf16.xpose.msra.mxu0 0
        %2384 = vmatprep.subr.bf16.mxu0 0
        %2385 = vmatpush1.bf16.xpose.msra.mxu0 0
        %2386 = vmatprep.subr.bf16.mxu0 0
        %2387 = vmatpush1.bf16.xpose.msra.mxu0 0
        %2388 = vmatprep.subr.bf16.mxu0 0
        %2389 = vmatpush1.bf16.xpose.msra.mxu0 0
        %2390 = vmatprep.mubr.bf16.mxu0 0
        %2391 = vmatmul.mubr.bf16.gmra.mrb[0].mxu0 %v2353
        %v2392 = vpop.f32.mrb[0].mxu0
        %v2393 = vadd.f32 %v2131, %v2392
        %v2394 = vpop.f32.mrb[0].mxu0
        %v2395 = vpop.f32.mrb[0].mxu0
        %v2396 = vpop.f32.mrb[0].mxu0
        %2397 = vdwg.mxu0
        %v2398 = vsel %vm2181, %v2393, -inf
        %2399 = vmax.xlane.f32.xlu0 %v2398
        %v2400 = vpop.xlane.xlu0 %2399
        %v2401 = vsub.f32 %v2393, %v2400
        %v2402 = vmul.f32 %v2401, 1.442695
        %v2403 = vpow.pop %v2402
        %v2404 = vsel %vm2181, %v2403, 0.0
        %2405 = vadd.xlane.f32.xlu0 %v2404
        %v2406 = vpop.xlane.xlu0 %2405
        %v2407 = vrcp.pop %v2406
        %v2408 = vmul.f32 %v2403, %v2407
        %v2409 = vpack.c.bf16 %v2408, %v2408
        %2410 = vrot.lane.b32.xlu0 %v2134, 64
        %v2411 = vpop.permute.xlu0 %2410
        %v2414 = vsel %vm2181, %v2409, 0
        %2416 = vmatprep.subr.bf16.mxu0 0
        %2417 = vmatpush1.bf16.msra.mxu0 %v2411
        %2418 = vmatprep.subr.bf16.mxu0 0
        %2419 = vmatpush1.bf16.msra.mxu0 0
        %2420 = vmatprep.subr.bf16.mxu0 0
        %2421 = vmatpush1.bf16.msra.mxu0 0
        %2422 = vmatprep.subr.bf16.mxu0 0
        %2423 = vmatpush1.bf16.msra.mxu0 0
        %2424 = vmatprep.subr.bf16.mxu0 0
        %2425 = vmatpush1.bf16.msra.mxu0 0
        %2426 = vmatprep.subr.bf16.mxu0 0
        %2427 = vmatpush1.bf16.msra.mxu0 0
        %2428 = vmatprep.subr.bf16.mxu0 0
        %2429 = vmatpush1.bf16.msra.mxu0 0
        %2430 = vmatprep.subr.bf16.mxu0 0
        %2431 = vmatpush1.bf16.msra.mxu0 0
        %2432 = vmatprep.subr.bf16.mxu0 0
        %2433 = vmatpush1.bf16.msra.mxu0 0
        %2434 = vmatprep.subr.bf16.mxu0 0
        %2435 = vmatpush1.bf16.msra.mxu0 0
        %2436 = vmatprep.subr.bf16.mxu0 0
        %2437 = vmatpush1.bf16.msra.mxu0 0
        %2438 = vmatprep.subr.bf16.mxu0 0
        %2439 = vmatpush1.bf16.msra.mxu0 0
        %2440 = vmatprep.subr.bf16.mxu0 0
        %2441 = vmatpush1.bf16.msra.mxu0 0
        %2442 = vmatprep.subr.bf16.mxu0 0
        %2443 = vmatpush1.bf16.msra.mxu0 0
        %2444 = vmatprep.subr.bf16.mxu0 0
        %2445 = vmatpush1.bf16.msra.mxu0 0
        %2446 = vmatprep.subr.bf16.mxu0 0
        %2447 = vmatpush1.bf16.msra.mxu0 0
        %2448 = vmatprep.mubr.bf16.mxu0 0
        %2449 = vmatmul.mubr.bf16.gmra.mrb[0].mxu0 %v2414
        %v2450 = vpop.f32.mrb[0].mxu0
        %v2451 = vadd.f32 0.0, %v2450
        %v2452 = vpop.f32.mrb[0].mxu0
        %v2453 = vpop.f32.mrb[0].mxu0
        %v2454 = vpop.f32.mrb[0].mxu0
        %2455 = vdwg.mxu0
        %2456 = vrot.lane.b32.xlu0 %v2132, 32
        %v2457 = vpop.permute.xlu0 %2456
        %2458 = vrot.lane.b32.xlu0 %v2133, 32
        %v2459 = vpop.permute.xlu0 %2458
        %v2461 = vsel %vm1266, %v2457, 0
        %v2464 = vsel %vm1266, %v2459, 0
        %2466 = vmatprep.subr.bf16.mxu0 0
        %2467 = vmatpush1.bf16.xpose.msra.mxu0 %v2464
        %2468 = vmatprep.subr.bf16.mxu0 0
        %2469 = vmatpush1.bf16.xpose.msra.mxu0 0
        %2470 = vmatprep.subr.bf16.mxu0 0
        %2471 = vmatpush1.bf16.xpose.msra.mxu0 0
        %2472 = vmatprep.subr.bf16.mxu0 0
        %2473 = vmatpush1.bf16.xpose.msra.mxu0 0
        %2474 = vmatprep.subr.bf16.mxu0 0
        %2475 = vmatpush1.bf16.xpose.msra.mxu0 0
        %2476 = vmatprep.subr.bf16.mxu0 0
        %2477 = vmatpush1.bf16.xpose.msra.mxu0 0
        %2478 = vmatprep.subr.bf16.mxu0 0
        %2479 = vmatpush1.bf16.xpose.msra.mxu0 0
        %2480 = vmatprep.subr.bf16.mxu0 0
        %2481 = vmatpush1.bf16.xpose.msra.mxu0 0
        %2482 = vmatprep.subr.bf16.mxu0 0
        %2483 = vmatpush1.bf16.xpose.msra.mxu0 0
        %2484 = vmatprep.subr.bf16.mxu0 0
        %2485 = vmatpush1.bf16.xpose.msra.mxu0 0
        %2486 = vmatprep.subr.bf16.mxu0 0
        %2487 = vmatpush1.bf16.xpose.msra.mxu0 0
        %2488 = vmatprep.subr.bf16.mxu0 0
        %2489 = vmatpush1.bf16.xpose.msra.mxu0 0
        %2490 = vmatprep.subr.bf16.mxu0 0
        %2491 = vmatpush1.bf16.xpose.msra.mxu0 0
        %2492 = vmatprep.subr.bf16.mxu0 0
        %2493 = vmatpush1.bf16.xpose.msra.mxu0 0
        %2494 = vmatprep.subr.bf16.mxu0 0
        %2495 = vmatpush1.bf16.xpose.msra.mxu0 0
        %2496 = vmatprep.subr.bf16.mxu0 0
        %2497 = vmatpush1.bf16.xpose.msra.mxu0 0
        %2498 = vmatprep.mubr.bf16.mxu0 0
        %2499 = vmatmul.mubr.bf16.gmra.mrb[0].mxu0 %v2461
        %v2500 = vpop.f32.mrb[0].mxu0
        %v2501 = vadd.f32 %v2131, %v2500
        %v2502 = vpop.f32.mrb[0].mxu0
        %v2503 = vpop.f32.mrb[0].mxu0
        %v2504 = vpop.f32.mrb[0].mxu0
        %2505 = vdwg.mxu0
        %v2506 = vsel %vm2181, %v2501, -inf
        %2507 = vmax.xlane.f32.xlu0 %v2506
        %v2508 = vpop.xlane.xlu0 %2507
        %v2509 = vsub.f32 %v2501, %v2508
        %v2510 = vmul.f32 %v2509, 1.442695
        %v2511 = vpow.pop %v2510
        %v2512 = vsel %vm2181, %v2511, 0.0
        %2513 = vadd.xlane.f32.xlu0 %v2512
        %v2514 = vpop.xlane.xlu0 %2513
        %v2515 = vrcp.pop %v2514
        %v2516 = vmul.f32 %v2511, %v2515
        %v2517 = vpack.c.bf16 %v2516, %v2516
        %2518 = vrot.lane.b32.xlu0 %v2134, 32
        %v2519 = vpop.permute.xlu0 %2518
        %v2522 = vsel %vm2181, %v2517, 0
        %2524 = vmatprep.subr.bf16.mxu0 0
        %2525 = vmatpush1.bf16.msra.mxu0 %v2519
        %2526 = vmatprep.subr.bf16.mxu0 0
        %2527 = vmatpush1.bf16.msra.mxu0 0
        %2528 = vmatprep.subr.bf16.mxu0 0
        %2529 = vmatpush1.bf16.msra.mxu0 0
        %2530 = vmatprep.subr.bf16.mxu0 0
        %2531 = vmatpush1.bf16.msra.mxu0 0
        %2532 = vmatprep.subr.bf16.mxu0 0
        %2533 = vmatpush1.bf16.msra.mxu0 0
        %2534 = vmatprep.subr.bf16.mxu0 0
        %2535 = vmatpush1.bf16.msra.mxu0 0
        %2536 = vmatprep.subr.bf16.mxu0 0
        %2537 = vmatpush1.bf16.msra.mxu0 0
        %2538 = vmatprep.subr.bf16.mxu0 0
        %2539 = vmatpush1.bf16.msra.mxu0 0
        %2540 = vmatprep.subr.bf16.mxu0 0
        %2541 = vmatpush1.bf16.msra.mxu0 0
        %2542 = vmatprep.subr.bf16.mxu0 0
        %2543 = vmatpush1.bf16.msra.mxu0 0
        %2544 = vmatprep.subr.bf16.mxu0 0
        %2545 = vmatpush1.bf16.msra.mxu0 0
        %2546 = vmatprep.subr.bf16.mxu0 0
        %2547 = vmatpush1.bf16.msra.mxu0 0
        %2548 = vmatprep.subr.bf16.mxu0 0
        %2549 = vmatpush1.bf16.msra.mxu0 0
        %2550 = vmatprep.subr.bf16.mxu0 0
        %2551 = vmatpush1.bf16.msra.mxu0 0
        %2552 = vmatprep.subr.bf16.mxu0 0
        %2553 = vmatpush1.bf16.msra.mxu0 0
        %2554 = vmatprep.subr.bf16.mxu0 0
        %2555 = vmatpush1.bf16.msra.mxu0 0
        %2556 = vmatprep.mubr.bf16.mxu0 0
        %2557 = vmatmul.mubr.bf16.gmra.mrb[0].mxu0 %v2522
        %v2558 = vpop.f32.mrb[0].mxu0
        %v2559 = vadd.f32 0.0, %v2558
        %v2560 = vpop.f32.mrb[0].mxu0
        %v2561 = vpop.f32.mrb[0].mxu0
        %v2562 = vpop.f32.mrb[0].mxu0
        %2563 = vdwg.mxu0
        %2565 = vrot.lane.b32.xlu0 %v2343, 32
        %v2566 = vpop.permute.xlu0 %2565
        %2569 = vrot.lane.b32.xlu0 %v2451, 64
        %v2570 = vpop.permute.xlu0 %2569
        %2573 = vrot.lane.b32.xlu0 %v2559, 96
        %v2574 = vpop.permute.xlu0 %2573
        %v2576 = vsel %vm1266, %v2232, %v2566
        %v2577 = vsel %vm1719, %v2576, %v2570
        %v2578 = vsel %vm1721, %v2577, %v2574
        %v2579 = vpack.c.bf16 %v2578, %v2578
        %v2580 = vld [vmem:[#allocation13] sm:$0xf]
        %v2581 = vld [vmem:[#allocation13 + $0x4] sm:$0xf]
        %v2582 = vld [vmem:[#allocation13 + $0x8] sm:$0xf]
        %v2583 = vld [vmem:[#allocation13 + $0xc] sm:$0xf]
        %v2584 = vld [vmem:[#allocation13 + $0x10] sm:$0xf]
        %v2585 = vld [vmem:[#allocation13 + $0x14] sm:$0xf]
        %v2586 = vld [vmem:[#allocation13 + $0x18] sm:$0xf]
        %v2587 = vld [vmem:[#allocation13 + $0x1c] sm:$0xf]
        %v2588 = vld [vmem:[#allocation13 + $0x20] sm:$0xf]
        %v2589 = vld [vmem:[#allocation13 + $0x24] sm:$0xf]
        %v2590 = vld [vmem:[#allocation13 + $0x28] sm:$0xf]
        %v2591 = vld [vmem:[#allocation13 + $0x2c] sm:$0xf]
        %v2592 = vld [vmem:[#allocation13 + $0x30] sm:$0xf]
        %v2593 = vld [vmem:[#allocation13 + $0x34] sm:$0xf]
        %v2594 = vld [vmem:[#allocation13 + $0x38] sm:$0xf]
        %v2595 = vld [vmem:[#allocation13 + $0x3c] sm:$0xf]
        %v2596 = vld [vmem:[#allocation15] sm:$0x1]
        %v2598 = vlaneseq
        %v2599 = vshrl.u32 %v2598, 7
        %v2600 = vsub.s32 0, %v2599
        %v2601 = vrot.slane %v2596, %v2600
        %v2619 = vunpack.c.l.b16 %v2580
        %v2620 = vunpack.c.l.b16 %v2581
        %v2621 = vunpack.c.l.b16 %v2582
        %v2622 = vunpack.c.l.b16 %v2583
        %v2623 = vunpack.c.l.b16 %v2584
        %v2624 = vunpack.c.l.b16 %v2585
        %v2625 = vunpack.c.l.b16 %v2586
        %v2626 = vunpack.c.l.b16 %v2587
        %v2627 = vunpack.c.l.b16 %v2588
        %v2628 = vunpack.c.l.b16 %v2589
        %v2629 = vunpack.c.l.b16 %v2590
        %v2630 = vunpack.c.l.b16 %v2591
        %v2631 = vunpack.c.l.b16 %v2592
        %v2632 = vunpack.c.l.b16 %v2593
        %v2633 = vunpack.c.l.b16 %v2594
        %v2634 = vunpack.c.l.b16 %v2595
        %v2635 = vpack.c.b16 %v2620, %v2619
        %v2636 = vpack.c.b16 %v2622, %v2621
        %v2637 = vpack.c.b16 %v2624, %v2623
        %v2638 = vpack.c.b16 %v2626, %v2625
        %v2639 = vpack.c.b16 %v2628, %v2627
        %v2640 = vpack.c.b16 %v2630, %v2629
        %v2641 = vpack.c.b16 %v2632, %v2631
        %v2642 = vpack.c.b16 %v2634, %v2633
        %2651 = vmatprep.subr.bf16.mxu0 0
        %2652 = vmatpush1.bf16.msra.mxu0 %v2635
        %2653 = vmatprep.subr.bf16.mxu0 0
        %2654 = vmatpush1.bf16.msra.mxu0 %v2636
        %2655 = vmatprep.subr.bf16.mxu0 0
        %2656 = vmatpush1.bf16.msra.mxu0 %v2637
        %2657 = vmatprep.subr.bf16.mxu0 0
        %2658 = vmatpush1.bf16.msra.mxu0 %v2638
        %2659 = vmatprep.subr.bf16.mxu0 0
        %2660 = vmatpush1.bf16.msra.mxu0 %v2639
        %2661 = vmatprep.subr.bf16.mxu0 0
        %2662 = vmatpush1.bf16.msra.mxu0 %v2640
        %2663 = vmatprep.subr.bf16.mxu0 0
        %2664 = vmatpush1.bf16.msra.mxu0 %v2641
        %2665 = vmatprep.subr.bf16.mxu0 0
        %2666 = vmatpush1.bf16.msra.mxu0 %v2642
        %2667 = vmatprep.subr.bf16.mxu0 0
        %2668 = vmatpush1.bf16.msra.mxu0 0
        %2669 = vmatprep.subr.bf16.mxu0 0
        %2670 = vmatpush1.bf16.msra.mxu0 0
        %2671 = vmatprep.subr.bf16.mxu0 0
        %2672 = vmatpush1.bf16.msra.mxu0 0
        %2673 = vmatprep.subr.bf16.mxu0 0
        %2674 = vmatpush1.bf16.msra.mxu0 0
        %2675 = vmatprep.subr.bf16.mxu0 0
        %2676 = vmatpush1.bf16.msra.mxu0 0
        %2677 = vmatprep.subr.bf16.mxu0 0
        %2678 = vmatpush1.bf16.msra.mxu0 0
        %2679 = vmatprep.subr.bf16.mxu0 0
        %2680 = vmatpush1.bf16.msra.mxu0 0
        %2681 = vmatprep.subr.bf16.mxu0 0
        %2682 = vmatpush1.bf16.msra.mxu0 0
        %2683 = vmatprep.mubr.bf16.mxu0 0
        %2684 = vmatmul.mubr.bf16.gmra.mrb[0].mxu0 %v2579
        %v2685 = vpop.f32.mrb[0].mxu0
        %v2686 = vadd.f32 %v2601, %v2685
        %v2687 = vpop.f32.mrb[0].mxu0
        %v2688 = vpop.f32.mrb[0].mxu0
        %v2689 = vpop.f32.mrb[0].mxu0
        %2690 = vdwg.mxu0
        %v2691 = vadd.f32 %v1863, %v2686
        %2692 = vadd.xlane.f32.xlu0 %v2691
        %v2693 = vpop.xlane.xlu0 %2692
        %v2694 = vmul.f32 %v2693, %v1838
        %v2695 = vsub.f32 %v2691, %v2694
        %v2696 = vmul.f32 %v2695, %v2695
        %2697 = vadd.xlane.f32.xlu0 %v2696
        %v2698 = vpop.xlane.xlu0 %2697
        %v2699 = vmul.f32 %v2698, %v1838
        %v2700 = vadd.f32 %v2699, 1e-05
        %v2701 = vrsqrt.pop %v2700
        %v2702 = vmul.f32 %v2695, %v2701
        %v2703 = vld [vmem:[#allocation16] sm:$0x1]
        %v2705 = vlaneseq
        %v2706 = vshrl.u32 %v2705, 7
        %v2707 = vsub.s32 0, %v2706
        %v2708 = vrot.slane %v2703, %v2707
        %v2710 = vmul.f32 %v2702, %v2708
        %v2711 = vld [vmem:[#allocation18] sm:$0x1]
        %v2713 = vlaneseq
        %v2714 = vshrl.u32 %v2713, 7
        %v2715 = vsub.s32 0, %v2714
        %v2716 = vrot.slane %v2711, %v2715
        %v2718 = vadd.f32 %v2710, %v2716
        %v2719 = vpack.c.bf16 %v2718, %v2718
        %v2720 = vld [vmem:[#allocation19] sm:$0xff]
        %v2721 = vld [vmem:[#allocation19 + $0x8] sm:$0xff]
        %v2722 = vld [vmem:[#allocation19 + $0x10] sm:$0xff]
        %v2723 = vld [vmem:[#allocation19 + $0x18] sm:$0xff]
        %v2724 = vld [vmem:[#allocation19 + $0x20] sm:$0xff]
        %v2725 = vld [vmem:[#allocation19 + $0x28] sm:$0xff]
        %v2726 = vld [vmem:[#allocation19 + $0x30] sm:$0xff]
        %v2727 = vld [vmem:[#allocation19 + $0x38] sm:$0xff]
        %v2728 = vld [vmem:[#allocation19 + $0x40] sm:$0xff]
        %v2729 = vld [vmem:[#allocation19 + $0x48] sm:$0xff]
        %v2730 = vld [vmem:[#allocation19 + $0x50] sm:$0xff]
        %v2731 = vld [vmem:[#allocation19 + $0x58] sm:$0xff]
        %v2732 = vld [vmem:[#allocation19 + $0x60] sm:$0xff]
        %v2733 = vld [vmem:[#allocation19 + $0x68] sm:$0xff]
        %v2734 = vld [vmem:[#allocation19 + $0x70] sm:$0xff]
        %v2735 = vld [vmem:[#allocation19 + $0x78] sm:$0xff]
        %v2736 = vld [vmem:[%s19] sm:$0x3]
        %v2738 = vlaneseq
        %v2739 = vshrl.u32 %v2738, 7
        %v2740 = vsub.s32 0, %v2739
        %v2741 = vrot.slane %v2736, %v2740
        %v2742 = vlaneseq
        %v2743 = vshrl.u32 %v2742, 7
        %v2744 = vsub.s32 1, %v2743
        %v2745 = vrot.slane %v2736, %v2744
        %v2764 = vunpack.c.l.b16 %v2720
        %v2765 = vunpack.c.h.b16 %v2720
        %v2766 = vunpack.c.l.b16 %v2721
        %v2767 = vunpack.c.h.b16 %v2721
        %v2768 = vunpack.c.l.b16 %v2722
        %v2769 = vunpack.c.h.b16 %v2722
        %v2770 = vunpack.c.l.b16 %v2723
        %v2771 = vunpack.c.h.b16 %v2723
        %v2772 = vunpack.c.l.b16 %v2724
        %v2773 = vunpack.c.h.b16 %v2724
        %v2774 = vunpack.c.l.b16 %v2725
        %v2775 = vunpack.c.h.b16 %v2725
        %v2776 = vunpack.c.l.b16 %v2726
        %v2777 = vunpack.c.h.b16 %v2726
        %v2778 = vunpack.c.l.b16 %v2727
        %v2779 = vunpack.c.h.b16 %v2727
        %v2780 = vunpack.c.l.b16 %v2728
        %v2781 = vunpack.c.h.b16 %v2728
        %v2782 = vunpack.c.l.b16 %v2729
        %v2783 = vunpack.c.h.b16 %v2729
        %v2784 = vunpack.c.l.b16 %v2730
        %v2785 = vunpack.c.h.b16 %v2730
        %v2786 = vunpack.c.l.b16 %v2731
        %v2787 = vunpack.c.h.b16 %v2731
        %v2788 = vunpack.c.l.b16 %v2732
        %v2789 = vunpack.c.h.b16 %v2732
        %v2790 = vunpack.c.l.b16 %v2733
        %v2791 = vunpack.c.h.b16 %v2733
        %v2792 = vunpack.c.l.b16 %v2734
        %v2793 = vunpack.c.h.b16 %v2734
        %v2794 = vunpack.c.l.b16 %v2735
        %v2795 = vunpack.c.h.b16 %v2735
        %v2796 = vpack.c.b16 %v2766, %v2764
        %v2797 = vpack.c.b16 %v2767, %v2765
        %v2798 = vpack.c.b16 %v2770, %v2768
        %v2799 = vpack.c.b16 %v2771, %v2769
        %v2800 = vpack.c.b16 %v2774, %v2772
        %v2801 = vpack.c.b16 %v2775, %v2773
        %v2802 = vpack.c.b16 %v2778, %v2776
        %v2803 = vpack.c.b16 %v2779, %v2777
        %v2804 = vpack.c.b16 %v2782, %v2780
        %v2805 = vpack.c.b16 %v2783, %v2781
        %v2806 = vpack.c.b16 %v2786, %v2784
        %v2807 = vpack.c.b16 %v2787, %v2785
        %v2808 = vpack.c.b16 %v2790, %v2788
        %v2809 = vpack.c.b16 %v2791, %v2789
        %v2810 = vpack.c.b16 %v2794, %v2792
        %v2811 = vpack.c.b16 %v2795, %v2793
        %2828 = vmatprep.subr.bf16.mxu0 %v2797
        %2829 = vmatpush1.bf16.msra.mxu0 %v2796
        %2830 = vmatprep.subr.bf16.mxu0 %v2799
        %2831 = vmatpush1.bf16.msra.mxu0 %v2798
        %2832 = vmatprep.subr.bf16.mxu0 %v2801
        %2833 = vmatpush1.bf16.msra.mxu0 %v2800
        %2834 = vmatprep.subr.bf16.mxu0 %v2803
        %2835 = vmatpush1.bf16.msra.mxu0 %v2802
        %2836 = vmatprep.subr.bf16.mxu0 %v2805
        %2837 = vmatpush1.bf16.msra.mxu0 %v2804
        %2838 = vmatprep.subr.bf16.mxu0 %v2807
        %2839 = vmatpush1.bf16.msra.mxu0 %v2806
        %2840 = vmatprep.subr.bf16.mxu0 %v2809
        %2841 = vmatpush1.bf16.msra.mxu0 %v2808
        %2842 = vmatprep.subr.bf16.mxu0 %v2811
        %2843 = vmatpush1.bf16.msra.mxu0 %v2810
        %2844 = vmatprep.subr.bf16.mxu0 0
        %2845 = vmatpush1.bf16.msra.mxu0 0
        %2846 = vmatprep.subr.bf16.mxu0 0
        %2847 = vmatpush1.bf16.msra.mxu0 0
        %2848 = vmatprep.subr.bf16.mxu0 0
        %2849 = vmatpush1.bf16.msra.mxu0 0
        %2850 = vmatprep.subr.bf16.mxu0 0
        %2851 = vmatpush1.bf16.msra.mxu0 0
        %2852 = vmatprep.subr.bf16.mxu0 0
        %2853 = vmatpush1.bf16.msra.mxu0 0
        %2854 = vmatprep.subr.bf16.mxu0 0
        %2855 = vmatpush1.bf16.msra.mxu0 0
        %2856 = vmatprep.subr.bf16.mxu0 0
        %2857 = vmatpush1.bf16.msra.mxu0 0
        %2858 = vmatprep.subr.bf16.mxu0 0
        %2859 = vmatpush1.bf16.msra.mxu0 0
        %2860 = vmatprep.mubr.bf16.mxu0 0
        %2861 = vmatmul.mubr.bf16.gmra.mrb[0].mxu0 %v2719
        %v2862 = vpop.f32.mrb[0].mxu0
        %v2863 = vadd.f32 %v2741, %v2862
        %v2864 = vpop.f32.mrb[0].mxu0
        %v2865 = vadd.f32 %v2745, %v2864
        %v2866 = vpop.f32.mrb[0].mxu0
        %v2867 = vpop.f32.mrb[0].mxu0
        %2868 = vdwg.mxu0
        %v2869 = vmax.f32 %v2863, 0.0
        %v2870 = vmax.f32 %v2865, 0.0
        %v2871 = vpack.c.bf16 %v2869, %v2869
        %v2872 = vpack.c.bf16 %v2870, %v2870
        %v2873 = vld [vmem:[#allocation21] sm:$0xf]
        %v2874 = vld [vmem:[#allocation21 + $0x4] sm:$0xf]
        %v2875 = vld [vmem:[#allocation21 + $0x8] sm:$0xf]
        %v2876 = vld [vmem:[#allocation21 + $0xc] sm:$0xf]
        %v2877 = vld [vmem:[#allocation21 + $0x10] sm:$0xf]
        %v2878 = vld [vmem:[#allocation21 + $0x14] sm:$0xf]
        %v2879 = vld [vmem:[#allocation21 + $0x18] sm:$0xf]
        %v2880 = vld [vmem:[#allocation21 + $0x1c] sm:$0xf]
        %v2881 = vld [vmem:[#allocation21 + $0x20] sm:$0xf]
        %v2882 = vld [vmem:[#allocation21 + $0x24] sm:$0xf]
        %v2883 = vld [vmem:[#allocation21 + $0x28] sm:$0xf]
        %v2884 = vld [vmem:[#allocation21 + $0x2c] sm:$0xf]
        %v2885 = vld [vmem:[#allocation21 + $0x30] sm:$0xf]
        %v2886 = vld [vmem:[#allocation21 + $0x34] sm:$0xf]
        %v2887 = vld [vmem:[#allocation21 + $0x38] sm:$0xf]
        %v2888 = vld [vmem:[#allocation21 + $0x3c] sm:$0xf]
        %v2889 = vld [vmem:[#allocation21 + $0x40] sm:$0xf]
        %v2890 = vld [vmem:[#allocation21 + $0x44] sm:$0xf]
        %v2891 = vld [vmem:[#allocation21 + $0x48] sm:$0xf]
        %v2892 = vld [vmem:[#allocation21 + $0x4c] sm:$0xf]
        %v2893 = vld [vmem:[#allocation21 + $0x50] sm:$0xf]
        %v2894 = vld [vmem:[#allocation21 + $0x54] sm:$0xf]
        %v2895 = vld [vmem:[#allocation21 + $0x58] sm:$0xf]
        %v2896 = vld [vmem:[#allocation21 + $0x5c] sm:$0xf]
        %v2897 = vld [vmem:[#allocation21 + $0x60] sm:$0xf]
        %v2898 = vld [vmem:[#allocation21 + $0x64] sm:$0xf]
        %v2899 = vld [vmem:[#allocation21 + $0x68] sm:$0xf]
        %v2900 = vld [vmem:[#allocation21 + $0x6c] sm:$0xf]
        %v2901 = vld [vmem:[#allocation21 + $0x70] sm:$0xf]
        %v2902 = vld [vmem:[#allocation21 + $0x74] sm:$0xf]
        %v2903 = vld [vmem:[#allocation21 + $0x78] sm:$0xf]
        %v2904 = vld [vmem:[#allocation21 + $0x7c] sm:$0xf]
        %v2905 = vld [vmem:[#allocation22] sm:$0x1]
        %v2907 = vlaneseq
        %v2908 = vshrl.u32 %v2907, 7
        %v2909 = vsub.s32 0, %v2908
        %v2910 = vrot.slane %v2905, %v2909
        %v2944 = vunpack.c.l.b16 %v2873
        %v2945 = vunpack.c.l.b16 %v2874
        %v2946 = vunpack.c.l.b16 %v2875
        %v2947 = vunpack.c.l.b16 %v2876
        %v2948 = vunpack.c.l.b16 %v2877
        %v2949 = vunpack.c.l.b16 %v2878
        %v2950 = vunpack.c.l.b16 %v2879
        %v2951 = vunpack.c.l.b16 %v2880
        %v2952 = vunpack.c.l.b16 %v2881
        %v2953 = vunpack.c.l.b16 %v2882
        %v2954 = vunpack.c.l.b16 %v2883
        %v2955 = vunpack.c.l.b16 %v2884
        %v2956 = vunpack.c.l.b16 %v2885
        %v2957 = vunpack.c.l.b16 %v2886
        %v2958 = vunpack.c.l.b16 %v2887
        %v2959 = vunpack.c.l.b16 %v2888
        %v2960 = vunpack.c.l.b16 %v2889
        %v2961 = vunpack.c.l.b16 %v2890
        %v2962 = vunpack.c.l.b16 %v2891
        %v2963 = vunpack.c.l.b16 %v2892
        %v2964 = vunpack.c.l.b16 %v2893
        %v2965 = vunpack.c.l.b16 %v2894
        %v2966 = vunpack.c.l.b16 %v2895
        %v2967 = vunpack.c.l.b16 %v2896
        %v2968 = vunpack.c.l.b16 %v2897
        %v2969 = vunpack.c.l.b16 %v2898
        %v2970 = vunpack.c.l.b16 %v2899
        %v2971 = vunpack.c.l.b16 %v2900
        %v2972 = vunpack.c.l.b16 %v2901
        %v2973 = vunpack.c.l.b16 %v2902
        %v2974 = vunpack.c.l.b16 %v2903
        %v2975 = vunpack.c.l.b16 %v2904
        %v2976 = vpack.c.b16 %v2945, %v2944
        %v2977 = vpack.c.b16 %v2947, %v2946
        %v2978 = vpack.c.b16 %v2949, %v2948
        %v2979 = vpack.c.b16 %v2951, %v2950
        %v2980 = vpack.c.b16 %v2953, %v2952
        %v2981 = vpack.c.b16 %v2955, %v2954
        %v2982 = vpack.c.b16 %v2957, %v2956
        %v2983 = vpack.c.b16 %v2959, %v2958
        %v2984 = vpack.c.b16 %v2961, %v2960
        %v2985 = vpack.c.b16 %v2963, %v2962
        %v2986 = vpack.c.b16 %v2965, %v2964
        %v2987 = vpack.c.b16 %v2967, %v2966
        %v2988 = vpack.c.b16 %v2969, %v2968
        %v2989 = vpack.c.b16 %v2971, %v2970
        %v2990 = vpack.c.b16 %v2973, %v2972
        %v2991 = vpack.c.b16 %v2975, %v2974
        %3008 = vmatprep.subr.bf16.mxu0 0
        %3009 = vmatpush1.bf16.msra.mxu0 %v2976
        %3010 = vmatprep.subr.bf16.mxu0 0
        %3011 = vmatpush1.bf16.msra.mxu0 %v2977
        %3012 = vmatprep.subr.bf16.mxu0 0
        %3013 = vmatpush1.bf16.msra.mxu0 %v2978
        %3014 = vmatprep.subr.bf16.mxu0 0
        %3015 = vmatpush1.bf16.msra.mxu0 %v2979
        %3016 = vmatprep.subr.bf16.mxu0 0
        %3017 = vmatpush1.bf16.msra.mxu0 %v2980
        %3018 = vmatprep.subr.bf16.mxu0 0
        %3019 = vmatpush1.bf16.msra.mxu0 %v2981
        %3020 = vmatprep.subr.bf16.mxu0 0
        %3021 = vmatpush1.bf16.msra.mxu0 %v2982
        %3022 = vmatprep.subr.bf16.mxu0 0
        %3023 = vmatpush1.bf16.msra.mxu0 %v2983
        %3024 = vmatprep.subr.bf16.mxu0 0
        %3025 = vmatpush1.bf16.msra.mxu0 %v2984
        %3026 = vmatprep.subr.bf16.mxu0 0
        %3027 = vmatpush1.bf16.msra.mxu0 %v2985
        %3028 = vmatprep.subr.bf16.mxu0 0
        %3029 = vmatpush1.bf16.msra.mxu0 %v2986
        %3030 = vmatprep.subr.bf16.mxu0 0
        %3031 = vmatpush1.bf16.msra.mxu0 %v2987
        %3032 = vmatprep.subr.bf16.mxu0 0
        %3033 = vmatpush1.bf16.msra.mxu0 %v2988
        %3034 = vmatprep.subr.bf16.mxu0 0
        %3035 = vmatpush1.bf16.msra.mxu0 %v2989
        %3036 = vmatprep.subr.bf16.mxu0 0
        %3037 = vmatpush1.bf16.msra.mxu0 %v2990
        %3038 = vmatprep.subr.bf16.mxu0 0
        %3039 = vmatpush1.bf16.msra.mxu0 %v2991
        %3040 = vmatprep.mubr.bf16.mxu0 %v2872
        %3041 = vmatmul.mubr.bf16.gmra.mrb[0].mxu0 %v2871
        %v3042 = vpop.f32.mrb[0].mxu0
        %v3043 = vadd.f32 %v2910, %v3042
        %v3044 = vpop.f32.mrb[0].mxu0
        %v3045 = vpop.f32.mrb[0].mxu0
        %v3046 = vpop.f32.mrb[0].mxu0
        %3047 = vdwg.mxu0
        %v3048 = vadd.f32 %v2718, %v3043
        %3049 = vadd.xlane.f32.xlu0 %v3048
        %v3050 = vpop.xlane.xlu0 %3049
        %v3051 = vmul.f32 %v3050, %v1838
        %v3052 = vsub.f32 %v3048, %v3051
        %v3053 = vmul.f32 %v3052, %v3052
        %3054 = vadd.xlane.f32.xlu0 %v3053
        %v3055 = vpop.xlane.xlu0 %3054
        %v3056 = vmul.f32 %v3055, %v1838
        %v3057 = vadd.f32 %v3056, 1e-05
        %v3058 = vrsqrt.pop %v3057
        %v3059 = vmul.f32 %v3052, %v3058
        %v3060 = vld [vmem:[#allocation24] sm:$0x1]
        %v3062 = vlaneseq
        %v3063 = vshrl.u32 %v3062, 7
        %v3064 = vsub.s32 0, %v3063
        %v3065 = vrot.slane %v3060, %v3064
        %v3067 = vmul.f32 %v3059, %v3065
        %v3068 = vld [vmem:[#allocation25] sm:$0x1]
        %v3070 = vlaneseq
        %v3071 = vshrl.u32 %v3070, 7
        %v3072 = vsub.s32 0, %v3071
        %v3073 = vrot.slane %v3068, %v3072
        %v3075 = vadd.f32 %v3067, %v3073
        %3076 = vst [vmem:[%s999] sm:$0xff] %v3075
        %p3077 = scmp.lt.s32.totalorder %s44, 1
        %s3078 = scalar_select %p3077, %s44, 1
        %s3079 = smul.addr %s3078, 8
        %s3080 = scalar_lea.vmem %s24, %s3079
        // Predicated region
        $region181: #{decoders_forward.2} parent=115 // pred_check
          %p3081 = pneg %p586
        $region182: #{decoders_forward.2} parent=115 // pred_check_branch
          %3083 = sbr.rel (%p3081) target = $region184
        $region183: #{decoders_forward.2} parent=115 // pred_region
          _
        $region184: #{decoders_forward.2} parent=115 // pred_fallthru
          _
      $region116: #{decoders_forward.2} parent=5 // pred_fallthru
        _
      %p3084 = scmp.le.s32.totalorder 2, %s39
      // Predicated region
      $region185: #{decoders_forward.2} parent=5 // pred_check
        %p3085 = pneg %p3084
      $region186: #{decoders_forward.2} parent=5 // pred_check_branch
        %3087 = sbr.rel (%p3085) target = $region188
      $region187: #{decoders_forward.2} parent=5 // pred_region
        %s3088 = ssub.s32 %s39, 2
        // Predicated region
        $region189: #{decoders_forward.2} parent=187 // pred_check
          %p3089 = pneg %p592
        $region190: #{decoders_forward.2} parent=187 // pred_check_branch
          %3091 = sbr.rel (%p3089) target = $region192
        $region191: #{decoders_forward.2} parent=187 // pred_region
          %p3092 = scmp.lt.s32.totalorder %s45, 1
          %s3093 = scalar_select %p3092, %s45, 1
          %s3094 = smul.addr %s3093, 8
          %s3095 = scalar_lea.vmem %s24, %s3094
        $region192: #{decoders_forward.2} parent=187 // pred_fallthru
          _
      $region188: #{decoders_forward.2} parent=5 // pred_fallthru
        _
    $region6: #{decoders_forward.2} parent=1 // loop_footer
      %s43 = sadd.s32 1, %s39
    $region7: #{decoders_forward.2} parent=1 // loop_footer_branch
      %38 = sbr.rel target = $region3
    $region8: #{decoders_forward.2} parent=1 // loop_exit
      _
    %3096 = vsyncpa [#allocation3], 1
    %s3097 = scalar_lea.sflag [#allocation3], 1
    %3098 = vsyncpa %s3097, 1
    %3099 = vsyncpa [#allocation5], 1
    %3100 = vsyncpa [#allocation8], 1
    %3101 = vsyncpa [#allocation11], 1
    %3102 = vsyncpa [#allocation14], 1
    %3103 = vsyncpa [#allocation17], 1
    %3104 = vsyncpa [#allocation20], 1
    %3105 = vsyncpa [#allocation23], 1
    %3106 = vsyncpa [#allocation26], 1

// kernel: decoders_forward.3
$region0: #{decoders_forward.3}
  #allocation0 [shape = 'u32[]', space=smem, size = 0x4, offset = 0x4, fixed_abs, tag = 'smem constant byte address 0x4 - core index']
  #allocation1 [shape = 'u32[144,128]{1,0:T(1,128)}', space=vmem, size = 0x12000, scoped, tag = 'internal scratch']
  %s0 = inlined_call_operand.vmem [shape: f32[2,8,128], index: 0, kind: input, shape index: {}]
  %s1 = inlined_call_operand.vmem [shape: f32[2,16,128], index: 1, kind: input, shape index: {}]
  %s2 = inlined_call_operand.vmem [shape: bf16[2,8,8], index: 2, kind: input, shape index: {}]
  %s3 = inlined_call_operand.vmem [shape: bf16[2,8,16], index: 3, kind: input, shape index: {}]
  %s4 = inlined_call_operand.vmem [shape: bf16[128,384], index: 4, kind: input, shape index: {}]
  %s5 = inlined_call_operand.vmem [shape: f32[1,384], index: 5, kind: input, shape index: {}]
  %s6 = inlined_call_operand.vmem [shape: bf16[128,128], index: 6, kind: input, shape index: {}]
  %s7 = inlined_call_operand.vmem [shape: f32[1,128], index: 7, kind: input, shape index: {}]
  %s8 = inlined_call_operand.vmem [shape: f32[1,128], index: 8, kind: input, shape index: {}]
  %s9 = inlined_call_operand.vmem [shape: f32[1,128], index: 9, kind: input, shape index: {}]
  %s10 = inlined_call_operand.vmem [shape: bf16[128,128], index: 10, kind: input, shape index: {}]
  %s11 = inlined_call_operand.vmem [shape: f32[1,128], index: 11, kind: input, shape index: {}]
  %s12 = inlined_call_operand.vmem [shape: bf16[128,256], index: 12, kind: input, shape index: {}]
  %s13 = inlined_call_operand.vmem [shape: f32[1,256], index: 13, kind: input, shape index: {}]
  %s14 = inlined_call_operand.vmem [shape: bf16[128,128], index: 14, kind: input, shape index: {}]
  %s15 = inlined_call_operand.vmem [shape: f32[1,128], index: 15, kind: input, shape index: {}]
  %s16 = inlined_call_operand.vmem [shape: f32[1,128], index: 16, kind: input, shape index: {}]
  %s17 = inlined_call_operand.vmem [shape: f32[1,128], index: 17, kind: input, shape index: {}]
  %s18 = inlined_call_operand.vmem [shape: bf16[128,256], index: 18, kind: input, shape index: {}]
  %s19 = inlined_call_operand.vmem [shape: f32[1,256], index: 19, kind: input, shape index: {}]
  %s20 = inlined_call_operand.vmem [shape: bf16[256,128], index: 20, kind: input, shape index: {}]
  %s21 = inlined_call_operand.vmem [shape: f32[1,128], index: 21, kind: input, shape index: {}]
  %s22 = inlined_call_operand.vmem [shape: f32[1,128], index: 22, kind: input, shape index: {}]
  %s23 = inlined_call_operand.vmem [shape: f32[1,128], index: 23, kind: input, shape index: {}]
  %s24 = inlined_call_operand.hbm [shape: f32[2,8,128], index: 24, kind: output, shape index: {}]
  %s25 = sld [smem:[#allocation0]]
  $region129: #{decoders_forward.3} parent=0
    _
  %s27 = ssub.s32 1, %s25
  %s28 = scalar_select 0, %s27, %s25
  $region1: #{decoders_forward.3} parent=0
    #allocation2 [shape = 'u8[8192]{0}', space=vmem, size = 0x2000, scoped, tag = 'output window, operand 0']
    #allocation3 [shape = 's32[2]{0}', space=sflag, size = 0x8, scoped, tag = 'scoped memory for decoders_forward.3']
    %29 = vsyncpa [#allocation3], 0
    %s30 = scalar_lea.sflag [#allocation3], 1
    %31 = vsyncpa %s30, 0
    loop: start=0, step=1, limit=4
    $region2: #{decoders_forward.3} parent=1 // loop_pre_header
      _
    $region3: #{decoders_forward.3} parent=1 // loop_header
      %s33 = sphi 0, %s37
      %p34 = scmp.ge.s32.totalorder %s33, 4
      %s43 = sphi 0, %s45
      %s46 = sphi 0, %s43
      %s47 = sphi 0, %s46
      %s63 = sphi 0, %s47
      %s69 = sphi 0, %s71
      %s72 = sphi 0, %s69
      %s73 = sphi 0, %s72
      %s89 = sphi 0, %s73
      %s95 = sphi 0, %s97
      %s98 = sphi 0, %s95
      %s99 = sphi 0, %s98
      %s115 = sphi 0, %s99
      %s121 = sphi 0, %s123
      %s124 = sphi 0, %s121
      %s125 = sphi 0, %s124
      %s141 = sphi 0, %s125
      %s145 = sphi 0, %s145
      %s147 = sphi 0, %s145
      %s148 = sphi 0, %s147
      %s162 = sphi 0, %s148
      %s166 = sphi 0, %s166
      %s168 = sphi 0, %s166
      %s169 = sphi 0, %s168
      %s183 = sphi 0, %s169
      %s187 = sphi 0, %s187
      %s189 = sphi 0, %s187
      %s190 = sphi 0, %s189
      %s204 = sphi 0, %s190
      %s208 = sphi 0, %s208
      %s210 = sphi 0, %s208
      %s211 = sphi 0, %s210
      %s225 = sphi 0, %s211
      %s229 = sphi 0, %s229
      %s231 = sphi 0, %s229
      %s232 = sphi 0, %s231
      %s246 = sphi 0, %s232
      %s250 = sphi 0, %s250
      %s252 = sphi 0, %s250
      %s253 = sphi 0, %s252
      %s267 = sphi 0, %s253
      %s271 = sphi 0, %s271
      %s273 = sphi 0, %s271
      %s274 = sphi 0, %s273
      %s288 = sphi 0, %s274
      %s292 = sphi 0, %s292
      %s294 = sphi 0, %s292
      %s295 = sphi 0, %s294
      %s309 = sphi 0, %s295
      %s313 = sphi 0, %s313
      %s315 = sphi 0, %s313
      %s316 = sphi 0, %s315
      %s330 = sphi 0, %s316
      %s334 = sphi 0, %s334
      %s336 = sphi 0, %s334
      %s337 = sphi 0, %s336
      %s351 = sphi 0, %s337
      %s355 = sphi 0, %s355
      %s357 = sphi 0, %s355
      %s358 = sphi 0, %s357
      %s372 = sphi 0, %s358
      %s376 = sphi 0, %s376
      %s378 = sphi 0, %s376
      %s379 = sphi 0, %s378
      %s393 = sphi 0, %s379
      %s397 = sphi 0, %s397
      %s399 = sphi 0, %s397
      %s400 = sphi 0, %s399
      %s414 = sphi 0, %s400
      %s418 = sphi 0, %s418
      %s420 = sphi 0, %s418
      %s421 = sphi 0, %s420
      %s435 = sphi 0, %s421
      %s439 = sphi 0, %s439
      %s441 = sphi 0, %s439
      %s442 = sphi 0, %s441
      %s456 = sphi 0, %s442
      %s460 = sphi 0, %s460
      %s462 = sphi 0, %s460
      %s463 = sphi 0, %s462
      %s477 = sphi 0, %s463
      %s481 = sphi 0, %s481
      %s483 = sphi 0, %s481
      %s484 = sphi 0, %s483
      %s498 = sphi 0, %s484
      %s502 = sphi 0, %s502
      %s504 = sphi 0, %s502
      %s505 = sphi 0, %s504
      %s519 = sphi 0, %s505
      %s523 = sphi 0, %s523
      %s525 = sphi 0, %s523
      %s526 = sphi 0, %s525
      %s540 = sphi 0, %s526
      %s544 = sphi 0, %s544
      %s546 = sphi 0, %s544
      %s547 = sphi 0, %s546
      %s561 = sphi 0, %s547
      %s567 = sphi 0, %s569
      %s570 = sphi 0, %s567
      %s571 = sphi 0, %s570
      %s587 = sphi 0, %s571
    $region4: #{decoders_forward.3} parent=1 // loop_header_branch
      %36 = sbr.rel (%p34) target = $region8
    $region5: #{decoders_forward.3} parent=1 // loop_body
      %s38 = ssub.s32 %s33, 1
      %s39 = ssub.s32 %s33, 2
      %s40 = sadd.s32 %s33, 1
      %s41 = ssub.s32 %s33, %s40
      %p42 = scmp.eq.s32.totalorder %s41, 0
      %s44 = sadd.s32 %s43, 1
      %s45 = scalar_select %p42, %s43, %s44
      %p48 = pneg %p42
      %p49 = scmp.eq.s32.totalorder %s33, 1
      %p50 = por %p48, %p49
      %p51 = scmp.ne.s32.totalorder %s43, %s46
      %p52 = scmp.eq.s32.totalorder %s33, 0
      %p53 = por %p51, %p52
      %p54 = scmp.ne.s32.totalorder %s43, %s46
      %p55 = scmp.eq.s32.totalorder %s38, 1
      %p56 = por %p54, %p55
      %p57 = scmp.ne.s32.totalorder %s46, %s47
      %p58 = scmp.eq.s32.totalorder %s38, 0
      %p59 = por %p57, %p58
      %p60 = scmp.ne.s32.totalorder %s46, %s47
      %p61 = scmp.eq.s32.totalorder %s39, 1
      %p62 = por %p60, %p61
      %p64 = scmp.ne.s32.totalorder %s47, %s63
      %p65 = scmp.eq.s32.totalorder %s39, 0
      %p66 = por %p64, %p65
      %s67 = ssub.s32 %s33, %s40
      %p68 = scmp.eq.s32.totalorder %s67, 0
      %s70 = sadd.s32 %s69, 1
      %s71 = scalar_select %p68, %s69, %s70
      %p74 = pneg %p68
      %p75 = scmp.eq.s32.totalorder %s33, 1
      %p76 = por %p74, %p75
      %p77 = scmp.ne.s32.totalorder %s69, %s72
      %p78 = scmp.eq.s32.totalorder %s33, 0
      %p79 = por %p77, %p78
      %p80 = scmp.ne.s32.totalorder %s69, %s72
      %p81 = scmp.eq.s32.totalorder %s38, 1
      %p82 = por %p80, %p81
      %p83 = scmp.ne.s32.totalorder %s72, %s73
      %p84 = scmp.eq.s32.totalorder %s38, 0
      %p85 = por %p83, %p84
      %p86 = scmp.ne.s32.totalorder %s72, %s73
      %p87 = scmp.eq.s32.totalorder %s39, 1
      %p88 = por %p86, %p87
      %p90 = scmp.ne.s32.totalorder %s73, %s89
      %p91 = scmp.eq.s32.totalorder %s39, 0
      %p92 = por %p90, %p91
      %s93 = ssub.s32 %s33, %s40
      %p94 = scmp.eq.s32.totalorder %s93, 0
      %s96 = sadd.s32 %s95, 1
      %s97 = scalar_select %p94, %s95, %s96
      %p100 = pneg %p94
      %p101 = scmp.eq.s32.totalorder %s33, 1
      %p102 = por %p100, %p101
      %p103 = scmp.ne.s32.totalorder %s95, %s98
      %p104 = scmp.eq.s32.totalorder %s33, 0
      %p105 = por %p103, %p104
      %p106 = scmp.ne.s32.totalorder %s95, %s98
      %p107 = scmp.eq.s32.totalorder %s38, 1
      %p108 = por %p106, %p107
      %p109 = scmp.ne.s32.totalorder %s98, %s99
      %p110 = scmp.eq.s32.totalorder %s38, 0
      %p111 = por %p109, %p110
      %p112 = scmp.ne.s32.totalorder %s98, %s99
      %p113 = scmp.eq.s32.totalorder %s39, 1
      %p114 = por %p112, %p113
      %p116 = scmp.ne.s32.totalorder %s99, %s115
      %p117 = scmp.eq.s32.totalorder %s39, 0
      %p118 = por %p116, %p117
      %s119 = ssub.s32 %s33, %s40
      %p120 = scmp.eq.s32.totalorder %s119, 0
      %s122 = sadd.s32 %s121, 1
      %s123 = scalar_select %p120, %s121, %s122
      %p126 = pneg %p120
      %p127 = scmp.eq.s32.totalorder %s33, 1
      %p128 = por %p126, %p127
      %p129 = scmp.ne.s32.totalorder %s121, %s124
      %p130 = scmp.eq.s32.totalorder %s33, 0
      %p131 = por %p129, %p130
      %p132 = scmp.ne.s32.totalorder %s121, %s124
      %p133 = scmp.eq.s32.totalorder %s38, 1
      %p134 = por %p132, %p133
      %p135 = scmp.ne.s32.totalorder %s124, %s125
      %p136 = scmp.eq.s32.totalorder %s38, 0
      %p137 = por %p135, %p136
      %p138 = scmp.ne.s32.totalorder %s124, %s125
      %p139 = scmp.eq.s32.totalorder %s39, 1
      %p140 = por %p138, %p139
      %p142 = scmp.ne.s32.totalorder %s125, %s141
      %p143 = scmp.eq.s32.totalorder %s39, 0
      %p144 = por %p142, %p143
      %s146 = sadd.s32 %s145, 1
      %p149 = scmp.eq.s32.totalorder %s33, 1
      %p150 = scmp.ne.s32.totalorder %s145, %s147
      %p151 = scmp.eq.s32.totalorder %s33, 0
      %p152 = por %p150, %p151
      %p153 = scmp.ne.s32.totalorder %s145, %s147
      %p154 = scmp.eq.s32.totalorder %s38, 1
      %p155 = por %p153, %p154
      %p156 = scmp.ne.s32.totalorder %s147, %s148
      %p157 = scmp.eq.s32.totalorder %s38, 0
      %p158 = por %p156, %p157
      %p159 = scmp.ne.s32.totalorder %s147, %s148
      %p160 = scmp.eq.s32.totalorder %s39, 1
      %p161 = por %p159, %p160
      %p163 = scmp.ne.s32.totalorder %s148, %s162
      %p164 = scmp.eq.s32.totalorder %s39, 0
      %p165 = por %p163, %p164
      %s167 = sadd.s32 %s166, 1
      %p170 = scmp.eq.s32.totalorder %s33, 1
      %p171 = scmp.ne.s32.totalorder %s166, %s168
      %p172 = scmp.eq.s32.totalorder %s33, 0
      %p173 = por %p171, %p172
      %p174 = scmp.ne.s32.totalorder %s166, %s168
      %p175 = scmp.eq.s32.totalorder %s38, 1
      %p176 = por %p174, %p175
      %p177 = scmp.ne.s32.totalorder %s168, %s169
      %p178 = scmp.eq.s32.totalorder %s38, 0
      %p179 = por %p177, %p178
      %p180 = scmp.ne.s32.totalorder %s168, %s169
      %p181 = scmp.eq.s32.totalorder %s39, 1
      %p182 = por %p180, %p181
      %p184 = scmp.ne.s32.totalorder %s169, %s183
      %p185 = scmp.eq.s32.totalorder %s39, 0
      %p186 = por %p184, %p185
      %s188 = sadd.s32 %s187, 1
      %p191 = scmp.eq.s32.totalorder %s33, 1
      %p192 = scmp.ne.s32.totalorder %s187, %s189
      %p193 = scmp.eq.s32.totalorder %s33, 0
      %p194 = por %p192, %p193
      %p195 = scmp.ne.s32.totalorder %s187, %s189
      %p196 = scmp.eq.s32.totalorder %s38, 1
      %p197 = por %p195, %p196
      %p198 = scmp.ne.s32.totalorder %s189, %s190
      %p199 = scmp.eq.s32.totalorder %s38, 0
      %p200 = por %p198, %p199
      %p201 = scmp.ne.s32.totalorder %s189, %s190
      %p202 = scmp.eq.s32.totalorder %s39, 1
      %p203 = por %p201, %p202
      %p205 = scmp.ne.s32.totalorder %s190, %s204
      %p206 = scmp.eq.s32.totalorder %s39, 0
      %p207 = por %p205, %p206
      %s209 = sadd.s32 %s208, 1
      %p212 = scmp.eq.s32.totalorder %s33, 1
      %p213 = scmp.ne.s32.totalorder %s208, %s210
      %p214 = scmp.eq.s32.totalorder %s33, 0
      %p215 = por %p213, %p214
      %p216 = scmp.ne.s32.totalorder %s208, %s210
      %p217 = scmp.eq.s32.totalorder %s38, 1
      %p218 = por %p216, %p217
      %p219 = scmp.ne.s32.totalorder %s210, %s211
      %p220 = scmp.eq.s32.totalorder %s38, 0
      %p221 = por %p219, %p220
      %p222 = scmp.ne.s32.totalorder %s210, %s211
      %p223 = scmp.eq.s32.totalorder %s39, 1
      %p224 = por %p222, %p223
      %p226 = scmp.ne.s32.totalorder %s211, %s225
      %p227 = scmp.eq.s32.totalorder %s39, 0
      %p228 = por %p226, %p227
      %s230 = sadd.s32 %s229, 1
      %p233 = scmp.eq.s32.totalorder %s33, 1
      %p234 = scmp.ne.s32.totalorder %s229, %s231
      %p235 = scmp.eq.s32.totalorder %s33, 0
      %p236 = por %p234, %p235
      %p237 = scmp.ne.s32.totalorder %s229, %s231
      %p238 = scmp.eq.s32.totalorder %s38, 1
      %p239 = por %p237, %p238
      %p240 = scmp.ne.s32.totalorder %s231, %s232
      %p241 = scmp.eq.s32.totalorder %s38, 0
      %p242 = por %p240, %p241
      %p243 = scmp.ne.s32.totalorder %s231, %s232
      %p244 = scmp.eq.s32.totalorder %s39, 1
      %p245 = por %p243, %p244
      %p247 = scmp.ne.s32.totalorder %s232, %s246
      %p248 = scmp.eq.s32.totalorder %s39, 0
      %p249 = por %p247, %p248
      %s251 = sadd.s32 %s250, 1
      %p254 = scmp.eq.s32.totalorder %s33, 1
      %p255 = scmp.ne.s32.totalorder %s250, %s252
      %p256 = scmp.eq.s32.totalorder %s33, 0
      %p257 = por %p255, %p256
      %p258 = scmp.ne.s32.totalorder %s250, %s252
      %p259 = scmp.eq.s32.totalorder %s38, 1
      %p260 = por %p258, %p259
      %p261 = scmp.ne.s32.totalorder %s252, %s253
      %p262 = scmp.eq.s32.totalorder %s38, 0
      %p263 = por %p261, %p262
      %p264 = scmp.ne.s32.totalorder %s252, %s253
      %p265 = scmp.eq.s32.totalorder %s39, 1
      %p266 = por %p264, %p265
      %p268 = scmp.ne.s32.totalorder %s253, %s267
      %p269 = scmp.eq.s32.totalorder %s39, 0
      %p270 = por %p268, %p269
      %s272 = sadd.s32 %s271, 1
      %p275 = scmp.eq.s32.totalorder %s33, 1
      %p276 = scmp.ne.s32.totalorder %s271, %s273
      %p277 = scmp.eq.s32.totalorder %s33, 0
      %p278 = por %p276, %p277
      %p279 = scmp.ne.s32.totalorder %s271, %s273
      %p280 = scmp.eq.s32.totalorder %s38, 1
      %p281 = por %p279, %p280
      %p282 = scmp.ne.s32.totalorder %s273, %s274
      %p283 = scmp.eq.s32.totalorder %s38, 0
      %p284 = por %p282, %p283
      %p285 = scmp.ne.s32.totalorder %s273, %s274
      %p286 = scmp.eq.s32.totalorder %s39, 1
      %p287 = por %p285, %p286
      %p289 = scmp.ne.s32.totalorder %s274, %s288
      %p290 = scmp.eq.s32.totalorder %s39, 0
      %p291 = por %p289, %p290
      %s293 = sadd.s32 %s292, 1
      %p296 = scmp.eq.s32.totalorder %s33, 1
      %p297 = scmp.ne.s32.totalorder %s292, %s294
      %p298 = scmp.eq.s32.totalorder %s33, 0
      %p299 = por %p297, %p298
      %p300 = scmp.ne.s32.totalorder %s292, %s294
      %p301 = scmp.eq.s32.totalorder %s38, 1
      %p302 = por %p300, %p301
      %p303 = scmp.ne.s32.totalorder %s294, %s295
      %p304 = scmp.eq.s32.totalorder %s38, 0
      %p305 = por %p303, %p304
      %p306 = scmp.ne.s32.totalorder %s294, %s295
      %p307 = scmp.eq.s32.totalorder %s39, 1
      %p308 = por %p306, %p307
      %p310 = scmp.ne.s32.totalorder %s295, %s309
      %p311 = scmp.eq.s32.totalorder %s39, 0
      %p312 = por %p310, %p311
      %s314 = sadd.s32 %s313, 1
      %p317 = scmp.eq.s32.totalorder %s33, 1
      %p318 = scmp.ne.s32.totalorder %s313, %s315
      %p319 = scmp.eq.s32.totalorder %s33, 0
      %p320 = por %p318, %p319
      %p321 = scmp.ne.s32.totalorder %s313, %s315
      %p322 = scmp.eq.s32.totalorder %s38, 1
      %p323 = por %p321, %p322
      %p324 = scmp.ne.s32.totalorder %s315, %s316
      %p325 = scmp.eq.s32.totalorder %s38, 0
      %p326 = por %p324, %p325
      %p327 = scmp.ne.s32.totalorder %s315, %s316
      %p328 = scmp.eq.s32.totalorder %s39, 1
      %p329 = por %p327, %p328
      %p331 = scmp.ne.s32.totalorder %s316, %s330
      %p332 = scmp.eq.s32.totalorder %s39, 0
      %p333 = por %p331, %p332
      %s335 = sadd.s32 %s334, 1
      %p338 = scmp.eq.s32.totalorder %s33, 1
      %p339 = scmp.ne.s32.totalorder %s334, %s336
      %p340 = scmp.eq.s32.totalorder %s33, 0
      %p341 = por %p339, %p340
      %p342 = scmp.ne.s32.totalorder %s334, %s336
      %p343 = scmp.eq.s32.totalorder %s38, 1
      %p344 = por %p342, %p343
      %p345 = scmp.ne.s32.totalorder %s336, %s337
      %p346 = scmp.eq.s32.totalorder %s38, 0
      %p347 = por %p345, %p346
      %p348 = scmp.ne.s32.totalorder %s336, %s337
      %p349 = scmp.eq.s32.totalorder %s39, 1
      %p350 = por %p348, %p349
      %p352 = scmp.ne.s32.totalorder %s337, %s351
      %p353 = scmp.eq.s32.totalorder %s39, 0
      %p354 = por %p352, %p353
      %s356 = sadd.s32 %s355, 1
      %p359 = scmp.eq.s32.totalorder %s33, 1
      %p360 = scmp.ne.s32.totalorder %s355, %s357
      %p361 = scmp.eq.s32.totalorder %s33, 0
      %p362 = por %p360, %p361
      %p363 = scmp.ne.s32.totalorder %s355, %s357
      %p364 = scmp.eq.s32.totalorder %s38, 1
      %p365 = por %p363, %p364
      %p366 = scmp.ne.s32.totalorder %s357, %s358
      %p367 = scmp.eq.s32.totalorder %s38, 0
      %p368 = por %p366, %p367
      %p369 = scmp.ne.s32.totalorder %s357, %s358
      %p370 = scmp.eq.s32.totalorder %s39, 1
      %p371 = por %p369, %p370
      %p373 = scmp.ne.s32.totalorder %s358, %s372
      %p374 = scmp.eq.s32.totalorder %s39, 0
      %p375 = por %p373, %p374
      %s377 = sadd.s32 %s376, 1
      %p380 = scmp.eq.s32.totalorder %s33, 1
      %p381 = scmp.ne.s32.totalorder %s376, %s378
      %p382 = scmp.eq.s32.totalorder %s33, 0
      %p383 = por %p381, %p382
      %p384 = scmp.ne.s32.totalorder %s376, %s378
      %p385 = scmp.eq.s32.totalorder %s38, 1
      %p386 = por %p384, %p385
      %p387 = scmp.ne.s32.totalorder %s378, %s379
      %p388 = scmp.eq.s32.totalorder %s38, 0
      %p389 = por %p387, %p388
      %p390 = scmp.ne.s32.totalorder %s378, %s379
      %p391 = scmp.eq.s32.totalorder %s39, 1
      %p392 = por %p390, %p391
      %p394 = scmp.ne.s32.totalorder %s379, %s393
      %p395 = scmp.eq.s32.totalorder %s39, 0
      %p396 = por %p394, %p395
      %s398 = sadd.s32 %s397, 1
      %p401 = scmp.eq.s32.totalorder %s33, 1
      %p402 = scmp.ne.s32.totalorder %s397, %s399
      %p403 = scmp.eq.s32.totalorder %s33, 0
      %p404 = por %p402, %p403
      %p405 = scmp.ne.s32.totalorder %s397, %s399
      %p406 = scmp.eq.s32.totalorder %s38, 1
      %p407 = por %p405, %p406
      %p408 = scmp.ne.s32.totalorder %s399, %s400
      %p409 = scmp.eq.s32.totalorder %s38, 0
      %p410 = por %p408, %p409
      %p411 = scmp.ne.s32.totalorder %s399, %s400
      %p412 = scmp.eq.s32.totalorder %s39, 1
      %p413 = por %p411, %p412
      %p415 = scmp.ne.s32.totalorder %s400, %s414
      %p416 = scmp.eq.s32.totalorder %s39, 0
      %p417 = por %p415, %p416
      %s419 = sadd.s32 %s418, 1
      %p422 = scmp.eq.s32.totalorder %s33, 1
      %p423 = scmp.ne.s32.totalorder %s418, %s420
      %p424 = scmp.eq.s32.totalorder %s33, 0
      %p425 = por %p423, %p424
      %p426 = scmp.ne.s32.totalorder %s418, %s420
      %p427 = scmp.eq.s32.totalorder %s38, 1
      %p428 = por %p426, %p427
      %p429 = scmp.ne.s32.totalorder %s420, %s421
      %p430 = scmp.eq.s32.totalorder %s38, 0
      %p431 = por %p429, %p430
      %p432 = scmp.ne.s32.totalorder %s420, %s421
      %p433 = scmp.eq.s32.totalorder %s39, 1
      %p434 = por %p432, %p433
      %p436 = scmp.ne.s32.totalorder %s421, %s435
      %p437 = scmp.eq.s32.totalorder %s39, 0
      %p438 = por %p436, %p437
      %s440 = sadd.s32 %s439, 1
      %p443 = scmp.eq.s32.totalorder %s33, 1
      %p444 = scmp.ne.s32.totalorder %s439, %s441
      %p445 = scmp.eq.s32.totalorder %s33, 0
      %p446 = por %p444, %p445
      %p447 = scmp.ne.s32.totalorder %s439, %s441
      %p448 = scmp.eq.s32.totalorder %s38, 1
      %p449 = por %p447, %p448
      %p450 = scmp.ne.s32.totalorder %s441, %s442
      %p451 = scmp.eq.s32.totalorder %s38, 0
      %p452 = por %p450, %p451
      %p453 = scmp.ne.s32.totalorder %s441, %s442
      %p454 = scmp.eq.s32.totalorder %s39, 1
      %p455 = por %p453, %p454
      %p457 = scmp.ne.s32.totalorder %s442, %s456
      %p458 = scmp.eq.s32.totalorder %s39, 0
      %p459 = por %p457, %p458
      %s461 = sadd.s32 %s460, 1
      %p464 = scmp.eq.s32.totalorder %s33, 1
      %p465 = scmp.ne.s32.totalorder %s460, %s462
      %p466 = scmp.eq.s32.totalorder %s33, 0
      %p467 = por %p465, %p466
      %p468 = scmp.ne.s32.totalorder %s460, %s462
      %p469 = scmp.eq.s32.totalorder %s38, 1
      %p470 = por %p468, %p469
      %p471 = scmp.ne.s32.totalorder %s462, %s463
      %p472 = scmp.eq.s32.totalorder %s38, 0
      %p473 = por %p471, %p472
      %p474 = scmp.ne.s32.totalorder %s462, %s463
      %p475 = scmp.eq.s32.totalorder %s39, 1
      %p476 = por %p474, %p475
      %p478 = scmp.ne.s32.totalorder %s463, %s477
      %p479 = scmp.eq.s32.totalorder %s39, 0
      %p480 = por %p478, %p479
      %s482 = sadd.s32 %s481, 1
      %p485 = scmp.eq.s32.totalorder %s33, 1
      %p486 = scmp.ne.s32.totalorder %s481, %s483
      %p487 = scmp.eq.s32.totalorder %s33, 0
      %p488 = por %p486, %p487
      %p489 = scmp.ne.s32.totalorder %s481, %s483
      %p490 = scmp.eq.s32.totalorder %s38, 1
      %p491 = por %p489, %p490
      %p492 = scmp.ne.s32.totalorder %s483, %s484
      %p493 = scmp.eq.s32.totalorder %s38, 0
      %p494 = por %p492, %p493
      %p495 = scmp.ne.s32.totalorder %s483, %s484
      %p496 = scmp.eq.s32.totalorder %s39, 1
      %p497 = por %p495, %p496
      %p499 = scmp.ne.s32.totalorder %s484, %s498
      %p500 = scmp.eq.s32.totalorder %s39, 0
      %p501 = por %p499, %p500
      %s503 = sadd.s32 %s502, 1
      %p506 = scmp.eq.s32.totalorder %s33, 1
      %p507 = scmp.ne.s32.totalorder %s502, %s504
      %p508 = scmp.eq.s32.totalorder %s33, 0
      %p509 = por %p507, %p508
      %p510 = scmp.ne.s32.totalorder %s502, %s504
      %p511 = scmp.eq.s32.totalorder %s38, 1
      %p512 = por %p510, %p511
      %p513 = scmp.ne.s32.totalorder %s504, %s505
      %p514 = scmp.eq.s32.totalorder %s38, 0
      %p515 = por %p513, %p514
      %p516 = scmp.ne.s32.totalorder %s504, %s505
      %p517 = scmp.eq.s32.totalorder %s39, 1
      %p518 = por %p516, %p517
      %p520 = scmp.ne.s32.totalorder %s505, %s519
      %p521 = scmp.eq.s32.totalorder %s39, 0
      %p522 = por %p520, %p521
      %s524 = sadd.s32 %s523, 1
      %p527 = scmp.eq.s32.totalorder %s33, 1
      %p528 = scmp.ne.s32.totalorder %s523, %s525
      %p529 = scmp.eq.s32.totalorder %s33, 0
      %p530 = por %p528, %p529
      %p531 = scmp.ne.s32.totalorder %s523, %s525
      %p532 = scmp.eq.s32.totalorder %s38, 1
      %p533 = por %p531, %p532
      %p534 = scmp.ne.s32.totalorder %s525, %s526
      %p535 = scmp.eq.s32.totalorder %s38, 0
      %p536 = por %p534, %p535
      %p537 = scmp.ne.s32.totalorder %s525, %s526
      %p538 = scmp.eq.s32.totalorder %s39, 1
      %p539 = por %p537, %p538
      %p541 = scmp.ne.s32.totalorder %s526, %s540
      %p542 = scmp.eq.s32.totalorder %s39, 0
      %p543 = por %p541, %p542
      %s545 = sadd.s32 %s544, 1
      %p548 = scmp.eq.s32.totalorder %s33, 1
      %p549 = scmp.ne.s32.totalorder %s544, %s546
      %p550 = scmp.eq.s32.totalorder %s33, 0
      %p551 = por %p549, %p550
      %p552 = scmp.ne.s32.totalorder %s544, %s546
      %p553 = scmp.eq.s32.totalorder %s38, 1
      %p554 = por %p552, %p553
      %p555 = scmp.ne.s32.totalorder %s546, %s547
      %p556 = scmp.eq.s32.totalorder %s38, 0
      %p557 = por %p555, %p556
      %p558 = scmp.ne.s32.totalorder %s546, %s547
      %p559 = scmp.eq.s32.totalorder %s39, 1
      %p560 = por %p558, %p559
      %p562 = scmp.ne.s32.totalorder %s547, %s561
      %p563 = scmp.eq.s32.totalorder %s39, 0
      %p564 = por %p562, %p563
      %s565 = ssub.s32 %s33, %s40
      %p566 = scmp.eq.s32.totalorder %s565, 0
      %s568 = sadd.s32 %s567, 1
      %s569 = scalar_select %p566, %s567, %s568
      %p572 = pneg %p566
      %p573 = scmp.eq.s32.totalorder %s33, 1
      %p574 = por %p572, %p573
      %p575 = scmp.ne.s32.totalorder %s567, %s570
      %p576 = scmp.eq.s32.totalorder %s33, 0
      %p577 = por %p575, %p576
      %p578 = scmp.ne.s32.totalorder %s567, %s570
      %p579 = scmp.eq.s32.totalorder %s38, 1
      %p580 = por %p578, %p579
      %p581 = scmp.ne.s32.totalorder %s570, %s571
      %p582 = scmp.eq.s32.totalorder %s38, 0
      %p583 = por %p581, %p582
      %p584 = scmp.ne.s32.totalorder %s570, %s571
      %p585 = scmp.eq.s32.totalorder %s39, 1
      %p586 = por %p584, %p585
      %p588 = scmp.ne.s32.totalorder %s571, %s587
      %p589 = scmp.eq.s32.totalorder %s39, 0
      %p590 = por %p588, %p589
      %p591 = scmp.le.s32.totalorder 1, %s33
      %p592 = scmp.lt.s32.totalorder %s33, 3
      %p593 = pnand %p591, %p592
      %p594 = pneg %p593
      // Predicated region
      $region9: #{decoders_forward.3} parent=5 // pred_check
        _
      $region10: #{decoders_forward.3} parent=5 // pred_check_branch
        %596 = sbr.rel (%p593) target = $region12
      $region11: #{decoders_forward.3} parent=5 // pred_region
        %s597 = ssub.s32 %s33, 1
        // Predicated region
        $region13: #{decoders_forward.3} parent=11 // pred_check
          %p598 = pneg %p158
        $region14: #{decoders_forward.3} parent=11 // pred_check_branch
          %600 = sbr.rel (%p598) target = $region16
        $region15: #{decoders_forward.3} parent=11 // pred_region
          _
        $region16: #{decoders_forward.3} parent=11 // pred_fallthru
          _
        // Predicated region
        $region17: #{decoders_forward.3} parent=11 // pred_check
          %p601 = pneg %p179
        $region18: #{decoders_forward.3} parent=11 // pred_check_branch
          %603 = sbr.rel (%p601) target = $region20
        $region19: #{decoders_forward.3} parent=11 // pred_region
          _
        $region20: #{decoders_forward.3} parent=11 // pred_fallthru
          _
        // Predicated region
        $region21: #{decoders_forward.3} parent=11 // pred_check
          %p604 = pneg %p200
        $region22: #{decoders_forward.3} parent=11 // pred_check_branch
          %606 = sbr.rel (%p604) target = $region24
        $region23: #{decoders_forward.3} parent=11 // pred_region
          _
        $region24: #{decoders_forward.3} parent=11 // pred_fallthru
          _
        // Predicated region
        $region25: #{decoders_forward.3} parent=11 // pred_check
          %p607 = pneg %p221
        $region26: #{decoders_forward.3} parent=11 // pred_check_branch
          %609 = sbr.rel (%p607) target = $region28
        $region27: #{decoders_forward.3} parent=11 // pred_region
          _
        $region28: #{decoders_forward.3} parent=11 // pred_fallthru
          _
        // Predicated region
        $region29: #{decoders_forward.3} parent=11 // pred_check
          %p610 = pneg %p242
        $region30: #{decoders_forward.3} parent=11 // pred_check_branch
          %612 = sbr.rel (%p610) target = $region32
        $region31: #{decoders_forward.3} parent=11 // pred_region
          _
        $region32: #{decoders_forward.3} parent=11 // pred_fallthru
          _
        // Predicated region
        $region33: #{decoders_forward.3} parent=11 // pred_check
          %p613 = pneg %p263
        $region34: #{decoders_forward.3} parent=11 // pred_check_branch
          %615 = sbr.rel (%p613) target = $region36
        $region35: #{decoders_forward.3} parent=11 // pred_region
          _
        $region36: #{decoders_forward.3} parent=11 // pred_fallthru
          _
        // Predicated region
        $region37: #{decoders_forward.3} parent=11 // pred_check
          %p616 = pneg %p284
        $region38: #{decoders_forward.3} parent=11 // pred_check_branch
          %618 = sbr.rel (%p616) target = $region40
        $region39: #{decoders_forward.3} parent=11 // pred_region
          _
        $region40: #{decoders_forward.3} parent=11 // pred_fallthru
          _
        // Predicated region
        $region41: #{decoders_forward.3} parent=11 // pred_check
          %p619 = pneg %p305
        $region42: #{decoders_forward.3} parent=11 // pred_check_branch
          %621 = sbr.rel (%p619) target = $region44
        $region43: #{decoders_forward.3} parent=11 // pred_region
          _
        $region44: #{decoders_forward.3} parent=11 // pred_fallthru
          _
        // Predicated region
        $region45: #{decoders_forward.3} parent=11 // pred_check
          %p622 = pneg %p326
        $region46: #{decoders_forward.3} parent=11 // pred_check_branch
          %624 = sbr.rel (%p622) target = $region48
        $region47: #{decoders_forward.3} parent=11 // pred_region
          _
        $region48: #{decoders_forward.3} parent=11 // pred_fallthru
          _
        // Predicated region
        $region49: #{decoders_forward.3} parent=11 // pred_check
          %p625 = pneg %p347
        $region50: #{decoders_forward.3} parent=11 // pred_check_branch
          %627 = sbr.rel (%p625) target = $region52
        $region51: #{decoders_forward.3} parent=11 // pred_region
          _
        $region52: #{decoders_forward.3} parent=11 // pred_fallthru
          _
        // Predicated region
        $region53: #{decoders_forward.3} parent=11 // pred_check
          %p628 = pneg %p368
        $region54: #{decoders_forward.3} parent=11 // pred_check_branch
          %630 = sbr.rel (%p628) target = $region56
        $region55: #{decoders_forward.3} parent=11 // pred_region
          _
        $region56: #{decoders_forward.3} parent=11 // pred_fallthru
          _
        // Predicated region
        $region57: #{decoders_forward.3} parent=11 // pred_check
          %p631 = pneg %p389
        $region58: #{decoders_forward.3} parent=11 // pred_check_branch
          %633 = sbr.rel (%p631) target = $region60
        $region59: #{decoders_forward.3} parent=11 // pred_region
          _
        $region60: #{decoders_forward.3} parent=11 // pred_fallthru
          _
        // Predicated region
        $region61: #{decoders_forward.3} parent=11 // pred_check
          %p634 = pneg %p410
        $region62: #{decoders_forward.3} parent=11 // pred_check_branch
          %636 = sbr.rel (%p634) target = $region64
        $region63: #{decoders_forward.3} parent=11 // pred_region
          _
        $region64: #{decoders_forward.3} parent=11 // pred_fallthru
          _
        // Predicated region
        $region65: #{decoders_forward.3} parent=11 // pred_check
          %p637 = pneg %p431
        $region66: #{decoders_forward.3} parent=11 // pred_check_branch
          %639 = sbr.rel (%p637) target = $region68
        $region67: #{decoders_forward.3} parent=11 // pred_region
          _
        $region68: #{decoders_forward.3} parent=11 // pred_fallthru
          _
        // Predicated region
        $region69: #{decoders_forward.3} parent=11 // pred_check
          %p640 = pneg %p452
        $region70: #{decoders_forward.3} parent=11 // pred_check_branch
          %642 = sbr.rel (%p640) target = $region72
        $region71: #{decoders_forward.3} parent=11 // pred_region
          _
        $region72: #{decoders_forward.3} parent=11 // pred_fallthru
          _
        // Predicated region
        $region73: #{decoders_forward.3} parent=11 // pred_check
          %p643 = pneg %p473
        $region74: #{decoders_forward.3} parent=11 // pred_check_branch
          %645 = sbr.rel (%p643) target = $region76
        $region75: #{decoders_forward.3} parent=11 // pred_region
          _
        $region76: #{decoders_forward.3} parent=11 // pred_fallthru
          _
        // Predicated region
        $region77: #{decoders_forward.3} parent=11 // pred_check
          %p646 = pneg %p494
        $region78: #{decoders_forward.3} parent=11 // pred_check_branch
          %648 = sbr.rel (%p646) target = $region80
        $region79: #{decoders_forward.3} parent=11 // pred_region
          _
        $region80: #{decoders_forward.3} parent=11 // pred_fallthru
          _
        // Predicated region
        $region81: #{decoders_forward.3} parent=11 // pred_check
          %p649 = pneg %p515
        $region82: #{decoders_forward.3} parent=11 // pred_check_branch
          %651 = sbr.rel (%p649) target = $region84
        $region83: #{decoders_forward.3} parent=11 // pred_region
          _
        $region84: #{decoders_forward.3} parent=11 // pred_fallthru
          _
        // Predicated region
        $region85: #{decoders_forward.3} parent=11 // pred_check
          %p652 = pneg %p536
        $region86: #{decoders_forward.3} parent=11 // pred_check_branch
          %654 = sbr.rel (%p652) target = $region88
        $region87: #{decoders_forward.3} parent=11 // pred_region
          _
        $region88: #{decoders_forward.3} parent=11 // pred_fallthru
          _
        // Predicated region
        $region89: #{decoders_forward.3} parent=11 // pred_check
          %p655 = pneg %p557
        $region90: #{decoders_forward.3} parent=11 // pred_check_branch
          %657 = sbr.rel (%p655) target = $region92
        $region91: #{decoders_forward.3} parent=11 // pred_region
          _
        $region92: #{decoders_forward.3} parent=11 // pred_fallthru
          _
      $region12: #{decoders_forward.3} parent=5 // pred_fallthru
        _
      %p658 = scmp.lt.s32.totalorder %s33, 2
      // Predicated region
      $region93: #{decoders_forward.3} parent=5 // pred_check
        %p659 = pneg %p658
      $region94: #{decoders_forward.3} parent=5 // pred_check_branch
        %661 = sbr.rel (%p659) target = $region96
      $region95: #{decoders_forward.3} parent=5 // pred_region
        // Predicated region
        $region97: #{decoders_forward.3} parent=95 // pred_check
          %p662 = pneg %p53
        $region98: #{decoders_forward.3} parent=95 // pred_check_branch
          %664 = sbr.rel (%p662) target = $region100
        $region99: #{decoders_forward.3} parent=95 // pred_region
          %p665 = scmp.lt.s32.totalorder %s33, 1
          %s666 = scalar_select %p665, %s33, 1
          %s667 = smul.addr %s666, 8
          %s668 = scalar_lea.vmem %s0, %s667
        $region100: #{decoders_forward.3} parent=95 // pred_fallthru
          _
        // Predicated region
        $region101: #{decoders_forward.3} parent=95 // pred_check
          %p669 = pneg %p79
        $region102: #{decoders_forward.3} parent=95 // pred_check_branch
          %671 = sbr.rel (%p669) target = $region104
        $region103: #{decoders_forward.3} parent=95 // pred_region
          %p672 = scmp.lt.s32.totalorder %s33, 1
          %s673 = scalar_select %p672, %s33, 1
          %s674 = smul.addr %s673, 2
          %s675 = smul.addr %s674, 8
          %s676 = scalar_lea.vmem %s1, %s675
        $region104: #{decoders_forward.3} parent=95 // pred_fallthru
          _
        // Predicated region
        $region105: #{decoders_forward.3} parent=95 // pred_check
          %p677 = pneg %p105
        $region106: #{decoders_forward.3} parent=95 // pred_check_branch
          %679 = sbr.rel (%p677) target = $region108
        $region107: #{decoders_forward.3} parent=95 // pred_region
          %p680 = scmp.lt.s32.totalorder %s33, 1
          %s681 = scalar_select %p680, %s33, 1
          %s682 = smul.addr %s681, 4
          %s683 = scalar_lea.vmem %s2, %s682
        $region108: #{decoders_forward.3} parent=95 // pred_fallthru
          _
        // Predicated region
        $region109: #{decoders_forward.3} parent=95 // pred_check
          %p684 = pneg %p131
        $region110: #{decoders_forward.3} parent=95 // pred_check_branch
          %686 = sbr.rel (%p684) target = $region112
        $region111: #{decoders_forward.3} parent=95 // pred_region
          %p687 = scmp.lt.s32.totalorder %s33, 1
          %s688 = scalar_select %p687, %s33, 1
          %s689 = smul.addr %s688, 4
          %s690 = scalar_lea.vmem %s3, %s689
        $region112: #{decoders_forward.3} parent=95 // pred_fallthru
          _
      $region96: #{decoders_forward.3} parent=5 // pred_fallthru
        _
      %p691 = scmp.le.s32.totalorder 1, %s33
      %p692 = scmp.lt.s32.totalorder %s33, 3
      %p693 = pnand %p691, %p692
      %p694 = pneg %p693
      // Predicated region
      $region113: #{decoders_forward.3} parent=5 // pred_check
        _
      $region114: #{decoders_forward.3} parent=5 // pred_check_branch
        %696 = sbr.rel (%p693) target = $region116
      $region115: #{decoders_forward.3} parent=5 // pred_region
        %s697 = ssub.s32 %s33, 1
        %p698 = scmp.lt.s32.totalorder %s38, 1
        %s699 = scalar_select %p698, %s38, 1
        %s700 = smul.addr %s699, 8
        %s701 = scalar_lea.vmem %s0, %s700
        %p702 = pneg %p59
        %p703 = pneg %p56
        %p704 = scmp.lt.s32.totalorder %s38, 1
        %s705 = scalar_select %p704, %s38, 1
        %s706 = smul.addr %s705, 2
        %s707 = smul.addr %s706, 8
        %s708 = scalar_lea.vmem %s1, %s707
        %p709 = pneg %p85
        %p710 = pneg %p82
        %p711 = scmp.lt.s32.totalorder %s38, 1
        %s712 = scalar_select %p711, %s38, 1
        %s713 = smul.addr %s712, 4
        %s714 = scalar_lea.vmem %s2, %s713
        %p715 = pneg %p111
        %p716 = pneg %p108
        %p717 = scmp.lt.s32.totalorder %s38, 1
        %s718 = scalar_select %p717, %s38, 1
        %s719 = smul.addr %s718, 4
        %s720 = scalar_lea.vmem %s3, %s719
        %p721 = pneg %p137
        %p722 = pneg %p134
        %p723 = pneg %p158
        %p724 = pneg %p155
        %p725 = pneg %p179
        %p726 = pneg %p176
        %p727 = pneg %p200
        %p728 = pneg %p197
        %p729 = pneg %p221
        %p730 = pneg %p218
        %p731 = pneg %p242
        %p732 = pneg %p239
        %p733 = pneg %p263
        %p734 = pneg %p260
        %p735 = pneg %p284
        %p736 = pneg %p281
        %p737 = pneg %p305
        %p738 = pneg %p302
        %p739 = pneg %p326
        %p740 = pneg %p323
        %p741 = pneg %p347
        %p742 = pneg %p344
        %p743 = pneg %p368
        %p744 = pneg %p365
        %p745 = pneg %p389
        %p746 = pneg %p386
        %p747 = pneg %p410
        %p748 = pneg %p407
        %p749 = pneg %p431
        %p750 = pneg %p428
        %p751 = pneg %p452
        %p752 = pneg %p449
        %p753 = pneg %p473
        %p754 = pneg %p470
        %p755 = pneg %p494
        %p756 = pneg %p491
        %p757 = pneg %p515
        %p758 = pneg %p512
        %p759 = pneg %p536
        %p760 = pneg %p533
        %p761 = pneg %p557
        %p762 = pneg %p554
        %p763 = pneg %p583
        %p764 = pneg %p580
        %s765 = sand.u32 %s570, 1
        %s766 = scalar_lea.sflag [#allocation3], %s765
        %s767 = sand.u32 %s570, 1
        %s768 = smul.addr %s767, 8
        %s769 = scalar_lea.vmem [#allocation2], %s768
        %p770 = scmp.lt.s32.totalorder %s38, 1
        %s771 = scalar_select %p770, %s38, 1
        %s772 = smul.addr %s771, 8
        %s773 = scalar_lea.vmem %s0, %s772
        %p774 = scmp.lt.s32.totalorder %s38, 1
        %s775 = scalar_select %p774, %s38, 1
        %s776 = smul.addr %s775, 2
        %s777 = smul.addr %s776, 8
        %s778 = scalar_lea.vmem %s1, %s777
        %p779 = scmp.lt.s32.totalorder %s38, 1
        %s780 = scalar_select %p779, %s38, 1
        %s781 = smul.addr %s780, 4
        %s782 = scalar_lea.vmem %s2, %s781
        %p783 = scmp.lt.s32.totalorder %s38, 1
        %s784 = scalar_select %p783, %s38, 1
        %s785 = smul.addr %s784, 4
        %s786 = scalar_lea.vmem %s3, %s785
        %v788 = vld [vmem:[%s773] sm:$0xff]
        %v789 = vpack.c.bf16 %v788, %v788
        %v790 = vld [vmem:[%s4] sm:$0xff]
        %v791 = vld [vmem:[%s4 + $0x8] sm:$0xf]
        %v792 = vld [vmem:[%s4 + $0xc] sm:$0xff]
        %v793 = vld [vmem:[%s4 + $0x14] sm:$0xf]
        %v794 = vld [vmem:[%s4 + $0x18] sm:$0xff]
        %v795 = vld [vmem:[%s4 + $0x20] sm:$0xf]
        %v796 = vld [vmem:[%s4 + $0x24] sm:$0xff]
        %v797 = vld [vmem:[%s4 + $0x2c] sm:$0xf]
        %v798 = vld [vmem:[%s4 + $0x30] sm:$0xff]
        %v799 = vld [vmem:[%s4 + $0x38] sm:$0xf]
        %v800 = vld [vmem:[%s4 + $0x3c] sm:$0xff]
        %v801 = vld [vmem:[%s4 + $0x44] sm:$0xf]
        %v802 = vld [vmem:[%s4 + $0x48] sm:$0xff]
        %v803 = vld [vmem:[%s4 + $0x50] sm:$0xf]
        %v804 = vld [vmem:[%s4 + $0x54] sm:$0xff]
        %v805 = vld [vmem:[%s4 + $0x5c] sm:$0xf]
        %v806 = vld [vmem:[%s4 + $0x60] sm:$0xff]
        %v807 = vld [vmem:[%s4 + $0x68] sm:$0xf]
        %v808 = vld [vmem:[%s4 + $0x6c] sm:$0xff]
        %v809 = vld [vmem:[%s4 + $0x74] sm:$0xf]
        %v810 = vld [vmem:[%s4 + $0x78] sm:$0xff]
        %v811 = vld [vmem:[%s4 + $0x80] sm:$0xf]
        %v812 = vld [vmem:[%s4 + $0x84] sm:$0xff]
        %v813 = vld [vmem:[%s4 + $0x8c] sm:$0xf]
        %v814 = vld [vmem:[%s4 + $0x90] sm:$0xff]
        %v815 = vld [vmem:[%s4 + $0x98] sm:$0xf]
        %v816 = vld [vmem:[%s4 + $0x9c] sm:$0xff]
        %v817 = vld [vmem:[%s4 + $0xa4] sm:$0xf]
        %v818 = vld [vmem:[%s4 + $0xa8] sm:$0xff]
        %v819 = vld [vmem:[%s4 + $0xb0] sm:$0xf]
        %v820 = vld [vmem:[%s4 + $0xb4] sm:$0xff]
        %v821 = vld [vmem:[%s4 + $0xbc] sm:$0xf]
        %v822 = vld [vmem:[%s5] sm:$0x7]
        %v824 = vlaneseq
        %v825 = vshrl.u32 %v824, 7
        %v826 = vsub.s32 0, %v825
        %v827 = vrot.slane %v822, %v826
        %v828 = vlaneseq
        %v829 = vshrl.u32 %v828, 7
        %v830 = vsub.s32 1, %v829
        %v831 = vrot.slane %v822, %v830
        %v832 = vlaneseq
        %v833 = vshrl.u32 %v832, 7
        %v834 = vsub.s32 2, %v833
        %v835 = vrot.slane %v822, %v834
        %v871 = vunpack.c.l.b16 %v790
        %v872 = vunpack.c.h.b16 %v790
        %v873 = vunpack.c.l.b16 %v791
        %v874 = vunpack.c.l.b16 %v792
        %v875 = vunpack.c.h.b16 %v792
        %v876 = vunpack.c.l.b16 %v793
        %v877 = vunpack.c.l.b16 %v794
        %v878 = vunpack.c.h.b16 %v794
        %v879 = vunpack.c.l.b16 %v795
        %v880 = vunpack.c.l.b16 %v796
        %v881 = vunpack.c.h.b16 %v796
        %v882 = vunpack.c.l.b16 %v797
        %v883 = vunpack.c.l.b16 %v798
        %v884 = vunpack.c.h.b16 %v798
        %v885 = vunpack.c.l.b16 %v799
        %v886 = vunpack.c.l.b16 %v800
        %v887 = vunpack.c.h.b16 %v800
        %v888 = vunpack.c.l.b16 %v801
        %v889 = vunpack.c.l.b16 %v802
        %v890 = vunpack.c.h.b16 %v802
        %v891 = vunpack.c.l.b16 %v803
        %v892 = vunpack.c.l.b16 %v804
        %v893 = vunpack.c.h.b16 %v804
        %v894 = vunpack.c.l.b16 %v805
        %v895 = vunpack.c.l.b16 %v806
        %v896 = vunpack.c.h.b16 %v806
        %v897 = vunpack.c.l.b16 %v807
        %v898 = vunpack.c.l.b16 %v808
        %v899 = vunpack.c.h.b16 %v808
        %v900 = vunpack.c.l.b16 %v809
        %v901 = vunpack.c.l.b16 %v810
        %v902 = vunpack.c.h.b16 %v810
        %v903 = vunpack.c.l.b16 %v811
        %v904 = vunpack.c.l.b16 %v812
        %v905 = vunpack.c.h.b16 %v812
        %v906 = vunpack.c.l.b16 %v813
        %v907 = vunpack.c.l.b16 %v814
        %v908 = vunpack.c.h.b16 %v814
        %v909 = vunpack.c.l.b16 %v815
        %v910 = vunpack.c.l.b16 %v816
        %v911 = vunpack.c.h.b16 %v816
        %v912 = vunpack.c.l.b16 %v817
        %v913 = vunpack.c.l.b16 %v818
        %v914 = vunpack.c.h.b16 %v818
        %v915 = vunpack.c.l.b16 %v819
        %v916 = vunpack.c.l.b16 %v820
        %v917 = vunpack.c.h.b16 %v820
        %v918 = vunpack.c.l.b16 %v821
        %v919 = vpack.c.b16 %v874, %v871
        %v920 = vpack.c.b16 %v875, %v872
        %v921 = vpack.c.b16 %v876, %v873
        %v922 = vpack.c.b16 %v880, %v877
        %v923 = vpack.c.b16 %v881, %v878
        %v924 = vpack.c.b16 %v882, %v879
        %v925 = vpack.c.b16 %v886, %v883
        %v926 = vpack.c.b16 %v887, %v884
        %v927 = vpack.c.b16 %v888, %v885
        %v928 = vpack.c.b16 %v892, %v889
        %v929 = vpack.c.b16 %v893, %v890
        %v930 = vpack.c.b16 %v894, %v891
        %v931 = vpack.c.b16 %v898, %v895
        %v932 = vpack.c.b16 %v899, %v896
        %v933 = vpack.c.b16 %v900, %v897
        %v934 = vpack.c.b16 %v904, %v901
        %v935 = vpack.c.b16 %v905, %v902
        %v936 = vpack.c.b16 %v906, %v903
        %v937 = vpack.c.b16 %v910, %v907
        %v938 = vpack.c.b16 %v911, %v908
        %v939 = vpack.c.b16 %v912, %v909
        %v940 = vpack.c.b16 %v916, %v913
        %v941 = vpack.c.b16 %v917, %v914
        %v942 = vpack.c.b16 %v918, %v915
        %967 = vmatprep.subr.bf16.mxu0 %v920
        %968 = vmatpush1.bf16.msra.mxu0 %v919
        %969 = vmatprep.subr.bf16.mxu0 %v923
        %970 = vmatpush1.bf16.msra.mxu0 %v922
        %971 = vmatprep.subr.bf16.mxu0 %v926
        %972 = vmatpush1.bf16.msra.mxu0 %v925
        %973 = vmatprep.subr.bf16.mxu0 %v929
        %974 = vmatpush1.bf16.msra.mxu0 %v928
        %975 = vmatprep.subr.bf16.mxu0 %v932
        %976 = vmatpush1.bf16.msra.mxu0 %v931
        %977 = vmatprep.subr.bf16.mxu0 %v935
        %978 = vmatpush1.bf16.msra.mxu0 %v934
        %979 = vmatprep.subr.bf16.mxu0 %v938
        %980 = vmatpush1.bf16.msra.mxu0 %v937
        %981 = vmatprep.subr.bf16.mxu0 %v941
        %982 = vmatpush1.bf16.msra.mxu0 %v940
        %983 = vmatprep.subr.bf16.mxu0 0
        %984 = vmatpush1.bf16.msra.mxu0 0
        %985 = vmatprep.subr.bf16.mxu0 0
        %986 = vmatpush1.bf16.msra.mxu0 0
        %987 = vmatprep.subr.bf16.mxu0 0
        %988 = vmatpush1.bf16.msra.mxu0 0
        %989 = vmatprep.subr.bf16.mxu0 0
        %990 = vmatpush1.bf16.msra.mxu0 0
        %991 = vmatprep.subr.bf16.mxu0 0
        %992 = vmatpush1.bf16.msra.mxu0 0
        %993 = vmatprep.subr.bf16.mxu0 0
        %994 = vmatpush1.bf16.msra.mxu0 0
        %995 = vmatprep.subr.bf16.mxu0 0
        %996 = vmatpush1.bf16.msra.mxu0 0
        %997 = vmatprep.subr.bf16.mxu0 0
        %998 = vmatpush1.bf16.msra.mxu0 0
        %999 = vmatprep.mubr.bf16.mxu0 0
        %1000 = vmatmul.mubr.bf16.gmra.mrb[0].mxu0 %v789
        %v1001 = vpop.f32.mrb[0].mxu0
        %v1002 = vadd.f32 %v827, %v1001
        %v1003 = vpop.f32.mrb[0].mxu0
        %v1004 = vadd.f32 %v831, %v1003
        %v1005 = vpop.f32.mrb[0].mxu0
        %v1006 = vpop.f32.mrb[0].mxu0
        %1007 = vdwg.mxu0
        %1008 = vmatprep.subr.bf16.mxu0 0
        %1009 = vmatpush1.bf16.msra.mxu0 %v921
        %1010 = vmatprep.subr.bf16.mxu0 0
        %1011 = vmatpush1.bf16.msra.mxu0 %v924
        %1012 = vmatprep.subr.bf16.mxu0 0
        %1013 = vmatpush1.bf16.msra.mxu0 %v927
        %1014 = vmatprep.subr.bf16.mxu0 0
        %1015 = vmatpush1.bf16.msra.mxu0 %v930
        %1016 = vmatprep.subr.bf16.mxu0 0
        %1017 = vmatpush1.bf16.msra.mxu0 %v933
        %1018 = vmatprep.subr.bf16.mxu0 0
        %1019 = vmatpush1.bf16.msra.mxu0 %v936
        %1020 = vmatprep.subr.bf16.mxu0 0
        %1021 = vmatpush1.bf16.msra.mxu0 %v939
        %1022 = vmatprep.subr.bf16.mxu0 0
        %1023 = vmatpush1.bf16.msra.mxu0 %v942
        %1024 = vmatprep.subr.bf16.mxu0 0
        %1025 = vmatpush1.bf16.msra.mxu0 0
        %1026 = vmatprep.subr.bf16.mxu0 0
        %1027 = vmatpush1.bf16.msra.mxu0 0
        %1028 = vmatprep.subr.bf16.mxu0 0
        %1029 = vmatpush1.bf16.msra.mxu0 0
        %1030 = vmatprep.subr.bf16.mxu0 0
        %1031 = vmatpush1.bf16.msra.mxu0 0
        %1032 = vmatprep.subr.bf16.mxu0 0
        %1033 = vmatpush1.bf16.msra.mxu0 0
        %1034 = vmatprep.subr.bf16.mxu0 0
        %1035 = vmatpush1.bf16.msra.mxu0 0
        %1036 = vmatprep.subr.bf16.mxu0 0
        %1037 = vmatpush1.bf16.msra.mxu0 0
        %1038 = vmatprep.subr.bf16.mxu0 0
        %1039 = vmatpush1.bf16.msra.mxu0 0
        %1040 = vmatprep.mubr.bf16.mxu0 0
        %1041 = vmatmul.mubr.bf16.gmra.mrb[0].mxu0 %v789
        %v1042 = vpop.f32.mrb[0].mxu0
        %v1043 = vadd.f32 %v835, %v1042
        %v1044 = vpop.f32.mrb[0].mxu0
        %v1045 = vpop.f32.mrb[0].mxu0
        %v1046 = vpop.f32.mrb[0].mxu0
        %1047 = vdwg.mxu0
        %v1048 = vld [vmem:[%s782] sm:$0xf]
        %v1049 = vunpack.c.l.bf16 %v1048
        %v1050 = vpack.c.bf16 %v1002, %v1002
        %v1051 = vpack.c.bf16 %v1004, %v1004
        %v1052 = vpack.c.bf16 %v1043, %v1043
        %vm1053 = vcmask 261120
        %v1055 = vsel %vm1053, %v1050, 0
        %v1058 = vsel %vm1053, %v1051, 0
        %1060 = vmatprep.subr.bf16.mxu0 0
        %1061 = vmatpush1.bf16.xpose.msra.mxu0 %v1058
        %1062 = vmatprep.subr.bf16.mxu0 0
        %1063 = vmatpush1.bf16.xpose.msra.mxu0 0
        %1064 = vmatprep.subr.bf16.mxu0 0
        %1065 = vmatpush1.bf16.xpose.msra.mxu0 0
        %1066 = vmatprep.subr.bf16.mxu0 0
        %1067 = vmatpush1.bf16.xpose.msra.mxu0 0
        %1068 = vmatprep.subr.bf16.mxu0 0
        %1069 = vmatpush1.bf16.xpose.msra.mxu0 0
        %1070 = vmatprep.subr.bf16.mxu0 0
        %1071 = vmatpush1.bf16.xpose.msra.mxu0 0
        %1072 = vmatprep.subr.bf16.mxu0 0
        %1073 = vmatpush1.bf16.xpose.msra.mxu0 0
        %1074 = vmatprep.subr.bf16.mxu0 0
        %1075 = vmatpush1.bf16.xpose.msra.mxu0 0
        %1076 = vmatprep.subr.bf16.mxu0 0
        %1077 = vmatpush1.bf16.xpose.msra.mxu0 0
        %1078 = vmatprep.subr.bf16.mxu0 0
        %1079 = vmatpush1.bf16.xpose.msra.mxu0 0
        %1080 = vmatprep.subr.bf16.mxu0 0
        %1081 = vmatpush1.bf16.xpose.msra.mxu0 0
        %1082 = vmatprep.subr.bf16.mxu0 0
        %1083 = vmatpush1.bf16.xpose.msra.mxu0 0
        %1084 = vmatprep.subr.bf16.mxu0 0
        %1085 = vmatpush1.bf16.xpose.msra.mxu0 0
        %1086 = vmatprep.subr.bf16.mxu0 0
        %1087 = vmatpush1.bf16.xpose.msra.mxu0 0
        %1088 = vmatprep.subr.bf16.mxu0 0
        %1089 = vmatpush1.bf16.xpose.msra.mxu0 0
        %1090 = vmatprep.subr.bf16.mxu0 0
        %1091 = vmatpush1.bf16.xpose.msra.mxu0 0
        %1092 = vmatprep.mubr.bf16.mxu0 0
        %1093 = vmatmul.mubr.bf16.gmra.mrb[0].mxu0 %v1055
        %v1094 = vpop.f32.mrb[0].mxu0
        %v1095 = vadd.f32 %v1049, %v1094
        %v1096 = vpop.f32.mrb[0].mxu0
        %v1097 = vpop.f32.mrb[0].mxu0
        %v1098 = vpop.f32.mrb[0].mxu0
        %1099 = vdwg.mxu0
        %vm1100 = vcmask 64512
        %v1101 = vsel %vm1100, %v1095, -inf
        %1102 = vmax.xlane.f32.xlu0 %v1101
        %v1103 = vpop.xlane.xlu0 %1102
        %v1104 = vsub.f32 %v1095, %v1103
        %v1105 = vmul.f32 %v1104, 1.442695
        %v1106 = vpow.pop %v1105
        %v1107 = vsel %vm1100, %v1106, 0.0
        %1108 = vadd.xlane.f32.xlu0 %v1107
        %v1109 = vpop.xlane.xlu0 %1108
        %v1110 = vrcp.pop %v1109
        %v1111 = vmul.f32 %v1106, %v1110
        %v1112 = vpack.c.bf16 %v1111, %v1111
        %v1114 = vsel %vm1100, %v1112, 0
        %vm1116 = vcmask 1043456
        %v1118 = vsel %vm1116, %v1052, 0
        %1120 = vmatprep.subr.bf16.mxu0 0
        %1121 = vmatpush1.bf16.msra.mxu0 %v1118
        %1122 = vmatprep.subr.bf16.mxu0 0
        %1123 = vmatpush1.bf16.msra.mxu0 0
        %1124 = vmatprep.subr.bf16.mxu0 0
        %1125 = vmatpush1.bf16.msra.mxu0 0
        %1126 = vmatprep.subr.bf16.mxu0 0
        %1127 = vmatpush1.bf16.msra.mxu0 0
        %1128 = vmatprep.subr.bf16.mxu0 0
        %1129 = vmatpush1.bf16.msra.mxu0 0
        %1130 = vmatprep.subr.bf16.mxu0 0
        %1131 = vmatpush1.bf16.msra.mxu0 0
        %1132 = vmatprep.subr.bf16.mxu0 0
        %1133 = vmatpush1.bf16.msra.mxu0 0
        %1134 = vmatprep.subr.bf16.mxu0 0
        %1135 = vmatpush1.bf16.msra.mxu0 0
        %1136 = vmatprep.subr.bf16.mxu0 0
        %1137 = vmatpush1.bf16.msra.mxu0 0
        %1138 = vmatprep.subr.bf16.mxu0 0
        %1139 = vmatpush1.bf16.msra.mxu0 0
        %1140 = vmatprep.subr.bf16.mxu0 0
        %1141 = vmatpush1.bf16.msra.mxu0 0
        %1142 = vmatprep.subr.bf16.mxu0 0
        %1143 = vmatpush1.bf16.msra.mxu0 0
        %1144 = vmatprep.subr.bf16.mxu0 0
        %1145 = vmatpush1.bf16.msra.mxu0 0
        %1146 = vmatprep.subr.bf16.mxu0 0
        %1147 = vmatpush1.bf16.msra.mxu0 0
        %1148 = vmatprep.subr.bf16.mxu0 0
        %1149 = vmatpush1.bf16.msra.mxu0 0
        %1150 = vmatprep.subr.bf16.mxu0 0
        %1151 = vmatpush1.bf16.msra.mxu0 0
        %1152 = vmatprep.mubr.bf16.mxu0 0
        %1153 = vmatmul.mubr.bf16.gmra.mrb[0].mxu0 %v1114
        %v1154 = vpop.f32.mrb[0].mxu0
        %v1155 = vadd.f32 0.0, %v1154
        %v1156 = vpop.f32.mrb[0].mxu0
        %v1157 = vpop.f32.mrb[0].mxu0
        %v1158 = vpop.f32.mrb[0].mxu0
        %1159 = vdwg.mxu0
        %1161 = vrot.lane.b32.xlu0 %v1050, 96
        %v1162 = vpop.permute.xlu0 %1161
        %1164 = vrot.lane.b32.xlu0 %v1051, 96
        %v1165 = vpop.permute.xlu0 %1164
        %v1167 = vsel %vm1053, %v1162, 0
        %v1170 = vsel %vm1053, %v1165, 0
        %1172 = vmatprep.subr.bf16.mxu0 0
        %1173 = vmatpush1.bf16.xpose.msra.mxu0 %v1170
        %1174 = vmatprep.subr.bf16.mxu0 0
        %1175 = vmatpush1.bf16.xpose.msra.mxu0 0
        %1176 = vmatprep.subr.bf16.mxu0 0
        %1177 = vmatpush1.bf16.xpose.msra.mxu0 0
        %1178 = vmatprep.subr.bf16.mxu0 0
        %1179 = vmatpush1.bf16.xpose.msra.mxu0 0
        %1180 = vmatprep.subr.bf16.mxu0 0
        %1181 = vmatpush1.bf16.xpose.msra.mxu0 0
        %1182 = vmatprep.subr.bf16.mxu0 0
        %1183 = vmatpush1.bf16.xpose.msra.mxu0 0
        %1184 = vmatprep.subr.bf16.mxu0 0
        %1185 = vmatpush1.bf16.xpose.msra.mxu0 0
        %1186 = vmatprep.subr.bf16.mxu0 0
        %1187 = vmatpush1.bf16.xpose.msra.mxu0 0
        %1188 = vmatprep.subr.bf16.mxu0 0
        %1189 = vmatpush1.bf16.xpose.msra.mxu0 0
        %1190 = vmatprep.subr.bf16.mxu0 0
        %1191 = vmatpush1.bf16.xpose.msra.mxu0 0
        %1192 = vmatprep.subr.bf16.mxu0 0
        %1193 = vmatpush1.bf16.xpose.msra.mxu0 0
        %1194 = vmatprep.subr.bf16.mxu0 0
        %1195 = vmatpush1.bf16.xpose.msra.mxu0 0
        %1196 = vmatprep.subr.bf16.mxu0 0
        %1197 = vmatpush1.bf16.xpose.msra.mxu0 0
        %1198 = vmatprep.subr.bf16.mxu0 0
        %1199 = vmatpush1.bf16.xpose.msra.mxu0 0
        %1200 = vmatprep.subr.bf16.mxu0 0
        %1201 = vmatpush1.bf16.xpose.msra.mxu0 0
        %1202 = vmatprep.subr.bf16.mxu0 0
        %1203 = vmatpush1.bf16.xpose.msra.mxu0 0
        %1204 = vmatprep.mubr.bf16.mxu0 0
        %1205 = vmatmul.mubr.bf16.gmra.mrb[0].mxu0 %v1167
        %v1206 = vpop.f32.mrb[0].mxu0
        %v1207 = vadd.f32 %v1049, %v1206
        %v1208 = vpop.f32.mrb[0].mxu0
        %v1209 = vpop.f32.mrb[0].mxu0
        %v1210 = vpop.f32.mrb[0].mxu0
        %1211 = vdwg.mxu0
        %v1212 = vsel %vm1100, %v1207, -inf
        %1213 = vmax.xlane.f32.xlu0 %v1212
        %v1214 = vpop.xlane.xlu0 %1213
        %v1215 = vsub.f32 %v1207, %v1214
        %v1216 = vmul.f32 %v1215, 1.442695
        %v1217 = vpow.pop %v1216
        %v1218 = vsel %vm1100, %v1217, 0.0
        %1219 = vadd.xlane.f32.xlu0 %v1218
        %v1220 = vpop.xlane.xlu0 %1219
        %v1221 = vrcp.pop %v1220
        %v1222 = vmul.f32 %v1217, %v1221
        %v1223 = vpack.c.bf16 %v1222, %v1222
        %1225 = vrot.lane.b32.xlu0 %v1052, 96
        %v1226 = vpop.permute.xlu0 %1225
        %v1228 = vsel %vm1100, %v1223, 0
        %v1231 = vsel %vm1116, %v1226, 0
        %1233 = vmatprep.subr.bf16.mxu0 0
        %1234 = vmatpush1.bf16.msra.mxu0 %v1231
        %1235 = vmatprep.subr.bf16.mxu0 0
        %1236 = vmatpush1.bf16.msra.mxu0 0
        %1237 = vmatprep.subr.bf16.mxu0 0
        %1238 = vmatpush1.bf16.msra.mxu0 0
        %1239 = vmatprep.subr.bf16.mxu0 0
        %1240 = vmatpush1.bf16.msra.mxu0 0
        %1241 = vmatprep.subr.bf16.mxu0 0
        %1242 = vmatpush1.bf16.msra.mxu0 0
        %1243 = vmatprep.subr.bf16.mxu0 0
        %1244 = vmatpush1.bf16.msra.mxu0 0
        %1245 = vmatprep.subr.bf16.mxu0 0
        %1246 = vmatpush1.bf16.msra.mxu0 0
        %1247 = vmatprep.subr.bf16.mxu0 0
        %1248 = vmatpush1.bf16.msra.mxu0 0
        %1249 = vmatprep.subr.bf16.mxu0 0
        %1250 = vmatpush1.bf16.msra.mxu0 0
        %1251 = vmatprep.subr.bf16.mxu0 0
        %1252 = vmatpush1.bf16.msra.mxu0 0
        %1253 = vmatprep.subr.bf16.mxu0 0
        %1254 = vmatpush1.bf16.msra.mxu0 0
        %1255 = vmatprep.subr.bf16.mxu0 0
        %1256 = vmatpush1.bf16.msra.mxu0 0
        %1257 = vmatprep.subr.bf16.mxu0 0
        %1258 = vmatpush1.bf16.msra.mxu0 0
        %1259 = vmatprep.subr.bf16.mxu0 0
        %1260 = vmatpush1.bf16.msra.mxu0 0
        %1261 = vmatprep.subr.bf16.mxu0 0
        %1262 = vmatpush1.bf16.msra.mxu0 0
        %1263 = vmatprep.subr.bf16.mxu0 0
        %1264 = vmatpush1.bf16.msra.mxu0 0
        %1265 = vmatprep.mubr.bf16.mxu0 0
        %1266 = vmatmul.mubr.bf16.gmra.mrb[0].mxu0 %v1228
        %v1267 = vpop.f32.mrb[0].mxu0
        %v1268 = vadd.f32 0.0, %v1267
        %v1269 = vpop.f32.mrb[0].mxu0
        %v1270 = vpop.f32.mrb[0].mxu0
        %v1271 = vpop.f32.mrb[0].mxu0
        %1272 = vdwg.mxu0
        %1273 = vrot.lane.b32.xlu0 %v1050, 64
        %v1274 = vpop.permute.xlu0 %1273
        %1275 = vrot.lane.b32.xlu0 %v1051, 64
        %v1276 = vpop.permute.xlu0 %1275
        %v1278 = vsel %vm1053, %v1274, 0
        %v1281 = vsel %vm1053, %v1276, 0
        %1283 = vmatprep.subr.bf16.mxu0 0
        %1284 = vmatpush1.bf16.xpose.msra.mxu0 %v1281
        %1285 = vmatprep.subr.bf16.mxu0 0
        %1286 = vmatpush1.bf16.xpose.msra.mxu0 0
        %1287 = vmatprep.subr.bf16.mxu0 0
        %1288 = vmatpush1.bf16.xpose.msra.mxu0 0
        %1289 = vmatprep.subr.bf16.mxu0 0
        %1290 = vmatpush1.bf16.xpose.msra.mxu0 0
        %1291 = vmatprep.subr.bf16.mxu0 0
        %1292 = vmatpush1.bf16.xpose.msra.mxu0 0
        %1293 = vmatprep.subr.bf16.mxu0 0
        %1294 = vmatpush1.bf16.xpose.msra.mxu0 0
        %1295 = vmatprep.subr.bf16.mxu0 0
        %1296 = vmatpush1.bf16.xpose.msra.mxu0 0
        %1297 = vmatprep.subr.bf16.mxu0 0
        %1298 = vmatpush1.bf16.xpose.msra.mxu0 0
        %1299 = vmatprep.subr.bf16.mxu0 0
        %1300 = vmatpush1.bf16.xpose.msra.mxu0 0
        %1301 = vmatprep.subr.bf16.mxu0 0
        %1302 = vmatpush1.bf16.xpose.msra.mxu0 0
        %1303 = vmatprep.subr.bf16.mxu0 0
        %1304 = vmatpush1.bf16.xpose.msra.mxu0 0
        %1305 = vmatprep.subr.bf16.mxu0 0
        %1306 = vmatpush1.bf16.xpose.msra.mxu0 0
        %1307 = vmatprep.subr.bf16.mxu0 0
        %1308 = vmatpush1.bf16.xpose.msra.mxu0 0
        %1309 = vmatprep.subr.bf16.mxu0 0
        %1310 = vmatpush1.bf16.xpose.msra.mxu0 0
        %1311 = vmatprep.subr.bf16.mxu0 0
        %1312 = vmatpush1.bf16.xpose.msra.mxu0 0
        %1313 = vmatprep.subr.bf16.mxu0 0
        %1314 = vmatpush1.bf16.xpose.msra.mxu0 0
        %1315 = vmatprep.mubr.bf16.mxu0 0
        %1316 = vmatmul.mubr.bf16.gmra.mrb[0].mxu0 %v1278
        %v1317 = vpop.f32.mrb[0].mxu0
        %v1318 = vadd.f32 %v1049, %v1317
        %v1319 = vpop.f32.mrb[0].mxu0
        %v1320 = vpop.f32.mrb[0].mxu0
        %v1321 = vpop.f32.mrb[0].mxu0
        %1322 = vdwg.mxu0
        %v1323 = vsel %vm1100, %v1318, -inf
        %1324 = vmax.xlane.f32.xlu0 %v1323
        %v1325 = vpop.xlane.xlu0 %1324
        %v1326 = vsub.f32 %v1318, %v1325
        %v1327 = vmul.f32 %v1326, 1.442695
        %v1328 = vpow.pop %v1327
        %v1329 = vsel %vm1100, %v1328, 0.0
        %1330 = vadd.xlane.f32.xlu0 %v1329
        %v1331 = vpop.xlane.xlu0 %1330
        %v1332 = vrcp.pop %v1331
        %v1333 = vmul.f32 %v1328, %v1332
        %v1334 = vpack.c.bf16 %v1333, %v1333
        %1335 = vrot.lane.b32.xlu0 %v1052, 64
        %v1336 = vpop.permute.xlu0 %1335
        %v1338 = vsel %vm1100, %v1334, 0
        %v1341 = vsel %vm1116, %v1336, 0
        %1343 = vmatprep.subr.bf16.mxu0 0
        %1344 = vmatpush1.bf16.msra.mxu0 %v1341
        %1345 = vmatprep.subr.bf16.mxu0 0
        %1346 = vmatpush1.bf16.msra.mxu0 0
        %1347 = vmatprep.subr.bf16.mxu0 0
        %1348 = vmatpush1.bf16.msra.mxu0 0
        %1349 = vmatprep.subr.bf16.mxu0 0
        %1350 = vmatpush1.bf16.msra.mxu0 0
        %1351 = vmatprep.subr.bf16.mxu0 0
        %1352 = vmatpush1.bf16.msra.mxu0 0
        %1353 = vmatprep.subr.bf16.mxu0 0
        %1354 = vmatpush1.bf16.msra.mxu0 0
        %1355 = vmatprep.subr.bf16.mxu0 0
        %1356 = vmatpush1.bf16.msra.mxu0 0
        %1357 = vmatprep.subr.bf16.mxu0 0
        %1358 = vmatpush1.bf16.msra.mxu0 0
        %1359 = vmatprep.subr.bf16.mxu0 0
        %1360 = vmatpush1.bf16.msra.mxu0 0
        %1361 = vmatprep.subr.bf16.mxu0 0
        %1362 = vmatpush1.bf16.msra.mxu0 0
        %1363 = vmatprep.subr.bf16.mxu0 0
        %1364 = vmatpush1.bf16.msra.mxu0 0
        %1365 = vmatprep.subr.bf16.mxu0 0
        %1366 = vmatpush1.bf16.msra.mxu0 0
        %1367 = vmatprep.subr.bf16.mxu0 0
        %1368 = vmatpush1.bf16.msra.mxu0 0
        %1369 = vmatprep.subr.bf16.mxu0 0
        %1370 = vmatpush1.bf16.msra.mxu0 0
        %1371 = vmatprep.subr.bf16.mxu0 0
        %1372 = vmatpush1.bf16.msra.mxu0 0
        %1373 = vmatprep.subr.bf16.mxu0 0
        %1374 = vmatpush1.bf16.msra.mxu0 0
        %1375 = vmatprep.mubr.bf16.mxu0 0
        %1376 = vmatmul.mubr.bf16.gmra.mrb[0].mxu0 %v1338
        %v1377 = vpop.f32.mrb[0].mxu0
        %v1378 = vadd.f32 0.0, %v1377
        %v1379 = vpop.f32.mrb[0].mxu0
        %v1380 = vpop.f32.mrb[0].mxu0
        %v1381 = vpop.f32.mrb[0].mxu0
        %1382 = vdwg.mxu0
        %1383 = vrot.lane.b32.xlu0 %v1050, 32
        %v1384 = vpop.permute.xlu0 %1383
        %1385 = vrot.lane.b32.xlu0 %v1051, 32
        %v1386 = vpop.permute.xlu0 %1385
        %v1388 = vsel %vm1053, %v1384, 0
        %v1391 = vsel %vm1053, %v1386, 0
        %1393 = vmatprep.subr.bf16.mxu0 0
        %1394 = vmatpush1.bf16.xpose.msra.mxu0 %v1391
        %1395 = vmatprep.subr.bf16.mxu0 0
        %1396 = vmatpush1.bf16.xpose.msra.mxu0 0
        %1397 = vmatprep.subr.bf16.mxu0 0
        %1398 = vmatpush1.bf16.xpose.msra.mxu0 0
        %1399 = vmatprep.subr.bf16.mxu0 0
        %1400 = vmatpush1.bf16.xpose.msra.mxu0 0
        %1401 = vmatprep.subr.bf16.mxu0 0
        %1402 = vmatpush1.bf16.xpose.msra.mxu0 0
        %1403 = vmatprep.subr.bf16.mxu0 0
        %1404 = vmatpush1.bf16.xpose.msra.mxu0 0
        %1405 = vmatprep.subr.bf16.mxu0 0
        %1406 = vmatpush1.bf16.xpose.msra.mxu0 0
        %1407 = vmatprep.subr.bf16.mxu0 0
        %1408 = vmatpush1.bf16.xpose.msra.mxu0 0
        %1409 = vmatprep.subr.bf16.mxu0 0
        %1410 = vmatpush1.bf16.xpose.msra.mxu0 0
        %1411 = vmatprep.subr.bf16.mxu0 0
        %1412 = vmatpush1.bf16.xpose.msra.mxu0 0
        %1413 = vmatprep.subr.bf16.mxu0 0
        %1414 = vmatpush1.bf16.xpose.msra.mxu0 0
        %1415 = vmatprep.subr.bf16.mxu0 0
        %1416 = vmatpush1.bf16.xpose.msra.mxu0 0
        %1417 = vmatprep.subr.bf16.mxu0 0
        %1418 = vmatpush1.bf16.xpose.msra.mxu0 0
        %1419 = vmatprep.subr.bf16.mxu0 0
        %1420 = vmatpush1.bf16.xpose.msra.mxu0 0
        %1421 = vmatprep.subr.bf16.mxu0 0
        %1422 = vmatpush1.bf16.xpose.msra.mxu0 0
        %1423 = vmatprep.subr.bf16.mxu0 0
        %1424 = vmatpush1.bf16.xpose.msra.mxu0 0
        %1425 = vmatprep.mubr.bf16.mxu0 0
        %1426 = vmatmul.mubr.bf16.gmra.mrb[0].mxu0 %v1388
        %v1427 = vpop.f32.mrb[0].mxu0
        %v1428 = vadd.f32 %v1049, %v1427
        %v1429 = vpop.f32.mrb[0].mxu0
        %v1430 = vpop.f32.mrb[0].mxu0
        %v1431 = vpop.f32.mrb[0].mxu0
        %1432 = vdwg.mxu0
        %v1433 = vsel %vm1100, %v1428, -inf
        %1434 = vmax.xlane.f32.xlu0 %v1433
        %v1435 = vpop.xlane.xlu0 %1434
        %v1436 = vsub.f32 %v1428, %v1435
        %v1437 = vmul.f32 %v1436, 1.442695
        %v1438 = vpow.pop %v1437
        %v1439 = vsel %vm1100, %v1438, 0.0
        %1440 = vadd.xlane.f32.xlu0 %v1439
        %v1441 = vpop.xlane.xlu0 %1440
        %v1442 = vrcp.pop %v1441
        %v1443 = vmul.f32 %v1438, %v1442
        %v1444 = vpack.c.bf16 %v1443, %v1443
        %1445 = vrot.lane.b32.xlu0 %v1052, 32
        %v1446 = vpop.permute.xlu0 %1445
        %v1448 = vsel %vm1100, %v1444, 0
        %v1451 = vsel %vm1116, %v1446, 0
        %1453 = vmatprep.subr.bf16.mxu0 0
        %1454 = vmatpush1.bf16.msra.mxu0 %v1451
        %1455 = vmatprep.subr.bf16.mxu0 0
        %1456 = vmatpush1.bf16.msra.mxu0 0
        %1457 = vmatprep.subr.bf16.mxu0 0
        %1458 = vmatpush1.bf16.msra.mxu0 0
        %1459 = vmatprep.subr.bf16.mxu0 0
        %1460 = vmatpush1.bf16.msra.mxu0 0
        %1461 = vmatprep.subr.bf16.mxu0 0
        %1462 = vmatpush1.bf16.msra.mxu0 0
        %1463 = vmatprep.subr.bf16.mxu0 0
        %1464 = vmatpush1.bf16.msra.mxu0 0
        %1465 = vmatprep.subr.bf16.mxu0 0
        %1466 = vmatpush1.bf16.msra.mxu0 0
        %1467 = vmatprep.subr.bf16.mxu0 0
        %1468 = vmatpush1.bf16.msra.mxu0 0
        %1469 = vmatprep.subr.bf16.mxu0 0
        %1470 = vmatpush1.bf16.msra.mxu0 0
        %1471 = vmatprep.subr.bf16.mxu0 0
        %1472 = vmatpush1.bf16.msra.mxu0 0
        %1473 = vmatprep.subr.bf16.mxu0 0
        %1474 = vmatpush1.bf16.msra.mxu0 0
        %1475 = vmatprep.subr.bf16.mxu0 0
        %1476 = vmatpush1.bf16.msra.mxu0 0
        %1477 = vmatprep.subr.bf16.mxu0 0
        %1478 = vmatpush1.bf16.msra.mxu0 0
        %1479 = vmatprep.subr.bf16.mxu0 0
        %1480 = vmatpush1.bf16.msra.mxu0 0
        %1481 = vmatprep.subr.bf16.mxu0 0
        %1482 = vmatpush1.bf16.msra.mxu0 0
        %1483 = vmatprep.subr.bf16.mxu0 0
        %1484 = vmatpush1.bf16.msra.mxu0 0
        %1485 = vmatprep.mubr.bf16.mxu0 0
        %1486 = vmatmul.mubr.bf16.gmra.mrb[0].mxu0 %v1448
        %v1487 = vpop.f32.mrb[0].mxu0
        %v1488 = vadd.f32 0.0, %v1487
        %v1489 = vpop.f32.mrb[0].mxu0
        %v1490 = vpop.f32.mrb[0].mxu0
        %v1491 = vpop.f32.mrb[0].mxu0
        %1492 = vdwg.mxu0
        %1494 = vrot.lane.b32.xlu0 %v1268, 32
        %v1495 = vpop.permute.xlu0 %1494
        %1498 = vrot.lane.b32.xlu0 %v1378, 64
        %v1499 = vpop.permute.xlu0 %1498
        %1502 = vrot.lane.b32.xlu0 %v1488, 96
        %v1503 = vpop.permute.xlu0 %1502
        %v1505 = vsel %vm1053, %v1155, %v1495
        %vm1506 = vcmask 523264
        %v1507 = vsel %vm1506, %v1505, %v1499
        %vm1508 = vcmask 785408
        %v1509 = vsel %vm1508, %v1507, %v1503
        %v1510 = vpack.c.bf16 %v1509, %v1509
        %v1511 = vld [vmem:[%s6] sm:$0xf]
        %v1512 = vld [vmem:[%s6 + $0x4] sm:$0xf]
        %v1513 = vld [vmem:[%s6 + $0x8] sm:$0xf]
        %v1514 = vld [vmem:[%s6 + $0xc] sm:$0xf]
        %v1515 = vld [vmem:[%s6 + $0x10] sm:$0xf]
        %v1516 = vld [vmem:[%s6 + $0x14] sm:$0xf]
        %v1517 = vld [vmem:[%s6 + $0x18] sm:$0xf]
        %v1518 = vld [vmem:[%s6 + $0x1c] sm:$0xf]
        %v1519 = vld [vmem:[%s6 + $0x20] sm:$0xf]
        %v1520 = vld [vmem:[%s6 + $0x24] sm:$0xf]
        %v1521 = vld [vmem:[%s6 + $0x28] sm:$0xf]
        %v1522 = vld [vmem:[%s6 + $0x2c] sm:$0xf]
        %v1523 = vld [vmem:[%s6 + $0x30] sm:$0xf]
        %v1524 = vld [vmem:[%s6 + $0x34] sm:$0xf]
        %v1525 = vld [vmem:[%s6 + $0x38] sm:$0xf]
        %v1526 = vld [vmem:[%s6 + $0x3c] sm:$0xf]
        %v1527 = vld [vmem:[%s7] sm:$0x1]
        %v1529 = vlaneseq
        %v1530 = vshrl.u32 %v1529, 7
        %v1531 = vsub.s32 0, %v1530
        %v1532 = vrot.slane %v1527, %v1531
        %v1550 = vunpack.c.l.b16 %v1511
        %v1551 = vunpack.c.l.b16 %v1512
        %v1552 = vunpack.c.l.b16 %v1513
        %v1553 = vunpack.c.l.b16 %v1514
        %v1554 = vunpack.c.l.b16 %v1515
        %v1555 = vunpack.c.l.b16 %v1516
        %v1556 = vunpack.c.l.b16 %v1517
        %v1557 = vunpack.c.l.b16 %v1518
        %v1558 = vunpack.c.l.b16 %v1519
        %v1559 = vunpack.c.l.b16 %v1520
        %v1560 = vunpack.c.l.b16 %v1521
        %v1561 = vunpack.c.l.b16 %v1522
        %v1562 = vunpack.c.l.b16 %v1523
        %v1563 = vunpack.c.l.b16 %v1524
        %v1564 = vunpack.c.l.b16 %v1525
        %v1565 = vunpack.c.l.b16 %v1526
        %v1566 = vpack.c.b16 %v1551, %v1550
        %v1567 = vpack.c.b16 %v1553, %v1552
        %v1568 = vpack.c.b16 %v1555, %v1554
        %v1569 = vpack.c.b16 %v1557, %v1556
        %v1570 = vpack.c.b16 %v1559, %v1558
        %v1571 = vpack.c.b16 %v1561, %v1560
        %v1572 = vpack.c.b16 %v1563, %v1562
        %v1573 = vpack.c.b16 %v1565, %v1564
        %1582 = vmatprep.subr.bf16.mxu0 0
        %1583 = vmatpush1.bf16.msra.mxu0 %v1566
        %1584 = vmatprep.subr.bf16.mxu0 0
        %1585 = vmatpush1.bf16.msra.mxu0 %v1567
        %1586 = vmatprep.subr.bf16.mxu0 0
        %1587 = vmatpush1.bf16.msra.mxu0 %v1568
        %1588 = vmatprep.subr.bf16.mxu0 0
        %1589 = vmatpush1.bf16.msra.mxu0 %v1569
        %1590 = vmatprep.subr.bf16.mxu0 0
        %1591 = vmatpush1.bf16.msra.mxu0 %v1570
        %1592 = vmatprep.subr.bf16.mxu0 0
        %1593 = vmatpush1.bf16.msra.mxu0 %v1571
        %1594 = vmatprep.subr.bf16.mxu0 0
        %1595 = vmatpush1.bf16.msra.mxu0 %v1572
        %1596 = vmatprep.subr.bf16.mxu0 0
        %1597 = vmatpush1.bf16.msra.mxu0 %v1573
        %1598 = vmatprep.subr.bf16.mxu0 0
        %1599 = vmatpush1.bf16.msra.mxu0 0
        %1600 = vmatprep.subr.bf16.mxu0 0
        %1601 = vmatpush1.bf16.msra.mxu0 0
        %1602 = vmatprep.subr.bf16.mxu0 0
        %1603 = vmatpush1.bf16.msra.mxu0 0
        %1604 = vmatprep.subr.bf16.mxu0 0
        %1605 = vmatpush1.bf16.msra.mxu0 0
        %1606 = vmatprep.subr.bf16.mxu0 0
        %1607 = vmatpush1.bf16.msra.mxu0 0
        %1608 = vmatprep.subr.bf16.mxu0 0
        %1609 = vmatpush1.bf16.msra.mxu0 0
        %1610 = vmatprep.subr.bf16.mxu0 0
        %1611 = vmatpush1.bf16.msra.mxu0 0
        %1612 = vmatprep.subr.bf16.mxu0 0
        %1613 = vmatpush1.bf16.msra.mxu0 0
        %1614 = vmatprep.mubr.bf16.mxu0 0
        %1615 = vmatmul.mubr.bf16.gmra.mrb[0].mxu0 %v1510
        %v1616 = vpop.f32.mrb[0].mxu0
        %v1617 = vadd.f32 %v1532, %v1616
        %v1618 = vpop.f32.mrb[0].mxu0
        %v1619 = vpop.f32.mrb[0].mxu0
        %v1620 = vpop.f32.mrb[0].mxu0
        %1621 = vdwg.mxu0
        %v1622 = vadd.f32 %v788, %v1617
        %1623 = vadd.xlane.f32.xlu0 %v1622
        %v1624 = vpop.xlane.xlu0 %1623
        %v1625 = vrcp.pop 128.0
        %v1626 = vmul.f32 %v1624, %v1625
        %v1627 = vsub.f32 %v1622, %v1626
        %v1628 = vmul.f32 %v1627, %v1627
        %1629 = vadd.xlane.f32.xlu0 %v1628
        %v1630 = vpop.xlane.xlu0 %1629
        %v1631 = vmul.f32 %v1630, %v1625
        %v1632 = vadd.f32 %v1631, 1e-05
        %v1633 = vrsqrt.pop %v1632
        %v1634 = vmul.f32 %v1627, %v1633
        %v1635 = vld [vmem:[%s8] sm:$0x1]
        %v1637 = vlaneseq
        %v1638 = vshrl.u32 %v1637, 7
        %v1639 = vsub.s32 0, %v1638
        %v1640 = vrot.slane %v1635, %v1639
        %v1642 = vmul.f32 %v1634, %v1640
        %v1643 = vld [vmem:[%s9] sm:$0x1]
        %v1645 = vlaneseq
        %v1646 = vshrl.u32 %v1645, 7
        %v1647 = vsub.s32 0, %v1646
        %v1648 = vrot.slane %v1643, %v1647
        %v1650 = vadd.f32 %v1642, %v1648
        %v1651 = vld [vmem:[%s778] sm:$0xff]
        %v1652 = vld [vmem:[%s778 + $0x8] sm:$0xff]
        %v1653 = vpack.c.bf16 %v1652, %v1651
        %v1654 = vld [vmem:[%s12] sm:$0xff]
        %v1655 = vld [vmem:[%s12 + $0x8] sm:$0xff]
        %v1656 = vld [vmem:[%s12 + $0x10] sm:$0xff]
        %v1657 = vld [vmem:[%s12 + $0x18] sm:$0xff]
        %v1658 = vld [vmem:[%s12 + $0x20] sm:$0xff]
        %v1659 = vld [vmem:[%s12 + $0x28] sm:$0xff]
        %v1660 = vld [vmem:[%s12 + $0x30] sm:$0xff]
        %v1661 = vld [vmem:[%s12 + $0x38] sm:$0xff]
        %v1662 = vld [vmem:[%s12 + $0x40] sm:$0xff]
        %v1663 = vld [vmem:[%s12 + $0x48] sm:$0xff]
        %v1664 = vld [vmem:[%s12 + $0x50] sm:$0xff]
        %v1665 = vld [vmem:[%s12 + $0x58] sm:$0xff]
        %v1666 = vld [vmem:[%s12 + $0x60] sm:$0xff]
        %v1667 = vld [vmem:[%s12 + $0x68] sm:$0xff]
        %v1668 = vld [vmem:[%s12 + $0x70] sm:$0xff]
        %v1669 = vld [vmem:[%s12 + $0x78] sm:$0xff]
        %v1670 = vld [vmem:[%s13] sm:$0x3]
        %v1672 = vlaneseq
        %v1673 = vshrl.u32 %v1672, 7
        %v1674 = vsub.s32 0, %v1673
        %v1675 = vrot.slane %v1670, %v1674
        %v1676 = vlaneseq
        %v1677 = vshrl.u32 %v1676, 7
        %v1678 = vsub.s32 1, %v1677
        %v1679 = vrot.slane %v1670, %v1678
        %v1698 = vunpack.c.l.b16 %v1654
        %v1699 = vunpack.c.h.b16 %v1654
        %v1700 = vunpack.c.l.b16 %v1655
        %v1701 = vunpack.c.h.b16 %v1655
        %v1702 = vunpack.c.l.b16 %v1656
        %v1703 = vunpack.c.h.b16 %v1656
        %v1704 = vunpack.c.l.b16 %v1657
        %v1705 = vunpack.c.h.b16 %v1657
        %v1706 = vunpack.c.l.b16 %v1658
        %v1707 = vunpack.c.h.b16 %v1658
        %v1708 = vunpack.c.l.b16 %v1659
        %v1709 = vunpack.c.h.b16 %v1659
        %v1710 = vunpack.c.l.b16 %v1660
        %v1711 = vunpack.c.h.b16 %v1660
        %v1712 = vunpack.c.l.b16 %v1661
        %v1713 = vunpack.c.h.b16 %v1661
        %v1714 = vunpack.c.l.b16 %v1662
        %v1715 = vunpack.c.h.b16 %v1662
        %v1716 = vunpack.c.l.b16 %v1663
        %v1717 = vunpack.c.h.b16 %v1663
        %v1718 = vunpack.c.l.b16 %v1664
        %v1719 = vunpack.c.h.b16 %v1664
        %v1720 = vunpack.c.l.b16 %v1665
        %v1721 = vunpack.c.h.b16 %v1665
        %v1722 = vunpack.c.l.b16 %v1666
        %v1723 = vunpack.c.h.b16 %v1666
        %v1724 = vunpack.c.l.b16 %v1667
        %v1725 = vunpack.c.h.b16 %v1667
        %v1726 = vunpack.c.l.b16 %v1668
        %v1727 = vunpack.c.h.b16 %v1668
        %v1728 = vunpack.c.l.b16 %v1669
        %v1729 = vunpack.c.h.b16 %v1669
        %v1730 = vpack.c.b16 %v1700, %v1698
        %v1731 = vpack.c.b16 %v1701, %v1699
        %v1732 = vpack.c.b16 %v1704, %v1702
        %v1733 = vpack.c.b16 %v1705, %v1703
        %v1734 = vpack.c.b16 %v1708, %v1706
        %v1735 = vpack.c.b16 %v1709, %v1707
        %v1736 = vpack.c.b16 %v1712, %v1710
        %v1737 = vpack.c.b16 %v1713, %v1711
        %v1738 = vpack.c.b16 %v1716, %v1714
        %v1739 = vpack.c.b16 %v1717, %v1715
        %v1740 = vpack.c.b16 %v1720, %v1718
        %v1741 = vpack.c.b16 %v1721, %v1719
        %v1742 = vpack.c.b16 %v1724, %v1722
        %v1743 = vpack.c.b16 %v1725, %v1723
        %v1744 = vpack.c.b16 %v1728, %v1726
        %v1745 = vpack.c.b16 %v1729, %v1727
        %1762 = vmatprep.subr.bf16.mxu0 %v1731
        %1763 = vmatpush1.bf16.msra.mxu0 %v1730
        %1764 = vmatprep.subr.bf16.mxu0 %v1733
        %1765 = vmatpush1.bf16.msra.mxu0 %v1732
        %1766 = vmatprep.subr.bf16.mxu0 %v1735
        %1767 = vmatpush1.bf16.msra.mxu0 %v1734
        %1768 = vmatprep.subr.bf16.mxu0 %v1737
        %1769 = vmatpush1.bf16.msra.mxu0 %v1736
        %1770 = vmatprep.subr.bf16.mxu0 %v1739
        %1771 = vmatpush1.bf16.msra.mxu0 %v1738
        %1772 = vmatprep.subr.bf16.mxu0 %v1741
        %1773 = vmatpush1.bf16.msra.mxu0 %v1740
        %1774 = vmatprep.subr.bf16.mxu0 %v1743
        %1775 = vmatpush1.bf16.msra.mxu0 %v1742
        %1776 = vmatprep.subr.bf16.mxu0 %v1745
        %1777 = vmatpush1.bf16.msra.mxu0 %v1744
        %1778 = vmatprep.subr.bf16.mxu0 0
        %1779 = vmatpush1.bf16.msra.mxu0 0
        %1780 = vmatprep.subr.bf16.mxu0 0
        %1781 = vmatpush1.bf16.msra.mxu0 0
        %1782 = vmatprep.subr.bf16.mxu0 0
        %1783 = vmatpush1.bf16.msra.mxu0 0
        %1784 = vmatprep.subr.bf16.mxu0 0
        %1785 = vmatpush1.bf16.msra.mxu0 0
        %1786 = vmatprep.subr.bf16.mxu0 0
        %1787 = vmatpush1.bf16.msra.mxu0 0
        %1788 = vmatprep.subr.bf16.mxu0 0
        %1789 = vmatpush1.bf16.msra.mxu0 0
        %1790 = vmatprep.subr.bf16.mxu0 0
        %1791 = vmatpush1.bf16.msra.mxu0 0
        %1792 = vmatprep.subr.bf16.mxu0 0
        %1793 = vmatpush1.bf16.msra.mxu0 0
        %1794 = vmatprep.mubr.bf16.mxu0 0
        %1795 = vmatmul.mubr.bf16.gmra.mrb[0].mxu0 %v1653
        %v1796 = vpop.f32.mrb[0].mxu0
        %v1797 = vadd.f32 %v1675, %v1796
        %v1798 = vpop.f32.mrb[0].mxu0
        %v1799 = vadd.f32 %v1679, %v1798
        %v1800 = vpop.f32.mrb[0].mxu0
        %v1801 = vadd.f32 %v1675, %v1800
        %v1802 = vpop.f32.mrb[0].mxu0
        %v1803 = vadd.f32 %v1679, %v1802
        %1804 = vdwg.mxu0
        %v1805 = vpack.c.bf16 %v1650, %v1650
        %v1806 = vld [vmem:[%s10] sm:$0xf]
        %v1807 = vld [vmem:[%s10 + $0x4] sm:$0xf]
        %v1808 = vld [vmem:[%s10 + $0x8] sm:$0xf]
        %v1809 = vld [vmem:[%s10 + $0xc] sm:$0xf]
        %v1810 = vld [vmem:[%s10 + $0x10] sm:$0xf]
        %v1811 = vld [vmem:[%s10 + $0x14] sm:$0xf]
        %v1812 = vld [vmem:[%s10 + $0x18] sm:$0xf]
        %v1813 = vld [vmem:[%s10 + $0x1c] sm:$0xf]
        %v1814 = vld [vmem:[%s10 + $0x20] sm:$0xf]
        %v1815 = vld [vmem:[%s10 + $0x24] sm:$0xf]
        %v1816 = vld [vmem:[%s10 + $0x28] sm:$0xf]
        %v1817 = vld [vmem:[%s10 + $0x2c] sm:$0xf]
        %v1818 = vld [vmem:[%s10 + $0x30] sm:$0xf]
        %v1819 = vld [vmem:[%s10 + $0x34] sm:$0xf]
        %v1820 = vld [vmem:[%s10 + $0x38] sm:$0xf]
        %v1821 = vld [vmem:[%s10 + $0x3c] sm:$0xf]
        %v1822 = vld [vmem:[%s11] sm:$0x1]
        %v1824 = vlaneseq
        %v1825 = vshrl.u32 %v1824, 7
        %v1826 = vsub.s32 0, %v1825
        %v1827 = vrot.slane %v1822, %v1826
        %v1845 = vunpack.c.l.b16 %v1806
        %v1846 = vunpack.c.l.b16 %v1807
        %v1847 = vunpack.c.l.b16 %v1808
        %v1848 = vunpack.c.l.b16 %v1809
        %v1849 = vunpack.c.l.b16 %v1810
        %v1850 = vunpack.c.l.b16 %v1811
        %v1851 = vunpack.c.l.b16 %v1812
        %v1852 = vunpack.c.l.b16 %v1813
        %v1853 = vunpack.c.l.b16 %v1814
        %v1854 = vunpack.c.l.b16 %v1815
        %v1855 = vunpack.c.l.b16 %v1816
        %v1856 = vunpack.c.l.b16 %v1817
        %v1857 = vunpack.c.l.b16 %v1818
        %v1858 = vunpack.c.l.b16 %v1819
        %v1859 = vunpack.c.l.b16 %v1820
        %v1860 = vunpack.c.l.b16 %v1821
        %v1861 = vpack.c.b16 %v1846, %v1845
        %v1862 = vpack.c.b16 %v1848, %v1847
        %v1863 = vpack.c.b16 %v1850, %v1849
        %v1864 = vpack.c.b16 %v1852, %v1851
        %v1865 = vpack.c.b16 %v1854, %v1853
        %v1866 = vpack.c.b16 %v1856, %v1855
        %v1867 = vpack.c.b16 %v1858, %v1857
        %v1868 = vpack.c.b16 %v1860, %v1859
        %1877 = vmatprep.subr.bf16.mxu0 0
        %1878 = vmatpush1.bf16.msra.mxu0 %v1861
        %1879 = vmatprep.subr.bf16.mxu0 0
        %1880 = vmatpush1.bf16.msra.mxu0 %v1862
        %1881 = vmatprep.subr.bf16.mxu0 0
        %1882 = vmatpush1.bf16.msra.mxu0 %v1863
        %1883 = vmatprep.subr.bf16.mxu0 0
        %1884 = vmatpush1.bf16.msra.mxu0 %v1864
        %1885 = vmatprep.subr.bf16.mxu0 0
        %1886 = vmatpush1.bf16.msra.mxu0 %v1865
        %1887 = vmatprep.subr.bf16.mxu0 0
        %1888 = vmatpush1.bf16.msra.mxu0 %v1866
        %1889 = vmatprep.subr.bf16.mxu0 0
        %1890 = vmatpush1.bf16.msra.mxu0 %v1867
        %1891 = vmatprep.subr.bf16.mxu0 0
        %1892 = vmatpush1.bf16.msra.mxu0 %v1868
        %1893 = vmatprep.subr.bf16.mxu0 0
        %1894 = vmatpush1.bf16.msra.mxu0 0
        %1895 = vmatprep.subr.bf16.mxu0 0
        %1896 = vmatpush1.bf16.msra.mxu0 0
        %1897 = vmatprep.subr.bf16.mxu0 0
        %1898 = vmatpush1.bf16.msra.mxu0 0
        %1899 = vmatprep.subr.bf16.mxu0 0
        %1900 = vmatpush1.bf16.msra.mxu0 0
        %1901 = vmatprep.subr.bf16.mxu0 0
        %1902 = vmatpush1.bf16.msra.mxu0 0
        %1903 = vmatprep.subr.bf16.mxu0 0
        %1904 = vmatpush1.bf16.msra.mxu0 0
        %1905 = vmatprep.subr.bf16.mxu0 0
        %1906 = vmatpush1.bf16.msra.mxu0 0
        %1907 = vmatprep.subr.bf16.mxu0 0
        %1908 = vmatpush1.bf16.msra.mxu0 0
        %1909 = vmatprep.mubr.bf16.mxu0 0
        %1910 = vmatmul.mubr.bf16.gmra.mrb[0].mxu0 %v1805
        %v1911 = vpop.f32.mrb[0].mxu0
        %v1912 = vadd.f32 %v1827, %v1911
        %v1913 = vpop.f32.mrb[0].mxu0
        %v1914 = vpop.f32.mrb[0].mxu0
        %v1915 = vpop.f32.mrb[0].mxu0
        %1916 = vdwg.mxu0
        %v1917 = vld [vmem:[%s786] sm:$0xf]
        %v1918 = vunpack.c.l.bf16 %v1917
        %v1919 = vpack.c.bf16 %v1912, %v1912
        %v1920 = vpack.c.bf16 %v1801, %v1797
        %v1921 = vpack.c.bf16 %v1803, %v1799
        %v1923 = vsel %vm1053, %v1919, 0
        %v1926 = vsel %vm1053, %v1920, 0
        %1928 = vmatprep.subr.bf16.mxu0 0
        %1929 = vmatpush1.bf16.xpose.msra.mxu0 %v1926
        %1930 = vmatprep.subr.bf16.mxu0 0
        %1931 = vmatpush1.bf16.xpose.msra.mxu0 0
        %1932 = vmatprep.subr.bf16.mxu0 0
        %1933 = vmatpush1.bf16.xpose.msra.mxu0 0
        %1934 = vmatprep.subr.bf16.mxu0 0
        %1935 = vmatpush1.bf16.xpose.msra.mxu0 0
        %1936 = vmatprep.subr.bf16.mxu0 0
        %1937 = vmatpush1.bf16.xpose.msra.mxu0 0
        %1938 = vmatprep.subr.bf16.mxu0 0
        %1939 = vmatpush1.bf16.xpose.msra.mxu0 0
        %1940 = vmatprep.subr.bf16.mxu0 0
        %1941 = vmatpush1.bf16.xpose.msra.mxu0 0
        %1942 = vmatprep.subr.bf16.mxu0 0
        %1943 = vmatpush1.bf16.xpose.msra.mxu0 0
        %1944 = vmatprep.subr.bf16.mxu0 0
        %1945 = vmatpush1.bf16.xpose.msra.mxu0 0
        %1946 = vmatprep.subr.bf16.mxu0 0
        %1947 = vmatpush1.bf16.xpose.msra.mxu0 0
        %1948 = vmatprep.subr.bf16.mxu0 0
        %1949 = vmatpush1.bf16.xpose.msra.mxu0 0
        %1950 = vmatprep.subr.bf16.mxu0 0
        %1951 = vmatpush1.bf16.xpose.msra.mxu0 0
        %1952 = vmatprep.subr.bf16.mxu0 0
        %1953 = vmatpush1.bf16.xpose.msra.mxu0 0
        %1954 = vmatprep.subr.bf16.mxu0 0
        %1955 = vmatpush1.bf16.xpose.msra.mxu0 0
        %1956 = vmatprep.subr.bf16.mxu0 0
        %1957 = vmatpush1.bf16.xpose.msra.mxu0 0
        %1958 = vmatprep.subr.bf16.mxu0 0
        %1959 = vmatpush1.bf16.xpose.msra.mxu0 0
        %1960 = vmatprep.mubr.bf16.mxu0 0
        %1961 = vmatmul.mubr.bf16.gmra.mrb[0].mxu0 %v1923
        %v1962 = vpop.f32.mrb[0].mxu0
        %v1963 = vadd.f32 %v1918, %v1962
        %v1964 = vpop.f32.mrb[0].mxu0
        %v1965 = vpop.f32.mrb[0].mxu0
        %v1966 = vpop.f32.mrb[0].mxu0
        %1967 = vdwg.mxu0
        %vm1968 = vcmask 130048
        %v1969 = vsel %vm1968, %v1963, -inf
        %1970 = vmax.xlane.f32.xlu0 %v1969
        %v1971 = vpop.xlane.xlu0 %1970
        %v1972 = vsub.f32 %v1963, %v1971
        %v1973 = vmul.f32 %v1972, 1.442695
        %v1974 = vpow.pop %v1973
        %v1975 = vsel %vm1968, %v1974, 0.0
        %1976 = vadd.xlane.f32.xlu0 %v1975
        %v1977 = vpop.xlane.xlu0 %1976
        %v1978 = vrcp.pop %v1977
        %v1979 = vmul.f32 %v1974, %v1978
        %v1980 = vpack.c.bf16 %v1979, %v1979
        %v1982 = vsel %vm1968, %v1980, 0
        %1984 = vmatprep.subr.bf16.mxu0 0
        %1985 = vmatpush1.bf16.msra.mxu0 %v1921
        %1986 = vmatprep.subr.bf16.mxu0 0
        %1987 = vmatpush1.bf16.msra.mxu0 0
        %1988 = vmatprep.subr.bf16.mxu0 0
        %1989 = vmatpush1.bf16.msra.mxu0 0
        %1990 = vmatprep.subr.bf16.mxu0 0
        %1991 = vmatpush1.bf16.msra.mxu0 0
        %1992 = vmatprep.subr.bf16.mxu0 0
        %1993 = vmatpush1.bf16.msra.mxu0 0
        %1994 = vmatprep.subr.bf16.mxu0 0
        %1995 = vmatpush1.bf16.msra.mxu0 0
        %1996 = vmatprep.subr.bf16.mxu0 0
        %1997 = vmatpush1.bf16.msra.mxu0 0
        %1998 = vmatprep.subr.bf16.mxu0 0
        %1999 = vmatpush1.bf16.msra.mxu0 0
        %2000 = vmatprep.subr.bf16.mxu0 0
        %2001 = vmatpush1.bf16.msra.mxu0 0
        %2002 = vmatprep.subr.bf16.mxu0 0
        %2003 = vmatpush1.bf16.msra.mxu0 0
        %2004 = vmatprep.subr.bf16.mxu0 0
        %2005 = vmatpush1.bf16.msra.mxu0 0
        %2006 = vmatprep.subr.bf16.mxu0 0
        %2007 = vmatpush1.bf16.msra.mxu0 0
        %2008 = vmatprep.subr.bf16.mxu0 0
        %2009 = vmatpush1.bf16.msra.mxu0 0
        %2010 = vmatprep.subr.bf16.mxu0 0
        %2011 = vmatpush1.bf16.msra.mxu0 0
        %2012 = vmatprep.subr.bf16.mxu0 0
        %2013 = vmatpush1.bf16.msra.mxu0 0
        %2014 = vmatprep.subr.bf16.mxu0 0
        %2015 = vmatpush1.bf16.msra.mxu0 0
        %2016 = vmatprep.mubr.bf16.mxu0 0
        %2017 = vmatmul.mubr.bf16.gmra.mrb[0].mxu0 %v1982
        %v2018 = vpop.f32.mrb[0].mxu0
        %v2019 = vadd.f32 0.0, %v2018
        %v2020 = vpop.f32.mrb[0].mxu0
        %v2021 = vpop.f32.mrb[0].mxu0
        %v2022 = vpop.f32.mrb[0].mxu0
        %2023 = vdwg.mxu0
        %2025 = vrot.lane.b32.xlu0 %v1919, 96
        %v2026 = vpop.permute.xlu0 %2025
        %2028 = vrot.lane.b32.xlu0 %v1920, 96
        %v2029 = vpop.permute.xlu0 %2028
        %v2031 = vsel %vm1053, %v2026, 0
        %v2034 = vsel %vm1053, %v2029, 0
        %2036 = vmatprep.subr.bf16.mxu0 0
        %2037 = vmatpush1.bf16.xpose.msra.mxu0 %v2034
        %2038 = vmatprep.subr.bf16.mxu0 0
        %2039 = vmatpush1.bf16.xpose.msra.mxu0 0
        %2040 = vmatprep.subr.bf16.mxu0 0
        %2041 = vmatpush1.bf16.xpose.msra.mxu0 0
        %2042 = vmatprep.subr.bf16.mxu0 0
        %2043 = vmatpush1.bf16.xpose.msra.mxu0 0
        %2044 = vmatprep.subr.bf16.mxu0 0
        %2045 = vmatpush1.bf16.xpose.msra.mxu0 0
        %2046 = vmatprep.subr.bf16.mxu0 0
        %2047 = vmatpush1.bf16.xpose.msra.mxu0 0
        %2048 = vmatprep.subr.bf16.mxu0 0
        %2049 = vmatpush1.bf16.xpose.msra.mxu0 0
        %2050 = vmatprep.subr.bf16.mxu0 0
        %2051 = vmatpush1.bf16.xpose.msra.mxu0 0
        %2052 = vmatprep.subr.bf16.mxu0 0
        %2053 = vmatpush1.bf16.xpose.msra.mxu0 0
        %2054 = vmatprep.subr.bf16.mxu0 0
        %2055 = vmatpush1.bf16.xpose.msra.mxu0 0
        %2056 = vmatprep.subr.bf16.mxu0 0
        %2057 = vmatpush1.bf16.xpose.msra.mxu0 0
        %2058 = vmatprep.subr.bf16.mxu0 0
        %2059 = vmatpush1.bf16.xpose.msra.mxu0 0
        %2060 = vmatprep.subr.bf16.mxu0 0
        %2061 = vmatpush1.bf16.xpose.msra.mxu0 0
        %2062 = vmatprep.subr.bf16.mxu0 0
        %2063 = vmatpush1.bf16.xpose.msra.mxu0 0
        %2064 = vmatprep.subr.bf16.mxu0 0
        %2065 = vmatpush1.bf16.xpose.msra.mxu0 0
        %2066 = vmatprep.subr.bf16.mxu0 0
        %2067 = vmatpush1.bf16.xpose.msra.mxu0 0
        %2068 = vmatprep.mubr.bf16.mxu0 0
        %2069 = vmatmul.mubr.bf16.gmra.mrb[0].mxu0 %v2031
        %v2070 = vpop.f32.mrb[0].mxu0
        %v2071 = vadd.f32 %v1918, %v2070
        %v2072 = vpop.f32.mrb[0].mxu0
        %v2073 = vpop.f32.mrb[0].mxu0
        %v2074 = vpop.f32.mrb[0].mxu0
        %2075 = vdwg.mxu0
        %v2076 = vsel %vm1968, %v2071, -inf
        %2077 = vmax.xlane.f32.xlu0 %v2076
        %v2078 = vpop.xlane.xlu0 %2077
        %v2079 = vsub.f32 %v2071, %v2078
        %v2080 = vmul.f32 %v2079, 1.442695
        %v2081 = vpow.pop %v2080
        %v2082 = vsel %vm1968, %v2081, 0.0
        %2083 = vadd.xlane.f32.xlu0 %v2082
        %v2084 = vpop.xlane.xlu0 %2083
        %v2085 = vrcp.pop %v2084
        %v2086 = vmul.f32 %v2081, %v2085
        %v2087 = vpack.c.bf16 %v2086, %v2086
        %2089 = vrot.lane.b32.xlu0 %v1921, 96
        %v2090 = vpop.permute.xlu0 %2089
        %v2093 = vsel %vm1968, %v2087, 0
        %2095 = vmatprep.subr.bf16.mxu0 0
        %2096 = vmatpush1.bf16.msra.mxu0 %v2090
        %2097 = vmatprep.subr.bf16.mxu0 0
        %2098 = vmatpush1.bf16.msra.mxu0 0
        %2099 = vmatprep.subr.bf16.mxu0 0
        %2100 = vmatpush1.bf16.msra.mxu0 0
        %2101 = vmatprep.subr.bf16.mxu0 0
        %2102 = vmatpush1.bf16.msra.mxu0 0
        %2103 = vmatprep.subr.bf16.mxu0 0
        %2104 = vmatpush1.bf16.msra.mxu0 0
        %2105 = vmatprep.subr.bf16.mxu0 0
        %2106 = vmatpush1.bf16.msra.mxu0 0
        %2107 = vmatprep.subr.bf16.mxu0 0
        %2108 = vmatpush1.bf16.msra.mxu0 0
        %2109 = vmatprep.subr.bf16.mxu0 0
        %2110 = vmatpush1.bf16.msra.mxu0 0
        %2111 = vmatprep.subr.bf16.mxu0 0
        %2112 = vmatpush1.bf16.msra.mxu0 0
        %2113 = vmatprep.subr.bf16.mxu0 0
        %2114 = vmatpush1.bf16.msra.mxu0 0
        %2115 = vmatprep.subr.bf16.mxu0 0
        %2116 = vmatpush1.bf16.msra.mxu0 0
        %2117 = vmatprep.subr.bf16.mxu0 0
        %2118 = vmatpush1.bf16.msra.mxu0 0
        %2119 = vmatprep.subr.bf16.mxu0 0
        %2120 = vmatpush1.bf16.msra.mxu0 0
        %2121 = vmatprep.subr.bf16.mxu0 0
        %2122 = vmatpush1.bf16.msra.mxu0 0
        %2123 = vmatprep.subr.bf16.mxu0 0
        %2124 = vmatpush1.bf16.msra.mxu0 0
        %2125 = vmatprep.subr.bf16.mxu0 0
        %2126 = vmatpush1.bf16.msra.mxu0 0
        %2127 = vmatprep.mubr.bf16.mxu0 0
        %2128 = vmatmul.mubr.bf16.gmra.mrb[0].mxu0 %v2093
        %v2129 = vpop.f32.mrb[0].mxu0
        %v2130 = vadd.f32 0.0, %v2129
        %v2131 = vpop.f32.mrb[0].mxu0
        %v2132 = vpop.f32.mrb[0].mxu0
        %v2133 = vpop.f32.mrb[0].mxu0
        %2134 = vdwg.mxu0
        %2135 = vrot.lane.b32.xlu0 %v1919, 64
        %v2136 = vpop.permute.xlu0 %2135
        %2137 = vrot.lane.b32.xlu0 %v1920, 64
        %v2138 = vpop.permute.xlu0 %2137
        %v2140 = vsel %vm1053, %v2136, 0
        %v2143 = vsel %vm1053, %v2138, 0
        %2145 = vmatprep.subr.bf16.mxu0 0
        %2146 = vmatpush1.bf16.xpose.msra.mxu0 %v2143
        %2147 = vmatprep.subr.bf16.mxu0 0
        %2148 = vmatpush1.bf16.xpose.msra.mxu0 0
        %2149 = vmatprep.subr.bf16.mxu0 0
        %2150 = vmatpush1.bf16.xpose.msra.mxu0 0
        %2151 = vmatprep.subr.bf16.mxu0 0
        %2152 = vmatpush1.bf16.xpose.msra.mxu0 0
        %2153 = vmatprep.subr.bf16.mxu0 0
        %2154 = vmatpush1.bf16.xpose.msra.mxu0 0
        %2155 = vmatprep.subr.bf16.mxu0 0
        %2156 = vmatpush1.bf16.xpose.msra.mxu0 0
        %2157 = vmatprep.subr.bf16.mxu0 0
        %2158 = vmatpush1.bf16.xpose.msra.mxu0 0
        %2159 = vmatprep.subr.bf16.mxu0 0
        %2160 = vmatpush1.bf16.xpose.msra.mxu0 0
        %2161 = vmatprep.subr.bf16.mxu0 0
        %2162 = vmatpush1.bf16.xpose.msra.mxu0 0
        %2163 = vmatprep.subr.bf16.mxu0 0
        %2164 = vmatpush1.bf16.xpose.msra.mxu0 0
        %2165 = vmatprep.subr.bf16.mxu0 0
        %2166 = vmatpush1.bf16.xpose.msra.mxu0 0
        %2167 = vmatprep.subr.bf16.mxu0 0
        %2168 = vmatpush1.bf16.xpose.msra.mxu0 0
        %2169 = vmatprep.subr.bf16.mxu0 0
        %2170 = vmatpush1.bf16.xpose.msra.mxu0 0
        %2171 = vmatprep.subr.bf16.mxu0 0
        %2172 = vmatpush1.bf16.xpose.msra.mxu0 0
        %2173 = vmatprep.subr.bf16.mxu0 0
        %2174 = vmatpush1.bf16.xpose.msra.mxu0 0
        %2175 = vmatprep.subr.bf16.mxu0 0
        %2176 = vmatpush1.bf16.xpose.msra.mxu0 0
        %2177 = vmatprep.mubr.bf16.mxu0 0
        %2178 = vmatmul.mubr.bf16.gmra.mrb[0].mxu0 %v2140
        %v2179 = vpop.f32.mrb[0].mxu0
        %v2180 = vadd.f32 %v1918, %v2179
        %v2181 = vpop.f32.mrb[0].mxu0
        %v2182 = vpop.f32.mrb[0].mxu0
        %v2183 = vpop.f32.mrb[0].mxu0
        %2184 = vdwg.mxu0
        %v2185 = vsel %vm1968, %v2180, -inf
        %2186 = vmax.xlane.f32.xlu0 %v2185
        %v2187 = vpop.xlane.xlu0 %2186
        %v2188 = vsub.f32 %v2180, %v2187
        %v2189 = vmul.f32 %v2188, 1.442695
        %v2190 = vpow.pop %v2189
        %v2191 = vsel %vm1968, %v2190, 0.0
        %2192 = vadd.xlane.f32.xlu0 %v2191
        %v2193 = vpop.xlane.xlu0 %2192
        %v2194 = vrcp.pop %v2193
        %v2195 = vmul.f32 %v2190, %v2194
        %v2196 = vpack.c.bf16 %v2195, %v2195
        %2197 = vrot.lane.b32.xlu0 %v1921, 64
        %v2198 = vpop.permute.xlu0 %2197
        %v2201 = vsel %vm1968, %v2196, 0
        %2203 = vmatprep.subr.bf16.mxu0 0
        %2204 = vmatpush1.bf16.msra.mxu0 %v2198
        %2205 = vmatprep.subr.bf16.mxu0 0
        %2206 = vmatpush1.bf16.msra.mxu0 0
        %2207 = vmatprep.subr.bf16.mxu0 0
        %2208 = vmatpush1.bf16.msra.mxu0 0
        %2209 = vmatprep.subr.bf16.mxu0 0
        %2210 = vmatpush1.bf16.msra.mxu0 0
        %2211 = vmatprep.subr.bf16.mxu0 0
        %2212 = vmatpush1.bf16.msra.mxu0 0
        %2213 = vmatprep.subr.bf16.mxu0 0
        %2214 = vmatpush1.bf16.msra.mxu0 0
        %2215 = vmatprep.subr.bf16.mxu0 0
        %2216 = vmatpush1.bf16.msra.mxu0 0
        %2217 = vmatprep.subr.bf16.mxu0 0
        %2218 = vmatpush1.bf16.msra.mxu0 0
        %2219 = vmatprep.subr.bf16.mxu0 0
        %2220 = vmatpush1.bf16.msra.mxu0 0
        %2221 = vmatprep.subr.bf16.mxu0 0
        %2222 = vmatpush1.bf16.msra.mxu0 0
        %2223 = vmatprep.subr.bf16.mxu0 0
        %2224 = vmatpush1.bf16.msra.mxu0 0
        %2225 = vmatprep.subr.bf16.mxu0 0
        %2226 = vmatpush1.bf16.msra.mxu0 0
        %2227 = vmatprep.subr.bf16.mxu0 0
        %2228 = vmatpush1.bf16.msra.mxu0 0
        %2229 = vmatprep.subr.bf16.mxu0 0
        %2230 = vmatpush1.bf16.msra.mxu0 0
        %2231 = vmatprep.subr.bf16.mxu0 0
        %2232 = vmatpush1.bf16.msra.mxu0 0
        %2233 = vmatprep.subr.bf16.mxu0 0
        %2234 = vmatpush1.bf16.msra.mxu0 0
        %2235 = vmatprep.mubr.bf16.mxu0 0
        %2236 = vmatmul.mubr.bf16.gmra.mrb[0].mxu0 %v2201
        %v2237 = vpop.f32.mrb[0].mxu0
        %v2238 = vadd.f32 0.0, %v2237
        %v2239 = vpop.f32.mrb[0].mxu0
        %v2240 = vpop.f32.mrb[0].mxu0
        %v2241 = vpop.f32.mrb[0].mxu0
        %2242 = vdwg.mxu0
        %2243 = vrot.lane.b32.xlu0 %v1919, 32
        %v2244 = vpop.permute.xlu0 %2243
        %2245 = vrot.lane.b32.xlu0 %v1920, 32
        %v2246 = vpop.permute.xlu0 %2245
        %v2248 = vsel %vm1053, %v2244, 0
        %v2251 = vsel %vm1053, %v2246, 0
        %2253 = vmatprep.subr.bf16.mxu0 0
        %2254 = vmatpush1.bf16.xpose.msra.mxu0 %v2251
        %2255 = vmatprep.subr.bf16.mxu0 0
        %2256 = vmatpush1.bf16.xpose.msra.mxu0 0
        %2257 = vmatprep.subr.bf16.mxu0 0
        %2258 = vmatpush1.bf16.xpose.msra.mxu0 0
        %2259 = vmatprep.subr.bf16.mxu0 0
        %2260 = vmatpush1.bf16.xpose.msra.mxu0 0
        %2261 = vmatprep.subr.bf16.mxu0 0
        %2262 = vmatpush1.bf16.xpose.msra.mxu0 0
        %2263 = vmatprep.subr.bf16.mxu0 0
        %2264 = vmatpush1.bf16.xpose.msra.mxu0 0
        %2265 = vmatprep.subr.bf16.mxu0 0
        %2266 = vmatpush1.bf16.xpose.msra.mxu0 0
        %2267 = vmatprep.subr.bf16.mxu0 0
        %2268 = vmatpush1.bf16.xpose.msra.mxu0 0
        %2269 = vmatprep.subr.bf16.mxu0 0
        %2270 = vmatpush1.bf16.xpose.msra.mxu0 0
        %2271 = vmatprep.subr.bf16.mxu0 0
        %2272 = vmatpush1.bf16.xpose.msra.mxu0 0
        %2273 = vmatprep.subr.bf16.mxu0 0
        %2274 = vmatpush1.bf16.xpose.msra.mxu0 0
        %2275 = vmatprep.subr.bf16.mxu0 0
        %2276 = vmatpush1.bf16.xpose.msra.mxu0 0
        %2277 = vmatprep.subr.bf16.mxu0 0
        %2278 = vmatpush1.bf16.xpose.msra.mxu0 0
        %2279 = vmatprep.subr.bf16.mxu0 0
        %2280 = vmatpush1.bf16.xpose.msra.mxu0 0
        %2281 = vmatprep.subr.bf16.mxu0 0
        %2282 = vmatpush1.bf16.xpose.msra.mxu0 0
        %2283 = vmatprep.subr.bf16.mxu0 0
        %2284 = vmatpush1.bf16.xpose.msra.mxu0 0
        %2285 = vmatprep.mubr.bf16.mxu0 0
        %2286 = vmatmul.mubr.bf16.gmra.mrb[0].mxu0 %v2248
        %v2287 = vpop.f32.mrb[0].mxu0
        %v2288 = vadd.f32 %v1918, %v2287
        %v2289 = vpop.f32.mrb[0].mxu0
        %v2290 = vpop.f32.mrb[0].mxu0
        %v2291 = vpop.f32.mrb[0].mxu0
        %2292 = vdwg.mxu0
        %v2293 = vsel %vm1968, %v2288, -inf
        %2294 = vmax.xlane.f32.xlu0 %v2293
        %v2295 = vpop.xlane.xlu0 %2294
        %v2296 = vsub.f32 %v2288, %v2295
        %v2297 = vmul.f32 %v2296, 1.442695
        %v2298 = vpow.pop %v2297
        %v2299 = vsel %vm1968, %v2298, 0.0
        %2300 = vadd.xlane.f32.xlu0 %v2299
        %v2301 = vpop.xlane.xlu0 %2300
        %v2302 = vrcp.pop %v2301
        %v2303 = vmul.f32 %v2298, %v2302
        %v2304 = vpack.c.bf16 %v2303, %v2303
        %2305 = vrot.lane.b32.xlu0 %v1921, 32
        %v2306 = vpop.permute.xlu0 %2305
        %v2309 = vsel %vm1968, %v2304, 0
        %2311 = vmatprep.subr.bf16.mxu0 0
        %2312 = vmatpush1.bf16.msra.mxu0 %v2306
        %2313 = vmatprep.subr.bf16.mxu0 0
        %2314 = vmatpush1.bf16.msra.mxu0 0
        %2315 = vmatprep.subr.bf16.mxu0 0
        %2316 = vmatpush1.bf16.msra.mxu0 0
        %2317 = vmatprep.subr.bf16.mxu0 0
        %2318 = vmatpush1.bf16.msra.mxu0 0
        %2319 = vmatprep.subr.bf16.mxu0 0
        %2320 = vmatpush1.bf16.msra.mxu0 0
        %2321 = vmatprep.subr.bf16.mxu0 0
        %2322 = vmatpush1.bf16.msra.mxu0 0
        %2323 = vmatprep.subr.bf16.mxu0 0
        %2324 = vmatpush1.bf16.msra.mxu0 0
        %2325 = vmatprep.subr.bf16.mxu0 0
        %2326 = vmatpush1.bf16.msra.mxu0 0
        %2327 = vmatprep.subr.bf16.mxu0 0
        %2328 = vmatpush1.bf16.msra.mxu0 0
        %2329 = vmatprep.subr.bf16.mxu0 0
        %2330 = vmatpush1.bf16.msra.mxu0 0
        %2331 = vmatprep.subr.bf16.mxu0 0
        %2332 = vmatpush1.bf16.msra.mxu0 0
        %2333 = vmatprep.subr.bf16.mxu0 0
        %2334 = vmatpush1.bf16.msra.mxu0 0
        %2335 = vmatprep.subr.bf16.mxu0 0
        %2336 = vmatpush1.bf16.msra.mxu0 0
        %2337 = vmatprep.subr.bf16.mxu0 0
        %2338 = vmatpush1.bf16.msra.mxu0 0
        %2339 = vmatprep.subr.bf16.mxu0 0
        %2340 = vmatpush1.bf16.msra.mxu0 0
        %2341 = vmatprep.subr.bf16.mxu0 0
        %2342 = vmatpush1.bf16.msra.mxu0 0
        %2343 = vmatprep.mubr.bf16.mxu0 0
        %2344 = vmatmul.mubr.bf16.gmra.mrb[0].mxu0 %v2309
        %v2345 = vpop.f32.mrb[0].mxu0
        %v2346 = vadd.f32 0.0, %v2345
        %v2347 = vpop.f32.mrb[0].mxu0
        %v2348 = vpop.f32.mrb[0].mxu0
        %v2349 = vpop.f32.mrb[0].mxu0
        %2350 = vdwg.mxu0
        %2352 = vrot.lane.b32.xlu0 %v2130, 32
        %v2353 = vpop.permute.xlu0 %2352
        %2356 = vrot.lane.b32.xlu0 %v2238, 64
        %v2357 = vpop.permute.xlu0 %2356
        %2360 = vrot.lane.b32.xlu0 %v2346, 96
        %v2361 = vpop.permute.xlu0 %2360
        %v2363 = vsel %vm1053, %v2019, %v2353
        %v2364 = vsel %vm1506, %v2363, %v2357
        %v2365 = vsel %vm1508, %v2364, %v2361
        %v2366 = vpack.c.bf16 %v2365, %v2365
        %v2367 = vld [vmem:[%s14] sm:$0xf]
        %v2368 = vld [vmem:[%s14 + $0x4] sm:$0xf]
        %v2369 = vld [vmem:[%s14 + $0x8] sm:$0xf]
        %v2370 = vld [vmem:[%s14 + $0xc] sm:$0xf]
        %v2371 = vld [vmem:[%s14 + $0x10] sm:$0xf]
        %v2372 = vld [vmem:[%s14 + $0x14] sm:$0xf]
        %v2373 = vld [vmem:[%s14 + $0x18] sm:$0xf]
        %v2374 = vld [vmem:[%s14 + $0x1c] sm:$0xf]
        %v2375 = vld [vmem:[%s14 + $0x20] sm:$0xf]
        %v2376 = vld [vmem:[%s14 + $0x24] sm:$0xf]
        %v2377 = vld [vmem:[%s14 + $0x28] sm:$0xf]
        %v2378 = vld [vmem:[%s14 + $0x2c] sm:$0xf]
        %v2379 = vld [vmem:[%s14 + $0x30] sm:$0xf]
        %v2380 = vld [vmem:[%s14 + $0x34] sm:$0xf]
        %v2381 = vld [vmem:[%s14 + $0x38] sm:$0xf]
        %v2382 = vld [vmem:[%s14 + $0x3c] sm:$0xf]
        %v2383 = vld [vmem:[%s15] sm:$0x1]
        %v2385 = vlaneseq
        %v2386 = vshrl.u32 %v2385, 7
        %v2387 = vsub.s32 0, %v2386
        %v2388 = vrot.slane %v2383, %v2387
        %v2406 = vunpack.c.l.b16 %v2367
        %v2407 = vunpack.c.l.b16 %v2368
        %v2408 = vunpack.c.l.b16 %v2369
        %v2409 = vunpack.c.l.b16 %v2370
        %v2410 = vunpack.c.l.b16 %v2371
        %v2411 = vunpack.c.l.b16 %v2372
        %v2412 = vunpack.c.l.b16 %v2373
        %v2413 = vunpack.c.l.b16 %v2374
        %v2414 = vunpack.c.l.b16 %v2375
        %v2415 = vunpack.c.l.b16 %v2376
        %v2416 = vunpack.c.l.b16 %v2377
        %v2417 = vunpack.c.l.b16 %v2378
        %v2418 = vunpack.c.l.b16 %v2379
        %v2419 = vunpack.c.l.b16 %v2380
        %v2420 = vunpack.c.l.b16 %v2381
        %v2421 = vunpack.c.l.b16 %v2382
        %v2422 = vpack.c.b16 %v2407, %v2406
        %v2423 = vpack.c.b16 %v2409, %v2408
        %v2424 = vpack.c.b16 %v2411, %v2410
        %v2425 = vpack.c.b16 %v2413, %v2412
        %v2426 = vpack.c.b16 %v2415, %v2414
        %v2427 = vpack.c.b16 %v2417, %v2416
        %v2428 = vpack.c.b16 %v2419, %v2418
        %v2429 = vpack.c.b16 %v2421, %v2420
        %2438 = vmatprep.subr.bf16.mxu0 0
        %2439 = vmatpush1.bf16.msra.mxu0 %v2422
        %2440 = vmatprep.subr.bf16.mxu0 0
        %2441 = vmatpush1.bf16.msra.mxu0 %v2423
        %2442 = vmatprep.subr.bf16.mxu0 0
        %2443 = vmatpush1.bf16.msra.mxu0 %v2424
        %2444 = vmatprep.subr.bf16.mxu0 0
        %2445 = vmatpush1.bf16.msra.mxu0 %v2425
        %2446 = vmatprep.subr.bf16.mxu0 0
        %2447 = vmatpush1.bf16.msra.mxu0 %v2426
        %2448 = vmatprep.subr.bf16.mxu0 0
        %2449 = vmatpush1.bf16.msra.mxu0 %v2427
        %2450 = vmatprep.subr.bf16.mxu0 0
        %2451 = vmatpush1.bf16.msra.mxu0 %v2428
        %2452 = vmatprep.subr.bf16.mxu0 0
        %2453 = vmatpush1.bf16.msra.mxu0 %v2429
        %2454 = vmatprep.subr.bf16.mxu0 0
        %2455 = vmatpush1.bf16.msra.mxu0 0
        %2456 = vmatprep.subr.bf16.mxu0 0
        %2457 = vmatpush1.bf16.msra.mxu0 0
        %2458 = vmatprep.subr.bf16.mxu0 0
        %2459 = vmatpush1.bf16.msra.mxu0 0
        %2460 = vmatprep.subr.bf16.mxu0 0
        %2461 = vmatpush1.bf16.msra.mxu0 0
        %2462 = vmatprep.subr.bf16.mxu0 0
        %2463 = vmatpush1.bf16.msra.mxu0 0
        %2464 = vmatprep.subr.bf16.mxu0 0
        %2465 = vmatpush1.bf16.msra.mxu0 0
        %2466 = vmatprep.subr.bf16.mxu0 0
        %2467 = vmatpush1.bf16.msra.mxu0 0
        %2468 = vmatprep.subr.bf16.mxu0 0
        %2469 = vmatpush1.bf16.msra.mxu0 0
        %2470 = vmatprep.mubr.bf16.mxu0 0
        %2471 = vmatmul.mubr.bf16.gmra.mrb[0].mxu0 %v2366
        %v2472 = vpop.f32.mrb[0].mxu0
        %v2473 = vadd.f32 %v2388, %v2472
        %v2474 = vpop.f32.mrb[0].mxu0
        %v2475 = vpop.f32.mrb[0].mxu0
        %v2476 = vpop.f32.mrb[0].mxu0
        %2477 = vdwg.mxu0
        %v2478 = vadd.f32 %v1650, %v2473
        %2479 = vadd.xlane.f32.xlu0 %v2478
        %v2480 = vpop.xlane.xlu0 %2479
        %v2481 = vmul.f32 %v2480, %v1625
        %v2482 = vsub.f32 %v2478, %v2481
        %v2483 = vmul.f32 %v2482, %v2482
        %2484 = vadd.xlane.f32.xlu0 %v2483
        %v2485 = vpop.xlane.xlu0 %2484
        %v2486 = vmul.f32 %v2485, %v1625
        %v2487 = vadd.f32 %v2486, 1e-05
        %v2488 = vrsqrt.pop %v2487
        %v2489 = vmul.f32 %v2482, %v2488
        %v2490 = vld [vmem:[%s16] sm:$0x1]
        %v2492 = vlaneseq
        %v2493 = vshrl.u32 %v2492, 7
        %v2494 = vsub.s32 0, %v2493
        %v2495 = vrot.slane %v2490, %v2494
        %v2497 = vmul.f32 %v2489, %v2495
        %v2498 = vld [vmem:[%s17] sm:$0x1]
        %v2500 = vlaneseq
        %v2501 = vshrl.u32 %v2500, 7
        %v2502 = vsub.s32 0, %v2501
        %v2503 = vrot.slane %v2498, %v2502
        %v2505 = vadd.f32 %v2497, %v2503
        %v2506 = vpack.c.bf16 %v2505, %v2505
        %v2507 = vld [vmem:[%s18] sm:$0xff]
        %v2508 = vld [vmem:[%s18 + $0x8] sm:$0xff]
        %v2509 = vld [vmem:[%s18 + $0x10] sm:$0xff]
        %v2510 = vld [vmem:[%s18 + $0x18] sm:$0xff]
        %v2511 = vld [vmem:[%s18 + $0x20] sm:$0xff]
        %v2512 = vld [vmem:[%s18 + $0x28] sm:$0xff]
        %v2513 = vld [vmem:[%s18 + $0x30] sm:$0xff]
        %v2514 = vld [vmem:[%s18 + $0x38] sm:$0xff]
        %v2515 = vld [vmem:[%s18 + $0x40] sm:$0xff]
        %v2516 = vld [vmem:[%s18 + $0x48] sm:$0xff]
        %v2517 = vld [vmem:[%s18 + $0x50] sm:$0xff]
        %v2518 = vld [vmem:[%s18 + $0x58] sm:$0xff]
        %v2519 = vld [vmem:[%s18 + $0x60] sm:$0xff]
        %v2520 = vld [vmem:[%s18 + $0x68] sm:$0xff]
        %v2521 = vld [vmem:[%s18 + $0x70] sm:$0xff]
        %v2522 = vld [vmem:[%s18 + $0x78] sm:$0xff]
        %v2523 = vld [vmem:[%s19] sm:$0x3]
        %v2525 = vlaneseq
        %v2526 = vshrl.u32 %v2525, 7
        %v2527 = vsub.s32 0, %v2526
        %v2528 = vrot.slane %v2523, %v2527
        %v2529 = vlaneseq
        %v2530 = vshrl.u32 %v2529, 7
        %v2531 = vsub.s32 1, %v2530
        %v2532 = vrot.slane %v2523, %v2531
        %v2551 = vunpack.c.l.b16 %v2507
        %v2552 = vunpack.c.h.b16 %v2507
        %v2553 = vunpack.c.l.b16 %v2508
        %v2554 = vunpack.c.h.b16 %v2508
        %v2555 = vunpack.c.l.b16 %v2509
        %v2556 = vunpack.c.h.b16 %v2509
        %v2557 = vunpack.c.l.b16 %v2510
        %v2558 = vunpack.c.h.b16 %v2510
        %v2559 = vunpack.c.l.b16 %v2511
        %v2560 = vunpack.c.h.b16 %v2511
        %v2561 = vunpack.c.l.b16 %v2512
        %v2562 = vunpack.c.h.b16 %v2512
        %v2563 = vunpack.c.l.b16 %v2513
        %v2564 = vunpack.c.h.b16 %v2513
        %v2565 = vunpack.c.l.b16 %v2514
        %v2566 = vunpack.c.h.b16 %v2514
        %v2567 = vunpack.c.l.b16 %v2515
        %v2568 = vunpack.c.h.b16 %v2515
        %v2569 = vunpack.c.l.b16 %v2516
        %v2570 = vunpack.c.h.b16 %v2516
        %v2571 = vunpack.c.l.b16 %v2517
        %v2572 = vunpack.c.h.b16 %v2517
        %v2573 = vunpack.c.l.b16 %v2518
        %v2574 = vunpack.c.h.b16 %v2518
        %v2575 = vunpack.c.l.b16 %v2519
        %v2576 = vunpack.c.h.b16 %v2519
        %v2577 = vunpack.c.l.b16 %v2520
        %v2578 = vunpack.c.h.b16 %v2520
        %v2579 = vunpack.c.l.b16 %v2521
        %v2580 = vunpack.c.h.b16 %v2521
        %v2581 = vunpack.c.l.b16 %v2522
        %v2582 = vunpack.c.h.b16 %v2522
        %v2583 = vpack.c.b16 %v2553, %v2551
        %v2584 = vpack.c.b16 %v2554, %v2552
        %v2585 = vpack.c.b16 %v2557, %v2555
        %v2586 = vpack.c.b16 %v2558, %v2556
        %v2587 = vpack.c.b16 %v2561, %v2559
        %v2588 = vpack.c.b16 %v2562, %v2560
        %v2589 = vpack.c.b16 %v2565, %v2563
        %v2590 = vpack.c.b16 %v2566, %v2564
        %v2591 = vpack.c.b16 %v2569, %v2567
        %v2592 = vpack.c.b16 %v2570, %v2568
        %v2593 = vpack.c.b16 %v2573, %v2571
        %v2594 = vpack.c.b16 %v2574, %v2572
        %v2595 = vpack.c.b16 %v2577, %v2575
        %v2596 = vpack.c.b16 %v2578, %v2576
        %v2597 = vpack.c.b16 %v2581, %v2579
        %v2598 = vpack.c.b16 %v2582, %v2580
        %2615 = vmatprep.subr.bf16.mxu0 %v2584
        %2616 = vmatpush1.bf16.msra.mxu0 %v2583
        %2617 = vmatprep.subr.bf16.mxu0 %v2586
        %2618 = vmatpush1.bf16.msra.mxu0 %v2585
        %2619 = vmatprep.subr.bf16.mxu0 %v2588
        %2620 = vmatpush1.bf16.msra.mxu0 %v2587
        %2621 = vmatprep.subr.bf16.mxu0 %v2590
        %2622 = vmatpush1.bf16.msra.mxu0 %v2589
        %2623 = vmatprep.subr.bf16.mxu0 %v2592
        %2624 = vmatpush1.bf16.msra.mxu0 %v2591
        %2625 = vmatprep.subr.bf16.mxu0 %v2594
        %2626 = vmatpush1.bf16.msra.mxu0 %v2593
        %2627 = vmatprep.subr.bf16.mxu0 %v2596
        %2628 = vmatpush1.bf16.msra.mxu0 %v2595
        %2629 = vmatprep.subr.bf16.mxu0 %v2598
        %2630 = vmatpush1.bf16.msra.mxu0 %v2597
        %2631 = vmatprep.subr.bf16.mxu0 0
        %2632 = vmatpush1.bf16.msra.mxu0 0
        %2633 = vmatprep.subr.bf16.mxu0 0
        %2634 = vmatpush1.bf16.msra.mxu0 0
        %2635 = vmatprep.subr.bf16.mxu0 0
        %2636 = vmatpush1.bf16.msra.mxu0 0
        %2637 = vmatprep.subr.bf16.mxu0 0
        %2638 = vmatpush1.bf16.msra.mxu0 0
        %2639 = vmatprep.subr.bf16.mxu0 0
        %2640 = vmatpush1.bf16.msra.mxu0 0
        %2641 = vmatprep.subr.bf16.mxu0 0
        %2642 = vmatpush1.bf16.msra.mxu0 0
        %2643 = vmatprep.subr.bf16.mxu0 0
        %2644 = vmatpush1.bf16.msra.mxu0 0
        %2645 = vmatprep.subr.bf16.mxu0 0
        %2646 = vmatpush1.bf16.msra.mxu0 0
        %2647 = vmatprep.mubr.bf16.mxu0 0
        %2648 = vmatmul.mubr.bf16.gmra.mrb[0].mxu0 %v2506
        %v2649 = vpop.f32.mrb[0].mxu0
        %v2650 = vadd.f32 %v2528, %v2649
        %v2651 = vpop.f32.mrb[0].mxu0
        %v2652 = vadd.f32 %v2532, %v2651
        %v2653 = vpop.f32.mrb[0].mxu0
        %v2654 = vpop.f32.mrb[0].mxu0
        %2655 = vdwg.mxu0
        %v2656 = vmax.f32 %v2650, 0.0
        %v2657 = vmax.f32 %v2652, 0.0
        %v2658 = vpack.c.bf16 %v2656, %v2656
        %v2659 = vpack.c.bf16 %v2657, %v2657
        %v2660 = vld [vmem:[%s20] sm:$0xf]
        %v2661 = vld [vmem:[%s20 + $0x4] sm:$0xf]
        %v2662 = vld [vmem:[%s20 + $0x8] sm:$0xf]
        %v2663 = vld [vmem:[%s20 + $0xc] sm:$0xf]
        %v2664 = vld [vmem:[%s20 + $0x10] sm:$0xf]
        %v2665 = vld [vmem:[%s20 + $0x14] sm:$0xf]
        %v2666 = vld [vmem:[%s20 + $0x18] sm:$0xf]
        %v2667 = vld [vmem:[%s20 + $0x1c] sm:$0xf]
        %v2668 = vld [vmem:[%s20 + $0x20] sm:$0xf]
        %v2669 = vld [vmem:[%s20 + $0x24] sm:$0xf]
        %v2670 = vld [vmem:[%s20 + $0x28] sm:$0xf]
        %v2671 = vld [vmem:[%s20 + $0x2c] sm:$0xf]
        %v2672 = vld [vmem:[%s20 + $0x30] sm:$0xf]
        %v2673 = vld [vmem:[%s20 + $0x34] sm:$0xf]
        %v2674 = vld [vmem:[%s20 + $0x38] sm:$0xf]
        %v2675 = vld [vmem:[%s20 + $0x3c] sm:$0xf]
        %v2676 = vld [vmem:[%s20 + $0x40] sm:$0xf]
        %v2677 = vld [vmem:[%s20 + $0x44] sm:$0xf]
        %v2678 = vld [vmem:[%s20 + $0x48] sm:$0xf]
        %v2679 = vld [vmem:[%s20 + $0x4c] sm:$0xf]
        %v2680 = vld [vmem:[%s20 + $0x50] sm:$0xf]
        %v2681 = vld [vmem:[%s20 + $0x54] sm:$0xf]
        %v2682 = vld [vmem:[%s20 + $0x58] sm:$0xf]
        %v2683 = vld [vmem:[%s20 + $0x5c] sm:$0xf]
        %v2684 = vld [vmem:[%s20 + $0x60] sm:$0xf]
        %v2685 = vld [vmem:[%s20 + $0x64] sm:$0xf]
        %v2686 = vld [vmem:[%s20 + $0x68] sm:$0xf]
        %v2687 = vld [vmem:[%s20 + $0x6c] sm:$0xf]
        %v2688 = vld [vmem:[%s20 + $0x70] sm:$0xf]
        %v2689 = vld [vmem:[%s20 + $0x74] sm:$0xf]
        %v2690 = vld [vmem:[%s20 + $0x78] sm:$0xf]
        %v2691 = vld [vmem:[%s20 + $0x7c] sm:$0xf]
        %v2692 = vld [vmem:[%s21] sm:$0x1]
        %v2694 = vlaneseq
        %v2695 = vshrl.u32 %v2694, 7
        %v2696 = vsub.s32 0, %v2695
        %v2697 = vrot.slane %v2692, %v2696
        %v2731 = vunpack.c.l.b16 %v2660
        %v2732 = vunpack.c.l.b16 %v2661
        %v2733 = vunpack.c.l.b16 %v2662
        %v2734 = vunpack.c.l.b16 %v2663
        %v2735 = vunpack.c.l.b16 %v2664
        %v2736 = vunpack.c.l.b16 %v2665
        %v2737 = vunpack.c.l.b16 %v2666
        %v2738 = vunpack.c.l.b16 %v2667
        %v2739 = vunpack.c.l.b16 %v2668
        %v2740 = vunpack.c.l.b16 %v2669
        %v2741 = vunpack.c.l.b16 %v2670
        %v2742 = vunpack.c.l.b16 %v2671
        %v2743 = vunpack.c.l.b16 %v2672
        %v2744 = vunpack.c.l.b16 %v2673
        %v2745 = vunpack.c.l.b16 %v2674
        %v2746 = vunpack.c.l.b16 %v2675
        %v2747 = vunpack.c.l.b16 %v2676
        %v2748 = vunpack.c.l.b16 %v2677
        %v2749 = vunpack.c.l.b16 %v2678
        %v2750 = vunpack.c.l.b16 %v2679
        %v2751 = vunpack.c.l.b16 %v2680
        %v2752 = vunpack.c.l.b16 %v2681
        %v2753 = vunpack.c.l.b16 %v2682
        %v2754 = vunpack.c.l.b16 %v2683
        %v2755 = vunpack.c.l.b16 %v2684
        %v2756 = vunpack.c.l.b16 %v2685
        %v2757 = vunpack.c.l.b16 %v2686
        %v2758 = vunpack.c.l.b16 %v2687
        %v2759 = vunpack.c.l.b16 %v2688
        %v2760 = vunpack.c.l.b16 %v2689
        %v2761 = vunpack.c.l.b16 %v2690
        %v2762 = vunpack.c.l.b16 %v2691
        %v2763 = vpack.c.b16 %v2732, %v2731
        %v2764 = vpack.c.b16 %v2734, %v2733
        %v2765 = vpack.c.b16 %v2736, %v2735
        %v2766 = vpack.c.b16 %v2738, %v2737
        %v2767 = vpack.c.b16 %v2740, %v2739
        %v2768 = vpack.c.b16 %v2742, %v2741
        %v2769 = vpack.c.b16 %v2744, %v2743
        %v2770 = vpack.c.b16 %v2746, %v2745
        %v2771 = vpack.c.b16 %v2748, %v2747
        %v2772 = vpack.c.b16 %v2750, %v2749
        %v2773 = vpack.c.b16 %v2752, %v2751
        %v2774 = vpack.c.b16 %v2754, %v2753
        %v2775 = vpack.c.b16 %v2756, %v2755
        %v2776 = vpack.c.b16 %v2758, %v2757
        %v2777 = vpack.c.b16 %v2760, %v2759
        %v2778 = vpack.c.b16 %v2762, %v2761
        %2795 = vmatprep.subr.bf16.mxu0 0
        %2796 = vmatpush1.bf16.msra.mxu0 %v2763
        %2797 = vmatprep.subr.bf16.mxu0 0
        %2798 = vmatpush1.bf16.msra.mxu0 %v2764
        %2799 = vmatprep.subr.bf16.mxu0 0
        %2800 = vmatpush1.bf16.msra.mxu0 %v2765
        %2801 = vmatprep.subr.bf16.mxu0 0
        %2802 = vmatpush1.bf16.msra.mxu0 %v2766
        %2803 = vmatprep.subr.bf16.mxu0 0
        %2804 = vmatpush1.bf16.msra.mxu0 %v2767
        %2805 = vmatprep.subr.bf16.mxu0 0
        %2806 = vmatpush1.bf16.msra.mxu0 %v2768
        %2807 = vmatprep.subr.bf16.mxu0 0
        %2808 = vmatpush1.bf16.msra.mxu0 %v2769
        %2809 = vmatprep.subr.bf16.mxu0 0
        %2810 = vmatpush1.bf16.msra.mxu0 %v2770
        %2811 = vmatprep.subr.bf16.mxu0 0
        %2812 = vmatpush1.bf16.msra.mxu0 %v2771
        %2813 = vmatprep.subr.bf16.mxu0 0
        %2814 = vmatpush1.bf16.msra.mxu0 %v2772
        %2815 = vmatprep.subr.bf16.mxu0 0
        %2816 = vmatpush1.bf16.msra.mxu0 %v2773
        %2817 = vmatprep.subr.bf16.mxu0 0
        %2818 = vmatpush1.bf16.msra.mxu0 %v2774
        %2819 = vmatprep.subr.bf16.mxu0 0
        %2820 = vmatpush1.bf16.msra.mxu0 %v2775
        %2821 = vmatprep.subr.bf16.mxu0 0
        %2822 = vmatpush1.bf16.msra.mxu0 %v2776
        %2823 = vmatprep.subr.bf16.mxu0 0
        %2824 = vmatpush1.bf16.msra.mxu0 %v2777
        %2825 = vmatprep.subr.bf16.mxu0 0
        %2826 = vmatpush1.bf16.msra.mxu0 %v2778
        %2827 = vmatprep.mubr.bf16.mxu0 %v2659
        %2828 = vmatmul.mubr.bf16.gmra.mrb[0].mxu0 %v2658
        %v2829 = vpop.f32.mrb[0].mxu0
        %v2830 = vadd.f32 %v2697, %v2829
        %v2831 = vpop.f32.mrb[0].mxu0
        %v2832 = vpop.f32.mrb[0].mxu0
        %v2833 = vpop.f32.mrb[0].mxu0
        %2834 = vdwg.mxu0
        %v2835 = vadd.f32 %v2505, %v2830
        %2836 = vadd.xlane.f32.xlu0 %v2835
        %v2837 = vpop.xlane.xlu0 %2836
        %v2838 = vmul.f32 %v2837, %v1625
        %v2839 = vsub.f32 %v2835, %v2838
        %v2840 = vmul.f32 %v2839, %v2839
        %2841 = vadd.xlane.f32.xlu0 %v2840
        %v2842 = vpop.xlane.xlu0 %2841
        %v2843 = vmul.f32 %v2842, %v1625
        %v2844 = vadd.f32 %v2843, 1e-05
        %v2845 = vrsqrt.pop %v2844
        %v2846 = vmul.f32 %v2839, %v2845
        %v2847 = vld [vmem:[%s22] sm:$0x1]
        %v2849 = vlaneseq
        %v2850 = vshrl.u32 %v2849, 7
        %v2851 = vsub.s32 0, %v2850
        %v2852 = vrot.slane %v2847, %v2851
        %v2854 = vmul.f32 %v2846, %v2852
        %v2855 = vld [vmem:[%s23] sm:$0x1]
        %v2857 = vlaneseq
        %v2858 = vshrl.u32 %v2857, 7
        %v2859 = vsub.s32 0, %v2858
        %v2860 = vrot.slane %v2855, %v2859
        %v2862 = vadd.f32 %v2854, %v2860
        %2863 = vst [vmem:[%s769] sm:$0xff] %v2862
        %s2864 = sand.u32 %s570, 1
        %s2865 = scalar_lea.sflag [#allocation3], %s2864
        %s2866 = sand.u32 %s570, 1
        %s2867 = smul.addr %s2866, 8
        %s2868 = scalar_lea.vmem [#allocation2], %s2867
        // Predicated region
        $region117: #{decoders_forward.3} parent=115 // pred_check
          %p2869 = pneg %p580
        $region118: #{decoders_forward.3} parent=115 // pred_check_branch
          %2871 = sbr.rel (%p2869) target = $region120
        $region119: #{decoders_forward.3} parent=115 // pred_region
          %s2873 = ssub.s32 128, 128
          %2874 = vsyncadd %s2865, %s2873
          %s2875 = smul.addr %s38, 128
          %s2876 = scalar_lea.hbm %s24, %s2875
          %s2878 = sshll.u32 %s2868, 4
          %s2879 = int_to_ptr.vmem [resolvable:$true] %s2878
          %2881 = dma.vmem_to_hbm [thread:$0]  %s2879, 128, %s2876, %s2865
        $region120: #{decoders_forward.3} parent=115 // pred_fallthru
          _
      $region116: #{decoders_forward.3} parent=5 // pred_fallthru
        _
      %p2882 = scmp.le.s32.totalorder 2, %s33
      // Predicated region
      $region121: #{decoders_forward.3} parent=5 // pred_check
        %p2883 = pneg %p2882
      $region122: #{decoders_forward.3} parent=5 // pred_check_branch
        %2885 = sbr.rel (%p2883) target = $region124
      $region123: #{decoders_forward.3} parent=5 // pred_region
        %s2886 = ssub.s32 %s33, 2
        // Predicated region
        $region125: #{decoders_forward.3} parent=123 // pred_check
          %p2887 = pneg %p586
        $region126: #{decoders_forward.3} parent=123 // pred_check_branch
          %2889 = sbr.rel (%p2887) target = $region128
        $region127: #{decoders_forward.3} parent=123 // pred_region
          %s2890 = sand.u32 %s571, 1
          %s2891 = scalar_lea.sflag [#allocation3], %s2890
          %s2892 = sand.u32 %s571, 1
          %s2893 = smul.addr %s2892, 8
          %s2894 = scalar_lea.vmem [#allocation2], %s2893
          %2895 = dma.done %s2891, 128
        $region128: #{decoders_forward.3} parent=123 // pred_fallthru
          _
      $region124: #{decoders_forward.3} parent=5 // pred_fallthru
        _
    $region6: #{decoders_forward.3} parent=1 // loop_footer
      %s37 = sadd.s32 1, %s33
    $region7: #{decoders_forward.3} parent=1 // loop_footer_branch
      %32 = sbr.rel target = $region3
    $region8: #{decoders_forward.3} parent=1 // loop_exit
      _
    %2896 = vsyncpa [#allocation3], 1
    %s2897 = scalar_lea.sflag [#allocation3], 1
    %2898 = vsyncpa %s2897, 1

</llo_original>
